<compile_context>
chip_gen: v7x
topology: tpu7x:2x2x1
jax: 0.10.0
libtpu: 0.0.40
codegen_flags: <defaults>
</compile_context>

<pallas_src>
import functools
import math

import jax
import jax.numpy as jnp
from jax import lax
from jax.experimental import pallas as pl
from jax.experimental.pallas import tpu as pltpu

EPS = 1e-6


# ----------------------------- in-kernel helpers -----------------------------

def _norm(x, alpha, bias, eps):
    # Custom Norm: (x - mean) / (unbiased_std + eps) * alpha + bias
    d = x.shape[-1]
    mean = jnp.mean(x, axis=-1, keepdims=True)
    xc = x - mean
    var = jnp.sum(xc * xc, axis=-1, keepdims=True) * (1.0 / (d - 1))
    std = jnp.sqrt(var)
    return alpha * (xc / (std + eps)) + bias


def _mha(q, k, v, wo, bo, n_heads):
    """Multi-head attention with the concat + out-projection fused.

    q: (Sq, E), k/v: (Sk, E), wo: (E, E), bo: (1, E).
    Per-head loop is statically unrolled (H is small).  The epilogue uses
        concat_h(o_h) @ Wo  ==  sum_h  o_h @ Wo[h*d:(h+1)*d, :]
    which avoids any lane-dim concatenate / transpose inside the kernel.
    """
    e = q.shape[-1]
    d = e // n_heads
    scale = 1.0 / math.sqrt(d)
    acc = None
    for h in range(n_heads):
        lo, hi = h * d, (h + 1) * d
        qh = q[:, lo:hi] * scale                      # fold 1/sqrt(d) into q
        kh = k[:, lo:hi]
        vh = v[:, lo:hi]
        # q @ k^T without materializing a transpose: contract last dims of both.
        s = lax.dot_general(qh, kh, (((1,), (1,)), ((), ())),
                            preferred_element_type=jnp.float32)   # (Sq, Sk)
        s = s - jnp.max(s, axis=-1, keepdims=True)
        p = jnp.exp(s)
        p = p * pl.reciprocal(jnp.sum(p, axis=-1, keepdims=True), approx=True)
        oh = jnp.dot(p, vh, preferred_element_type=jnp.float32)   # (Sq, d)
        contrib = jnp.dot(oh, wo[lo:hi, :], preferred_element_type=jnp.float32)
        acc = contrib if acc is None else acc + contrib
    return acc + bo


def _ffn(x, w1, b1, w2, b2):
    h = jnp.maximum(jnp.dot(x, w1, preferred_element_type=jnp.float32) + b1, 0.0)
    return jnp.dot(h, w2, preferred_element_type=jnp.float32) + b2


# ----------------------------- Pallas kernels -----------------------------

def _encoder_layer_kernel(x_ref,
                          n1a_ref, n1b_ref, n2a_ref, n2b_ref,
                          wqkv_ref, bqkv_ref, wo_ref, bo_ref,
                          fw1_ref, fb1_ref, fw2_ref, fb2_ref,
                          o_ref, *, n_heads, eps):
    x = x_ref[0]                                   # (S, E)
    e = x.shape[-1]
    _x = _norm(x, n1a_ref[...], n1b_ref[...], eps)
    qkv = jnp.dot(_x, wqkv_ref[...], preferred_element_type=jnp.float32) + bqkv_ref[...]
    attn = _mha(qkv[:, 0:e], qkv[:, e:2 * e], qkv[:, 2 * e:3 * e],
                wo_ref[...], bo_ref[...], n_heads)
    out = x + attn                                 # dropout_1 = identity
    _out = _norm(out, n2a_ref[...], n2b_ref[...], eps)
    o_ref[0] = _ffn(_out, fw1_ref[...], fb1_ref[...], fw2_ref[...], fb2_ref[...]) + _out


def _decoder_layer_kernel(x_ref, enc_ref,
                          n1a_ref, n1b_ref, n2a_ref, n2b_ref, n3a_ref, n3b_ref,
                          wqkv1_ref, bqkv1_ref, wo1_ref, bo1_ref,
                          wq2_ref, bq2_ref, wkv2_ref, bkv2_ref, wo2_ref, bo2_ref,
                          fw1_ref, fb1_ref, fw2_ref, fb2_ref,
                          o_ref, *, n_heads, eps):
    x = x_ref[0]                                   # (S_trg, E)
    enc = enc_ref[0]                               # (S_src, E)
    e = x.shape[-1]

    # --- self-attention sublayer ---
    _x = _norm(x, n1a_ref[...], n1b_ref[...], eps)
    qkv = jnp.dot(_x, wqkv1_ref[...], preferred_element_type=jnp.float32) + bqkv1_ref[...]
    a1 = _mha(qkv[:, 0:e], qkv[:, e:2 * e], qkv[:, 2 * e:3 * e],
              wo1_ref[...], bo1_ref[...], n_heads)
    out = a1 + x                                   # dropout_1 = identity

    # --- cross-attention sublayer ---
    _out = _norm(out, n2a_ref[...], n2b_ref[...], eps)
    q2 = jnp.dot(_out, wq2_ref[...], preferred_element_type=jnp.float32) + bq2_ref[...]
    kv2 = jnp.dot(enc, wkv2_ref[...], preferred_element_type=jnp.float32) + bkv2_ref[...]
    a2 = _mha(q2, kv2[:, 0:e], kv2[:, e:2 * e], wo2_ref[...], bo2_ref[...], n_heads)
    out = a2 + _out                                # dropout_2 = identity

    # --- feed-forward sublayer ---
    _out = _norm(out, n3a_ref[...], n3b_ref[...], eps)
    o_ref[0] = _ffn(_out, fw1_ref[...], fb1_ref[...], fw2_ref[...], fb2_ref[...]) + _out


def _norm_kernel(x_ref, a_ref, b_ref, o_ref, *, eps):
    o_ref[...] = _norm(x_ref[...], a_ref[...], b_ref[...], eps)


def _norm_proj_softmax_kernel(x_ref, a_ref, b_ref, w_ref, bias_ref, o_ref, *, eps, vocab):
    # final decoder norm + output projection + softmax, vocab padded to 128 lanes
    _x = _norm(x_ref[...], a_ref[...], b_ref[...], eps)
    logits = jnp.dot(_x, w_ref[...], preferred_element_type=jnp.float32) + bias_ref[...]
    col = lax.broadcasted_iota(jnp.int32, logits.shape, 1)
    logits = jnp.where(col < vocab, logits, -1e30)      # mask padded vocab columns
    logits = logits - jnp.max(logits, axis=-1, keepdims=True)
    p = jnp.exp(logits)
    # exact division for the user-visible probabilities
    o_ref[...] = p / jnp.sum(p, axis=-1, keepdims=True)


# ----------------------------- wrappers -----------------------------

def _rep(shape):
    zeros = (0,) * len(shape)
    return pl.BlockSpec(shape, lambda i: zeros)


def encoder_layer_forward(p, x, n_heads, eps=EPS):
    b, s, e = x.shape
    ff = p["fw1"].shape[1]
    kernel = functools.partial(_encoder_layer_kernel, n_heads=n_heads, eps=eps)
    return pl.pallas_call(
        kernel,
        out_shape=jax.ShapeDtypeStruct((b, s, e), jnp.float32),
        grid=(b,),
        in_specs=[
            pl.BlockSpec((1, s, e), lambda i: (i, 0, 0)),
            _rep((1, e)), _rep((1, e)), _rep((1, e)), _rep((1, e)),
            _rep((e, 3 * e)), _rep((1, 3 * e)), _rep((e, e)), _rep((1, e)),
            _rep((e, ff)), _rep((1, ff)), _rep((ff, e)), _rep((1, e)),
        ],
        out_specs=pl.BlockSpec((1, s, e), lambda i: (i, 0, 0)),
        compiler_params=pltpu.CompilerParams(dimension_semantics=("parallel",)),
    )(x,
      p["n1a"], p["n1b"], p["n2a"], p["n2b"],
      p["wqkv"], p["bqkv"], p["wo"], p["bo"],
      p["fw1"], p["fb1"], p["fw2"], p["fb2"])


def decoder_layer_forward(p, x, enc, n_heads, eps=EPS):
    b, s_trg, e = x.shape
    s_src = enc.shape[1]
    ff = p["fw1"].shape[1]
    kernel = functools.partial(_decoder_layer_kernel, n_heads=n_heads, eps=eps)
    return pl.pallas_call(
        kernel,
        out_shape=jax.ShapeDtypeStruct((b, s_trg, e), jnp.float32),
        grid=(b,),
        in_specs=[
            pl.BlockSpec((1, s_trg, e), lambda i: (i, 0, 0)),
            pl.BlockSpec((1, s_src, e), lambda i: (i, 0, 0)),
            _rep((1, e)), _rep((1, e)), _rep((1, e)),
            _rep((1, e)), _rep((1, e)), _rep((1, e)),
            _rep((e, 3 * e)), _rep((1, 3 * e)), _rep((e, e)), _rep((1, e)),
            _rep((e, e)), _rep((1, e)), _rep((e, 2 * e)), _rep((1, 2 * e)),
            _rep((e, e)), _rep((1, e)),
            _rep((e, ff)), _rep((1, ff)), _rep((ff, e)), _rep((1, e)),
        ],
        out_specs=pl.BlockSpec((1, s_trg, e), lambda i: (i, 0, 0)),
        compiler_params=pltpu.CompilerParams(dimension_semantics=("parallel",)),
    )(x, enc,
      p["n1a"], p["n1b"], p["n2a"], p["n2b"], p["n3a"], p["n3b"],
      p["wqkv1"], p["bqkv1"], p["wo1"], p["bo1"],
      p["wq2"], p["bq2"], p["wkv2"], p["bkv2"], p["wo2"], p["bo2"],
      p["fw1"], p["fb1"], p["fw2"], p["fb2"])


def norm_forward(x, alpha, bias, eps=EPS):
    b, s, e = x.shape
    m = b * s
    x2 = x.reshape(m, e)
    out = pl.pallas_call(
        functools.partial(_norm_kernel, eps=eps),
        out_shape=jax.ShapeDtypeStruct((m, e), jnp.float32),
        grid=(1,),
        in_specs=[_rep((m, e)), _rep((1, e)), _rep((1, e))],
        out_specs=_rep((m, e)),
        compiler_params=pltpu.CompilerParams(dimension_semantics=("arbitrary",)),
    )(x2, alpha, bias)
    return out.reshape(b, s, e)


def norm_proj_softmax_forward(x, alpha, bias, w_pad, b_pad, vocab, eps=EPS):
    b, s, e = x.shape
    m = b * s
    vp = w_pad.shape[1]
    x2 = x.reshape(m, e)
    out = pl.pallas_call(
        functools.partial(_norm_proj_softmax_kernel, eps=eps, vocab=vocab),
        out_shape=jax.ShapeDtypeStruct((m, vp), jnp.float32),
        grid=(1,),
        in_specs=[_rep((m, e)), _rep((1, e)), _rep((1, e)),
                  _rep((e, vp)), _rep((1, vp))],
        out_specs=_rep((m, vp)),
        compiler_params=pltpu.CompilerParams(dimension_semantics=("arbitrary",)),
    )(x2, alpha, bias, w_pad, b_pad)
    return out[:, :vocab].reshape(b, s, vocab)


def transformer_forward(params, src, trg, *, n_heads, trg_vocab):
    # Encoder: x + positional embedding (positions 0..S-1, broadcast over batch)
    s_src = src.shape[1]
    out = src + params["pos_embed"][None, :s_src, :]
    for lp in params["enc_layers"]:
        out = encoder_layer_forward(lp, out, n_heads)
    enc_out = norm_forward(out, params["enc_norm_a"], params["enc_norm_b"])

    # Decoder (reference Decoder has no positional embedding)
    out = trg
    for lp in params["dec_layers"]:
        out = decoder_layer_forward(lp, out, enc_out, n_heads)

    # Fused final norm + output projection + softmax
    return norm_proj_softmax_forward(out, params["dec_norm_a"], params["dec_norm_b"],
                                     params["w_out"], params["b_out"], trg_vocab)
    # TODO(synk): src/trg attention masks omitted — Transformer.forward is
    # exercised with src_mask=None / trg_mask=None (default call path).


# ----------------------------- parameter init -----------------------------

def init_norm(e):
    return jnp.ones((1, e), jnp.float32), jnp.zeros((1, e), jnp.float32)


def init_linear(key, d_in, d_out):
    kw, kb = jax.random.split(key)
    bound = 1.0 / math.sqrt(d_in)
    w = jax.random.uniform(kw, (d_in, d_out), jnp.float32, -bound, bound)
    b = jax.random.uniform(kb, (1, d_out), jnp.float32, -bound, bound)
    return w, b


def init_self_mha(key, e):
    kq, kk, kv, ko = jax.random.split(key, 4)
    wq, bq = init_linear(kq, e, e)
    wk, bk = init_linear(kk, e, e)
    wv, bv = init_linear(kv, e, e)
    wo, bo = init_linear(ko, e, e)
    return (jnp.concatenate([wq, wk, wv], axis=1),
            jnp.concatenate([bq, bk, bv], axis=1), wo, bo)


def init_cross_mha(key, e):
    kq, kk, kv, ko = jax.random.split(key, 4)
    wq, bq = init_linear(kq, e, e)
    wk, bk = init_linear(kk, e, e)
    wv, bv = init_linear(kv, e, e)
    wo, bo = init_linear(ko, e, e)
    return (wq, bq,
            jnp.concatenate([wk, wv], axis=1),
            jnp.concatenate([bk, bv], axis=1), wo, bo)


def init_encoder_layer(key, e, ff):
    ka, k1, k2 = jax.random.split(key, 3)
    wqkv, bqkv, wo, bo = init_self_mha(ka, e)
    fw1, fb1 = init_linear(k1, e, ff)
    fw2, fb2 = init_linear(k2, ff, e)
    n1a, n1b = init_norm(e)
    n2a, n2b = init_norm(e)
    return dict(n1a=n1a, n1b=n1b, n2a=n2a, n2b=n2b,
                wqkv=wqkv, bqkv=bqkv, wo=wo, bo=bo,
                fw1=fw1, fb1=fb1, fw2=fw2, fb2=fb2)


def init_decoder_layer(key, e, ff):
    ka1, ka2, k1, k2 = jax.random.split(key, 4)
    wqkv1, bqkv1, wo1, bo1 = init_self_mha(ka1, e)
    wq2, bq2, wkv2, bkv2, wo2, bo2 = init_cross_mha(ka2, e)
    fw1, fb1 = init_linear(k1, e, ff)
    fw2, fb2 = init_linear(k2, ff, e)
    n1a, n1b = init_norm(e)
    n2a, n2b = init_norm(e)
    n3a, n3b = init_norm(e)
    return dict(n1a=n1a, n1b=n1b, n2a=n2a, n2b=n2b, n3a=n3a, n3b=n3b,
                wqkv1=wqkv1, bqkv1=bqkv1, wo1=wo1, bo1=bo1,
                wq2=wq2, bq2=bq2, wkv2=wkv2, bkv2=bkv2, wo2=wo2, bo2=bo2,
                fw1=fw1, fb1=fb1, fw2=fw2, fb2=fb2)


def init_transformer(key, trg_vocab, e, ff, n_layers, max_seq_len=100):
    keys = jax.random.split(key, 2 * n_layers + 2)
    enc_layers = [init_encoder_layer(keys[i], e, ff) for i in range(n_layers)]
    dec_layers = [init_decoder_layer(keys[n_layers + i], e, ff) for i in range(n_layers)]
    pos_embed = jax.random.normal(keys[-2], (max_seq_len, e), jnp.float32)
    w_out, b_out = init_linear(keys[-1], e, trg_vocab)
    # pad vocab dim to a multiple of 128 for lane-dense output stores
    vp = ((trg_vocab + 127) // 128) * 128
    w_out_p = jnp.zeros((e, vp), jnp.float32).at[:, :trg_vocab].set(w_out)
    b_out_p = jnp.zeros((1, vp), jnp.float32).at[:, :trg_vocab].set(b_out)
    ena, enb = init_norm(e)
    dna, dnb = init_norm(e)
    return dict(enc_layers=enc_layers, dec_layers=dec_layers,
                enc_norm_a=ena, enc_norm_b=enb,
                dec_norm_a=dna, dec_norm_b=dnb,
                pos_embed=pos_embed, w_out=w_out_p, b_out=b_out_p)


# ----------------------------- pure-JAX reference -----------------------------

def _ref_norm(x, alpha, bias, eps=EPS):
    mean = jnp.mean(x, axis=-1, keepdims=True)
    std = jnp.std(x, axis=-1, keepdims=True, ddof=1)
    return alpha * ((x - mean) / (std + eps)) + bias


def _ref_mha(q_in, kv_in, wq, bq, wk, bk, wv, bv, wo, bo, n_heads):
    b, sq, e = q_in.shape
    sk = kv_in.shape[1]
    d = e // n_heads
    q = (q_in @ wq + bq).reshape(b, sq, n_heads, d).transpose(0, 2, 1, 3)
    k = (kv_in @ wk + bk).reshape(b, sk, n_heads, d).transpose(0, 2, 1, 3)
    v = (kv_in @ wv + bv).reshape(b, sk, n_heads, d).transpose(0, 2, 1, 3)
    s = jnp.einsum("bhqd,bhkd->bhqk", q, k) / math.sqrt(d)
    p = jax.nn.softmax(s, axis=-1)
    o = jnp.einsum("bhqk,bhkd->bhqd", p, v).transpose(0, 2, 1, 3).reshape(b, sq, e)
    return o @ wo + bo


def _ref_ffn(x, w1, b1, w2, b2):
    return jnp.maximum(x @ w1 + b1, 0.0) @ w2 + b2


def _ref_encoder_layer(p, x, n_heads):
    e = x.shape[-1]
    _x = _ref_norm(x, p["n1a"], p["n1b"])
    out = x + _ref_mha(_x, _x,
                       p["wqkv"][:, :e], p["bqkv"][:, :e],
                       p["wqkv"][:, e:2 * e], p["bqkv"][:, e:2 * e],
                       p["wqkv"][:, 2 * e:], p["bqkv"][:, 2 * e:],
                       p["wo"], p["bo"], n_heads)
    _out = _ref_norm(out, p["n2a"], p["n2b"])
    return _ref_ffn(_out, p["fw1"], p["fb1"], p["fw2"], p["fb2"]) + _out


def _ref_decoder_layer(p, x, enc, n_heads):
    e = x.shape[-1]
    _x = _ref_norm(x, p["n1a"], p["n1b"])
    out = _ref_mha(_x, _x,
                   p["wqkv1"][:, :e], p["bqkv1"][:, :e],
                   p["wqkv1"][:, e:2 * e], p["bqkv1"][:, e:2 * e],
                   p["wqkv1"][:, 2 * e:], p["bqkv1"][:, 2 * e:],
                   p["wo1"], p["bo1"], n_heads) + x
    _out = _ref_norm(out, p["n2a"], p["n2b"])
    out = _ref_mha(_out, enc,
                   p["wq2"], p["bq2"],
                   p["wkv2"][:, :e], p["bkv2"][:, :e],
                   p["wkv2"][:, e:], p["bkv2"][:, e:],
                   p["wo2"], p["bo2"], n_heads) + _out
    _out = _ref_norm(out, p["n3a"], p["n3b"])
    return _ref_ffn(_out, p["fw1"], p["fb1"], p["fw2"], p["fb2"]) + _out


def ref_forward(params, src, trg, n_heads, vocab):
    s_src = src.shape[1]
    out = src + params["pos_embed"][None, :s_src, :]
    for lp in params["enc_layers"]:
        out = _ref_encoder_layer(lp, out, n_heads)
    enc_out = _ref_norm(out, params["enc_norm_a"], params["enc_norm_b"])
    out = trg
    for lp in params["dec_layers"]:
        out = _ref_decoder_layer(lp, out, enc_out, n_heads)
    dec_out = _ref_norm(out, params["dec_norm_a"], params["dec_norm_b"])
    logits = dec_out @ params["w_out"][:, :vocab] + params["b_out"][:, :vocab]
    return jax.nn.softmax(logits, axis=-1)


# ----------------------------- main -----------------------------

if __name__ == "__main__":
    batch = 2
    src_seq = 8
    trg_seq = 8
    embed_dim = 32
    n_heads = 4
    ff_dim = 64
    n_layers = 2
    trg_vocab_size = 16   # src_vocab unused in forward (inputs are already embeddings)

    key = jax.random.PRNGKey(0)
    k_params, k_src, k_trg = jax.random.split(key, 3)

    params = init_transformer(k_params, trg_vocab_size, embed_dim, ff_dim, n_layers)

    src = jax.random.normal(k_src, (batch, src_seq, embed_dim), jnp.float32)
    trg = jax.random.normal(k_trg, (batch, trg_seq, embed_dim), jnp.float32)

    fwd = jax.jit(functools.partial(transformer_forward,
                                    n_heads=n_heads, trg_vocab=trg_vocab_size))
    out = jax.block_until_ready(fwd(params, src, trg))

    assert out.shape == (batch, trg_seq, trg_vocab_size), out.shape
    assert bool(jnp.all(jnp.isfinite(out)))
    # softmax rows sum to ~1 (final softmax uses exact division)
    assert bool(jnp.allclose(jnp.sum(out, axis=-1), 1.0, atol=1e-4))

    # compare against the pure-JAX reference of the PyTorch module
    ref = ref_forward(params, src, trg, n_heads, trg_vocab_size)
    assert bool(jnp.allclose(out, ref, atol=3e-2, rtol=0.0))

    print("KERNEL_OK")
</pallas_src>

<mosaic_0001>
module attributes {stable_mosaic.version = 11 : i64} {
  func.func @_encoder_layer_kernel(%arg0: i32, %arg1: memref<1x8x32xf32, #tpu.memory_space<vmem>>, %arg2: memref<1x32xf32, #tpu.memory_space<vmem>>, %arg3: memref<1x32xf32, #tpu.memory_space<vmem>>, %arg4: memref<1x32xf32, #tpu.memory_space<vmem>>, %arg5: memref<1x32xf32, #tpu.memory_space<vmem>>, %arg6: memref<32x96xf32, #tpu.memory_space<vmem>>, %arg7: memref<1x96xf32, #tpu.memory_space<vmem>>, %arg8: memref<32x32xf32, #tpu.memory_space<vmem>>, %arg9: memref<1x32xf32, #tpu.memory_space<vmem>>, %arg10: memref<32x64xf32, #tpu.memory_space<vmem>>, %arg11: memref<1x64xf32, #tpu.memory_space<vmem>>, %arg12: memref<64x32xf32, #tpu.memory_space<vmem>>, %arg13: memref<1x32xf32, #tpu.memory_space<vmem>>, %arg14: memref<1x8x32xf32, #tpu.memory_space<vmem>>) attributes {dimension_semantics = [#tpu.dimension_semantics<parallel>], iteration_bounds = array<i64: 2>, scalar_prefetch = 0 : i64, scratch_operands = 0 : i64, tpu.core_type = #tpu.core_type<tc>, window_params = [{transform_indices = @transform_0, window_bounds = array<i64: 1, 8, 32>}, {pipeline_mode = #tpu.pipeline_mode<synchronous>, transform_indices = @transform_1, window_bounds = array<i64: 1, 32>}, {pipeline_mode = #tpu.pipeline_mode<synchronous>, transform_indices = @transform_2, window_bounds = array<i64: 1, 32>}, {pipeline_mode = #tpu.pipeline_mode<synchronous>, transform_indices = @transform_3, window_bounds = array<i64: 1, 32>}, {pipeline_mode = #tpu.pipeline_mode<synchronous>, transform_indices = @transform_4, window_bounds = array<i64: 1, 32>}, {pipeline_mode = #tpu.pipeline_mode<synchronous>, transform_indices = @transform_5, window_bounds = array<i64: 32, 96>}, {pipeline_mode = #tpu.pipeline_mode<synchronous>, transform_indices = @transform_6, window_bounds = array<i64: 1, 96>}, {pipeline_mode = #tpu.pipeline_mode<synchronous>, transform_indices = @transform_7, window_bounds = array<i64: 32, 32>}, {pipeline_mode = #tpu.pipeline_mode<synchronous>, transform_indices = @transform_8, window_bounds = array<i64: 1, 32>}, {pipeline_mode = #tpu.pipeline_mode<synchronous>, transform_indices = @transform_9, window_bounds = array<i64: 32, 64>}, {pipeline_mode = #tpu.pipeline_mode<synchronous>, transform_indices = @transform_10, window_bounds = array<i64: 1, 64>}, {pipeline_mode = #tpu.pipeline_mode<synchronous>, transform_indices = @transform_11, window_bounds = array<i64: 64, 32>}, {pipeline_mode = #tpu.pipeline_mode<synchronous>, transform_indices = @transform_12, window_bounds = array<i64: 1, 32>}, {transform_indices = @transform_13, window_bounds = array<i64: 1, 8, 32>}]} {
    %c0 = arith.constant 0 : index
    %c0_0 = arith.constant 0 : index
    %c0_1 = arith.constant 0 : index
    %0 = vector.load %arg1[%c0, %c0_0, %c0_1] : memref<1x8x32xf32, #tpu.memory_space<vmem>>, vector<1x8x32xf32>
    %1 = vector.shape_cast %0 : vector<1x8x32xf32> to vector<8x32xf32>
    %c0_2 = arith.constant 0 : index
    %c0_3 = arith.constant 0 : index
    %2 = vector.load %arg2[%c0_2, %c0_3] : memref<1x32xf32, #tpu.memory_space<vmem>>, vector<1x32xf32>
    %c0_4 = arith.constant 0 : index
    %c0_5 = arith.constant 0 : index
    %3 = vector.load %arg3[%c0_4, %c0_5] : memref<1x32xf32, #tpu.memory_space<vmem>>, vector<1x32xf32>
    %cst = arith.constant dense<0.000000e+00> : vector<8xf32>
    %4 = vector.multi_reduction <add>, %1, %cst [1] : vector<8x32xf32> to vector<8xf32>
    %5 = vector.shape_cast %4 : vector<8xf32> to vector<8x1xf32>
    %cst_6 = arith.constant 3.200000e+01 : f32
    %6 = vector.broadcast %cst_6 : f32 to vector<8x1xf32>
    %7 = arith.divf %5, %6 : vector<8x1xf32>
    %8 = vector.broadcast %7 : vector<8x1xf32> to vector<8x32xf32>
    %9 = arith.subf %1, %8 : vector<8x32xf32>
    %10 = arith.mulf %9, %9 : vector<8x32xf32>
    %cst_7 = arith.constant dense<0.000000e+00> : vector<8xf32>
    %11 = vector.multi_reduction <add>, %10, %cst_7 [1] : vector<8x32xf32> to vector<8xf32>
    %12 = vector.shape_cast %11 : vector<8xf32> to vector<8x1xf32>
    %cst_8 = arith.constant 0.0322580636 : f32
    %13 = vector.broadcast %cst_8 : f32 to vector<8x1xf32>
    %14 = arith.mulf %12, %13 : vector<8x1xf32>
    %15 = math.sqrt %14 : vector<8x1xf32>
    %cst_9 = arith.constant 9.99999997E-7 : f32
    %16 = vector.broadcast %cst_9 : f32 to vector<8x1xf32>
    %17 = arith.addf %15, %16 : vector<8x1xf32>
    %18 = vector.broadcast %17 : vector<8x1xf32> to vector<8x32xf32>
    %19 = arith.divf %9, %18 : vector<8x32xf32>
    %20 = vector.broadcast %2 : vector<1x32xf32> to vector<8x32xf32>
    %21 = arith.mulf %20, %19 : vector<8x32xf32>
    %22 = vector.broadcast %3 : vector<1x32xf32> to vector<8x32xf32>
    %23 = arith.addf %21, %22 : vector<8x32xf32>
    %c0_10 = arith.constant 0 : index
    %c0_11 = arith.constant 0 : index
    %24 = vector.load %arg6[%c0_10, %c0_11] : memref<32x96xf32, #tpu.memory_space<vmem>>, vector<32x96xf32>
    %cst_12 = arith.constant dense<0.000000e+00> : vector<8x96xf32>
    %25 = tpu.matmul %23, %24, %cst_12 {dimension_numbers = #tpu.dot_dimension_numbers<[1], [0], [0], [1], [0, 0, 1, 1], [], []>} : vector<8x32xf32>, vector<32x96xf32>, vector<8x96xf32> -> vector<8x96xf32>
    %c0_13 = arith.constant 0 : index
    %c0_14 = arith.constant 0 : index
    %26 = vector.load %arg7[%c0_13, %c0_14] : memref<1x96xf32, #tpu.memory_space<vmem>>, vector<1x96xf32>
    %27 = vector.broadcast %26 : vector<1x96xf32> to vector<8x96xf32>
    %28 = arith.addf %25, %27 : vector<8x96xf32>
    %29 = vector.extract_strided_slice %28 {offsets = [0, 0], sizes = [8, 32], strides = [1, 1]} : vector<8x96xf32> to vector<8x32xf32>
    %30 = vector.extract_strided_slice %28 {offsets = [0, 32], sizes = [8, 32], strides = [1, 1]} : vector<8x96xf32> to vector<8x32xf32>
    %31 = vector.extract_strided_slice %28 {offsets = [0, 64], sizes = [8, 32], strides = [1, 1]} : vector<8x96xf32> to vector<8x32xf32>
    %c0_15 = arith.constant 0 : index
    %c0_16 = arith.constant 0 : index
    %32 = vector.load %arg8[%c0_15, %c0_16] : memref<32x32xf32, #tpu.memory_space<vmem>>, vector<32x32xf32>
    %c0_17 = arith.constant 0 : index
    %c0_18 = arith.constant 0 : index
    %33 = vector.load %arg9[%c0_17, %c0_18] : memref<1x32xf32, #tpu.memory_space<vmem>>, vector<1x32xf32>
    %34 = vector.extract_strided_slice %29 {offsets = [0, 0], sizes = [8, 8], strides = [1, 1]} : vector<8x32xf32> to vector<8x8xf32>
    %cst_19 = arith.constant 0.353553385 : f32
    %35 = vector.broadcast %cst_19 : f32 to vector<8x8xf32>
    %36 = arith.mulf %34, %35 : vector<8x8xf32>
    %37 = vector.extract_strided_slice %30 {offsets = [0, 0], sizes = [8, 8], strides = [1, 1]} : vector<8x32xf32> to vector<8x8xf32>
    %38 = vector.extract_strided_slice %31 {offsets = [0, 0], sizes = [8, 8], strides = [1, 1]} : vector<8x32xf32> to vector<8x8xf32>
    %cst_20 = arith.constant dense<0.000000e+00> : vector<8x8xf32>
    %39 = tpu.matmul %36, %37, %cst_20 {dimension_numbers = #tpu.dot_dimension_numbers<[1], [1], [0], [0], [0, 0, 1, 0], [], []>} : vector<8x8xf32>, vector<8x8xf32>, vector<8x8xf32> -> vector<8x8xf32>
    %cst_21 = arith.constant dense<0xFF800000> : vector<8xf32>
    %40 = vector.multi_reduction <maximumf>, %39, %cst_21 [1] : vector<8x8xf32> to vector<8xf32>
    %41 = vector.shape_cast %40 : vector<8xf32> to vector<8x1xf32>
    %42 = vector.broadcast %41 : vector<8x1xf32> to vector<8x8xf32>
    %43 = arith.subf %39, %42 : vector<8x8xf32>
    %44 = math.exp %43 : vector<8x8xf32>
    %cst_22 = arith.constant dense<0.000000e+00> : vector<8xf32>
    %45 = vector.multi_reduction <add>, %44, %cst_22 [1] : vector<8x8xf32> to vector<8xf32>
    %46 = vector.shape_cast %45 : vector<8xf32> to vector<8x1xf32>
    %47 = tpu.reciprocal %46 {approx = true} : vector<8x1xf32> -> vector<8x1xf32>
    %48 = vector.broadcast %47 : vector<8x1xf32> to vector<8x8xf32>
    %49 = arith.mulf %44, %48 : vector<8x8xf32>
    %cst_23 = arith.constant dense<0.000000e+00> : vector<8x8xf32>
    %50 = tpu.matmul %49, %38, %cst_23 {dimension_numbers = #tpu.dot_dimension_numbers<[1], [0], [0], [1], [0, 0, 1, 1], [], []>} : vector<8x8xf32>, vector<8x8xf32>, vector<8x8xf32> -> vector<8x8xf32>
    %51 = vector.extract_strided_slice %32 {offsets = [0, 0], sizes = [8, 32], strides = [1, 1]} : vector<32x32xf32> to vector<8x32xf32>
    %cst_24 = arith.constant dense<0.000000e+00> : vector<8x32xf32>
    %52 = tpu.matmul %50, %51, %cst_24 {dimension_numbers = #tpu.dot_dimension_numbers<[1], [0], [0], [1], [0, 0, 1, 1], [], []>} : vector<8x8xf32>, vector<8x32xf32>, vector<8x32xf32> -> vector<8x32xf32>
    %53 = vector.extract_strided_slice %29 {offsets = [0, 8], sizes = [8, 8], strides = [1, 1]} : vector<8x32xf32> to vector<8x8xf32>
    %cst_25 = arith.constant 0.353553385 : f32
    %54 = vector.broadcast %cst_25 : f32 to vector<8x8xf32>
    %55 = arith.mulf %53, %54 : vector<8x8xf32>
    %56 = vector.extract_strided_slice %30 {offsets = [0, 8], sizes = [8, 8], strides = [1, 1]} : vector<8x32xf32> to vector<8x8xf32>
    %57 = vector.extract_strided_slice %31 {offsets = [0, 8], sizes = [8, 8], strides = [1, 1]} : vector<8x32xf32> to vector<8x8xf32>
    %cst_26 = arith.constant dense<0.000000e+00> : vector<8x8xf32>
    %58 = tpu.matmul %55, %56, %cst_26 {dimension_numbers = #tpu.dot_dimension_numbers<[1], [1], [0], [0], [0, 0, 1, 0], [], []>} : vector<8x8xf32>, vector<8x8xf32>, vector<8x8xf32> -> vector<8x8xf32>
    %cst_27 = arith.constant dense<0xFF800000> : vector<8xf32>
    %59 = vector.multi_reduction <maximumf>, %58, %cst_27 [1] : vector<8x8xf32> to vector<8xf32>
    %60 = vector.shape_cast %59 : vector<8xf32> to vector<8x1xf32>
    %61 = vector.broadcast %60 : vector<8x1xf32> to vector<8x8xf32>
    %62 = arith.subf %58, %61 : vector<8x8xf32>
    %63 = math.exp %62 : vector<8x8xf32>
    %cst_28 = arith.constant dense<0.000000e+00> : vector<8xf32>
    %64 = vector.multi_reduction <add>, %63, %cst_28 [1] : vector<8x8xf32> to vector<8xf32>
    %65 = vector.shape_cast %64 : vector<8xf32> to vector<8x1xf32>
    %66 = tpu.reciprocal %65 {approx = true} : vector<8x1xf32> -> vector<8x1xf32>
    %67 = vector.broadcast %66 : vector<8x1xf32> to vector<8x8xf32>
    %68 = arith.mulf %63, %67 : vector<8x8xf32>
    %cst_29 = arith.constant dense<0.000000e+00> : vector<8x8xf32>
    %69 = tpu.matmul %68, %57, %cst_29 {dimension_numbers = #tpu.dot_dimension_numbers<[1], [0], [0], [1], [0, 0, 1, 1], [], []>} : vector<8x8xf32>, vector<8x8xf32>, vector<8x8xf32> -> vector<8x8xf32>
    %70 = vector.extract_strided_slice %32 {offsets = [8, 0], sizes = [8, 32], strides = [1, 1]} : vector<32x32xf32> to vector<8x32xf32>
    %cst_30 = arith.constant dense<0.000000e+00> : vector<8x32xf32>
    %71 = tpu.matmul %69, %70, %cst_30 {dimension_numbers = #tpu.dot_dimension_numbers<[1], [0], [0], [1], [0, 0, 1, 1], [], []>} : vector<8x8xf32>, vector<8x32xf32>, vector<8x32xf32> -> vector<8x32xf32>
    %72 = arith.addf %52, %71 : vector<8x32xf32>
    %73 = vector.extract_strided_slice %29 {offsets = [0, 16], sizes = [8, 8], strides = [1, 1]} : vector<8x32xf32> to vector<8x8xf32>
    %cst_31 = arith.constant 0.353553385 : f32
    %74 = vector.broadcast %cst_31 : f32 to vector<8x8xf32>
    %75 = arith.mulf %73, %74 : vector<8x8xf32>
    %76 = vector.extract_strided_slice %30 {offsets = [0, 16], sizes = [8, 8], strides = [1, 1]} : vector<8x32xf32> to vector<8x8xf32>
    %77 = vector.extract_strided_slice %31 {offsets = [0, 16], sizes = [8, 8], strides = [1, 1]} : vector<8x32xf32> to vector<8x8xf32>
    %cst_32 = arith.constant dense<0.000000e+00> : vector<8x8xf32>
    %78 = tpu.matmul %75, %76, %cst_32 {dimension_numbers = #tpu.dot_dimension_numbers<[1], [1], [0], [0], [0, 0, 1, 0], [], []>} : vector<8x8xf32>, vector<8x8xf32>, vector<8x8xf32> -> vector<8x8xf32>
    %cst_33 = arith.constant dense<0xFF800000> : vector<8xf32>
    %79 = vector.multi_reduction <maximumf>, %78, %cst_33 [1] : vector<8x8xf32> to vector<8xf32>
    %80 = vector.shape_cast %79 : vector<8xf32> to vector<8x1xf32>
    %81 = vector.broadcast %80 : vector<8x1xf32> to vector<8x8xf32>
    %82 = arith.subf %78, %81 : vector<8x8xf32>
    %83 = math.exp %82 : vector<8x8xf32>
    %cst_34 = arith.constant dense<0.000000e+00> : vector<8xf32>
    %84 = vector.multi_reduction <add>, %83, %cst_34 [1] : vector<8x8xf32> to vector<8xf32>
    %85 = vector.shape_cast %84 : vector<8xf32> to vector<8x1xf32>
    %86 = tpu.reciprocal %85 {approx = true} : vector<8x1xf32> -> vector<8x1xf32>
    %87 = vector.broadcast %86 : vector<8x1xf32> to vector<8x8xf32>
    %88 = arith.mulf %83, %87 : vector<8x8xf32>
    %cst_35 = arith.constant dense<0.000000e+00> : vector<8x8xf32>
    %89 = tpu.matmul %88, %77, %cst_35 {dimension_numbers = #tpu.dot_dimension_numbers<[1], [0], [0], [1], [0, 0, 1, 1], [], []>} : vector<8x8xf32>, vector<8x8xf32>, vector<8x8xf32> -> vector<8x8xf32>
    %90 = vector.extract_strided_slice %32 {offsets = [16, 0], sizes = [8, 32], strides = [1, 1]} : vector<32x32xf32> to vector<8x32xf32>
    %cst_36 = arith.constant dense<0.000000e+00> : vector<8x32xf32>
    %91 = tpu.matmul %89, %90, %cst_36 {dimension_numbers = #tpu.dot_dimension_numbers<[1], [0], [0], [1], [0, 0, 1, 1], [], []>} : vector<8x8xf32>, vector<8x32xf32>, vector<8x32xf32> -> vector<8x32xf32>
    %92 = arith.addf %72, %91 : vector<8x32xf32>
    %93 = vector.extract_strided_slice %29 {offsets = [0, 24], sizes = [8, 8], strides = [1, 1]} : vector<8x32xf32> to vector<8x8xf32>
    %cst_37 = arith.constant 0.353553385 : f32
    %94 = vector.broadcast %cst_37 : f32 to vector<8x8xf32>
    %95 = arith.mulf %93, %94 : vector<8x8xf32>
    %96 = vector.extract_strided_slice %30 {offsets = [0, 24], sizes = [8, 8], strides = [1, 1]} : vector<8x32xf32> to vector<8x8xf32>
    %97 = vector.extract_strided_slice %31 {offsets = [0, 24], sizes = [8, 8], strides = [1, 1]} : vector<8x32xf32> to vector<8x8xf32>
    %cst_38 = arith.constant dense<0.000000e+00> : vector<8x8xf32>
    %98 = tpu.matmul %95, %96, %cst_38 {dimension_numbers = #tpu.dot_dimension_numbers<[1], [1], [0], [0], [0, 0, 1, 0], [], []>} : vector<8x8xf32>, vector<8x8xf32>, vector<8x8xf32> -> vector<8x8xf32>
    %cst_39 = arith.constant dense<0xFF800000> : vector<8xf32>
    %99 = vector.multi_reduction <maximumf>, %98, %cst_39 [1] : vector<8x8xf32> to vector<8xf32>
    %100 = vector.shape_cast %99 : vector<8xf32> to vector<8x1xf32>
    %101 = vector.broadcast %100 : vector<8x1xf32> to vector<8x8xf32>
    %102 = arith.subf %98, %101 : vector<8x8xf32>
    %103 = math.exp %102 : vector<8x8xf32>
    %cst_40 = arith.constant dense<0.000000e+00> : vector<8xf32>
    %104 = vector.multi_reduction <add>, %103, %cst_40 [1] : vector<8x8xf32> to vector<8xf32>
    %105 = vector.shape_cast %104 : vector<8xf32> to vector<8x1xf32>
    %106 = tpu.reciprocal %105 {approx = true} : vector<8x1xf32> -> vector<8x1xf32>
    %107 = vector.broadcast %106 : vector<8x1xf32> to vector<8x8xf32>
    %108 = arith.mulf %103, %107 : vector<8x8xf32>
    %cst_41 = arith.constant dense<0.000000e+00> : vector<8x8xf32>
    %109 = tpu.matmul %108, %97, %cst_41 {dimension_numbers = #tpu.dot_dimension_numbers<[1], [0], [0], [1], [0, 0, 1, 1], [], []>} : vector<8x8xf32>, vector<8x8xf32>, vector<8x8xf32> -> vector<8x8xf32>
    %110 = vector.extract_strided_slice %32 {offsets = [24, 0], sizes = [8, 32], strides = [1, 1]} : vector<32x32xf32> to vector<8x32xf32>
    %cst_42 = arith.constant dense<0.000000e+00> : vector<8x32xf32>
    %111 = tpu.matmul %109, %110, %cst_42 {dimension_numbers = #tpu.dot_dimension_numbers<[1], [0], [0], [1], [0, 0, 1, 1], [], []>} : vector<8x8xf32>, vector<8x32xf32>, vector<8x32xf32> -> vector<8x32xf32>
    %112 = arith.addf %92, %111 : vector<8x32xf32>
    %113 = vector.broadcast %33 : vector<1x32xf32> to vector<8x32xf32>
    %114 = arith.addf %112, %113 : vector<8x32xf32>
    %115 = arith.addf %1, %114 : vector<8x32xf32>
    %c0_43 = arith.constant 0 : index
    %c0_44 = arith.constant 0 : index
    %116 = vector.load %arg4[%c0_43, %c0_44] : memref<1x32xf32, #tpu.memory_space<vmem>>, vector<1x32xf32>
    %c0_45 = arith.constant 0 : index
    %c0_46 = arith.constant 0 : index
    %117 = vector.load %arg5[%c0_45, %c0_46] : memref<1x32xf32, #tpu.memory_space<vmem>>, vector<1x32xf32>
    %cst_47 = arith.constant dense<0.000000e+00> : vector<8xf32>
    %118 = vector.multi_reduction <add>, %115, %cst_47 [1] : vector<8x32xf32> to vector<8xf32>
    %119 = vector.shape_cast %118 : vector<8xf32> to vector<8x1xf32>
    %cst_48 = arith.constant 3.200000e+01 : f32
    %120 = vector.broadcast %cst_48 : f32 to vector<8x1xf32>
    %121 = arith.divf %119, %120 : vector<8x1xf32>
    %122 = vector.broadcast %121 : vector<8x1xf32> to vector<8x32xf32>
    %123 = arith.subf %115, %122 : vector<8x32xf32>
    %124 = arith.mulf %123, %123 : vector<8x32xf32>
    %cst_49 = arith.constant dense<0.000000e+00> : vector<8xf32>
    %125 = vector.multi_reduction <add>, %124, %cst_49 [1] : vector<8x32xf32> to vector<8xf32>
    %126 = vector.shape_cast %125 : vector<8xf32> to vector<8x1xf32>
    %cst_50 = arith.constant 0.0322580636 : f32
    %127 = vector.broadcast %cst_50 : f32 to vector<8x1xf32>
    %128 = arith.mulf %126, %127 : vector<8x1xf32>
    %129 = math.sqrt %128 : vector<8x1xf32>
    %cst_51 = arith.constant 9.99999997E-7 : f32
    %130 = vector.broadcast %cst_51 : f32 to vector<8x1xf32>
    %131 = arith.addf %129, %130 : vector<8x1xf32>
    %132 = vector.broadcast %131 : vector<8x1xf32> to vector<8x32xf32>
    %133 = arith.divf %123, %132 : vector<8x32xf32>
    %134 = vector.broadcast %116 : vector<1x32xf32> to vector<8x32xf32>
    %135 = arith.mulf %134, %133 : vector<8x32xf32>
    %136 = vector.broadcast %117 : vector<1x32xf32> to vector<8x32xf32>
    %137 = arith.addf %135, %136 : vector<8x32xf32>
    %c0_52 = arith.constant 0 : index
    %c0_53 = arith.constant 0 : index
    %138 = vector.load %arg10[%c0_52, %c0_53] : memref<32x64xf32, #tpu.memory_space<vmem>>, vector<32x64xf32>
    %c0_54 = arith.constant 0 : index
    %c0_55 = arith.constant 0 : index
    %139 = vector.load %arg11[%c0_54, %c0_55] : memref<1x64xf32, #tpu.memory_space<vmem>>, vector<1x64xf32>
    %c0_56 = arith.constant 0 : index
    %c0_57 = arith.constant 0 : index
    %140 = vector.load %arg12[%c0_56, %c0_57] : memref<64x32xf32, #tpu.memory_space<vmem>>, vector<64x32xf32>
    %c0_58 = arith.constant 0 : index
    %c0_59 = arith.constant 0 : index
    %141 = vector.load %arg13[%c0_58, %c0_59] : memref<1x32xf32, #tpu.memory_space<vmem>>, vector<1x32xf32>
    %cst_60 = arith.constant dense<0.000000e+00> : vector<8x64xf32>
    %142 = tpu.matmul %137, %138, %cst_60 {dimension_numbers = #tpu.dot_dimension_numbers<[1], [0], [0], [1], [0, 0, 1, 1], [], []>} : vector<8x32xf32>, vector<32x64xf32>, vector<8x64xf32> -> vector<8x64xf32>
    %143 = vector.broadcast %139 : vector<1x64xf32> to vector<8x64xf32>
    %144 = arith.addf %142, %143 : vector<8x64xf32>
    %cst_61 = arith.constant 0.000000e+00 : f32
    %145 = vector.broadcast %cst_61 : f32 to vector<8x64xf32>
    %146 = arith.maximumf %144, %145 : vector<8x64xf32>
    %cst_62 = arith.constant dense<0.000000e+00> : vector<8x32xf32>
    %147 = tpu.matmul %146, %140, %cst_62 {dimension_numbers = #tpu.dot_dimension_numbers<[1], [0], [0], [1], [0, 0, 1, 1], [], []>} : vector<8x64xf32>, vector<64x32xf32>, vector<8x32xf32> -> vector<8x32xf32>
    %148 = vector.broadcast %141 : vector<1x32xf32> to vector<8x32xf32>
    %149 = arith.addf %147, %148 : vector<8x32xf32>
    %150 = arith.addf %149, %137 : vector<8x32xf32>
    %c0_63 = arith.constant 0 : index
    %c0_64 = arith.constant 0 : index
    %c0_65 = arith.constant 0 : index
    %151 = vector.load %arg14[%c0_63, %c0_64, %c0_65] : memref<1x8x32xf32, #tpu.memory_space<vmem>>, vector<1x8x32xf32>
    %152 = vector.shape_cast %151 : vector<1x8x32xf32> to vector<8x32xf32>
    %153 = vector.shape_cast %150 : vector<8x32xf32> to vector<1x8x32xf32>
    tpu.vector_store %arg14[%c0_63, %c0_64, %c0_65], %153 {strides = array<i32>} : memref<1x8x32xf32, #tpu.memory_space<vmem>>, vector<1x8x32xf32>,
    return
  }
  func.func @transform_0(%arg0: i32) -> (i32, i32, i32) {
    %c0_i32 = arith.constant 0 : i32
    %c0_i32_0 = arith.constant 0 : i32
    %c0_i32_1 = arith.constant 0 : i32
    return %arg0, %c0_i32, %c0_i32_0 : i32, i32, i32
  }
  func.func @transform_1(%arg0: i32) -> (i32, i32) {
    %c0_i32 = arith.constant 0 : i32
    %c0_i32_0 = arith.constant 0 : i32
    %c0_i32_1 = arith.constant 0 : i32
    return %c0_i32, %c0_i32_0 : i32, i32
  }
  func.func @transform_2(%arg0: i32) -> (i32, i32) {
    %c0_i32 = arith.constant 0 : i32
    %c0_i32_0 = arith.constant 0 : i32
    %c0_i32_1 = arith.constant 0 : i32
    return %c0_i32, %c0_i32_0 : i32, i32
  }
  func.func @transform_3(%arg0: i32) -> (i32, i32) {
    %c0_i32 = arith.constant 0 : i32
    %c0_i32_0 = arith.constant 0 : i32
    %c0_i32_1 = arith.constant 0 : i32
    return %c0_i32, %c0_i32_0 : i32, i32
  }
  func.func @transform_4(%arg0: i32) -> (i32, i32) {
    %c0_i32 = arith.constant 0 : i32
    %c0_i32_0 = arith.constant 0 : i32
    %c0_i32_1 = arith.constant 0 : i32
    return %c0_i32, %c0_i32_0 : i32, i32
  }
  func.func @transform_5(%arg0: i32) -> (i32, i32) {
    %c0_i32 = arith.constant 0 : i32
    %c0_i32_0 = arith.constant 0 : i32
    %c0_i32_1 = arith.constant 0 : i32
    return %c0_i32, %c0_i32_0 : i32, i32
  }
  func.func @transform_6(%arg0: i32) -> (i32, i32) {
    %c0_i32 = arith.constant 0 : i32
    %c0_i32_0 = arith.constant 0 : i32
    %c0_i32_1 = arith.constant 0 : i32
    return %c0_i32, %c0_i32_0 : i32, i32
  }
  func.func @transform_7(%arg0: i32) -> (i32, i32) {
    %c0_i32 = arith.constant 0 : i32
    %c0_i32_0 = arith.constant 0 : i32
    %c0_i32_1 = arith.constant 0 : i32
    return %c0_i32, %c0_i32_0 : i32, i32
  }
  func.func @transform_8(%arg0: i32) -> (i32, i32) {
    %c0_i32 = arith.constant 0 : i32
    %c0_i32_0 = arith.constant 0 : i32
    %c0_i32_1 = arith.constant 0 : i32
    return %c0_i32, %c0_i32_0 : i32, i32
  }
  func.func @transform_9(%arg0: i32) -> (i32, i32) {
    %c0_i32 = arith.constant 0 : i32
    %c0_i32_0 = arith.constant 0 : i32
    %c0_i32_1 = arith.constant 0 : i32
    return %c0_i32, %c0_i32_0 : i32, i32
  }
  func.func @transform_10(%arg0: i32) -> (i32, i32) {
    %c0_i32 = arith.constant 0 : i32
    %c0_i32_0 = arith.constant 0 : i32
    %c0_i32_1 = arith.constant 0 : i32
    return %c0_i32, %c0_i32_0 : i32, i32
  }
  func.func @transform_11(%arg0: i32) -> (i32, i32) {
    %c0_i32 = arith.constant 0 : i32
    %c0_i32_0 = arith.constant 0 : i32
    %c0_i32_1 = arith.constant 0 : i32
    return %c0_i32, %c0_i32_0 : i32, i32
  }
  func.func @transform_12(%arg0: i32) -> (i32, i32) {
    %c0_i32 = arith.constant 0 : i32
    %c0_i32_0 = arith.constant 0 : i32
    %c0_i32_1 = arith.constant 0 : i32
    return %c0_i32, %c0_i32_0 : i32, i32
  }
  func.func @transform_13(%arg0: i32) -> (i32, i32, i32) {
    %c0_i32 = arith.constant 0 : i32
    %c0_i32_0 = arith.constant 0 : i32
    %c0_i32_1 = arith.constant 0 : i32
    return %arg0, %c0_i32, %c0_i32_0 : i32, i32, i32
  }
}

module attributes {stable_mosaic.version = 11 : i64} {
  func.func @_norm_kernel(%arg0: i32, %arg1: memref<16x32xf32, #tpu.memory_space<vmem>>, %arg2: memref<1x32xf32, #tpu.memory_space<vmem>>, %arg3: memref<1x32xf32, #tpu.memory_space<vmem>>, %arg4: memref<16x32xf32, #tpu.memory_space<vmem>>) attributes {dimension_semantics = [#tpu.dimension_semantics<arbitrary>], iteration_bounds = array<i64: 1>, scalar_prefetch = 0 : i64, scratch_operands = 0 : i64, tpu.core_type = #tpu.core_type<tc>, window_params = [{pipeline_mode = #tpu.pipeline_mode<synchronous>, transform_indices = @transform_0, window_bounds = array<i64: 16, 32>}, {pipeline_mode = #tpu.pipeline_mode<synchronous>, transform_indices = @transform_1, window_bounds = array<i64: 1, 32>}, {pipeline_mode = #tpu.pipeline_mode<synchronous>, transform_indices = @transform_2, window_bounds = array<i64: 1, 32>}, {pipeline_mode = #tpu.pipeline_mode<synchronous>, transform_indices = @transform_3, window_bounds = array<i64: 16, 32>}]} {
    %c0 = arith.constant 0 : index
    %c0_0 = arith.constant 0 : index
    %0 = vector.load %arg1[%c0, %c0_0] : memref<16x32xf32, #tpu.memory_space<vmem>>, vector<16x32xf32>
    %c0_1 = arith.constant 0 : index
    %c0_2 = arith.constant 0 : index
    %1 = vector.load %arg2[%c0_1, %c0_2] : memref<1x32xf32, #tpu.memory_space<vmem>>, vector<1x32xf32>
    %c0_3 = arith.constant 0 : index
    %c0_4 = arith.constant 0 : index
    %2 = vector.load %arg3[%c0_3, %c0_4] : memref<1x32xf32, #tpu.memory_space<vmem>>, vector<1x32xf32>
    %cst = arith.constant dense<0.000000e+00> : vector<16xf32>
    %3 = vector.multi_reduction <add>, %0, %cst [1] : vector<16x32xf32> to vector<16xf32>
    %4 = vector.shape_cast %3 : vector<16xf32> to vector<16x1xf32>
    %cst_5 = arith.constant 3.200000e+01 : f32
    %5 = vector.broadcast %cst_5 : f32 to vector<16x1xf32>
    %6 = arith.divf %4, %5 : vector<16x1xf32>
    %7 = vector.broadcast %6 : vector<16x1xf32> to vector<16x32xf32>
    %8 = arith.subf %0, %7 : vector<16x32xf32>
    %9 = arith.mulf %8, %8 : vector<16x32xf32>
    %cst_6 = arith.constant dense<0.000000e+00> : vector<16xf32>
    %10 = vector.multi_reduction <add>, %9, %cst_6 [1] : vector<16x32xf32> to vector<16xf32>
    %11 = vector.shape_cast %10 : vector<16xf32> to vector<16x1xf32>
    %cst_7 = arith.constant 0.0322580636 : f32
    %12 = vector.broadcast %cst_7 : f32 to vector<16x1xf32>
    %13 = arith.mulf %11, %12 : vector<16x1xf32>
    %14 = math.sqrt %13 : vector<16x1xf32>
    %cst_8 = arith.constant 9.99999997E-7 : f32
    %15 = vector.broadcast %cst_8 : f32 to vector<16x1xf32>
    %16 = arith.addf %14, %15 : vector<16x1xf32>
    %17 = vector.broadcast %16 : vector<16x1xf32> to vector<16x32xf32>
    %18 = arith.divf %8, %17 : vector<16x32xf32>
    %19 = vector.broadcast %1 : vector<1x32xf32> to vector<16x32xf32>
    %20 = arith.mulf %19, %18 : vector<16x32xf32>
    %21 = vector.broadcast %2 : vector<1x32xf32> to vector<16x32xf32>
    %22 = arith.addf %20, %21 : vector<16x32xf32>
    %c0_9 = arith.constant 0 : index
    %c0_10 = arith.constant 0 : index
    %23 = vector.load %arg4[%c0_9, %c0_10] : memref<16x32xf32, #tpu.memory_space<vmem>>, vector<16x32xf32>
    tpu.vector_store %arg4[%c0_9, %c0_10], %22 {strides = array<i32>} : memref<16x32xf32, #tpu.memory_space<vmem>>, vector<16x32xf32>,
    return
  }
  func.func @transform_0(%arg0: i32) -> (i32, i32) {
    %c0_i32 = arith.constant 0 : i32
    %c0_i32_0 = arith.constant 0 : i32
    %c0_i32_1 = arith.constant 0 : i32
    return %c0_i32, %c0_i32_0 : i32, i32
  }
  func.func @transform_1(%arg0: i32) -> (i32, i32) {
    %c0_i32 = arith.constant 0 : i32
    %c0_i32_0 = arith.constant 0 : i32
    %c0_i32_1 = arith.constant 0 : i32
    return %c0_i32, %c0_i32_0 : i32, i32
  }
  func.func @transform_2(%arg0: i32) -> (i32, i32) {
    %c0_i32 = arith.constant 0 : i32
    %c0_i32_0 = arith.constant 0 : i32
    %c0_i32_1 = arith.constant 0 : i32
    return %c0_i32, %c0_i32_0 : i32, i32
  }
  func.func @transform_3(%arg0: i32) -> (i32, i32) {
    %c0_i32 = arith.constant 0 : i32
    %c0_i32_0 = arith.constant 0 : i32
    %c0_i32_1 = arith.constant 0 : i32
    return %c0_i32, %c0_i32_0 : i32, i32
  }
}

module attributes {stable_mosaic.version = 11 : i64} {
  func.func @_decoder_layer_kernel(%arg0: i32, %arg1: memref<1x8x32xf32, #tpu.memory_space<vmem>>, %arg2: memref<1x8x32xf32, #tpu.memory_space<vmem>>, %arg3: memref<1x32xf32, #tpu.memory_space<vmem>>, %arg4: memref<1x32xf32, #tpu.memory_space<vmem>>, %arg5: memref<1x32xf32, #tpu.memory_space<vmem>>, %arg6: memref<1x32xf32, #tpu.memory_space<vmem>>, %arg7: memref<1x32xf32, #tpu.memory_space<vmem>>, %arg8: memref<1x32xf32, #tpu.memory_space<vmem>>, %arg9: memref<32x96xf32, #tpu.memory_space<vmem>>, %arg10: memref<1x96xf32, #tpu.memory_space<vmem>>, %arg11: memref<32x32xf32, #tpu.memory_space<vmem>>, %arg12: memref<1x32xf32, #tpu.memory_space<vmem>>, %arg13: memref<32x32xf32, #tpu.memory_space<vmem>>, %arg14: memref<1x32xf32, #tpu.memory_space<vmem>>, %arg15: memref<32x64xf32, #tpu.memory_space<vmem>>, %arg16: memref<1x64xf32, #tpu.memory_space<vmem>>, %arg17: memref<32x32xf32, #tpu.memory_space<vmem>>, %arg18: memref<1x32xf32, #tpu.memory_space<vmem>>, %arg19: memref<32x64xf32, #tpu.memory_space<vmem>>, %arg20: memref<1x64xf32, #tpu.memory_space<vmem>>, %arg21: memref<64x32xf32, #tpu.memory_space<vmem>>, %arg22: memref<1x32xf32, #tpu.memory_space<vmem>>, %arg23: memref<1x8x32xf32, #tpu.memory_space<vmem>>) attributes {dimension_semantics = [#tpu.dimension_semantics<parallel>], iteration_bounds = array<i64: 2>, scalar_prefetch = 0 : i64, scratch_operands = 0 : i64, tpu.core_type = #tpu.core_type<tc>, window_params = [{transform_indices = @transform_0, window_bounds = array<i64: 1, 8, 32>}, {transform_indices = @transform_1, window_bounds = array<i64: 1, 8, 32>}, {pipeline_mode = #tpu.pipeline_mode<synchronous>, transform_indices = @transform_2, window_bounds = array<i64: 1, 32>}, {pipeline_mode = #tpu.pipeline_mode<synchronous>, transform_indices = @transform_3, window_bounds = array<i64: 1, 32>}, {pipeline_mode = #tpu.pipeline_mode<synchronous>, transform_indices = @transform_4, window_bounds = array<i64: 1, 32>}, {pipeline_mode = #tpu.pipeline_mode<synchronous>, transform_indices = @transform_5, window_bounds = array<i64: 1, 32>}, {pipeline_mode = #tpu.pipeline_mode<synchronous>, transform_indices = @transform_6, window_bounds = array<i64: 1, 32>}, {pipeline_mode = #tpu.pipeline_mode<synchronous>, transform_indices = @transform_7, window_bounds = array<i64: 1, 32>}, {pipeline_mode = #tpu.pipeline_mode<synchronous>, transform_indices = @transform_8, window_bounds = array<i64: 32, 96>}, {pipeline_mode = #tpu.pipeline_mode<synchronous>, transform_indices = @transform_9, window_bounds = array<i64: 1, 96>}, {pipeline_mode = #tpu.pipeline_mode<synchronous>, transform_indices = @transform_10, window_bounds = array<i64: 32, 32>}, {pipeline_mode = #tpu.pipeline_mode<synchronous>, transform_indices = @transform_11, window_bounds = array<i64: 1, 32>}, {pipeline_mode = #tpu.pipeline_mode<synchronous>, transform_indices = @transform_12, window_bounds = array<i64: 32, 32>}, {pipeline_mode = #tpu.pipeline_mode<synchronous>, transform_indices = @transform_13, window_bounds = array<i64: 1, 32>}, {pipeline_mode = #tpu.pipeline_mode<synchronous>, transform_indices = @transform_14, window_bounds = array<i64: 32, 64>}, {pipeline_mode = #tpu.pipeline_mode<synchronous>, transform_indices = @transform_15, window_bounds = array<i64: 1, 64>}, {pipeline_mode = #tpu.pipeline_mode<synchronous>, transform_indices = @transform_16, window_bounds = array<i64: 32, 32>}, {pipeline_mode = #tpu.pipeline_mode<synchronous>, transform_indices = @transform_17, window_bounds = array<i64: 1, 32>}, {pipeline_mode = #tpu.pipeline_mode<synchronous>, transform_indices = @transform_18, window_bounds = array<i64: 32, 64>}, {pipeline_mode = #tpu.pipeline_mode<synchronous>, transform_indices = @transform_19, window_bounds = array<i64: 1, 64>}, {pipeline_mode = #tpu.pipeline_mode<synchronous>, transform_indices = @transform_20, window_bounds = array<i64: 64, 32>}, {pipeline_mode = #tpu.pipeline_mode<synchronous>, transform_indices = @transform_21, window_bounds = array<i64: 1, 32>}, {transform_indices = @transform_22, window_bounds = array<i64: 1, 8, 32>}]} {
    %c0 = arith.constant 0 : index
    %c0_0 = arith.constant 0 : index
    %c0_1 = arith.constant 0 : index
    %0 = vector.load %arg1[%c0, %c0_0, %c0_1] : memref<1x8x32xf32, #tpu.memory_space<vmem>>, vector<1x8x32xf32>
    %1 = vector.shape_cast %0 : vector<1x8x32xf32> to vector<8x32xf32>
    %c0_2 = arith.constant 0 : index
    %c0_3 = arith.constant 0 : index
    %c0_4 = arith.constant 0 : index
    %2 = vector.load %arg2[%c0_2, %c0_3, %c0_4] : memref<1x8x32xf32, #tpu.memory_space<vmem>>, vector<1x8x32xf32>
    %3 = vector.shape_cast %2 : vector<1x8x32xf32> to vector<8x32xf32>
    %c0_5 = arith.constant 0 : index
    %c0_6 = arith.constant 0 : index
    %4 = vector.load %arg3[%c0_5, %c0_6] : memref<1x32xf32, #tpu.memory_space<vmem>>, vector<1x32xf32>
    %c0_7 = arith.constant 0 : index
    %c0_8 = arith.constant 0 : index
    %5 = vector.load %arg4[%c0_7, %c0_8] : memref<1x32xf32, #tpu.memory_space<vmem>>, vector<1x32xf32>
    %cst = arith.constant dense<0.000000e+00> : vector<8xf32>
    %6 = vector.multi_reduction <add>, %1, %cst [1] : vector<8x32xf32> to vector<8xf32>
    %7 = vector.shape_cast %6 : vector<8xf32> to vector<8x1xf32>
    %cst_9 = arith.constant 3.200000e+01 : f32
    %8 = vector.broadcast %cst_9 : f32 to vector<8x1xf32>
    %9 = arith.divf %7, %8 : vector<8x1xf32>
    %10 = vector.broadcast %9 : vector<8x1xf32> to vector<8x32xf32>
    %11 = arith.subf %1, %10 : vector<8x32xf32>
    %12 = arith.mulf %11, %11 : vector<8x32xf32>
    %cst_10 = arith.constant dense<0.000000e+00> : vector<8xf32>
    %13 = vector.multi_reduction <add>, %12, %cst_10 [1] : vector<8x32xf32> to vector<8xf32>
    %14 = vector.shape_cast %13 : vector<8xf32> to vector<8x1xf32>
    %cst_11 = arith.constant 0.0322580636 : f32
    %15 = vector.broadcast %cst_11 : f32 to vector<8x1xf32>
    %16 = arith.mulf %14, %15 : vector<8x1xf32>
    %17 = math.sqrt %16 : vector<8x1xf32>
    %cst_12 = arith.constant 9.99999997E-7 : f32
    %18 = vector.broadcast %cst_12 : f32 to vector<8x1xf32>
    %19 = arith.addf %17, %18 : vector<8x1xf32>
    %20 = vector.broadcast %19 : vector<8x1xf32> to vector<8x32xf32>
    %21 = arith.divf %11, %20 : vector<8x32xf32>
    %22 = vector.broadcast %4 : vector<1x32xf32> to vector<8x32xf32>
    %23 = arith.mulf %22, %21 : vector<8x32xf32>
    %24 = vector.broadcast %5 : vector<1x32xf32> to vector<8x32xf32>
    %25 = arith.addf %23, %24 : vector<8x32xf32>
    %c0_13 = arith.constant 0 : index
    %c0_14 = arith.constant 0 : index
    %26 = vector.load %arg9[%c0_13, %c0_14] : memref<32x96xf32, #tpu.memory_space<vmem>>, vector<32x96xf32>
    %cst_15 = arith.constant dense<0.000000e+00> : vector<8x96xf32>
    %27 = tpu.matmul %25, %26, %cst_15 {dimension_numbers = #tpu.dot_dimension_numbers<[1], [0], [0], [1], [0, 0, 1, 1], [], []>} : vector<8x32xf32>, vector<32x96xf32>, vector<8x96xf32> -> vector<8x96xf32>
    %c0_16 = arith.constant 0 : index
    %c0_17 = arith.constant 0 : index
    %28 = vector.load %arg10[%c0_16, %c0_17] : memref<1x96xf32, #tpu.memory_space<vmem>>, vector<1x96xf32>
    %29 = vector.broadcast %28 : vector<1x96xf32> to vector<8x96xf32>
    %30 = arith.addf %27, %29 : vector<8x96xf32>
    %31 = vector.extract_strided_slice %30 {offsets = [0, 0], sizes = [8, 32], strides = [1, 1]} : vector<8x96xf32> to vector<8x32xf32>
    %32 = vector.extract_strided_slice %30 {offsets = [0, 32], sizes = [8, 32], strides = [1, 1]} : vector<8x96xf32> to vector<8x32xf32>
    %33 = vector.extract_strided_slice %30 {offsets = [0, 64], sizes = [8, 32], strides = [1, 1]} : vector<8x96xf32> to vector<8x32xf32>
    %c0_18 = arith.constant 0 : index
    %c0_19 = arith.constant 0 : index
    %34 = vector.load %arg11[%c0_18, %c0_19] : memref<32x32xf32, #tpu.memory_space<vmem>>, vector<32x32xf32>
    %c0_20 = arith.constant 0 : index
    %c0_21 = arith.constant 0 : index
    %35 = vector.load %arg12[%c0_20, %c0_21] : memref<1x32xf32, #tpu.memory_space<vmem>>, vector<1x32xf32>
    %36 = vector.extract_strided_slice %31 {offsets = [0, 0], sizes = [8, 8], strides = [1, 1]} : vector<8x32xf32> to vector<8x8xf32>
    %cst_22 = arith.constant 0.353553385 : f32
    %37 = vector.broadcast %cst_22 : f32 to vector<8x8xf32>
    %38 = arith.mulf %36, %37 : vector<8x8xf32>
    %39 = vector.extract_strided_slice %32 {offsets = [0, 0], sizes = [8, 8], strides = [1, 1]} : vector<8x32xf32> to vector<8x8xf32>
    %40 = vector.extract_strided_slice %33 {offsets = [0, 0], sizes = [8, 8], strides = [1, 1]} : vector<8x32xf32> to vector<8x8xf32>
    %cst_23 = arith.constant dense<0.000000e+00> : vector<8x8xf32>
    %41 = tpu.matmul %38, %39, %cst_23 {dimension_numbers = #tpu.dot_dimension_numbers<[1], [1], [0], [0], [0, 0, 1, 0], [], []>} : vector<8x8xf32>, vector<8x8xf32>, vector<8x8xf32> -> vector<8x8xf32>
    %cst_24 = arith.constant dense<0xFF800000> : vector<8xf32>
    %42 = vector.multi_reduction <maximumf>, %41, %cst_24 [1] : vector<8x8xf32> to vector<8xf32>
    %43 = vector.shape_cast %42 : vector<8xf32> to vector<8x1xf32>
    %44 = vector.broadcast %43 : vector<8x1xf32> to vector<8x8xf32>
    %45 = arith.subf %41, %44 : vector<8x8xf32>
    %46 = math.exp %45 : vector<8x8xf32>
    %cst_25 = arith.constant dense<0.000000e+00> : vector<8xf32>
    %47 = vector.multi_reduction <add>, %46, %cst_25 [1] : vector<8x8xf32> to vector<8xf32>
    %48 = vector.shape_cast %47 : vector<8xf32> to vector<8x1xf32>
    %49 = tpu.reciprocal %48 {approx = true} : vector<8x1xf32> -> vector<8x1xf32>
    %50 = vector.broadcast %49 : vector<8x1xf32> to vector<8x8xf32>
    %51 = arith.mulf %46, %50 : vector<8x8xf32>
    %cst_26 = arith.constant dense<0.000000e+00> : vector<8x8xf32>
    %52 = tpu.matmul %51, %40, %cst_26 {dimension_numbers = #tpu.dot_dimension_numbers<[1], [0], [0], [1], [0, 0, 1, 1], [], []>} : vector<8x8xf32>, vector<8x8xf32>, vector<8x8xf32> -> vector<8x8xf32>
    %53 = vector.extract_strided_slice %34 {offsets = [0, 0], sizes = [8, 32], strides = [1, 1]} : vector<32x32xf32> to vector<8x32xf32>
    %cst_27 = arith.constant dense<0.000000e+00> : vector<8x32xf32>
    %54 = tpu.matmul %52, %53, %cst_27 {dimension_numbers = #tpu.dot_dimension_numbers<[1], [0], [0], [1], [0, 0, 1, 1], [], []>} : vector<8x8xf32>, vector<8x32xf32>, vector<8x32xf32> -> vector<8x32xf32>
    %55 = vector.extract_strided_slice %31 {offsets = [0, 8], sizes = [8, 8], strides = [1, 1]} : vector<8x32xf32> to vector<8x8xf32>
    %cst_28 = arith.constant 0.353553385 : f32
    %56 = vector.broadcast %cst_28 : f32 to vector<8x8xf32>
    %57 = arith.mulf %55, %56 : vector<8x8xf32>
    %58 = vector.extract_strided_slice %32 {offsets = [0, 8], sizes = [8, 8], strides = [1, 1]} : vector<8x32xf32> to vector<8x8xf32>
    %59 = vector.extract_strided_slice %33 {offsets = [0, 8], sizes = [8, 8], strides = [1, 1]} : vector<8x32xf32> to vector<8x8xf32>
    %cst_29 = arith.constant dense<0.000000e+00> : vector<8x8xf32>
    %60 = tpu.matmul %57, %58, %cst_29 {dimension_numbers = #tpu.dot_dimension_numbers<[1], [1], [0], [0], [0, 0, 1, 0], [], []>} : vector<8x8xf32>, vector<8x8xf32>, vector<8x8xf32> -> vector<8x8xf32>
    %cst_30 = arith.constant dense<0xFF800000> : vector<8xf32>
    %61 = vector.multi_reduction <maximumf>, %60, %cst_30 [1] : vector<8x8xf32> to vector<8xf32>
    %62 = vector.shape_cast %61 : vector<8xf32> to vector<8x1xf32>
    %63 = vector.broadcast %62 : vector<8x1xf32> to vector<8x8xf32>
    %64 = arith.subf %60, %63 : vector<8x8xf32>
    %65 = math.exp %64 : vector<8x8xf32>
    %cst_31 = arith.constant dense<0.000000e+00> : vector<8xf32>
    %66 = vector.multi_reduction <add>, %65, %cst_31 [1] : vector<8x8xf32> to vector<8xf32>
    %67 = vector.shape_cast %66 : vector<8xf32> to vector<8x1xf32>
    %68 = tpu.reciprocal %67 {approx = true} : vector<8x1xf32> -> vector<8x1xf32>
    %69 = vector.broadcast %68 : vector<8x1xf32> to vector<8x8xf32>
    %70 = arith.mulf %65, %69 : vector<8x8xf32>
    %cst_32 = arith.constant dense<0.000000e+00> : vector<8x8xf32>
    %71 = tpu.matmul %70, %59, %cst_32 {dimension_numbers = #tpu.dot_dimension_numbers<[1], [0], [0], [1], [0, 0, 1, 1], [], []>} : vector<8x8xf32>, vector<8x8xf32>, vector<8x8xf32> -> vector<8x8xf32>
    %72 = vector.extract_strided_slice %34 {offsets = [8, 0], sizes = [8, 32], strides = [1, 1]} : vector<32x32xf32> to vector<8x32xf32>
    %cst_33 = arith.constant dense<0.000000e+00> : vector<8x32xf32>
    %73 = tpu.matmul %71, %72, %cst_33 {dimension_numbers = #tpu.dot_dimension_numbers<[1], [0], [0], [1], [0, 0, 1, 1], [], []>} : vector<8x8xf32>, vector<8x32xf32>, vector<8x32xf32> -> vector<8x32xf32>
    %74 = arith.addf %54, %73 : vector<8x32xf32>
    %75 = vector.extract_strided_slice %31 {offsets = [0, 16], sizes = [8, 8], strides = [1, 1]} : vector<8x32xf32> to vector<8x8xf32>
    %cst_34 = arith.constant 0.353553385 : f32
    %76 = vector.broadcast %cst_34 : f32 to vector<8x8xf32>
    %77 = arith.mulf %75, %76 : vector<8x8xf32>
    %78 = vector.extract_strided_slice %32 {offsets = [0, 16], sizes = [8, 8], strides = [1, 1]} : vector<8x32xf32> to vector<8x8xf32>
    %79 = vector.extract_strided_slice %33 {offsets = [0, 16], sizes = [8, 8], strides = [1, 1]} : vector<8x32xf32> to vector<8x8xf32>
    %cst_35 = arith.constant dense<0.000000e+00> : vector<8x8xf32>
    %80 = tpu.matmul %77, %78, %cst_35 {dimension_numbers = #tpu.dot_dimension_numbers<[1], [1], [0], [0], [0, 0, 1, 0], [], []>} : vector<8x8xf32>, vector<8x8xf32>, vector<8x8xf32> -> vector<8x8xf32>
    %cst_36 = arith.constant dense<0xFF800000> : vector<8xf32>
    %81 = vector.multi_reduction <maximumf>, %80, %cst_36 [1] : vector<8x8xf32> to vector<8xf32>
    %82 = vector.shape_cast %81 : vector<8xf32> to vector<8x1xf32>
    %83 = vector.broadcast %82 : vector<8x1xf32> to vector<8x8xf32>
    %84 = arith.subf %80, %83 : vector<8x8xf32>
    %85 = math.exp %84 : vector<8x8xf32>
    %cst_37 = arith.constant dense<0.000000e+00> : vector<8xf32>
    %86 = vector.multi_reduction <add>, %85, %cst_37 [1] : vector<8x8xf32> to vector<8xf32>
    %87 = vector.shape_cast %86 : vector<8xf32> to vector<8x1xf32>
    %88 = tpu.reciprocal %87 {approx = true} : vector<8x1xf32> -> vector<8x1xf32>
    %89 = vector.broadcast %88 : vector<8x1xf32> to vector<8x8xf32>
    %90 = arith.mulf %85, %89 : vector<8x8xf32>
    %cst_38 = arith.constant dense<0.000000e+00> : vector<8x8xf32>
    %91 = tpu.matmul %90, %79, %cst_38 {dimension_numbers = #tpu.dot_dimension_numbers<[1], [0], [0], [1], [0, 0, 1, 1], [], []>} : vector<8x8xf32>, vector<8x8xf32>, vector<8x8xf32> -> vector<8x8xf32>
    %92 = vector.extract_strided_slice %34 {offsets = [16, 0], sizes = [8, 32], strides = [1, 1]} : vector<32x32xf32> to vector<8x32xf32>
    %cst_39 = arith.constant dense<0.000000e+00> : vector<8x32xf32>
    %93 = tpu.matmul %91, %92, %cst_39 {dimension_numbers = #tpu.dot_dimension_numbers<[1], [0], [0], [1], [0, 0, 1, 1], [], []>} : vector<8x8xf32>, vector<8x32xf32>, vector<8x32xf32> -> vector<8x32xf32>
    %94 = arith.addf %74, %93 : vector<8x32xf32>
    %95 = vector.extract_strided_slice %31 {offsets = [0, 24], sizes = [8, 8], strides = [1, 1]} : vector<8x32xf32> to vector<8x8xf32>
    %cst_40 = arith.constant 0.353553385 : f32
    %96 = vector.broadcast %cst_40 : f32 to vector<8x8xf32>
    %97 = arith.mulf %95, %96 : vector<8x8xf32>
    %98 = vector.extract_strided_slice %32 {offsets = [0, 24], sizes = [8, 8], strides = [1, 1]} : vector<8x32xf32> to vector<8x8xf32>
    %99 = vector.extract_strided_slice %33 {offsets = [0, 24], sizes = [8, 8], strides = [1, 1]} : vector<8x32xf32> to vector<8x8xf32>
    %cst_41 = arith.constant dense<0.000000e+00> : vector<8x8xf32>
    %100 = tpu.matmul %97, %98, %cst_41 {dimension_numbers = #tpu.dot_dimension_numbers<[1], [1], [0], [0], [0, 0, 1, 0], [], []>} : vector<8x8xf32>, vector<8x8xf32>, vector<8x8xf32> -> vector<8x8xf32>
    %cst_42 = arith.constant dense<0xFF800000> : vector<8xf32>
    %101 = vector.multi_reduction <maximumf>, %100, %cst_42 [1] : vector<8x8xf32> to vector<8xf32>
    %102 = vector.shape_cast %101 : vector<8xf32> to vector<8x1xf32>
    %103 = vector.broadcast %102 : vector<8x1xf32> to vector<8x8xf32>
    %104 = arith.subf %100, %103 : vector<8x8xf32>
    %105 = math.exp %104 : vector<8x8xf32>
    %cst_43 = arith.constant dense<0.000000e+00> : vector<8xf32>
    %106 = vector.multi_reduction <add>, %105, %cst_43 [1] : vector<8x8xf32> to vector<8xf32>
    %107 = vector.shape_cast %106 : vector<8xf32> to vector<8x1xf32>
    %108 = tpu.reciprocal %107 {approx = true} : vector<8x1xf32> -> vector<8x1xf32>
    %109 = vector.broadcast %108 : vector<8x1xf32> to vector<8x8xf32>
    %110 = arith.mulf %105, %109 : vector<8x8xf32>
    %cst_44 = arith.constant dense<0.000000e+00> : vector<8x8xf32>
    %111 = tpu.matmul %110, %99, %cst_44 {dimension_numbers = #tpu.dot_dimension_numbers<[1], [0], [0], [1], [0, 0, 1, 1], [], []>} : vector<8x8xf32>, vector<8x8xf32>, vector<8x8xf32> -> vector<8x8xf32>
    %112 = vector.extract_strided_slice %34 {offsets = [24, 0], sizes = [8, 32], strides = [1, 1]} : vector<32x32xf32> to vector<8x32xf32>
    %cst_45 = arith.constant dense<0.000000e+00> : vector<8x32xf32>
    %113 = tpu.matmul %111, %112, %cst_45 {dimension_numbers = #tpu.dot_dimension_numbers<[1], [0], [0], [1], [0, 0, 1, 1], [], []>} : vector<8x8xf32>, vector<8x32xf32>, vector<8x32xf32> -> vector<8x32xf32>
    %114 = arith.addf %94, %113 : vector<8x32xf32>
    %115 = vector.broadcast %35 : vector<1x32xf32> to vector<8x32xf32>
    %116 = arith.addf %114, %115 : vector<8x32xf32>
    %117 = arith.addf %116, %1 : vector<8x32xf32>
    %c0_46 = arith.constant 0 : index
    %c0_47 = arith.constant 0 : index
    %118 = vector.load %arg5[%c0_46, %c0_47] : memref<1x32xf32, #tpu.memory_space<vmem>>, vector<1x32xf32>
    %c0_48 = arith.constant 0 : index
    %c0_49 = arith.constant 0 : index
    %119 = vector.load %arg6[%c0_48, %c0_49] : memref<1x32xf32, #tpu.memory_space<vmem>>, vector<1x32xf32>
    %cst_50 = arith.constant dense<0.000000e+00> : vector<8xf32>
    %120 = vector.multi_reduction <add>, %117, %cst_50 [1] : vector<8x32xf32> to vector<8xf32>
    %121 = vector.shape_cast %120 : vector<8xf32> to vector<8x1xf32>
    %cst_51 = arith.constant 3.200000e+01 : f32
    %122 = vector.broadcast %cst_51 : f32 to vector<8x1xf32>
    %123 = arith.divf %121, %122 : vector<8x1xf32>
    %124 = vector.broadcast %123 : vector<8x1xf32> to vector<8x32xf32>
    %125 = arith.subf %117, %124 : vector<8x32xf32>
    %126 = arith.mulf %125, %125 : vector<8x32xf32>
    %cst_52 = arith.constant dense<0.000000e+00> : vector<8xf32>
    %127 = vector.multi_reduction <add>, %126, %cst_52 [1] : vector<8x32xf32> to vector<8xf32>
    %128 = vector.shape_cast %127 : vector<8xf32> to vector<8x1xf32>
    %cst_53 = arith.constant 0.0322580636 : f32
    %129 = vector.broadcast %cst_53 : f32 to vector<8x1xf32>
    %130 = arith.mulf %128, %129 : vector<8x1xf32>
    %131 = math.sqrt %130 : vector<8x1xf32>
    %cst_54 = arith.constant 9.99999997E-7 : f32
    %132 = vector.broadcast %cst_54 : f32 to vector<8x1xf32>
    %133 = arith.addf %131, %132 : vector<8x1xf32>
    %134 = vector.broadcast %133 : vector<8x1xf32> to vector<8x32xf32>
    %135 = arith.divf %125, %134 : vector<8x32xf32>
    %136 = vector.broadcast %118 : vector<1x32xf32> to vector<8x32xf32>
    %137 = arith.mulf %136, %135 : vector<8x32xf32>
    %138 = vector.broadcast %119 : vector<1x32xf32> to vector<8x32xf32>
    %139 = arith.addf %137, %138 : vector<8x32xf32>
    %c0_55 = arith.constant 0 : index
    %c0_56 = arith.constant 0 : index
    %140 = vector.load %arg13[%c0_55, %c0_56] : memref<32x32xf32, #tpu.memory_space<vmem>>, vector<32x32xf32>
    %cst_57 = arith.constant dense<0.000000e+00> : vector<8x32xf32>
    %141 = tpu.matmul %139, %140, %cst_57 {dimension_numbers = #tpu.dot_dimension_numbers<[1], [0], [0], [1], [0, 0, 1, 1], [], []>} : vector<8x32xf32>, vector<32x32xf32>, vector<8x32xf32> -> vector<8x32xf32>
    %c0_58 = arith.constant 0 : index
    %c0_59 = arith.constant 0 : index
    %142 = vector.load %arg14[%c0_58, %c0_59] : memref<1x32xf32, #tpu.memory_space<vmem>>, vector<1x32xf32>
    %143 = vector.broadcast %142 : vector<1x32xf32> to vector<8x32xf32>
    %144 = arith.addf %141, %143 : vector<8x32xf32>
    %c0_60 = arith.constant 0 : index
    %c0_61 = arith.constant 0 : index
    %145 = vector.load %arg15[%c0_60, %c0_61] : memref<32x64xf32, #tpu.memory_space<vmem>>, vector<32x64xf32>
    %cst_62 = arith.constant dense<0.000000e+00> : vector<8x64xf32>
    %146 = tpu.matmul %3, %145, %cst_62 {dimension_numbers = #tpu.dot_dimension_numbers<[1], [0], [0], [1], [0, 0, 1, 1], [], []>} : vector<8x32xf32>, vector<32x64xf32>, vector<8x64xf32> -> vector<8x64xf32>
    %c0_63 = arith.constant 0 : index
    %c0_64 = arith.constant 0 : index
    %147 = vector.load %arg16[%c0_63, %c0_64] : memref<1x64xf32, #tpu.memory_space<vmem>>, vector<1x64xf32>
    %148 = vector.broadcast %147 : vector<1x64xf32> to vector<8x64xf32>
    %149 = arith.addf %146, %148 : vector<8x64xf32>
    %150 = vector.extract_strided_slice %149 {offsets = [0, 0], sizes = [8, 32], strides = [1, 1]} : vector<8x64xf32> to vector<8x32xf32>
    %151 = vector.extract_strided_slice %149 {offsets = [0, 32], sizes = [8, 32], strides = [1, 1]} : vector<8x64xf32> to vector<8x32xf32>
    %c0_65 = arith.constant 0 : index
    %c0_66 = arith.constant 0 : index
    %152 = vector.load %arg17[%c0_65, %c0_66] : memref<32x32xf32, #tpu.memory_space<vmem>>, vector<32x32xf32>
    %c0_67 = arith.constant 0 : index
    %c0_68 = arith.constant 0 : index
    %153 = vector.load %arg18[%c0_67, %c0_68] : memref<1x32xf32, #tpu.memory_space<vmem>>, vector<1x32xf32>
    %154 = vector.extract_strided_slice %144 {offsets = [0, 0], sizes = [8, 8], strides = [1, 1]} : vector<8x32xf32> to vector<8x8xf32>
    %cst_69 = arith.constant 0.353553385 : f32
    %155 = vector.broadcast %cst_69 : f32 to vector<8x8xf32>
    %156 = arith.mulf %154, %155 : vector<8x8xf32>
    %157 = vector.extract_strided_slice %150 {offsets = [0, 0], sizes = [8, 8], strides = [1, 1]} : vector<8x32xf32> to vector<8x8xf32>
    %158 = vector.extract_strided_slice %151 {offsets = [0, 0], sizes = [8, 8], strides = [1, 1]} : vector<8x32xf32> to vector<8x8xf32>
    %cst_70 = arith.constant dense<0.000000e+00> : vector<8x8xf32>
    %159 = tpu.matmul %156, %157, %cst_70 {dimension_numbers = #tpu.dot_dimension_numbers<[1], [1], [0], [0], [0, 0, 1, 0], [], []>} : vector<8x8xf32>, vector<8x8xf32>, vector<8x8xf32> -> vector<8x8xf32>
    %cst_71 = arith.constant dense<0xFF800000> : vector<8xf32>
    %160 = vector.multi_reduction <maximumf>, %159, %cst_71 [1] : vector<8x8xf32> to vector<8xf32>
    %161 = vector.shape_cast %160 : vector<8xf32> to vector<8x1xf32>
    %162 = vector.broadcast %161 : vector<8x1xf32> to vector<8x8xf32>
    %163 = arith.subf %159, %162 : vector<8x8xf32>
    %164 = math.exp %163 : vector<8x8xf32>
    %cst_72 = arith.constant dense<0.000000e+00> : vector<8xf32>
    %165 = vector.multi_reduction <add>, %164, %cst_72 [1] : vector<8x8xf32> to vector<8xf32>
    %166 = vector.shape_cast %165 : vector<8xf32> to vector<8x1xf32>
    %167 = tpu.reciprocal %166 {approx = true} : vector<8x1xf32> -> vector<8x1xf32>
    %168 = vector.broadcast %167 : vector<8x1xf32> to vector<8x8xf32>
    %169 = arith.mulf %164, %168 : vector<8x8xf32>
    %cst_73 = arith.constant dense<0.000000e+00> : vector<8x8xf32>
    %170 = tpu.matmul %169, %158, %cst_73 {dimension_numbers = #tpu.dot_dimension_numbers<[1], [0], [0], [1], [0, 0, 1, 1], [], []>} : vector<8x8xf32>, vector<8x8xf32>, vector<8x8xf32> -> vector<8x8xf32>
    %171 = vector.extract_strided_slice %152 {offsets = [0, 0], sizes = [8, 32], strides = [1, 1]} : vector<32x32xf32> to vector<8x32xf32>
    %cst_74 = arith.constant dense<0.000000e+00> : vector<8x32xf32>
    %172 = tpu.matmul %170, %171, %cst_74 {dimension_numbers = #tpu.dot_dimension_numbers<[1], [0], [0], [1], [0, 0, 1, 1], [], []>} : vector<8x8xf32>, vector<8x32xf32>, vector<8x32xf32> -> vector<8x32xf32>
    %173 = vector.extract_strided_slice %144 {offsets = [0, 8], sizes = [8, 8], strides = [1, 1]} : vector<8x32xf32> to vector<8x8xf32>
    %cst_75 = arith.constant 0.353553385 : f32
    %174 = vector.broadcast %cst_75 : f32 to vector<8x8xf32>
    %175 = arith.mulf %173, %174 : vector<8x8xf32>
    %176 = vector.extract_strided_slice %150 {offsets = [0, 8], sizes = [8, 8], strides = [1, 1]} : vector<8x32xf32> to vector<8x8xf32>
    %177 = vector.extract_strided_slice %151 {offsets = [0, 8], sizes = [8, 8], strides = [1, 1]} : vector<8x32xf32> to vector<8x8xf32>
    %cst_76 = arith.constant dense<0.000000e+00> : vector<8x8xf32>
    %178 = tpu.matmul %175, %176, %cst_76 {dimension_numbers = #tpu.dot_dimension_numbers<[1], [1], [0], [0], [0, 0, 1, 0], [], []>} : vector<8x8xf32>, vector<8x8xf32>, vector<8x8xf32> -> vector<8x8xf32>
    %cst_77 = arith.constant dense<0xFF800000> : vector<8xf32>
    %179 = vector.multi_reduction <maximumf>, %178, %cst_77 [1] : vector<8x8xf32> to vector<8xf32>
    %180 = vector.shape_cast %179 : vector<8xf32> to vector<8x1xf32>
    %181 = vector.broadcast %180 : vector<8x1xf32> to vector<8x8xf32>
    %182 = arith.subf %178, %181 : vector<8x8xf32>
    %183 = math.exp %182 : vector<8x8xf32>
    %cst_78 = arith.constant dense<0.000000e+00> : vector<8xf32>
    %184 = vector.multi_reduction <add>, %183, %cst_78 [1] : vector<8x8xf32> to vector<8xf32>
    %185 = vector.shape_cast %184 : vector<8xf32> to vector<8x1xf32>
    %186 = tpu.reciprocal %185 {approx = true} : vector<8x1xf32> -> vector<8x1xf32>
    %187 = vector.broadcast %186 : vector<8x1xf32> to vector<8x8xf32>
    %188 = arith.mulf %183, %187 : vector<8x8xf32>
    %cst_79 = arith.constant dense<0.000000e+00> : vector<8x8xf32>
    %189 = tpu.matmul %188, %177, %cst_79 {dimension_numbers = #tpu.dot_dimension_numbers<[1], [0], [0], [1], [0, 0, 1, 1], [], []>} : vector<8x8xf32>, vector<8x8xf32>, vector<8x8xf32> -> vector<8x8xf32>
    %190 = vector.extract_strided_slice %152 {offsets = [8, 0], sizes = [8, 32], strides = [1, 1]} : vector<32x32xf32> to vector<8x32xf32>
    %cst_80 = arith.constant dense<0.000000e+00> : vector<8x32xf32>
    %191 = tpu.matmul %189, %190, %cst_80 {dimension_numbers = #tpu.dot_dimension_numbers<[1], [0], [0], [1], [0, 0, 1, 1], [], []>} : vector<8x8xf32>, vector<8x32xf32>, vector<8x32xf32> -> vector<8x32xf32>
    %192 = arith.addf %172, %191 : vector<8x32xf32>
    %193 = vector.extract_strided_slice %144 {offsets = [0, 16], sizes = [8, 8], strides = [1, 1]} : vector<8x32xf32> to vector<8x8xf32>
    %cst_81 = arith.constant 0.353553385 : f32
    %194 = vector.broadcast %cst_81 : f32 to vector<8x8xf32>
    %195 = arith.mulf %193, %194 : vector<8x8xf32>
    %196 = vector.extract_strided_slice %150 {offsets = [0, 16], sizes = [8, 8], strides = [1, 1]} : vector<8x32xf32> to vector<8x8xf32>
    %197 = vector.extract_strided_slice %151 {offsets = [0, 16], sizes = [8, 8], strides = [1, 1]} : vector<8x32xf32> to vector<8x8xf32>
    %cst_82 = arith.constant dense<0.000000e+00> : vector<8x8xf32>
    %198 = tpu.matmul %195, %196, %cst_82 {dimension_numbers = #tpu.dot_dimension_numbers<[1], [1], [0], [0], [0, 0, 1, 0], [], []>} : vector<8x8xf32>, vector<8x8xf32>, vector<8x8xf32> -> vector<8x8xf32>
    %cst_83 = arith.constant dense<0xFF800000> : vector<8xf32>
    %199 = vector.multi_reduction <maximumf>, %198, %cst_83 [1] : vector<8x8xf32> to vector<8xf32>
    %200 = vector.shape_cast %199 : vector<8xf32> to vector<8x1xf32>
    %201 = vector.broadcast %200 : vector<8x1xf32> to vector<8x8xf32>
    %202 = arith.subf %198, %201 : vector<8x8xf32>
    %203 = math.exp %202 : vector<8x8xf32>
    %cst_84 = arith.constant dense<0.000000e+00> : vector<8xf32>
    %204 = vector.multi_reduction <add>, %203, %cst_84 [1] : vector<8x8xf32> to vector<8xf32>
    %205 = vector.shape_cast %204 : vector<8xf32> to vector<8x1xf32>
    %206 = tpu.reciprocal %205 {approx = true} : vector<8x1xf32> -> vector<8x1xf32>
    %207 = vector.broadcast %206 : vector<8x1xf32> to vector<8x8xf32>
    %208 = arith.mulf %203, %207 : vector<8x8xf32>
    %cst_85 = arith.constant dense<0.000000e+00> : vector<8x8xf32>
    %209 = tpu.matmul %208, %197, %cst_85 {dimension_numbers = #tpu.dot_dimension_numbers<[1], [0], [0], [1], [0, 0, 1, 1], [], []>} : vector<8x8xf32>, vector<8x8xf32>, vector<8x8xf32> -> vector<8x8xf32>
    %210 = vector.extract_strided_slice %152 {offsets = [16, 0], sizes = [8, 32], strides = [1, 1]} : vector<32x32xf32> to vector<8x32xf32>
    %cst_86 = arith.constant dense<0.000000e+00> : vector<8x32xf32>
    %211 = tpu.matmul %209, %210, %cst_86 {dimension_numbers = #tpu.dot_dimension_numbers<[1], [0], [0], [1], [0, 0, 1, 1], [], []>} : vector<8x8xf32>, vector<8x32xf32>, vector<8x32xf32> -> vector<8x32xf32>
    %212 = arith.addf %192, %211 : vector<8x32xf32>
    %213 = vector.extract_strided_slice %144 {offsets = [0, 24], sizes = [8, 8], strides = [1, 1]} : vector<8x32xf32> to vector<8x8xf32>
    %cst_87 = arith.constant 0.353553385 : f32
    %214 = vector.broadcast %cst_87 : f32 to vector<8x8xf32>
    %215 = arith.mulf %213, %214 : vector<8x8xf32>
    %216 = vector.extract_strided_slice %150 {offsets = [0, 24], sizes = [8, 8], strides = [1, 1]} : vector<8x32xf32> to vector<8x8xf32>
    %217 = vector.extract_strided_slice %151 {offsets = [0, 24], sizes = [8, 8], strides = [1, 1]} : vector<8x32xf32> to vector<8x8xf32>
    %cst_88 = arith.constant dense<0.000000e+00> : vector<8x8xf32>
    %218 = tpu.matmul %215, %216, %cst_88 {dimension_numbers = #tpu.dot_dimension_numbers<[1], [1], [0], [0], [0, 0, 1, 0], [], []>} : vector<8x8xf32>, vector<8x8xf32>, vector<8x8xf32> -> vector<8x8xf32>
    %cst_89 = arith.constant dense<0xFF800000> : vector<8xf32>
    %219 = vector.multi_reduction <maximumf>, %218, %cst_89 [1] : vector<8x8xf32> to vector<8xf32>
    %220 = vector.shape_cast %219 : vector<8xf32> to vector<8x1xf32>
    %221 = vector.broadcast %220 : vector<8x1xf32> to vector<8x8xf32>
    %222 = arith.subf %218, %221 : vector<8x8xf32>
    %223 = math.exp %222 : vector<8x8xf32>
    %cst_90 = arith.constant dense<0.000000e+00> : vector<8xf32>
    %224 = vector.multi_reduction <add>, %223, %cst_90 [1] : vector<8x8xf32> to vector<8xf32>
    %225 = vector.shape_cast %224 : vector<8xf32> to vector<8x1xf32>
    %226 = tpu.reciprocal %225 {approx = true} : vector<8x1xf32> -> vector<8x1xf32>
    %227 = vector.broadcast %226 : vector<8x1xf32> to vector<8x8xf32>
    %228 = arith.mulf %223, %227 : vector<8x8xf32>
    %cst_91 = arith.constant dense<0.000000e+00> : vector<8x8xf32>
    %229 = tpu.matmul %228, %217, %cst_91 {dimension_numbers = #tpu.dot_dimension_numbers<[1], [0], [0], [1], [0, 0, 1, 1], [], []>} : vector<8x8xf32>, vector<8x8xf32>, vector<8x8xf32> -> vector<8x8xf32>
    %230 = vector.extract_strided_slice %152 {offsets = [24, 0], sizes = [8, 32], strides = [1, 1]} : vector<32x32xf32> to vector<8x32xf32>
    %cst_92 = arith.constant dense<0.000000e+00> : vector<8x32xf32>
    %231 = tpu.matmul %229, %230, %cst_92 {dimension_numbers = #tpu.dot_dimension_numbers<[1], [0], [0], [1], [0, 0, 1, 1], [], []>} : vector<8x8xf32>, vector<8x32xf32>, vector<8x32xf32> -> vector<8x32xf32>
    %232 = arith.addf %212, %231 : vector<8x32xf32>
    %233 = vector.broadcast %153 : vector<1x32xf32> to vector<8x32xf32>
    %234 = arith.addf %232, %233 : vector<8x32xf32>
    %235 = arith.addf %234, %139 : vector<8x32xf32>
    %c0_93 = arith.constant 0 : index
    %c0_94 = arith.constant 0 : index
    %236 = vector.load %arg7[%c0_93, %c0_94] : memref<1x32xf32, #tpu.memory_space<vmem>>, vector<1x32xf32>
    %c0_95 = arith.constant 0 : index
    %c0_96 = arith.constant 0 : index
    %237 = vector.load %arg8[%c0_95, %c0_96] : memref<1x32xf32, #tpu.memory_space<vmem>>, vector<1x32xf32>
    %cst_97 = arith.constant dense<0.000000e+00> : vector<8xf32>
    %238 = vector.multi_reduction <add>, %235, %cst_97 [1] : vector<8x32xf32> to vector<8xf32>
    %239 = vector.shape_cast %238 : vector<8xf32> to vector<8x1xf32>
    %cst_98 = arith.constant 3.200000e+01 : f32
    %240 = vector.broadcast %cst_98 : f32 to vector<8x1xf32>
    %241 = arith.divf %239, %240 : vector<8x1xf32>
    %242 = vector.broadcast %241 : vector<8x1xf32> to vector<8x32xf32>
    %243 = arith.subf %235, %242 : vector<8x32xf32>
    %244 = arith.mulf %243, %243 : vector<8x32xf32>
    %cst_99 = arith.constant dense<0.000000e+00> : vector<8xf32>
    %245 = vector.multi_reduction <add>, %244, %cst_99 [1] : vector<8x32xf32> to vector<8xf32>
    %246 = vector.shape_cast %245 : vector<8xf32> to vector<8x1xf32>
    %cst_100 = arith.constant 0.0322580636 : f32
    %247 = vector.broadcast %cst_100 : f32 to vector<8x1xf32>
    %248 = arith.mulf %246, %247 : vector<8x1xf32>
    %249 = math.sqrt %248 : vector<8x1xf32>
    %cst_101 = arith.constant 9.99999997E-7 : f32
    %250 = vector.broadcast %cst_101 : f32 to vector<8x1xf32>
    %251 = arith.addf %249, %250 : vector<8x1xf32>
    %252 = vector.broadcast %251 : vector<8x1xf32> to vector<8x32xf32>
    %253 = arith.divf %243, %252 : vector<8x32xf32>
    %254 = vector.broadcast %236 : vector<1x32xf32> to vector<8x32xf32>
    %255 = arith.mulf %254, %253 : vector<8x32xf32>
    %256 = vector.broadcast %237 : vector<1x32xf32> to vector<8x32xf32>
    %257 = arith.addf %255, %256 : vector<8x32xf32>
    %c0_102 = arith.constant 0 : index
    %c0_103 = arith.constant 0 : index
    %258 = vector.load %arg19[%c0_102, %c0_103] : memref<32x64xf32, #tpu.memory_space<vmem>>, vector<32x64xf32>
    %c0_104 = arith.constant 0 : index
    %c0_105 = arith.constant 0 : index
    %259 = vector.load %arg20[%c0_104, %c0_105] : memref<1x64xf32, #tpu.memory_space<vmem>>, vector<1x64xf32>
    %c0_106 = arith.constant 0 : index
    %c0_107 = arith.constant 0 : index
    %260 = vector.load %arg21[%c0_106, %c0_107] : memref<64x32xf32, #tpu.memory_space<vmem>>, vector<64x32xf32>
    %c0_108 = arith.constant 0 : index
    %c0_109 = arith.constant 0 : index
    %261 = vector.load %arg22[%c0_108, %c0_109] : memref<1x32xf32, #tpu.memory_space<vmem>>, vector<1x32xf32>
    %cst_110 = arith.constant dense<0.000000e+00> : vector<8x64xf32>
    %262 = tpu.matmul %257, %258, %cst_110 {dimension_numbers = #tpu.dot_dimension_numbers<[1], [0], [0], [1], [0, 0, 1, 1], [], []>} : vector<8x32xf32>, vector<32x64xf32>, vector<8x64xf32> -> vector<8x64xf32>
    %263 = vector.broadcast %259 : vector<1x64xf32> to vector<8x64xf32>
    %264 = arith.addf %262, %263 : vector<8x64xf32>
    %cst_111 = arith.constant 0.000000e+00 : f32
    %265 = vector.broadcast %cst_111 : f32 to vector<8x64xf32>
    %266 = arith.maximumf %264, %265 : vector<8x64xf32>
    %cst_112 = arith.constant dense<0.000000e+00> : vector<8x32xf32>
    %267 = tpu.matmul %266, %260, %cst_112 {dimension_numbers = #tpu.dot_dimension_numbers<[1], [0], [0], [1], [0, 0, 1, 1], [], []>} : vector<8x64xf32>, vector<64x32xf32>, vector<8x32xf32> -> vector<8x32xf32>
    %268 = vector.broadcast %261 : vector<1x32xf32> to vector<8x32xf32>
    %269 = arith.addf %267, %268 : vector<8x32xf32>
    %270 = arith.addf %269, %257 : vector<8x32xf32>
    %c0_113 = arith.constant 0 : index
    %c0_114 = arith.constant 0 : index
    %c0_115 = arith.constant 0 : index
    %271 = vector.load %arg23[%c0_113, %c0_114, %c0_115] : memref<1x8x32xf32, #tpu.memory_space<vmem>>, vector<1x8x32xf32>
    %272 = vector.shape_cast %271 : vector<1x8x32xf32> to vector<8x32xf32>
    %273 = vector.shape_cast %270 : vector<8x32xf32> to vector<1x8x32xf32>
    tpu.vector_store %arg23[%c0_113, %c0_114, %c0_115], %273 {strides = array<i32>} : memref<1x8x32xf32, #tpu.memory_space<vmem>>, vector<1x8x32xf32>,
    return
  }
  func.func @transform_0(%arg0: i32) -> (i32, i32, i32) {
    %c0_i32 = arith.constant 0 : i32
    %c0_i32_0 = arith.constant 0 : i32
    %c0_i32_1 = arith.constant 0 : i32
    return %arg0, %c0_i32, %c0_i32_0 : i32, i32, i32
  }
  func.func @transform_1(%arg0: i32) -> (i32, i32, i32) {
    %c0_i32 = arith.constant 0 : i32
    %c0_i32_0 = arith.constant 0 : i32
    %c0_i32_1 = arith.constant 0 : i32
    return %arg0, %c0_i32, %c0_i32_0 : i32, i32, i32
  }
  func.func @transform_2(%arg0: i32) -> (i32, i32) {
    %c0_i32 = arith.constant 0 : i32
    %c0_i32_0 = arith.constant 0 : i32
    %c0_i32_1 = arith.constant 0 : i32
    return %c0_i32, %c0_i32_0 : i32, i32
  }
  func.func @transform_3(%arg0: i32) -> (i32, i32) {
    %c0_i32 = arith.constant 0 : i32
    %c0_i32_0 = arith.constant 0 : i32
    %c0_i32_1 = arith.constant 0 : i32
    return %c0_i32, %c0_i32_0 : i32, i32
  }
  func.func @transform_4(%arg0: i32) -> (i32, i32) {
    %c0_i32 = arith.constant 0 : i32
    %c0_i32_0 = arith.constant 0 : i32
    %c0_i32_1 = arith.constant 0 : i32
    return %c0_i32, %c0_i32_0 : i32, i32
  }
  func.func @transform_5(%arg0: i32) -> (i32, i32) {
    %c0_i32 = arith.constant 0 : i32
    %c0_i32_0 = arith.constant 0 : i32
    %c0_i32_1 = arith.constant 0 : i32
    return %c0_i32, %c0_i32_0 : i32, i32
  }
  func.func @transform_6(%arg0: i32) -> (i32, i32) {
    %c0_i32 = arith.constant 0 : i32
    %c0_i32_0 = arith.constant 0 : i32
    %c0_i32_1 = arith.constant 0 : i32
    return %c0_i32, %c0_i32_0 : i32, i32
  }
  func.func @transform_7(%arg0: i32) -> (i32, i32) {
    %c0_i32 = arith.constant 0 : i32
    %c0_i32_0 = arith.constant 0 : i32
    %c0_i32_1 = arith.constant 0 : i32
    return %c0_i32, %c0_i32_0 : i32, i32
  }
  func.func @transform_8(%arg0: i32) -> (i32, i32) {
    %c0_i32 = arith.constant 0 : i32
    %c0_i32_0 = arith.constant 0 : i32
    %c0_i32_1 = arith.constant 0 : i32
    return %c0_i32, %c0_i32_0 : i32, i32
  }
  func.func @transform_9(%arg0: i32) -> (i32, i32) {
    %c0_i32 = arith.constant 0 : i32
    %c0_i32_0 = arith.constant 0 : i32
    %c0_i32_1 = arith.constant 0 : i32
    return %c0_i32, %c0_i32_0 : i32, i32
  }
  func.func @transform_10(%arg0: i32) -> (i32, i32) {
    %c0_i32 = arith.constant 0 : i32
    %c0_i32_0 = arith.constant 0 : i32
    %c0_i32_1 = arith.constant 0 : i32
    return %c0_i32, %c0_i32_0 : i32, i32
  }
  func.func @transform_11(%arg0: i32) -> (i32, i32) {
    %c0_i32 = arith.constant 0 : i32
    %c0_i32_0 = arith.constant 0 : i32
    %c0_i32_1 = arith.constant 0 : i32
    return %c0_i32, %c0_i32_0 : i32, i32
  }
  func.func @transform_12(%arg0: i32) -> (i32, i32) {
    %c0_i32 = arith.constant 0 : i32
    %c0_i32_0 = arith.constant 0 : i32
    %c0_i32_1 = arith.constant 0 : i32
    return %c0_i32, %c0_i32_0 : i32, i32
  }
  func.func @transform_13(%arg0: i32) -> (i32, i32) {
    %c0_i32 = arith.constant 0 : i32
    %c0_i32_0 = arith.constant 0 : i32
    %c0_i32_1 = arith.constant 0 : i32
    return %c0_i32, %c0_i32_0 : i32, i32
  }
  func.func @transform_14(%arg0: i32) -> (i32, i32) {
    %c0_i32 = arith.constant 0 : i32
    %c0_i32_0 = arith.constant 0 : i32
    %c0_i32_1 = arith.constant 0 : i32
    return %c0_i32, %c0_i32_0 : i32, i32
  }
  func.func @transform_15(%arg0: i32) -> (i32, i32) {
    %c0_i32 = arith.constant 0 : i32
    %c0_i32_0 = arith.constant 0 : i32
    %c0_i32_1 = arith.constant 0 : i32
    return %c0_i32, %c0_i32_0 : i32, i32
  }
  func.func @transform_16(%arg0: i32) -> (i32, i32) {
    %c0_i32 = arith.constant 0 : i32
    %c0_i32_0 = arith.constant 0 : i32
    %c0_i32_1 = arith.constant 0 : i32
    return %c0_i32, %c0_i32_0 : i32, i32
  }
  func.func @transform_17(%arg0: i32) -> (i32, i32) {
    %c0_i32 = arith.constant 0 : i32
    %c0_i32_0 = arith.constant 0 : i32
    %c0_i32_1 = arith.constant 0 : i32
    return %c0_i32, %c0_i32_0 : i32, i32
  }
  func.func @transform_18(%arg0: i32) -> (i32, i32) {
    %c0_i32 = arith.constant 0 : i32
    %c0_i32_0 = arith.constant 0 : i32
    %c0_i32_1 = arith.constant 0 : i32
    return %c0_i32, %c0_i32_0 : i32, i32
  }
  func.func @transform_19(%arg0: i32) -> (i32, i32) {
    %c0_i32 = arith.constant 0 : i32
    %c0_i32_0 = arith.constant 0 : i32
    %c0_i32_1 = arith.constant 0 : i32
    return %c0_i32, %c0_i32_0 : i32, i32
  }
  func.func @transform_20(%arg0: i32) -> (i32, i32) {
    %c0_i32 = arith.constant 0 : i32
    %c0_i32_0 = arith.constant 0 : i32
    %c0_i32_1 = arith.constant 0 : i32
    return %c0_i32, %c0_i32_0 : i32, i32
  }
  func.func @transform_21(%arg0: i32) -> (i32, i32) {
    %c0_i32 = arith.constant 0 : i32
    %c0_i32_0 = arith.constant 0 : i32
    %c0_i32_1 = arith.constant 0 : i32
    return %c0_i32, %c0_i32_0 : i32, i32
  }
  func.func @transform_22(%arg0: i32) -> (i32, i32, i32) {
    %c0_i32 = arith.constant 0 : i32
    %c0_i32_0 = arith.constant 0 : i32
    %c0_i32_1 = arith.constant 0 : i32
    return %arg0, %c0_i32, %c0_i32_0 : i32, i32, i32
  }
}

module attributes {stable_mosaic.version = 11 : i64} {
  func.func @_decoder_layer_kernel(%arg0: i32, %arg1: memref<1x8x32xf32, #tpu.memory_space<vmem>>, %arg2: memref<1x8x32xf32, #tpu.memory_space<vmem>>, %arg3: memref<1x32xf32, #tpu.memory_space<vmem>>, %arg4: memref<1x32xf32, #tpu.memory_space<vmem>>, %arg5: memref<1x32xf32, #tpu.memory_space<vmem>>, %arg6: memref<1x32xf32, #tpu.memory_space<vmem>>, %arg7: memref<1x32xf32, #tpu.memory_space<vmem>>, %arg8: memref<1x32xf32, #tpu.memory_space<vmem>>, %arg9: memref<32x96xf32, #tpu.memory_space<vmem>>, %arg10: memref<1x96xf32, #tpu.memory_space<vmem>>, %arg11: memref<32x32xf32, #tpu.memory_space<vmem>>, %arg12: memref<1x32xf32, #tpu.memory_space<vmem>>, %arg13: memref<32x32xf32, #tpu.memory_space<vmem>>, %arg14: memref<1x32xf32, #tpu.memory_space<vmem>>, %arg15: memref<32x64xf32, #tpu.memory_space<vmem>>, %arg16: memref<1x64xf32, #tpu.memory_space<vmem>>, %arg17: memref<32x32xf32, #tpu.memory_space<vmem>>, %arg18: memref<1x32xf32, #tpu.memory_space<vmem>>, %arg19: memref<32x64xf32, #tpu.memory_space<vmem>>, %arg20: memref<1x64xf32, #tpu.memory_space<vmem>>, %arg21: memref<64x32xf32, #tpu.memory_space<vmem>>, %arg22: memref<1x32xf32, #tpu.memory_space<vmem>>, %arg23: memref<1x8x32xf32, #tpu.memory_space<vmem>>) attributes {dimension_semantics = [#tpu.dimension_semantics<parallel>], iteration_bounds = array<i64: 2>, scalar_prefetch = 0 : i64, scratch_operands = 0 : i64, tpu.core_type = #tpu.core_type<tc>, window_params = [{transform_indices = @transform_0, window_bounds = array<i64: 1, 8, 32>}, {transform_indices = @transform_1, window_bounds = array<i64: 1, 8, 32>}, {pipeline_mode = #tpu.pipeline_mode<synchronous>, transform_indices = @transform_2, window_bounds = array<i64: 1, 32>}, {pipeline_mode = #tpu.pipeline_mode<synchronous>, transform_indices = @transform_3, window_bounds = array<i64: 1, 32>}, {pipeline_mode = #tpu.pipeline_mode<synchronous>, transform_indices = @transform_4, window_bounds = array<i64: 1, 32>}, {pipeline_mode = #tpu.pipeline_mode<synchronous>, transform_indices = @transform_5, window_bounds = array<i64: 1, 32>}, {pipeline_mode = #tpu.pipeline_mode<synchronous>, transform_indices = @transform_6, window_bounds = array<i64: 1, 32>}, {pipeline_mode = #tpu.pipeline_mode<synchronous>, transform_indices = @transform_7, window_bounds = array<i64: 1, 32>}, {pipeline_mode = #tpu.pipeline_mode<synchronous>, transform_indices = @transform_8, window_bounds = array<i64: 32, 96>}, {pipeline_mode = #tpu.pipeline_mode<synchronous>, transform_indices = @transform_9, window_bounds = array<i64: 1, 96>}, {pipeline_mode = #tpu.pipeline_mode<synchronous>, transform_indices = @transform_10, window_bounds = array<i64: 32, 32>}, {pipeline_mode = #tpu.pipeline_mode<synchronous>, transform_indices = @transform_11, window_bounds = array<i64: 1, 32>}, {pipeline_mode = #tpu.pipeline_mode<synchronous>, transform_indices = @transform_12, window_bounds = array<i64: 32, 32>}, {pipeline_mode = #tpu.pipeline_mode<synchronous>, transform_indices = @transform_13, window_bounds = array<i64: 1, 32>}, {pipeline_mode = #tpu.pipeline_mode<synchronous>, transform_indices = @transform_14, window_bounds = array<i64: 32, 64>}, {pipeline_mode = #tpu.pipeline_mode<synchronous>, transform_indices = @transform_15, window_bounds = array<i64: 1, 64>}, {pipeline_mode = #tpu.pipeline_mode<synchronous>, transform_indices = @transform_16, window_bounds = array<i64: 32, 32>}, {pipeline_mode = #tpu.pipeline_mode<synchronous>, transform_indices = @transform_17, window_bounds = array<i64: 1, 32>}, {pipeline_mode = #tpu.pipeline_mode<synchronous>, transform_indices = @transform_18, window_bounds = array<i64: 32, 64>}, {pipeline_mode = #tpu.pipeline_mode<synchronous>, transform_indices = @transform_19, window_bounds = array<i64: 1, 64>}, {pipeline_mode = #tpu.pipeline_mode<synchronous>, transform_indices = @transform_20, window_bounds = array<i64: 64, 32>}, {pipeline_mode = #tpu.pipeline_mode<synchronous>, transform_indices = @transform_21, window_bounds = array<i64: 1, 32>}, {transform_indices = @transform_22, window_bounds = array<i64: 1, 8, 32>}]} {
    %c0 = arith.constant 0 : index
    %c0_0 = arith.constant 0 : index
    %c0_1 = arith.constant 0 : index
    %0 = vector.load %arg1[%c0, %c0_0, %c0_1] : memref<1x8x32xf32, #tpu.memory_space<vmem>>, vector<1x8x32xf32>
    %1 = vector.shape_cast %0 : vector<1x8x32xf32> to vector<8x32xf32>
    %c0_2 = arith.constant 0 : index
    %c0_3 = arith.constant 0 : index
    %c0_4 = arith.constant 0 : index
    %2 = vector.load %arg2[%c0_2, %c0_3, %c0_4] : memref<1x8x32xf32, #tpu.memory_space<vmem>>, vector<1x8x32xf32>
    %3 = vector.shape_cast %2 : vector<1x8x32xf32> to vector<8x32xf32>
    %c0_5 = arith.constant 0 : index
    %c0_6 = arith.constant 0 : index
    %4 = vector.load %arg3[%c0_5, %c0_6] : memref<1x32xf32, #tpu.memory_space<vmem>>, vector<1x32xf32>
    %c0_7 = arith.constant 0 : index
    %c0_8 = arith.constant 0 : index
    %5 = vector.load %arg4[%c0_7, %c0_8] : memref<1x32xf32, #tpu.memory_space<vmem>>, vector<1x32xf32>
    %cst = arith.constant dense<0.000000e+00> : vector<8xf32>
    %6 = vector.multi_reduction <add>, %1, %cst [1] : vector<8x32xf32> to vector<8xf32>
    %7 = vector.shape_cast %6 : vector<8xf32> to vector<8x1xf32>
    %cst_9 = arith.constant 3.200000e+01 : f32
    %8 = vector.broadcast %cst_9 : f32 to vector<8x1xf32>
    %9 = arith.divf %7, %8 : vector<8x1xf32>
    %10 = vector.broadcast %9 : vector<8x1xf32> to vector<8x32xf32>
    %11 = arith.subf %1, %10 : vector<8x32xf32>
    %12 = arith.mulf %11, %11 : vector<8x32xf32>
    %cst_10 = arith.constant dense<0.000000e+00> : vector<8xf32>
    %13 = vector.multi_reduction <add>, %12, %cst_10 [1] : vector<8x32xf32> to vector<8xf32>
    %14 = vector.shape_cast %13 : vector<8xf32> to vector<8x1xf32>
    %cst_11 = arith.constant 0.0322580636 : f32
    %15 = vector.broadcast %cst_11 : f32 to vector<8x1xf32>
    %16 = arith.mulf %14, %15 : vector<8x1xf32>
    %17 = math.sqrt %16 : vector<8x1xf32>
    %cst_12 = arith.constant 9.99999997E-7 : f32
    %18 = vector.broadcast %cst_12 : f32 to vector<8x1xf32>
    %19 = arith.addf %17, %18 : vector<8x1xf32>
    %20 = vector.broadcast %19 : vector<8x1xf32> to vector<8x32xf32>
    %21 = arith.divf %11, %20 : vector<8x32xf32>
    %22 = vector.broadcast %4 : vector<1x32xf32> to vector<8x32xf32>
    %23 = arith.mulf %22, %21 : vector<8x32xf32>
    %24 = vector.broadcast %5 : vector<1x32xf32> to vector<8x32xf32>
    %25 = arith.addf %23, %24 : vector<8x32xf32>
    %c0_13 = arith.constant 0 : index
    %c0_14 = arith.constant 0 : index
    %26 = vector.load %arg9[%c0_13, %c0_14] : memref<32x96xf32, #tpu.memory_space<vmem>>, vector<32x96xf32>
    %cst_15 = arith.constant dense<0.000000e+00> : vector<8x96xf32>
    %27 = tpu.matmul %25, %26, %cst_15 {dimension_numbers = #tpu.dot_dimension_numbers<[1], [0], [0], [1], [0, 0, 1, 1], [], []>} : vector<8x32xf32>, vector<32x96xf32>, vector<8x96xf32> -> vector<8x96xf32>
    %c0_16 = arith.constant 0 : index
    %c0_17 = arith.constant 0 : index
    %28 = vector.load %arg10[%c0_16, %c0_17] : memref<1x96xf32, #tpu.memory_space<vmem>>, vector<1x96xf32>
    %29 = vector.broadcast %28 : vector<1x96xf32> to vector<8x96xf32>
    %30 = arith.addf %27, %29 : vector<8x96xf32>
    %31 = vector.extract_strided_slice %30 {offsets = [0, 0], sizes = [8, 32], strides = [1, 1]} : vector<8x96xf32> to vector<8x32xf32>
    %32 = vector.extract_strided_slice %30 {offsets = [0, 32], sizes = [8, 32], strides = [1, 1]} : vector<8x96xf32> to vector<8x32xf32>
    %33 = vector.extract_strided_slice %30 {offsets = [0, 64], sizes = [8, 32], strides = [1, 1]} : vector<8x96xf32> to vector<8x32xf32>
    %c0_18 = arith.constant 0 : index
    %c0_19 = arith.constant 0 : index
    %34 = vector.load %arg11[%c0_18, %c0_19] : memref<32x32xf32, #tpu.memory_space<vmem>>, vector<32x32xf32>
    %c0_20 = arith.constant 0 : index
    %c0_21 = arith.constant 0 : index
    %35 = vector.load %arg12[%c0_20, %c0_21] : memref<1x32xf32, #tpu.memory_space<vmem>>, vector<1x32xf32>
    %36 = vector.extract_strided_slice %31 {offsets = [0, 0], sizes = [8, 8], strides = [1, 1]} : vector<8x32xf32> to vector<8x8xf32>
    %cst_22 = arith.constant 0.353553385 : f32
    %37 = vector.broadcast %cst_22 : f32 to vector<8x8xf32>
    %38 = arith.mulf %36, %37 : vector<8x8xf32>
    %39 = vector.extract_strided_slice %32 {offsets = [0, 0], sizes = [8, 8], strides = [1, 1]} : vector<8x32xf32> to vector<8x8xf32>
    %40 = vector.extract_strided_slice %33 {offsets = [0, 0], sizes = [8, 8], strides = [1, 1]} : vector<8x32xf32> to vector<8x8xf32>
    %cst_23 = arith.constant dense<0.000000e+00> : vector<8x8xf32>
    %41 = tpu.matmul %38, %39, %cst_23 {dimension_numbers = #tpu.dot_dimension_numbers<[1], [1], [0], [0], [0, 0, 1, 0], [], []>} : vector<8x8xf32>, vector<8x8xf32>, vector<8x8xf32> -> vector<8x8xf32>
    %cst_24 = arith.constant dense<0xFF800000> : vector<8xf32>
    %42 = vector.multi_reduction <maximumf>, %41, %cst_24 [1] : vector<8x8xf32> to vector<8xf32>
    %43 = vector.shape_cast %42 : vector<8xf32> to vector<8x1xf32>
    %44 = vector.broadcast %43 : vector<8x1xf32> to vector<8x8xf32>
    %45 = arith.subf %41, %44 : vector<8x8xf32>
    %46 = math.exp %45 : vector<8x8xf32>
    %cst_25 = arith.constant dense<0.000000e+00> : vector<8xf32>
    %47 = vector.multi_reduction <add>, %46, %cst_25 [1] : vector<8x8xf32> to vector<8xf32>
    %48 = vector.shape_cast %47 : vector<8xf32> to vector<8x1xf32>
    %49 = tpu.reciprocal %48 {approx = true} : vector<8x1xf32> -> vector<8x1xf32>
    %50 = vector.broadcast %49 : vector<8x1xf32> to vector<8x8xf32>
    %51 = arith.mulf %46, %50 : vector<8x8xf32>
    %cst_26 = arith.constant dense<0.000000e+00> : vector<8x8xf32>
    %52 = tpu.matmul %51, %40, %cst_26 {dimension_numbers = #tpu.dot_dimension_numbers<[1], [0], [0], [1], [0, 0, 1, 1], [], []>} : vector<8x8xf32>, vector<8x8xf32>, vector<8x8xf32> -> vector<8x8xf32>
    %53 = vector.extract_strided_slice %34 {offsets = [0, 0], sizes = [8, 32], strides = [1, 1]} : vector<32x32xf32> to vector<8x32xf32>
    %cst_27 = arith.constant dense<0.000000e+00> : vector<8x32xf32>
    %54 = tpu.matmul %52, %53, %cst_27 {dimension_numbers = #tpu.dot_dimension_numbers<[1], [0], [0], [1], [0, 0, 1, 1], [], []>} : vector<8x8xf32>, vector<8x32xf32>, vector<8x32xf32> -> vector<8x32xf32>
    %55 = vector.extract_strided_slice %31 {offsets = [0, 8], sizes = [8, 8], strides = [1, 1]} : vector<8x32xf32> to vector<8x8xf32>
    %cst_28 = arith.constant 0.353553385 : f32
    %56 = vector.broadcast %cst_28 : f32 to vector<8x8xf32>
    %57 = arith.mulf %55, %56 : vector<8x8xf32>
    %58 = vector.extract_strided_slice %32 {offsets = [0, 8], sizes = [8, 8], strides = [1, 1]} : vector<8x32xf32> to vector<8x8xf32>
    %59 = vector.extract_strided_slice %33 {offsets = [0, 8], sizes = [8, 8], strides = [1, 1]} : vector<8x32xf32> to vector<8x8xf32>
    %cst_29 = arith.constant dense<0.000000e+00> : vector<8x8xf32>
    %60 = tpu.matmul %57, %58, %cst_29 {dimension_numbers = #tpu.dot_dimension_numbers<[1], [1], [0], [0], [0, 0, 1, 0], [], []>} : vector<8x8xf32>, vector<8x8xf32>, vector<8x8xf32> -> vector<8x8xf32>
    %cst_30 = arith.constant dense<0xFF800000> : vector<8xf32>
    %61 = vector.multi_reduction <maximumf>, %60, %cst_30 [1] : vector<8x8xf32> to vector<8xf32>
    %62 = vector.shape_cast %61 : vector<8xf32> to vector<8x1xf32>
    %63 = vector.broadcast %62 : vector<8x1xf32> to vector<8x8xf32>
    %64 = arith.subf %60, %63 : vector<8x8xf32>
    %65 = math.exp %64 : vector<8x8xf32>
    %cst_31 = arith.constant dense<0.000000e+00> : vector<8xf32>
    %66 = vector.multi_reduction <add>, %65, %cst_31 [1] : vector<8x8xf32> to vector<8xf32>
    %67 = vector.shape_cast %66 : vector<8xf32> to vector<8x1xf32>
    %68 = tpu.reciprocal %67 {approx = true} : vector<8x1xf32> -> vector<8x1xf32>
    %69 = vector.broadcast %68 : vector<8x1xf32> to vector<8x8xf32>
    %70 = arith.mulf %65, %69 : vector<8x8xf32>
    %cst_32 = arith.constant dense<0.000000e+00> : vector<8x8xf32>
    %71 = tpu.matmul %70, %59, %cst_32 {dimension_numbers = #tpu.dot_dimension_numbers<[1], [0], [0], [1], [0, 0, 1, 1], [], []>} : vector<8x8xf32>, vector<8x8xf32>, vector<8x8xf32> -> vector<8x8xf32>
    %72 = vector.extract_strided_slice %34 {offsets = [8, 0], sizes = [8, 32], strides = [1, 1]} : vector<32x32xf32> to vector<8x32xf32>
    %cst_33 = arith.constant dense<0.000000e+00> : vector<8x32xf32>
    %73 = tpu.matmul %71, %72, %cst_33 {dimension_numbers = #tpu.dot_dimension_numbers<[1], [0], [0], [1], [0, 0, 1, 1], [], []>} : vector<8x8xf32>, vector<8x32xf32>, vector<8x32xf32> -> vector<8x32xf32>
    %74 = arith.addf %54, %73 : vector<8x32xf32>
    %75 = vector.extract_strided_slice %31 {offsets = [0, 16], sizes = [8, 8], strides = [1, 1]} : vector<8x32xf32> to vector<8x8xf32>
    %cst_34 = arith.constant 0.353553385 : f32
    %76 = vector.broadcast %cst_34 : f32 to vector<8x8xf32>
    %77 = arith.mulf %75, %76 : vector<8x8xf32>
    %78 = vector.extract_strided_slice %32 {offsets = [0, 16], sizes = [8, 8], strides = [1, 1]} : vector<8x32xf32> to vector<8x8xf32>
    %79 = vector.extract_strided_slice %33 {offsets = [0, 16], sizes = [8, 8], strides = [1, 1]} : vector<8x32xf32> to vector<8x8xf32>
    %cst_35 = arith.constant dense<0.000000e+00> : vector<8x8xf32>
    %80 = tpu.matmul %77, %78, %cst_35 {dimension_numbers = #tpu.dot_dimension_numbers<[1], [1], [0], [0], [0, 0, 1, 0], [], []>} : vector<8x8xf32>, vector<8x8xf32>, vector<8x8xf32> -> vector<8x8xf32>
    %cst_36 = arith.constant dense<0xFF800000> : vector<8xf32>
    %81 = vector.multi_reduction <maximumf>, %80, %cst_36 [1] : vector<8x8xf32> to vector<8xf32>
    %82 = vector.shape_cast %81 : vector<8xf32> to vector<8x1xf32>
    %83 = vector.broadcast %82 : vector<8x1xf32> to vector<8x8xf32>
    %84 = arith.subf %80, %83 : vector<8x8xf32>
    %85 = math.exp %84 : vector<8x8xf32>
    %cst_37 = arith.constant dense<0.000000e+00> : vector<8xf32>
    %86 = vector.multi_reduction <add>, %85, %cst_37 [1] : vector<8x8xf32> to vector<8xf32>
    %87 = vector.shape_cast %86 : vector<8xf32> to vector<8x1xf32>
    %88 = tpu.reciprocal %87 {approx = true} : vector<8x1xf32> -> vector<8x1xf32>
    %89 = vector.broadcast %88 : vector<8x1xf32> to vector<8x8xf32>
    %90 = arith.mulf %85, %89 : vector<8x8xf32>
    %cst_38 = arith.constant dense<0.000000e+00> : vector<8x8xf32>
    %91 = tpu.matmul %90, %79, %cst_38 {dimension_numbers = #tpu.dot_dimension_numbers<[1], [0], [0], [1], [0, 0, 1, 1], [], []>} : vector<8x8xf32>, vector<8x8xf32>, vector<8x8xf32> -> vector<8x8xf32>
    %92 = vector.extract_strided_slice %34 {offsets = [16, 0], sizes = [8, 32], strides = [1, 1]} : vector<32x32xf32> to vector<8x32xf32>
    %cst_39 = arith.constant dense<0.000000e+00> : vector<8x32xf32>
    %93 = tpu.matmul %91, %92, %cst_39 {dimension_numbers = #tpu.dot_dimension_numbers<[1], [0], [0], [1], [0, 0, 1, 1], [], []>} : vector<8x8xf32>, vector<8x32xf32>, vector<8x32xf32> -> vector<8x32xf32>
    %94 = arith.addf %74, %93 : vector<8x32xf32>
    %95 = vector.extract_strided_slice %31 {offsets = [0, 24], sizes = [8, 8], strides = [1, 1]} : vector<8x32xf32> to vector<8x8xf32>
    %cst_40 = arith.constant 0.353553385 : f32
    %96 = vector.broadcast %cst_40 : f32 to vector<8x8xf32>
    %97 = arith.mulf %95, %96 : vector<8x8xf32>
    %98 = vector.extract_strided_slice %32 {offsets = [0, 24], sizes = [8, 8], strides = [1, 1]} : vector<8x32xf32> to vector<8x8xf32>
    %99 = vector.extract_strided_slice %33 {offsets = [0, 24], sizes = [8, 8], strides = [1, 1]} : vector<8x32xf32> to vector<8x8xf32>
    %cst_41 = arith.constant dense<0.000000e+00> : vector<8x8xf32>
    %100 = tpu.matmul %97, %98, %cst_41 {dimension_numbers = #tpu.dot_dimension_numbers<[1], [1], [0], [0], [0, 0, 1, 0], [], []>} : vector<8x8xf32>, vector<8x8xf32>, vector<8x8xf32> -> vector<8x8xf32>
    %cst_42 = arith.constant dense<0xFF800000> : vector<8xf32>
    %101 = vector.multi_reduction <maximumf>, %100, %cst_42 [1] : vector<8x8xf32> to vector<8xf32>
    %102 = vector.shape_cast %101 : vector<8xf32> to vector<8x1xf32>
    %103 = vector.broadcast %102 : vector<8x1xf32> to vector<8x8xf32>
    %104 = arith.subf %100, %103 : vector<8x8xf32>
    %105 = math.exp %104 : vector<8x8xf32>
    %cst_43 = arith.constant dense<0.000000e+00> : vector<8xf32>
    %106 = vector.multi_reduction <add>, %105, %cst_43 [1] : vector<8x8xf32> to vector<8xf32>
    %107 = vector.shape_cast %106 : vector<8xf32> to vector<8x1xf32>
    %108 = tpu.reciprocal %107 {approx = true} : vector<8x1xf32> -> vector<8x1xf32>
    %109 = vector.broadcast %108 : vector<8x1xf32> to vector<8x8xf32>
    %110 = arith.mulf %105, %109 : vector<8x8xf32>
    %cst_44 = arith.constant dense<0.000000e+00> : vector<8x8xf32>
    %111 = tpu.matmul %110, %99, %cst_44 {dimension_numbers = #tpu.dot_dimension_numbers<[1], [0], [0], [1], [0, 0, 1, 1], [], []>} : vector<8x8xf32>, vector<8x8xf32>, vector<8x8xf32> -> vector<8x8xf32>
    %112 = vector.extract_strided_slice %34 {offsets = [24, 0], sizes = [8, 32], strides = [1, 1]} : vector<32x32xf32> to vector<8x32xf32>
    %cst_45 = arith.constant dense<0.000000e+00> : vector<8x32xf32>
    %113 = tpu.matmul %111, %112, %cst_45 {dimension_numbers = #tpu.dot_dimension_numbers<[1], [0], [0], [1], [0, 0, 1, 1], [], []>} : vector<8x8xf32>, vector<8x32xf32>, vector<8x32xf32> -> vector<8x32xf32>
    %114 = arith.addf %94, %113 : vector<8x32xf32>
    %115 = vector.broadcast %35 : vector<1x32xf32> to vector<8x32xf32>
    %116 = arith.addf %114, %115 : vector<8x32xf32>
    %117 = arith.addf %116, %1 : vector<8x32xf32>
    %c0_46 = arith.constant 0 : index
    %c0_47 = arith.constant 0 : index
    %118 = vector.load %arg5[%c0_46, %c0_47] : memref<1x32xf32, #tpu.memory_space<vmem>>, vector<1x32xf32>
    %c0_48 = arith.constant 0 : index
    %c0_49 = arith.constant 0 : index
    %119 = vector.load %arg6[%c0_48, %c0_49] : memref<1x32xf32, #tpu.memory_space<vmem>>, vector<1x32xf32>
    %cst_50 = arith.constant dense<0.000000e+00> : vector<8xf32>
    %120 = vector.multi_reduction <add>, %117, %cst_50 [1] : vector<8x32xf32> to vector<8xf32>
    %121 = vector.shape_cast %120 : vector<8xf32> to vector<8x1xf32>
    %cst_51 = arith.constant 3.200000e+01 : f32
    %122 = vector.broadcast %cst_51 : f32 to vector<8x1xf32>
    %123 = arith.divf %121, %122 : vector<8x1xf32>
    %124 = vector.broadcast %123 : vector<8x1xf32> to vector<8x32xf32>
    %125 = arith.subf %117, %124 : vector<8x32xf32>
    %126 = arith.mulf %125, %125 : vector<8x32xf32>
    %cst_52 = arith.constant dense<0.000000e+00> : vector<8xf32>
    %127 = vector.multi_reduction <add>, %126, %cst_52 [1] : vector<8x32xf32> to vector<8xf32>
    %128 = vector.shape_cast %127 : vector<8xf32> to vector<8x1xf32>
    %cst_53 = arith.constant 0.0322580636 : f32
    %129 = vector.broadcast %cst_53 : f32 to vector<8x1xf32>
    %130 = arith.mulf %128, %129 : vector<8x1xf32>
    %131 = math.sqrt %130 : vector<8x1xf32>
    %cst_54 = arith.constant 9.99999997E-7 : f32
    %132 = vector.broadcast %cst_54 : f32 to vector<8x1xf32>
    %133 = arith.addf %131, %132 : vector<8x1xf32>
    %134 = vector.broadcast %133 : vector<8x1xf32> to vector<8x32xf32>
    %135 = arith.divf %125, %134 : vector<8x32xf32>
    %136 = vector.broadcast %118 : vector<1x32xf32> to vector<8x32xf32>
    %137 = arith.mulf %136, %135 : vector<8x32xf32>
    %138 = vector.broadcast %119 : vector<1x32xf32> to vector<8x32xf32>
    %139 = arith.addf %137, %138 : vector<8x32xf32>
    %c0_55 = arith.constant 0 : index
    %c0_56 = arith.constant 0 : index
    %140 = vector.load %arg13[%c0_55, %c0_56] : memref<32x32xf32, #tpu.memory_space<vmem>>, vector<32x32xf32>
    %cst_57 = arith.constant dense<0.000000e+00> : vector<8x32xf32>
    %141 = tpu.matmul %139, %140, %cst_57 {dimension_numbers = #tpu.dot_dimension_numbers<[1], [0], [0], [1], [0, 0, 1, 1], [], []>} : vector<8x32xf32>, vector<32x32xf32>, vector<8x32xf32> -> vector<8x32xf32>
    %c0_58 = arith.constant 0 : index
    %c0_59 = arith.constant 0 : index
    %142 = vector.load %arg14[%c0_58, %c0_59] : memref<1x32xf32, #tpu.memory_space<vmem>>, vector<1x32xf32>
    %143 = vector.broadcast %142 : vector<1x32xf32> to vector<8x32xf32>
    %144 = arith.addf %141, %143 : vector<8x32xf32>
    %c0_60 = arith.constant 0 : index
    %c0_61 = arith.constant 0 : index
    %145 = vector.load %arg15[%c0_60, %c0_61] : memref<32x64xf32, #tpu.memory_space<vmem>>, vector<32x64xf32>
    %cst_62 = arith.constant dense<0.000000e+00> : vector<8x64xf32>
    %146 = tpu.matmul %3, %145, %cst_62 {dimension_numbers = #tpu.dot_dimension_numbers<[1], [0], [0], [1], [0, 0, 1, 1], [], []>} : vector<8x32xf32>, vector<32x64xf32>, vector<8x64xf32> -> vector<8x64xf32>
    %c0_63 = arith.constant 0 : index
    %c0_64 = arith.constant 0 : index
    %147 = vector.load %arg16[%c0_63, %c0_64] : memref<1x64xf32, #tpu.memory_space<vmem>>, vector<1x64xf32>
    %148 = vector.broadcast %147 : vector<1x64xf32> to vector<8x64xf32>
    %149 = arith.addf %146, %148 : vector<8x64xf32>
    %150 = vector.extract_strided_slice %149 {offsets = [0, 0], sizes = [8, 32], strides = [1, 1]} : vector<8x64xf32> to vector<8x32xf32>
    %151 = vector.extract_strided_slice %149 {offsets = [0, 32], sizes = [8, 32], strides = [1, 1]} : vector<8x64xf32> to vector<8x32xf32>
    %c0_65 = arith.constant 0 : index
    %c0_66 = arith.constant 0 : index
    %152 = vector.load %arg17[%c0_65, %c0_66] : memref<32x32xf32, #tpu.memory_space<vmem>>, vector<32x32xf32>
    %c0_67 = arith.constant 0 : index
    %c0_68 = arith.constant 0 : index
    %153 = vector.load %arg18[%c0_67, %c0_68] : memref<1x32xf32, #tpu.memory_space<vmem>>, vector<1x32xf32>
    %154 = vector.extract_strided_slice %144 {offsets = [0, 0], sizes = [8, 8], strides = [1, 1]} : vector<8x32xf32> to vector<8x8xf32>
    %cst_69 = arith.constant 0.353553385 : f32
    %155 = vector.broadcast %cst_69 : f32 to vector<8x8xf32>
    %156 = arith.mulf %154, %155 : vector<8x8xf32>
    %157 = vector.extract_strided_slice %150 {offsets = [0, 0], sizes = [8, 8], strides = [1, 1]} : vector<8x32xf32> to vector<8x8xf32>
    %158 = vector.extract_strided_slice %151 {offsets = [0, 0], sizes = [8, 8], strides = [1, 1]} : vector<8x32xf32> to vector<8x8xf32>
    %cst_70 = arith.constant dense<0.000000e+00> : vector<8x8xf32>
    %159 = tpu.matmul %156, %157, %cst_70 {dimension_numbers = #tpu.dot_dimension_numbers<[1], [1], [0], [0], [0, 0, 1, 0], [], []>} : vector<8x8xf32>, vector<8x8xf32>, vector<8x8xf32> -> vector<8x8xf32>
    %cst_71 = arith.constant dense<0xFF800000> : vector<8xf32>
    %160 = vector.multi_reduction <maximumf>, %159, %cst_71 [1] : vector<8x8xf32> to vector<8xf32>
    %161 = vector.shape_cast %160 : vector<8xf32> to vector<8x1xf32>
    %162 = vector.broadcast %161 : vector<8x1xf32> to vector<8x8xf32>
    %163 = arith.subf %159, %162 : vector<8x8xf32>
    %164 = math.exp %163 : vector<8x8xf32>
    %cst_72 = arith.constant dense<0.000000e+00> : vector<8xf32>
    %165 = vector.multi_reduction <add>, %164, %cst_72 [1] : vector<8x8xf32> to vector<8xf32>
    %166 = vector.shape_cast %165 : vector<8xf32> to vector<8x1xf32>
    %167 = tpu.reciprocal %166 {approx = true} : vector<8x1xf32> -> vector<8x1xf32>
    %168 = vector.broadcast %167 : vector<8x1xf32> to vector<8x8xf32>
    %169 = arith.mulf %164, %168 : vector<8x8xf32>
    %cst_73 = arith.constant dense<0.000000e+00> : vector<8x8xf32>
    %170 = tpu.matmul %169, %158, %cst_73 {dimension_numbers = #tpu.dot_dimension_numbers<[1], [0], [0], [1], [0, 0, 1, 1], [], []>} : vector<8x8xf32>, vector<8x8xf32>, vector<8x8xf32> -> vector<8x8xf32>
    %171 = vector.extract_strided_slice %152 {offsets = [0, 0], sizes = [8, 32], strides = [1, 1]} : vector<32x32xf32> to vector<8x32xf32>
    %cst_74 = arith.constant dense<0.000000e+00> : vector<8x32xf32>
    %172 = tpu.matmul %170, %171, %cst_74 {dimension_numbers = #tpu.dot_dimension_numbers<[1], [0], [0], [1], [0, 0, 1, 1], [], []>} : vector<8x8xf32>, vector<8x32xf32>, vector<8x32xf32> -> vector<8x32xf32>
    %173 = vector.extract_strided_slice %144 {offsets = [0, 8], sizes = [8, 8], strides = [1, 1]} : vector<8x32xf32> to vector<8x8xf32>
    %cst_75 = arith.constant 0.353553385 : f32
    %174 = vector.broadcast %cst_75 : f32 to vector<8x8xf32>
    %175 = arith.mulf %173, %174 : vector<8x8xf32>
    %176 = vector.extract_strided_slice %150 {offsets = [0, 8], sizes = [8, 8], strides = [1, 1]} : vector<8x32xf32> to vector<8x8xf32>
    %177 = vector.extract_strided_slice %151 {offsets = [0, 8], sizes = [8, 8], strides = [1, 1]} : vector<8x32xf32> to vector<8x8xf32>
    %cst_76 = arith.constant dense<0.000000e+00> : vector<8x8xf32>
    %178 = tpu.matmul %175, %176, %cst_76 {dimension_numbers = #tpu.dot_dimension_numbers<[1], [1], [0], [0], [0, 0, 1, 0], [], []>} : vector<8x8xf32>, vector<8x8xf32>, vector<8x8xf32> -> vector<8x8xf32>
    %cst_77 = arith.constant dense<0xFF800000> : vector<8xf32>
    %179 = vector.multi_reduction <maximumf>, %178, %cst_77 [1] : vector<8x8xf32> to vector<8xf32>
    %180 = vector.shape_cast %179 : vector<8xf32> to vector<8x1xf32>
    %181 = vector.broadcast %180 : vector<8x1xf32> to vector<8x8xf32>
    %182 = arith.subf %178, %181 : vector<8x8xf32>
    %183 = math.exp %182 : vector<8x8xf32>
    %cst_78 = arith.constant dense<0.000000e+00> : vector<8xf32>
    %184 = vector.multi_reduction <add>, %183, %cst_78 [1] : vector<8x8xf32> to vector<8xf32>
    %185 = vector.shape_cast %184 : vector<8xf32> to vector<8x1xf32>
    %186 = tpu.reciprocal %185 {approx = true} : vector<8x1xf32> -> vector<8x1xf32>
    %187 = vector.broadcast %186 : vector<8x1xf32> to vector<8x8xf32>
    %188 = arith.mulf %183, %187 : vector<8x8xf32>
    %cst_79 = arith.constant dense<0.000000e+00> : vector<8x8xf32>
    %189 = tpu.matmul %188, %177, %cst_79 {dimension_numbers = #tpu.dot_dimension_numbers<[1], [0], [0], [1], [0, 0, 1, 1], [], []>} : vector<8x8xf32>, vector<8x8xf32>, vector<8x8xf32> -> vector<8x8xf32>
    %190 = vector.extract_strided_slice %152 {offsets = [8, 0], sizes = [8, 32], strides = [1, 1]} : vector<32x32xf32> to vector<8x32xf32>
    %cst_80 = arith.constant dense<0.000000e+00> : vector<8x32xf32>
    %191 = tpu.matmul %189, %190, %cst_80 {dimension_numbers = #tpu.dot_dimension_numbers<[1], [0], [0], [1], [0, 0, 1, 1], [], []>} : vector<8x8xf32>, vector<8x32xf32>, vector<8x32xf32> -> vector<8x32xf32>
    %192 = arith.addf %172, %191 : vector<8x32xf32>
    %193 = vector.extract_strided_slice %144 {offsets = [0, 16], sizes = [8, 8], strides = [1, 1]} : vector<8x32xf32> to vector<8x8xf32>
    %cst_81 = arith.constant 0.353553385 : f32
    %194 = vector.broadcast %cst_81 : f32 to vector<8x8xf32>
    %195 = arith.mulf %193, %194 : vector<8x8xf32>
    %196 = vector.extract_strided_slice %150 {offsets = [0, 16], sizes = [8, 8], strides = [1, 1]} : vector<8x32xf32> to vector<8x8xf32>
    %197 = vector.extract_strided_slice %151 {offsets = [0, 16], sizes = [8, 8], strides = [1, 1]} : vector<8x32xf32> to vector<8x8xf32>
    %cst_82 = arith.constant dense<0.000000e+00> : vector<8x8xf32>
    %198 = tpu.matmul %195, %196, %cst_82 {dimension_numbers = #tpu.dot_dimension_numbers<[1], [1], [0], [0], [0, 0, 1, 0], [], []>} : vector<8x8xf32>, vector<8x8xf32>, vector<8x8xf32> -> vector<8x8xf32>
    %cst_83 = arith.constant dense<0xFF800000> : vector<8xf32>
    %199 = vector.multi_reduction <maximumf>, %198, %cst_83 [1] : vector<8x8xf32> to vector<8xf32>
    %200 = vector.shape_cast %199 : vector<8xf32> to vector<8x1xf32>
    %201 = vector.broadcast %200 : vector<8x1xf32> to vector<8x8xf32>
    %202 = arith.subf %198, %201 : vector<8x8xf32>
    %203 = math.exp %202 : vector<8x8xf32>
    %cst_84 = arith.constant dense<0.000000e+00> : vector<8xf32>
    %204 = vector.multi_reduction <add>, %203, %cst_84 [1] : vector<8x8xf32> to vector<8xf32>
    %205 = vector.shape_cast %204 : vector<8xf32> to vector<8x1xf32>
    %206 = tpu.reciprocal %205 {approx = true} : vector<8x1xf32> -> vector<8x1xf32>
    %207 = vector.broadcast %206 : vector<8x1xf32> to vector<8x8xf32>
    %208 = arith.mulf %203, %207 : vector<8x8xf32>
    %cst_85 = arith.constant dense<0.000000e+00> : vector<8x8xf32>
    %209 = tpu.matmul %208, %197, %cst_85 {dimension_numbers = #tpu.dot_dimension_numbers<[1], [0], [0], [1], [0, 0, 1, 1], [], []>} : vector<8x8xf32>, vector<8x8xf32>, vector<8x8xf32> -> vector<8x8xf32>
    %210 = vector.extract_strided_slice %152 {offsets = [16, 0], sizes = [8, 32], strides = [1, 1]} : vector<32x32xf32> to vector<8x32xf32>
    %cst_86 = arith.constant dense<0.000000e+00> : vector<8x32xf32>
    %211 = tpu.matmul %209, %210, %cst_86 {dimension_numbers = #tpu.dot_dimension_numbers<[1], [0], [0], [1], [0, 0, 1, 1], [], []>} : vector<8x8xf32>, vector<8x32xf32>, vector<8x32xf32> -> vector<8x32xf32>
    %212 = arith.addf %192, %211 : vector<8x32xf32>
    %213 = vector.extract_strided_slice %144 {offsets = [0, 24], sizes = [8, 8], strides = [1, 1]} : vector<8x32xf32> to vector<8x8xf32>
    %cst_87 = arith.constant 0.353553385 : f32
    %214 = vector.broadcast %cst_87 : f32 to vector<8x8xf32>
    %215 = arith.mulf %213, %214 : vector<8x8xf32>
    %216 = vector.extract_strided_slice %150 {offsets = [0, 24], sizes = [8, 8], strides = [1, 1]} : vector<8x32xf32> to vector<8x8xf32>
    %217 = vector.extract_strided_slice %151 {offsets = [0, 24], sizes = [8, 8], strides = [1, 1]} : vector<8x32xf32> to vector<8x8xf32>
    %cst_88 = arith.constant dense<0.000000e+00> : vector<8x8xf32>
    %218 = tpu.matmul %215, %216, %cst_88 {dimension_numbers = #tpu.dot_dimension_numbers<[1], [1], [0], [0], [0, 0, 1, 0], [], []>} : vector<8x8xf32>, vector<8x8xf32>, vector<8x8xf32> -> vector<8x8xf32>
    %cst_89 = arith.constant dense<0xFF800000> : vector<8xf32>
    %219 = vector.multi_reduction <maximumf>, %218, %cst_89 [1] : vector<8x8xf32> to vector<8xf32>
    %220 = vector.shape_cast %219 : vector<8xf32> to vector<8x1xf32>
    %221 = vector.broadcast %220 : vector<8x1xf32> to vector<8x8xf32>
    %222 = arith.subf %218, %221 : vector<8x8xf32>
    %223 = math.exp %222 : vector<8x8xf32>
    %cst_90 = arith.constant dense<0.000000e+00> : vector<8xf32>
    %224 = vector.multi_reduction <add>, %223, %cst_90 [1] : vector<8x8xf32> to vector<8xf32>
    %225 = vector.shape_cast %224 : vector<8xf32> to vector<8x1xf32>
    %226 = tpu.reciprocal %225 {approx = true} : vector<8x1xf32> -> vector<8x1xf32>
    %227 = vector.broadcast %226 : vector<8x1xf32> to vector<8x8xf32>
    %228 = arith.mulf %223, %227 : vector<8x8xf32>
    %cst_91 = arith.constant dense<0.000000e+00> : vector<8x8xf32>
    %229 = tpu.matmul %228, %217, %cst_91 {dimension_numbers = #tpu.dot_dimension_numbers<[1], [0], [0], [1], [0, 0, 1, 1], [], []>} : vector<8x8xf32>, vector<8x8xf32>, vector<8x8xf32> -> vector<8x8xf32>
    %230 = vector.extract_strided_slice %152 {offsets = [24, 0], sizes = [8, 32], strides = [1, 1]} : vector<32x32xf32> to vector<8x32xf32>
    %cst_92 = arith.constant dense<0.000000e+00> : vector<8x32xf32>
    %231 = tpu.matmul %229, %230, %cst_92 {dimension_numbers = #tpu.dot_dimension_numbers<[1], [0], [0], [1], [0, 0, 1, 1], [], []>} : vector<8x8xf32>, vector<8x32xf32>, vector<8x32xf32> -> vector<8x32xf32>
    %232 = arith.addf %212, %231 : vector<8x32xf32>
    %233 = vector.broadcast %153 : vector<1x32xf32> to vector<8x32xf32>
    %234 = arith.addf %232, %233 : vector<8x32xf32>
    %235 = arith.addf %234, %139 : vector<8x32xf32>
    %c0_93 = arith.constant 0 : index
    %c0_94 = arith.constant 0 : index
    %236 = vector.load %arg7[%c0_93, %c0_94] : memref<1x32xf32, #tpu.memory_space<vmem>>, vector<1x32xf32>
    %c0_95 = arith.constant 0 : index
    %c0_96 = arith.constant 0 : index
    %237 = vector.load %arg8[%c0_95, %c0_96] : memref<1x32xf32, #tpu.memory_space<vmem>>, vector<1x32xf32>
    %cst_97 = arith.constant dense<0.000000e+00> : vector<8xf32>
    %238 = vector.multi_reduction <add>, %235, %cst_97 [1] : vector<8x32xf32> to vector<8xf32>
    %239 = vector.shape_cast %238 : vector<8xf32> to vector<8x1xf32>
    %cst_98 = arith.constant 3.200000e+01 : f32
    %240 = vector.broadcast %cst_98 : f32 to vector<8x1xf32>
    %241 = arith.divf %239, %240 : vector<8x1xf32>
    %242 = vector.broadcast %241 : vector<8x1xf32> to vector<8x32xf32>
    %243 = arith.subf %235, %242 : vector<8x32xf32>
    %244 = arith.mulf %243, %243 : vector<8x32xf32>
    %cst_99 = arith.constant dense<0.000000e+00> : vector<8xf32>
    %245 = vector.multi_reduction <add>, %244, %cst_99 [1] : vector<8x32xf32> to vector<8xf32>
    %246 = vector.shape_cast %245 : vector<8xf32> to vector<8x1xf32>
    %cst_100 = arith.constant 0.0322580636 : f32
    %247 = vector.broadcast %cst_100 : f32 to vector<8x1xf32>
    %248 = arith.mulf %246, %247 : vector<8x1xf32>
    %249 = math.sqrt %248 : vector<8x1xf32>
    %cst_101 = arith.constant 9.99999997E-7 : f32
    %250 = vector.broadcast %cst_101 : f32 to vector<8x1xf32>
    %251 = arith.addf %249, %250 : vector<8x1xf32>
    %252 = vector.broadcast %251 : vector<8x1xf32> to vector<8x32xf32>
    %253 = arith.divf %243, %252 : vector<8x32xf32>
    %254 = vector.broadcast %236 : vector<1x32xf32> to vector<8x32xf32>
    %255 = arith.mulf %254, %253 : vector<8x32xf32>
    %256 = vector.broadcast %237 : vector<1x32xf32> to vector<8x32xf32>
    %257 = arith.addf %255, %256 : vector<8x32xf32>
    %c0_102 = arith.constant 0 : index
    %c0_103 = arith.constant 0 : index
    %258 = vector.load %arg19[%c0_102, %c0_103] : memref<32x64xf32, #tpu.memory_space<vmem>>, vector<32x64xf32>
    %c0_104 = arith.constant 0 : index
    %c0_105 = arith.constant 0 : index
    %259 = vector.load %arg20[%c0_104, %c0_105] : memref<1x64xf32, #tpu.memory_space<vmem>>, vector<1x64xf32>
    %c0_106 = arith.constant 0 : index
    %c0_107 = arith.constant 0 : index
    %260 = vector.load %arg21[%c0_106, %c0_107] : memref<64x32xf32, #tpu.memory_space<vmem>>, vector<64x32xf32>
    %c0_108 = arith.constant 0 : index
    %c0_109 = arith.constant 0 : index
    %261 = vector.load %arg22[%c0_108, %c0_109] : memref<1x32xf32, #tpu.memory_space<vmem>>, vector<1x32xf32>
    %cst_110 = arith.constant dense<0.000000e+00> : vector<8x64xf32>
    %262 = tpu.matmul %257, %258, %cst_110 {dimension_numbers = #tpu.dot_dimension_numbers<[1], [0], [0], [1], [0, 0, 1, 1], [], []>} : vector<8x32xf32>, vector<32x64xf32>, vector<8x64xf32> -> vector<8x64xf32>
    %263 = vector.broadcast %259 : vector<1x64xf32> to vector<8x64xf32>
    %264 = arith.addf %262, %263 : vector<8x64xf32>
    %cst_111 = arith.constant 0.000000e+00 : f32
    %265 = vector.broadcast %cst_111 : f32 to vector<8x64xf32>
    %266 = arith.maximumf %264, %265 : vector<8x64xf32>
    %cst_112 = arith.constant dense<0.000000e+00> : vector<8x32xf32>
    %267 = tpu.matmul %266, %260, %cst_112 {dimension_numbers = #tpu.dot_dimension_numbers<[1], [0], [0], [1], [0, 0, 1, 1], [], []>} : vector<8x64xf32>, vector<64x32xf32>, vector<8x32xf32> -> vector<8x32xf32>
    %268 = vector.broadcast %261 : vector<1x32xf32> to vector<8x32xf32>
    %269 = arith.addf %267, %268 : vector<8x32xf32>
    %270 = arith.addf %269, %257 : vector<8x32xf32>
    %c0_113 = arith.constant 0 : index
    %c0_114 = arith.constant 0 : index
    %c0_115 = arith.constant 0 : index
    %271 = vector.load %arg23[%c0_113, %c0_114, %c0_115] : memref<1x8x32xf32, #tpu.memory_space<vmem>>, vector<1x8x32xf32>
    %272 = vector.shape_cast %271 : vector<1x8x32xf32> to vector<8x32xf32>
    %273 = vector.shape_cast %270 : vector<8x32xf32> to vector<1x8x32xf32>
    tpu.vector_store %arg23[%c0_113, %c0_114, %c0_115], %273 {strides = array<i32>} : memref<1x8x32xf32, #tpu.memory_space<vmem>>, vector<1x8x32xf32>,
    return
  }
  func.func @transform_0(%arg0: i32) -> (i32, i32, i32) {
    %c0_i32 = arith.constant 0 : i32
    %c0_i32_0 = arith.constant 0 : i32
    %c0_i32_1 = arith.constant 0 : i32
    return %arg0, %c0_i32, %c0_i32_0 : i32, i32, i32
  }
  func.func @transform_1(%arg0: i32) -> (i32, i32, i32) {
    %c0_i32 = arith.constant 0 : i32
    %c0_i32_0 = arith.constant 0 : i32
    %c0_i32_1 = arith.constant 0 : i32
    return %arg0, %c0_i32, %c0_i32_0 : i32, i32, i32
  }
  func.func @transform_2(%arg0: i32) -> (i32, i32) {
    %c0_i32 = arith.constant 0 : i32
    %c0_i32_0 = arith.constant 0 : i32
    %c0_i32_1 = arith.constant 0 : i32
    return %c0_i32, %c0_i32_0 : i32, i32
  }
  func.func @transform_3(%arg0: i32) -> (i32, i32) {
    %c0_i32 = arith.constant 0 : i32
    %c0_i32_0 = arith.constant 0 : i32
    %c0_i32_1 = arith.constant 0 : i32
    return %c0_i32, %c0_i32_0 : i32, i32
  }
  func.func @transform_4(%arg0: i32) -> (i32, i32) {
    %c0_i32 = arith.constant 0 : i32
    %c0_i32_0 = arith.constant 0 : i32
    %c0_i32_1 = arith.constant 0 : i32
    return %c0_i32, %c0_i32_0 : i32, i32
  }
  func.func @transform_5(%arg0: i32) -> (i32, i32) {
    %c0_i32 = arith.constant 0 : i32
    %c0_i32_0 = arith.constant 0 : i32
    %c0_i32_1 = arith.constant 0 : i32
    return %c0_i32, %c0_i32_0 : i32, i32
  }
  func.func @transform_6(%arg0: i32) -> (i32, i32) {
    %c0_i32 = arith.constant 0 : i32
    %c0_i32_0 = arith.constant 0 : i32
    %c0_i32_1 = arith.constant 0 : i32
    return %c0_i32, %c0_i32_0 : i32, i32
  }
  func.func @transform_7(%arg0: i32) -> (i32, i32) {
    %c0_i32 = arith.constant 0 : i32
    %c0_i32_0 = arith.constant 0 : i32
    %c0_i32_1 = arith.constant 0 : i32
    return %c0_i32, %c0_i32_0 : i32, i32
  }
  func.func @transform_8(%arg0: i32) -> (i32, i32) {
    %c0_i32 = arith.constant 0 : i32
    %c0_i32_0 = arith.constant 0 : i32
    %c0_i32_1 = arith.constant 0 : i32
    return %c0_i32, %c0_i32_0 : i32, i32
  }
  func.func @transform_9(%arg0: i32) -> (i32, i32) {
    %c0_i32 = arith.constant 0 : i32
    %c0_i32_0 = arith.constant 0 : i32
    %c0_i32_1 = arith.constant 0 : i32
    return %c0_i32, %c0_i32_0 : i32, i32
  }
  func.func @transform_10(%arg0: i32) -> (i32, i32) {
    %c0_i32 = arith.constant 0 : i32
    %c0_i32_0 = arith.constant 0 : i32
    %c0_i32_1 = arith.constant 0 : i32
    return %c0_i32, %c0_i32_0 : i32, i32
  }
  func.func @transform_11(%arg0: i32) -> (i32, i32) {
    %c0_i32 = arith.constant 0 : i32
    %c0_i32_0 = arith.constant 0 : i32
    %c0_i32_1 = arith.constant 0 : i32
    return %c0_i32, %c0_i32_0 : i32, i32
  }
  func.func @transform_12(%arg0: i32) -> (i32, i32) {
    %c0_i32 = arith.constant 0 : i32
    %c0_i32_0 = arith.constant 0 : i32
    %c0_i32_1 = arith.constant 0 : i32
    return %c0_i32, %c0_i32_0 : i32, i32
  }
  func.func @transform_13(%arg0: i32) -> (i32, i32) {
    %c0_i32 = arith.constant 0 : i32
    %c0_i32_0 = arith.constant 0 : i32
    %c0_i32_1 = arith.constant 0 : i32
    return %c0_i32, %c0_i32_0 : i32, i32
  }
  func.func @transform_14(%arg0: i32) -> (i32, i32) {
    %c0_i32 = arith.constant 0 : i32
    %c0_i32_0 = arith.constant 0 : i32
    %c0_i32_1 = arith.constant 0 : i32
    return %c0_i32, %c0_i32_0 : i32, i32
  }
  func.func @transform_15(%arg0: i32) -> (i32, i32) {
    %c0_i32 = arith.constant 0 : i32
    %c0_i32_0 = arith.constant 0 : i32
    %c0_i32_1 = arith.constant 0 : i32
    return %c0_i32, %c0_i32_0 : i32, i32
  }
  func.func @transform_16(%arg0: i32) -> (i32, i32) {
    %c0_i32 = arith.constant 0 : i32
    %c0_i32_0 = arith.constant 0 : i32
    %c0_i32_1 = arith.constant 0 : i32
    return %c0_i32, %c0_i32_0 : i32, i32
  }
  func.func @transform_17(%arg0: i32) -> (i32, i32) {
    %c0_i32 = arith.constant 0 : i32
    %c0_i32_0 = arith.constant 0 : i32
    %c0_i32_1 = arith.constant 0 : i32
    return %c0_i32, %c0_i32_0 : i32, i32
  }
  func.func @transform_18(%arg0: i32) -> (i32, i32) {
    %c0_i32 = arith.constant 0 : i32
    %c0_i32_0 = arith.constant 0 : i32
    %c0_i32_1 = arith.constant 0 : i32
    return %c0_i32, %c0_i32_0 : i32, i32
  }
  func.func @transform_19(%arg0: i32) -> (i32, i32) {
    %c0_i32 = arith.constant 0 : i32
    %c0_i32_0 = arith.constant 0 : i32
    %c0_i32_1 = arith.constant 0 : i32
    return %c0_i32, %c0_i32_0 : i32, i32
  }
  func.func @transform_20(%arg0: i32) -> (i32, i32) {
    %c0_i32 = arith.constant 0 : i32
    %c0_i32_0 = arith.constant 0 : i32
    %c0_i32_1 = arith.constant 0 : i32
    return %c0_i32, %c0_i32_0 : i32, i32
  }
  func.func @transform_21(%arg0: i32) -> (i32, i32) {
    %c0_i32 = arith.constant 0 : i32
    %c0_i32_0 = arith.constant 0 : i32
    %c0_i32_1 = arith.constant 0 : i32
    return %c0_i32, %c0_i32_0 : i32, i32
  }
  func.func @transform_22(%arg0: i32) -> (i32, i32, i32) {
    %c0_i32 = arith.constant 0 : i32
    %c0_i32_0 = arith.constant 0 : i32
    %c0_i32_1 = arith.constant 0 : i32
    return %arg0, %c0_i32, %c0_i32_0 : i32, i32, i32
  }
}

module attributes {stable_mosaic.version = 11 : i64} {
  func.func @_norm_proj_softmax_kernel(%arg0: i32, %arg1: memref<16x32xf32, #tpu.memory_space<vmem>>, %arg2: memref<1x32xf32, #tpu.memory_space<vmem>>, %arg3: memref<1x32xf32, #tpu.memory_space<vmem>>, %arg4: memref<32x128xf32, #tpu.memory_space<vmem>>, %arg5: memref<1x128xf32, #tpu.memory_space<vmem>>, %arg6: memref<16x128xf32, #tpu.memory_space<vmem>>) attributes {dimension_semantics = [#tpu.dimension_semantics<arbitrary>], iteration_bounds = array<i64: 1>, scalar_prefetch = 0 : i64, scratch_operands = 0 : i64, tpu.core_type = #tpu.core_type<tc>, window_params = [{pipeline_mode = #tpu.pipeline_mode<synchronous>, transform_indices = @transform_0, window_bounds = array<i64: 16, 32>}, {pipeline_mode = #tpu.pipeline_mode<synchronous>, transform_indices = @transform_1, window_bounds = array<i64: 1, 32>}, {pipeline_mode = #tpu.pipeline_mode<synchronous>, transform_indices = @transform_2, window_bounds = array<i64: 1, 32>}, {pipeline_mode = #tpu.pipeline_mode<synchronous>, transform_indices = @transform_3, window_bounds = array<i64: 32, 128>}, {pipeline_mode = #tpu.pipeline_mode<synchronous>, transform_indices = @transform_4, window_bounds = array<i64: 1, 128>}, {pipeline_mode = #tpu.pipeline_mode<synchronous>, transform_indices = @transform_5, window_bounds = array<i64: 16, 128>}]} {
    %c0 = arith.constant 0 : index
    %c0_0 = arith.constant 0 : index
    %0 = vector.load %arg1[%c0, %c0_0] : memref<16x32xf32, #tpu.memory_space<vmem>>, vector<16x32xf32>
    %c0_1 = arith.constant 0 : index
    %c0_2 = arith.constant 0 : index
    %1 = vector.load %arg2[%c0_1, %c0_2] : memref<1x32xf32, #tpu.memory_space<vmem>>, vector<1x32xf32>
    %c0_3 = arith.constant 0 : index
    %c0_4 = arith.constant 0 : index
    %2 = vector.load %arg3[%c0_3, %c0_4] : memref<1x32xf32, #tpu.memory_space<vmem>>, vector<1x32xf32>
    %cst = arith.constant dense<0.000000e+00> : vector<16xf32>
    %3 = vector.multi_reduction <add>, %0, %cst [1] : vector<16x32xf32> to vector<16xf32>
    %4 = vector.shape_cast %3 : vector<16xf32> to vector<16x1xf32>
    %cst_5 = arith.constant 3.200000e+01 : f32
    %5 = vector.broadcast %cst_5 : f32 to vector<16x1xf32>
    %6 = arith.divf %4, %5 : vector<16x1xf32>
    %7 = vector.broadcast %6 : vector<16x1xf32> to vector<16x32xf32>
    %8 = arith.subf %0, %7 : vector<16x32xf32>
    %9 = arith.mulf %8, %8 : vector<16x32xf32>
    %cst_6 = arith.constant dense<0.000000e+00> : vector<16xf32>
    %10 = vector.multi_reduction <add>, %9, %cst_6 [1] : vector<16x32xf32> to vector<16xf32>
    %11 = vector.shape_cast %10 : vector<16xf32> to vector<16x1xf32>
    %cst_7 = arith.constant 0.0322580636 : f32
    %12 = vector.broadcast %cst_7 : f32 to vector<16x1xf32>
    %13 = arith.mulf %11, %12 : vector<16x1xf32>
    %14 = math.sqrt %13 : vector<16x1xf32>
    %cst_8 = arith.constant 9.99999997E-7 : f32
    %15 = vector.broadcast %cst_8 : f32 to vector<16x1xf32>
    %16 = arith.addf %14, %15 : vector<16x1xf32>
    %17 = vector.broadcast %16 : vector<16x1xf32> to vector<16x32xf32>
    %18 = arith.divf %8, %17 : vector<16x32xf32>
    %19 = vector.broadcast %1 : vector<1x32xf32> to vector<16x32xf32>
    %20 = arith.mulf %19, %18 : vector<16x32xf32>
    %21 = vector.broadcast %2 : vector<1x32xf32> to vector<16x32xf32>
    %22 = arith.addf %20, %21 : vector<16x32xf32>
    %c0_9 = arith.constant 0 : index
    %c0_10 = arith.constant 0 : index
    %23 = vector.load %arg4[%c0_9, %c0_10] : memref<32x128xf32, #tpu.memory_space<vmem>>, vector<32x128xf32>
    %cst_11 = arith.constant dense<0.000000e+00> : vector<16x128xf32>
    %24 = tpu.matmul %22, %23, %cst_11 {dimension_numbers = #tpu.dot_dimension_numbers<[1], [0], [0], [1], [0, 0, 1, 1], [], []>} : vector<16x32xf32>, vector<32x128xf32>, vector<16x128xf32> -> vector<16x128xf32>
    %c0_12 = arith.constant 0 : index
    %c0_13 = arith.constant 0 : index
    %25 = vector.load %arg5[%c0_12, %c0_13] : memref<1x128xf32, #tpu.memory_space<vmem>>, vector<1x128xf32>
    %26 = vector.broadcast %25 : vector<1x128xf32> to vector<16x128xf32>
    %27 = arith.addf %24, %26 : vector<16x128xf32>
    %28 = tpu.iota {dimensions = array<i32: 1>} : vector<16x128xi32>
    %c16_i32 = arith.constant 16 : i32
    %29 = vector.broadcast %c16_i32 : i32 to vector<16x128xi32>
    %30 = arith.cmpi slt, %28, %29 : vector<16x128xi32>
    %cst_14 = arith.constant -1.000000e+30 : f32
    %31 = vector.broadcast %cst_14 : f32 to vector<16x128xf32>
    %32 = arith.select %30, %27, %31 : vector<16x128xi1>, vector<16x128xf32>
    %cst_15 = arith.constant dense<0xFF800000> : vector<16xf32>
    %33 = vector.multi_reduction <maximumf>, %32, %cst_15 [1] : vector<16x128xf32> to vector<16xf32>
    %34 = vector.shape_cast %33 : vector<16xf32> to vector<16x1xf32>
    %35 = vector.broadcast %34 : vector<16x1xf32> to vector<16x128xf32>
    %36 = arith.subf %32, %35 : vector<16x128xf32>
    %37 = math.exp %36 : vector<16x128xf32>
    %cst_16 = arith.constant dense<0.000000e+00> : vector<16xf32>
    %38 = vector.multi_reduction <add>, %37, %cst_16 [1] : vector<16x128xf32> to vector<16xf32>
    %39 = vector.shape_cast %38 : vector<16xf32> to vector<16x1xf32>
    %40 = vector.broadcast %39 : vector<16x1xf32> to vector<16x128xf32>
    %41 = arith.divf %37, %40 : vector<16x128xf32>
    %c0_17 = arith.constant 0 : index
    %c0_18 = arith.constant 0 : index
    %42 = vector.load %arg6[%c0_17, %c0_18] : memref<16x128xf32, #tpu.memory_space<vmem>>, vector<16x128xf32>
    tpu.vector_store %arg6[%c0_17, %c0_18], %41 {strides = array<i32>} : memref<16x128xf32, #tpu.memory_space<vmem>>, vector<16x128xf32>,
    return
  }
  func.func @transform_0(%arg0: i32) -> (i32, i32) {
    %c0_i32 = arith.constant 0 : i32
    %c0_i32_0 = arith.constant 0 : i32
    %c0_i32_1 = arith.constant 0 : i32
    return %c0_i32, %c0_i32_0 : i32, i32
  }
  func.func @transform_1(%arg0: i32) -> (i32, i32) {
    %c0_i32 = arith.constant 0 : i32
    %c0_i32_0 = arith.constant 0 : i32
    %c0_i32_1 = arith.constant 0 : i32
    return %c0_i32, %c0_i32_0 : i32, i32
  }
  func.func @transform_2(%arg0: i32) -> (i32, i32) {
    %c0_i32 = arith.constant 0 : i32
    %c0_i32_0 = arith.constant 0 : i32
    %c0_i32_1 = arith.constant 0 : i32
    return %c0_i32, %c0_i32_0 : i32, i32
  }
  func.func @transform_3(%arg0: i32) -> (i32, i32) {
    %c0_i32 = arith.constant 0 : i32
    %c0_i32_0 = arith.constant 0 : i32
    %c0_i32_1 = arith.constant 0 : i32
    return %c0_i32, %c0_i32_0 : i32, i32
  }
  func.func @transform_4(%arg0: i32) -> (i32, i32) {
    %c0_i32 = arith.constant 0 : i32
    %c0_i32_0 = arith.constant 0 : i32
    %c0_i32_1 = arith.constant 0 : i32
    return %c0_i32, %c0_i32_0 : i32, i32
  }
  func.func @transform_5(%arg0: i32) -> (i32, i32) {
    %c0_i32 = arith.constant 0 : i32
    %c0_i32_0 = arith.constant 0 : i32
    %c0_i32_1 = arith.constant 0 : i32
    return %c0_i32, %c0_i32_0 : i32, i32
  }
}

</mosaic_0001>

<llo_original>
// kernel: transformer_forward.8
$region0: #{transformer_forward.8}
  #allocation0 [shape = 'u32[]', space=smem, size = 0x4, offset = 0x4, fixed_abs, tag = 'smem constant byte address 0x4 - core index']
  #allocation1 [shape = 'u32[144,128]{1,0:T(1,128)}', space=vmem, size = 0x12000, scoped, tag = 'internal scratch']
  %s0 = inlined_call_operand.vmem [shape: f32[16,32], index: 0, kind: input, shape index: {}]
  %s1 = inlined_call_operand.vmem [shape: f32[1,32], index: 1, kind: input, shape index: {}]
  %s2 = inlined_call_operand.vmem [shape: f32[1,32], index: 2, kind: input, shape index: {}]
  %s3 = inlined_call_operand.vmem [shape: f32[16,32], index: 3, kind: output, shape index: {}]
  %s4 = sld [smem:[#allocation0]]
  $region22: #{transformer_forward.8} parent=0
    _
  %s6 = ssub.s32 1, %s4
  %s7 = scalar_select 0, %s6, %s4
  // Predicated region
  $region2: #{transformer_forward.8} parent=0 // pred_check
    _
  $region3: #{transformer_forward.8} parent=0 // pred_check_branch
    %9 = sbr.rel (0) target = $region5
  $region4: #{transformer_forward.8} parent=0 // pred_region
    _
  $region5: #{transformer_forward.8} parent=0 // pred_fallthru
    _
  // Predicated region
  $region6: #{transformer_forward.8} parent=0 // pred_check
    _
  $region7: #{transformer_forward.8} parent=0 // pred_check_branch
    %11 = sbr.rel (0) target = $region9
  $region8: #{transformer_forward.8} parent=0 // pred_region
    _
  $region9: #{transformer_forward.8} parent=0 // pred_fallthru
    _
  // Predicated region
  $region10: #{transformer_forward.8} parent=0 // pred_check
    _
  $region11: #{transformer_forward.8} parent=0 // pred_check_branch
    %13 = sbr.rel (0) target = $region13
  $region12: #{transformer_forward.8} parent=0 // pred_region
    _
  $region13: #{transformer_forward.8} parent=0 // pred_fallthru
    _
  %v14 = vld [vmem:[%s0] sm:$0xff]
  %v15 = vld [vmem:[%s0 + $0x8] sm:$0xff]
  %v16 = vld [vmem:[%s1] sm:$0x1]
  %v17 = vld [vmem:[%s2] sm:$0x1]
  %vm18 = vcmask 261120
  %v19 = vsel %vm18, %v14, 0.0
  %20 = vadd.xlane.f32.xlu0 %v19
  %v21 = vpop.xlane.xlu0 %20
  %v22 = vsel %vm18, %v15, 0.0
  %23 = vadd.xlane.f32.xlu0 %v22
  %v24 = vpop.xlane.xlu0 %23
  %v25 = vrcp.pop 32.0
  %v26 = vmul.f32 %v21, %v25
  %v27 = vmul.f32 %v24, %v25
  %v28 = vsub.f32 %v14, %v26
  %v29 = vsub.f32 %v15, %v27
  %v30 = vmul.f32 %v28, %v28
  %v31 = vmul.f32 %v29, %v29
  %v32 = vsel %vm18, %v30, 0.0
  %33 = vadd.xlane.f32.xlu0 %v32
  %v34 = vpop.xlane.xlu0 %33
  %v35 = vsel %vm18, %v31, 0.0
  %36 = vadd.xlane.f32.xlu0 %v35
  %v37 = vpop.xlane.xlu0 %36
  %v38 = vmul.f32 %v34, 0.032258064
  %v39 = vmul.f32 %v37, 0.032258064
  %v40 = vrsqrt.pop %v38
  %v41 = vmul.f32 %v38, %v40
  %vm42 = vcmp.eq.f32.partialorder %v38, inf
  %v43 = vsel %vm42, %v38, %v41
  %vm44 = vcmp.eq.f32.partialorder %v38, 0.0
  %v45 = vand.u32 %v38, 2147483648
  %v46 = vsel %vm44, %v45, %v43
  %v47 = vrsqrt.pop %v39
  %v48 = vmul.f32 %v39, %v47
  %vm49 = vcmp.eq.f32.partialorder %v39, inf
  %v50 = vsel %vm49, %v39, %v48
  %vm51 = vcmp.eq.f32.partialorder %v39, 0.0
  %v52 = vand.u32 %v39, 2147483648
  %v53 = vsel %vm51, %v52, %v50
  %v54 = vadd.f32 %v46, 1e-06
  %v55 = vadd.f32 %v53, 1e-06
  %v56 = vrcp.pop %v54
  %v57 = vmul.f32 %v28, %v56
  %v58 = vrcp.pop %v55
  %v59 = vmul.f32 %v29, %v58
  %v61 = vlaneseq
  %v62 = vshrl.u32 %v61, 7
  %v63 = vsub.s32 0, %v62
  %v64 = vrot.slane %v16, %v63
  %v66 = vmul.f32 %v64, %v57
  %v67 = vmul.f32 %v64, %v59
  %v69 = vlaneseq
  %v70 = vshrl.u32 %v69, 7
  %v71 = vsub.s32 0, %v70
  %v72 = vrot.slane %v17, %v71
  %v74 = vadd.f32 %v66, %v72
  %v75 = vadd.f32 %v67, %v72
  %76 = vst.msk [vmem:[%s3] sm:$0xff] %vm18, %v74
  %77 = vst.msk [vmem:[%s3 + $0x8] sm:$0xff] %vm18, %v75
  // Predicated region
  $region14: #{transformer_forward.8} parent=0 // pred_check
    _
  $region15: #{transformer_forward.8} parent=0 // pred_check_branch
    %79 = sbr.rel (0) target = $region17
  $region16: #{transformer_forward.8} parent=0 // pred_region
    _
  $region17: #{transformer_forward.8} parent=0 // pred_fallthru
    _
  // Predicated region
  $region18: #{transformer_forward.8} parent=0 // pred_check
    _
  $region19: #{transformer_forward.8} parent=0 // pred_check_branch
    %81 = sbr.rel (0) target = $region21
  $region20: #{transformer_forward.8} parent=0 // pred_region
    _
  $region21: #{transformer_forward.8} parent=0 // pred_fallthru
    _

// kernel: transformer_forward.6
$region0: #{transformer_forward.6}
  #allocation0 [shape = 'u32[]', space=smem, size = 0x4, offset = 0x4, fixed_abs, tag = 'smem constant byte address 0x4 - core index']
  #allocation1 [shape = 'u32[144,128]{1,0:T(1,128)}', space=vmem, size = 0x12000, scoped, tag = 'internal scratch']
  %s0 = inlined_call_operand.vmem [shape: f32[2,8,32], index: 0, kind: input, shape index: {}]
  %s1 = inlined_call_operand.vmem [shape: f32[1,32], index: 1, kind: input, shape index: {}]
  %s2 = inlined_call_operand.vmem [shape: f32[1,32], index: 2, kind: input, shape index: {}]
  %s3 = inlined_call_operand.vmem [shape: f32[1,32], index: 3, kind: input, shape index: {}]
  %s4 = inlined_call_operand.vmem [shape: f32[1,32], index: 4, kind: input, shape index: {}]
  %s5 = inlined_call_operand.vmem [shape: f32[32,96], index: 5, kind: input, shape index: {}]
  %s6 = inlined_call_operand.vmem [shape: f32[1,96], index: 6, kind: input, shape index: {}]
  %s7 = inlined_call_operand.vmem [shape: f32[32,32], index: 7, kind: input, shape index: {}]
  %s8 = inlined_call_operand.vmem [shape: f32[1,32], index: 8, kind: input, shape index: {}]
  %s9 = inlined_call_operand.vmem [shape: f32[32,64], index: 9, kind: input, shape index: {}]
  %s10 = inlined_call_operand.vmem [shape: f32[1,64], index: 10, kind: input, shape index: {}]
  %s11 = inlined_call_operand.vmem [shape: f32[64,32], index: 11, kind: input, shape index: {}]
  %s12 = inlined_call_operand.vmem [shape: f32[1,32], index: 12, kind: input, shape index: {}]
  %s13 = inlined_call_operand.vmem [shape: f32[2,8,32], index: 13, kind: output, shape index: {}]
  %s14 = sld [smem:[#allocation0]]
  $region85: #{transformer_forward.6} parent=0
    _
  %s16 = ssub.s32 1, %s14
  %s17 = scalar_select 0, %s16, %s14
  loop: start=0, step=1, limit=4
  $region2: #{transformer_forward.6} parent=0 // loop_pre_header
    _
  $region3: #{transformer_forward.6} parent=0 // loop_header
    %s19 = sphi 0, %s23
    %p20 = scmp.ge.s32.totalorder %s19, 4
    %s29 = sphi 0, %s31
    %s32 = sphi 0, %s29
    %s33 = sphi 0, %s32
    %s49 = sphi 0, %s33
    %s53 = sphi 0, %s53
    %s55 = sphi 0, %s53
    %s56 = sphi 0, %s55
    %s70 = sphi 0, %s56
    %s74 = sphi 0, %s74
    %s76 = sphi 0, %s74
    %s77 = sphi 0, %s76
    %s91 = sphi 0, %s77
    %s95 = sphi 0, %s95
    %s97 = sphi 0, %s95
    %s98 = sphi 0, %s97
    %s112 = sphi 0, %s98
    %s116 = sphi 0, %s116
    %s118 = sphi 0, %s116
    %s119 = sphi 0, %s118
    %s133 = sphi 0, %s119
    %s137 = sphi 0, %s137
    %s139 = sphi 0, %s137
    %s140 = sphi 0, %s139
    %s154 = sphi 0, %s140
    %s158 = sphi 0, %s158
    %s160 = sphi 0, %s158
    %s161 = sphi 0, %s160
    %s175 = sphi 0, %s161
    %s179 = sphi 0, %s179
    %s181 = sphi 0, %s179
    %s182 = sphi 0, %s181
    %s196 = sphi 0, %s182
    %s200 = sphi 0, %s200
    %s202 = sphi 0, %s200
    %s203 = sphi 0, %s202
    %s217 = sphi 0, %s203
    %s221 = sphi 0, %s221
    %s223 = sphi 0, %s221
    %s224 = sphi 0, %s223
    %s238 = sphi 0, %s224
    %s242 = sphi 0, %s242
    %s244 = sphi 0, %s242
    %s245 = sphi 0, %s244
    %s259 = sphi 0, %s245
    %s263 = sphi 0, %s263
    %s265 = sphi 0, %s263
    %s266 = sphi 0, %s265
    %s280 = sphi 0, %s266
    %s284 = sphi 0, %s284
    %s286 = sphi 0, %s284
    %s287 = sphi 0, %s286
    %s301 = sphi 0, %s287
    %s307 = sphi 0, %s309
    %s310 = sphi 0, %s307
    %s311 = sphi 0, %s310
    %s327 = sphi 0, %s311
  $region4: #{transformer_forward.6} parent=0 // loop_header_branch
    %22 = sbr.rel (%p20) target = $region8
  $region5: #{transformer_forward.6} parent=0 // loop_body
    %s24 = ssub.s32 %s19, 1
    %s25 = ssub.s32 %s19, 2
    %s26 = sadd.s32 %s19, 1
    %s27 = ssub.s32 %s19, %s26
    %p28 = scmp.eq.s32.totalorder %s27, 0
    %s30 = sadd.s32 %s29, 1
    %s31 = scalar_select %p28, %s29, %s30
    %p34 = pneg %p28
    %p35 = scmp.eq.s32.totalorder %s19, 1
    %p36 = por %p34, %p35
    %p37 = scmp.ne.s32.totalorder %s29, %s32
    %p38 = scmp.eq.s32.totalorder %s19, 0
    %p39 = por %p37, %p38
    %p40 = scmp.ne.s32.totalorder %s29, %s32
    %p41 = scmp.eq.s32.totalorder %s24, 1
    %p42 = por %p40, %p41
    %p43 = scmp.ne.s32.totalorder %s32, %s33
    %p44 = scmp.eq.s32.totalorder %s24, 0
    %p45 = por %p43, %p44
    %p46 = scmp.ne.s32.totalorder %s32, %s33
    %p47 = scmp.eq.s32.totalorder %s25, 1
    %p48 = por %p46, %p47
    %p50 = scmp.ne.s32.totalorder %s33, %s49
    %p51 = scmp.eq.s32.totalorder %s25, 0
    %p52 = por %p50, %p51
    %s54 = sadd.s32 %s53, 1
    %p57 = scmp.eq.s32.totalorder %s19, 1
    %p58 = scmp.ne.s32.totalorder %s53, %s55
    %p59 = scmp.eq.s32.totalorder %s19, 0
    %p60 = por %p58, %p59
    %p61 = scmp.ne.s32.totalorder %s53, %s55
    %p62 = scmp.eq.s32.totalorder %s24, 1
    %p63 = por %p61, %p62
    %p64 = scmp.ne.s32.totalorder %s55, %s56
    %p65 = scmp.eq.s32.totalorder %s24, 0
    %p66 = por %p64, %p65
    %p67 = scmp.ne.s32.totalorder %s55, %s56
    %p68 = scmp.eq.s32.totalorder %s25, 1
    %p69 = por %p67, %p68
    %p71 = scmp.ne.s32.totalorder %s56, %s70
    %p72 = scmp.eq.s32.totalorder %s25, 0
    %p73 = por %p71, %p72
    %s75 = sadd.s32 %s74, 1
    %p78 = scmp.eq.s32.totalorder %s19, 1
    %p79 = scmp.ne.s32.totalorder %s74, %s76
    %p80 = scmp.eq.s32.totalorder %s19, 0
    %p81 = por %p79, %p80
    %p82 = scmp.ne.s32.totalorder %s74, %s76
    %p83 = scmp.eq.s32.totalorder %s24, 1
    %p84 = por %p82, %p83
    %p85 = scmp.ne.s32.totalorder %s76, %s77
    %p86 = scmp.eq.s32.totalorder %s24, 0
    %p87 = por %p85, %p86
    %p88 = scmp.ne.s32.totalorder %s76, %s77
    %p89 = scmp.eq.s32.totalorder %s25, 1
    %p90 = por %p88, %p89
    %p92 = scmp.ne.s32.totalorder %s77, %s91
    %p93 = scmp.eq.s32.totalorder %s25, 0
    %p94 = por %p92, %p93
    %s96 = sadd.s32 %s95, 1
    %p99 = scmp.eq.s32.totalorder %s19, 1
    %p100 = scmp.ne.s32.totalorder %s95, %s97
    %p101 = scmp.eq.s32.totalorder %s19, 0
    %p102 = por %p100, %p101
    %p103 = scmp.ne.s32.totalorder %s95, %s97
    %p104 = scmp.eq.s32.totalorder %s24, 1
    %p105 = por %p103, %p104
    %p106 = scmp.ne.s32.totalorder %s97, %s98
    %p107 = scmp.eq.s32.totalorder %s24, 0
    %p108 = por %p106, %p107
    %p109 = scmp.ne.s32.totalorder %s97, %s98
    %p110 = scmp.eq.s32.totalorder %s25, 1
    %p111 = por %p109, %p110
    %p113 = scmp.ne.s32.totalorder %s98, %s112
    %p114 = scmp.eq.s32.totalorder %s25, 0
    %p115 = por %p113, %p114
    %s117 = sadd.s32 %s116, 1
    %p120 = scmp.eq.s32.totalorder %s19, 1
    %p121 = scmp.ne.s32.totalorder %s116, %s118
    %p122 = scmp.eq.s32.totalorder %s19, 0
    %p123 = por %p121, %p122
    %p124 = scmp.ne.s32.totalorder %s116, %s118
    %p125 = scmp.eq.s32.totalorder %s24, 1
    %p126 = por %p124, %p125
    %p127 = scmp.ne.s32.totalorder %s118, %s119
    %p128 = scmp.eq.s32.totalorder %s24, 0
    %p129 = por %p127, %p128
    %p130 = scmp.ne.s32.totalorder %s118, %s119
    %p131 = scmp.eq.s32.totalorder %s25, 1
    %p132 = por %p130, %p131
    %p134 = scmp.ne.s32.totalorder %s119, %s133
    %p135 = scmp.eq.s32.totalorder %s25, 0
    %p136 = por %p134, %p135
    %s138 = sadd.s32 %s137, 1
    %p141 = scmp.eq.s32.totalorder %s19, 1
    %p142 = scmp.ne.s32.totalorder %s137, %s139
    %p143 = scmp.eq.s32.totalorder %s19, 0
    %p144 = por %p142, %p143
    %p145 = scmp.ne.s32.totalorder %s137, %s139
    %p146 = scmp.eq.s32.totalorder %s24, 1
    %p147 = por %p145, %p146
    %p148 = scmp.ne.s32.totalorder %s139, %s140
    %p149 = scmp.eq.s32.totalorder %s24, 0
    %p150 = por %p148, %p149
    %p151 = scmp.ne.s32.totalorder %s139, %s140
    %p152 = scmp.eq.s32.totalorder %s25, 1
    %p153 = por %p151, %p152
    %p155 = scmp.ne.s32.totalorder %s140, %s154
    %p156 = scmp.eq.s32.totalorder %s25, 0
    %p157 = por %p155, %p156
    %s159 = sadd.s32 %s158, 1
    %p162 = scmp.eq.s32.totalorder %s19, 1
    %p163 = scmp.ne.s32.totalorder %s158, %s160
    %p164 = scmp.eq.s32.totalorder %s19, 0
    %p165 = por %p163, %p164
    %p166 = scmp.ne.s32.totalorder %s158, %s160
    %p167 = scmp.eq.s32.totalorder %s24, 1
    %p168 = por %p166, %p167
    %p169 = scmp.ne.s32.totalorder %s160, %s161
    %p170 = scmp.eq.s32.totalorder %s24, 0
    %p171 = por %p169, %p170
    %p172 = scmp.ne.s32.totalorder %s160, %s161
    %p173 = scmp.eq.s32.totalorder %s25, 1
    %p174 = por %p172, %p173
    %p176 = scmp.ne.s32.totalorder %s161, %s175
    %p177 = scmp.eq.s32.totalorder %s25, 0
    %p178 = por %p176, %p177
    %s180 = sadd.s32 %s179, 1
    %p183 = scmp.eq.s32.totalorder %s19, 1
    %p184 = scmp.ne.s32.totalorder %s179, %s181
    %p185 = scmp.eq.s32.totalorder %s19, 0
    %p186 = por %p184, %p185
    %p187 = scmp.ne.s32.totalorder %s179, %s181
    %p188 = scmp.eq.s32.totalorder %s24, 1
    %p189 = por %p187, %p188
    %p190 = scmp.ne.s32.totalorder %s181, %s182
    %p191 = scmp.eq.s32.totalorder %s24, 0
    %p192 = por %p190, %p191
    %p193 = scmp.ne.s32.totalorder %s181, %s182
    %p194 = scmp.eq.s32.totalorder %s25, 1
    %p195 = por %p193, %p194
    %p197 = scmp.ne.s32.totalorder %s182, %s196
    %p198 = scmp.eq.s32.totalorder %s25, 0
    %p199 = por %p197, %p198
    %s201 = sadd.s32 %s200, 1
    %p204 = scmp.eq.s32.totalorder %s19, 1
    %p205 = scmp.ne.s32.totalorder %s200, %s202
    %p206 = scmp.eq.s32.totalorder %s19, 0
    %p207 = por %p205, %p206
    %p208 = scmp.ne.s32.totalorder %s200, %s202
    %p209 = scmp.eq.s32.totalorder %s24, 1
    %p210 = por %p208, %p209
    %p211 = scmp.ne.s32.totalorder %s202, %s203
    %p212 = scmp.eq.s32.totalorder %s24, 0
    %p213 = por %p211, %p212
    %p214 = scmp.ne.s32.totalorder %s202, %s203
    %p215 = scmp.eq.s32.totalorder %s25, 1
    %p216 = por %p214, %p215
    %p218 = scmp.ne.s32.totalorder %s203, %s217
    %p219 = scmp.eq.s32.totalorder %s25, 0
    %p220 = por %p218, %p219
    %s222 = sadd.s32 %s221, 1
    %p225 = scmp.eq.s32.totalorder %s19, 1
    %p226 = scmp.ne.s32.totalorder %s221, %s223
    %p227 = scmp.eq.s32.totalorder %s19, 0
    %p228 = por %p226, %p227
    %p229 = scmp.ne.s32.totalorder %s221, %s223
    %p230 = scmp.eq.s32.totalorder %s24, 1
    %p231 = por %p229, %p230
    %p232 = scmp.ne.s32.totalorder %s223, %s224
    %p233 = scmp.eq.s32.totalorder %s24, 0
    %p234 = por %p232, %p233
    %p235 = scmp.ne.s32.totalorder %s223, %s224
    %p236 = scmp.eq.s32.totalorder %s25, 1
    %p237 = por %p235, %p236
    %p239 = scmp.ne.s32.totalorder %s224, %s238
    %p240 = scmp.eq.s32.totalorder %s25, 0
    %p241 = por %p239, %p240
    %s243 = sadd.s32 %s242, 1
    %p246 = scmp.eq.s32.totalorder %s19, 1
    %p247 = scmp.ne.s32.totalorder %s242, %s244
    %p248 = scmp.eq.s32.totalorder %s19, 0
    %p249 = por %p247, %p248
    %p250 = scmp.ne.s32.totalorder %s242, %s244
    %p251 = scmp.eq.s32.totalorder %s24, 1
    %p252 = por %p250, %p251
    %p253 = scmp.ne.s32.totalorder %s244, %s245
    %p254 = scmp.eq.s32.totalorder %s24, 0
    %p255 = por %p253, %p254
    %p256 = scmp.ne.s32.totalorder %s244, %s245
    %p257 = scmp.eq.s32.totalorder %s25, 1
    %p258 = por %p256, %p257
    %p260 = scmp.ne.s32.totalorder %s245, %s259
    %p261 = scmp.eq.s32.totalorder %s25, 0
    %p262 = por %p260, %p261
    %s264 = sadd.s32 %s263, 1
    %p267 = scmp.eq.s32.totalorder %s19, 1
    %p268 = scmp.ne.s32.totalorder %s263, %s265
    %p269 = scmp.eq.s32.totalorder %s19, 0
    %p270 = por %p268, %p269
    %p271 = scmp.ne.s32.totalorder %s263, %s265
    %p272 = scmp.eq.s32.totalorder %s24, 1
    %p273 = por %p271, %p272
    %p274 = scmp.ne.s32.totalorder %s265, %s266
    %p275 = scmp.eq.s32.totalorder %s24, 0
    %p276 = por %p274, %p275
    %p277 = scmp.ne.s32.totalorder %s265, %s266
    %p278 = scmp.eq.s32.totalorder %s25, 1
    %p279 = por %p277, %p278
    %p281 = scmp.ne.s32.totalorder %s266, %s280
    %p282 = scmp.eq.s32.totalorder %s25, 0
    %p283 = por %p281, %p282
    %s285 = sadd.s32 %s284, 1
    %p288 = scmp.eq.s32.totalorder %s19, 1
    %p289 = scmp.ne.s32.totalorder %s284, %s286
    %p290 = scmp.eq.s32.totalorder %s19, 0
    %p291 = por %p289, %p290
    %p292 = scmp.ne.s32.totalorder %s284, %s286
    %p293 = scmp.eq.s32.totalorder %s24, 1
    %p294 = por %p292, %p293
    %p295 = scmp.ne.s32.totalorder %s286, %s287
    %p296 = scmp.eq.s32.totalorder %s24, 0
    %p297 = por %p295, %p296
    %p298 = scmp.ne.s32.totalorder %s286, %s287
    %p299 = scmp.eq.s32.totalorder %s25, 1
    %p300 = por %p298, %p299
    %p302 = scmp.ne.s32.totalorder %s287, %s301
    %p303 = scmp.eq.s32.totalorder %s25, 0
    %p304 = por %p302, %p303
    %s305 = ssub.s32 %s19, %s26
    %p306 = scmp.eq.s32.totalorder %s305, 0
    %s308 = sadd.s32 %s307, 1
    %s309 = scalar_select %p306, %s307, %s308
    %p312 = pneg %p306
    %p313 = scmp.eq.s32.totalorder %s19, 1
    %p314 = por %p312, %p313
    %p315 = scmp.ne.s32.totalorder %s307, %s310
    %p316 = scmp.eq.s32.totalorder %s19, 0
    %p317 = por %p315, %p316
    %p318 = scmp.ne.s32.totalorder %s307, %s310
    %p319 = scmp.eq.s32.totalorder %s24, 1
    %p320 = por %p318, %p319
    %p321 = scmp.ne.s32.totalorder %s310, %s311
    %p322 = scmp.eq.s32.totalorder %s24, 0
    %p323 = por %p321, %p322
    %p324 = scmp.ne.s32.totalorder %s310, %s311
    %p325 = scmp.eq.s32.totalorder %s25, 1
    %p326 = por %p324, %p325
    %p328 = scmp.ne.s32.totalorder %s311, %s327
    %p329 = scmp.eq.s32.totalorder %s25, 0
    %p330 = por %p328, %p329
    %p331 = scmp.le.s32.totalorder 1, %s19
    %p332 = scmp.lt.s32.totalorder %s19, 3
    %p333 = pnand %p331, %p332
    %p334 = pneg %p333
    // Predicated region
    $region9: #{transformer_forward.6} parent=5 // pred_check
      _
    $region10: #{transformer_forward.6} parent=5 // pred_check_branch
      %336 = sbr.rel (%p333) target = $region12
    $region11: #{transformer_forward.6} parent=5 // pred_region
      %s337 = ssub.s32 %s19, 1
      // Predicated region
      $region13: #{transformer_forward.6} parent=11 // pred_check
        %p338 = pneg %p66
      $region14: #{transformer_forward.6} parent=11 // pred_check_branch
        %340 = sbr.rel (%p338) target = $region16
      $region15: #{transformer_forward.6} parent=11 // pred_region
        _
      $region16: #{transformer_forward.6} parent=11 // pred_fallthru
        _
      // Predicated region
      $region17: #{transformer_forward.6} parent=11 // pred_check
        %p341 = pneg %p87
      $region18: #{transformer_forward.6} parent=11 // pred_check_branch
        %343 = sbr.rel (%p341) target = $region20
      $region19: #{transformer_forward.6} parent=11 // pred_region
        _
      $region20: #{transformer_forward.6} parent=11 // pred_fallthru
        _
      // Predicated region
      $region21: #{transformer_forward.6} parent=11 // pred_check
        %p344 = pneg %p108
      $region22: #{transformer_forward.6} parent=11 // pred_check_branch
        %346 = sbr.rel (%p344) target = $region24
      $region23: #{transformer_forward.6} parent=11 // pred_region
        _
      $region24: #{transformer_forward.6} parent=11 // pred_fallthru
        _
      // Predicated region
      $region25: #{transformer_forward.6} parent=11 // pred_check
        %p347 = pneg %p129
      $region26: #{transformer_forward.6} parent=11 // pred_check_branch
        %349 = sbr.rel (%p347) target = $region28
      $region27: #{transformer_forward.6} parent=11 // pred_region
        _
      $region28: #{transformer_forward.6} parent=11 // pred_fallthru
        _
      // Predicated region
      $region29: #{transformer_forward.6} parent=11 // pred_check
        %p350 = pneg %p150
      $region30: #{transformer_forward.6} parent=11 // pred_check_branch
        %352 = sbr.rel (%p350) target = $region32
      $region31: #{transformer_forward.6} parent=11 // pred_region
        _
      $region32: #{transformer_forward.6} parent=11 // pred_fallthru
        _
      // Predicated region
      $region33: #{transformer_forward.6} parent=11 // pred_check
        %p353 = pneg %p171
      $region34: #{transformer_forward.6} parent=11 // pred_check_branch
        %355 = sbr.rel (%p353) target = $region36
      $region35: #{transformer_forward.6} parent=11 // pred_region
        _
      $region36: #{transformer_forward.6} parent=11 // pred_fallthru
        _
      // Predicated region
      $region37: #{transformer_forward.6} parent=11 // pred_check
        %p356 = pneg %p192
      $region38: #{transformer_forward.6} parent=11 // pred_check_branch
        %358 = sbr.rel (%p356) target = $region40
      $region39: #{transformer_forward.6} parent=11 // pred_region
        _
      $region40: #{transformer_forward.6} parent=11 // pred_fallthru
        _
      // Predicated region
      $region41: #{transformer_forward.6} parent=11 // pred_check
        %p359 = pneg %p213
      $region42: #{transformer_forward.6} parent=11 // pred_check_branch
        %361 = sbr.rel (%p359) target = $region44
      $region43: #{transformer_forward.6} parent=11 // pred_region
        _
      $region44: #{transformer_forward.6} parent=11 // pred_fallthru
        _
      // Predicated region
      $region45: #{transformer_forward.6} parent=11 // pred_check
        %p362 = pneg %p234
      $region46: #{transformer_forward.6} parent=11 // pred_check_branch
        %364 = sbr.rel (%p362) target = $region48
      $region47: #{transformer_forward.6} parent=11 // pred_region
        _
      $region48: #{transformer_forward.6} parent=11 // pred_fallthru
        _
      // Predicated region
      $region49: #{transformer_forward.6} parent=11 // pred_check
        %p365 = pneg %p255
      $region50: #{transformer_forward.6} parent=11 // pred_check_branch
        %367 = sbr.rel (%p365) target = $region52
      $region51: #{transformer_forward.6} parent=11 // pred_region
        _
      $region52: #{transformer_forward.6} parent=11 // pred_fallthru
        _
      // Predicated region
      $region53: #{transformer_forward.6} parent=11 // pred_check
        %p368 = pneg %p276
      $region54: #{transformer_forward.6} parent=11 // pred_check_branch
        %370 = sbr.rel (%p368) target = $region56
      $region55: #{transformer_forward.6} parent=11 // pred_region
        _
      $region56: #{transformer_forward.6} parent=11 // pred_fallthru
        _
      // Predicated region
      $region57: #{transformer_forward.6} parent=11 // pred_check
        %p371 = pneg %p297
      $region58: #{transformer_forward.6} parent=11 // pred_check_branch
        %373 = sbr.rel (%p371) target = $region60
      $region59: #{transformer_forward.6} parent=11 // pred_region
        _
      $region60: #{transformer_forward.6} parent=11 // pred_fallthru
        _
    $region12: #{transformer_forward.6} parent=5 // pred_fallthru
      _
    %p374 = scmp.lt.s32.totalorder %s19, 2
    // Predicated region
    $region61: #{transformer_forward.6} parent=5 // pred_check
      %p375 = pneg %p374
    $region62: #{transformer_forward.6} parent=5 // pred_check_branch
      %377 = sbr.rel (%p375) target = $region64
    $region63: #{transformer_forward.6} parent=5 // pred_region
      // Predicated region
      $region65: #{transformer_forward.6} parent=63 // pred_check
        %p378 = pneg %p39
      $region66: #{transformer_forward.6} parent=63 // pred_check_branch
        %380 = sbr.rel (%p378) target = $region68
      $region67: #{transformer_forward.6} parent=63 // pred_region
        %p381 = scmp.lt.s32.totalorder %s19, 1
        %s382 = scalar_select %p381, %s19, 1
        %s383 = smul.addr %s382, 8
        %s384 = scalar_lea.vmem %s0, %s383
      $region68: #{transformer_forward.6} parent=63 // pred_fallthru
        _
    $region64: #{transformer_forward.6} parent=5 // pred_fallthru
      _
    %p385 = scmp.le.s32.totalorder 1, %s19
    %p386 = scmp.lt.s32.totalorder %s19, 3
    %p387 = pnand %p385, %p386
    %p388 = pneg %p387
    // Predicated region
    $region69: #{transformer_forward.6} parent=5 // pred_check
      _
    $region70: #{transformer_forward.6} parent=5 // pred_check_branch
      %390 = sbr.rel (%p387) target = $region72
    $region71: #{transformer_forward.6} parent=5 // pred_region
      %s391 = ssub.s32 %s19, 1
      %p392 = scmp.lt.s32.totalorder %s24, 1
      %s393 = scalar_select %p392, %s24, 1
      %s394 = smul.addr %s393, 8
      %s395 = scalar_lea.vmem %s0, %s394
      %p396 = pneg %p45
      %p397 = pneg %p42
      %p398 = pneg %p66
      %p399 = pneg %p63
      %p400 = pneg %p87
      %p401 = pneg %p84
      %p402 = pneg %p108
      %p403 = pneg %p105
      %p404 = pneg %p129
      %p405 = pneg %p126
      %p406 = pneg %p150
      %p407 = pneg %p147
      %p408 = pneg %p171
      %p409 = pneg %p168
      %p410 = pneg %p192
      %p411 = pneg %p189
      %p412 = pneg %p213
      %p413 = pneg %p210
      %p414 = pneg %p234
      %p415 = pneg %p231
      %p416 = pneg %p255
      %p417 = pneg %p252
      %p418 = pneg %p276
      %p419 = pneg %p273
      %p420 = pneg %p297
      %p421 = pneg %p294
      %p422 = pneg %p323
      %p423 = pneg %p320
      %p424 = scmp.lt.s32.totalorder %s24, 1
      %s425 = scalar_select %p424, %s24, 1
      %s426 = smul.addr %s425, 8
      %s427 = scalar_lea.vmem %s13, %s426
      %p428 = scmp.lt.s32.totalorder %s24, 1
      %s429 = scalar_select %p428, %s24, 1
      %s430 = smul.addr %s429, 8
      %s431 = scalar_lea.vmem %s0, %s430
      %p432 = scmp.lt.s32.totalorder %s24, 1
      %s433 = scalar_select %p432, %s24, 1
      %s434 = smul.addr %s433, 8
      %s435 = scalar_lea.vmem %s13, %s434
      %v436 = vld [vmem:[%s431] sm:$0xff]
      %v437 = vld [vmem:[%s1] sm:$0x1]
      %v438 = vld [vmem:[%s2] sm:$0x1]
      %vm439 = vcmask 261120
      %v440 = vsel %vm439, %v436, 0.0
      %441 = vadd.xlane.f32.xlu0 %v440
      %v442 = vpop.xlane.xlu0 %441
      %v443 = vrcp.pop 32.0
      %v444 = vmul.f32 %v442, %v443
      %v445 = vsub.f32 %v436, %v444
      %v446 = vmul.f32 %v445, %v445
      %v447 = vsel %vm439, %v446, 0.0
      %448 = vadd.xlane.f32.xlu0 %v447
      %v449 = vpop.xlane.xlu0 %448
      %v450 = vmul.f32 %v449, 0.032258064
      %v451 = vrsqrt.pop %v450
      %v452 = vmul.f32 %v450, %v451
      %vm453 = vcmp.eq.f32.partialorder %v450, inf
      %v454 = vsel %vm453, %v450, %v452
      %vm455 = vcmp.eq.f32.partialorder %v450, 0.0
      %v456 = vand.u32 %v450, 2147483648
      %v457 = vsel %vm455, %v456, %v454
      %v458 = vadd.f32 %v457, 1e-06
      %v459 = vrcp.pop %v458
      %v460 = vmul.f32 %v445, %v459
      %v462 = vlaneseq
      %v463 = vshrl.u32 %v462, 7
      %v464 = vsub.s32 0, %v463
      %v465 = vrot.slane %v437, %v464
      %v467 = vmul.f32 %v465, %v460
      %v469 = vlaneseq
      %v470 = vshrl.u32 %v469, 7
      %v471 = vsub.s32 0, %v470
      %v472 = vrot.slane %v438, %v471
      %v474 = vadd.f32 %v467, %v472
      %v475 = vld [vmem:[%s5] sm:$0xff]
      %v476 = vld [vmem:[%s5 + $0x8] sm:$0xff]
      %v477 = vld [vmem:[%s5 + $0x10] sm:$0xff]
      %v478 = vld [vmem:[%s5 + $0x18] sm:$0xff]
      %v479 = vld [vmem:[%s6] sm:$0x1]
      %v481 = vlaneseq
      %v482 = vshrl.u32 %v481, 7
      %v483 = vsub.s32 0, %v482
      %v484 = vrot.slane %v479, %v483
      %v487 = vsel %vm439, %v474, 0
      %489 = vmatprep.subr.mxu0 0.0
      %490 = vmatpush1.msra.mxu0 %v475
      %491 = vmatprep.subr.mxu0 0.0
      %492 = vmatpush1.msra.mxu0 %v476
      %493 = vmatprep.subr.mxu0 0.0
      %494 = vmatpush1.msra.mxu0 %v477
      %495 = vmatprep.subr.mxu0 0.0
      %496 = vmatpush1.msra.mxu0 %v478
      %497 = vmatprep.subr.mxu0 0.0
      %498 = vmatpush1.msra.mxu0 0.0
      %499 = vmatprep.subr.mxu0 0.0
      %500 = vmatpush1.msra.mxu0 0.0
      %501 = vmatprep.subr.mxu0 0.0
      %502 = vmatpush1.msra.mxu0 0.0
      %503 = vmatprep.subr.mxu0 0.0
      %504 = vmatpush1.msra.mxu0 0.0
      %505 = vmatprep.subr.mxu0 0.0
      %506 = vmatpush1.msra.mxu0 0.0
      %507 = vmatprep.subr.mxu0 0.0
      %508 = vmatpush1.msra.mxu0 0.0
      %509 = vmatprep.subr.mxu0 0.0
      %510 = vmatpush1.msra.mxu0 0.0
      %511 = vmatprep.subr.mxu0 0.0
      %512 = vmatpush1.msra.mxu0 0.0
      %513 = vmatprep.subr.mxu0 0.0
      %514 = vmatpush1.msra.mxu0 0.0
      %515 = vmatprep.subr.mxu0 0.0
      %516 = vmatpush1.msra.mxu0 0.0
      %517 = vmatprep.subr.mxu0 0.0
      %518 = vmatpush1.msra.mxu0 0.0
      %519 = vmatprep.subr.mxu0 0.0
      %520 = vmatpush1.msra.mxu0 0.0
      %521 = vmatprep.subr.mxu0 0.0
      %522 = vmatpush1.msra.mxu0 0.0
      %523 = vmatprep.subr.mxu0 0.0
      %524 = vmatpush1.msra.mxu0 0.0
      %525 = vmatprep.subr.mxu0 0.0
      %526 = vmatpush1.msra.mxu0 0.0
      %527 = vmatprep.subr.mxu0 0.0
      %528 = vmatpush1.msra.mxu0 0.0
      %529 = vmatprep.subr.mxu0 0.0
      %530 = vmatpush1.msra.mxu0 0.0
      %531 = vmatprep.subr.mxu0 0.0
      %532 = vmatpush1.msra.mxu0 0.0
      %533 = vmatprep.subr.mxu0 0.0
      %534 = vmatpush1.msra.mxu0 0.0
      %535 = vmatprep.subr.mxu0 0.0
      %536 = vmatpush1.msra.mxu0 0.0
      %537 = vmatprep.subr.mxu0 0.0
      %538 = vmatpush1.msra.mxu0 0.0
      %539 = vmatprep.subr.mxu0 0.0
      %540 = vmatpush1.msra.mxu0 0.0
      %541 = vmatprep.subr.mxu0 0.0
      %542 = vmatpush1.msra.mxu0 0.0
      %543 = vmatprep.subr.mxu0 0.0
      %544 = vmatpush1.msra.mxu0 0.0
      %545 = vmatprep.subr.mxu0 0.0
      %546 = vmatpush1.msra.mxu0 0.0
      %547 = vmatprep.subr.mxu0 0.0
      %548 = vmatpush1.msra.mxu0 0.0
      %549 = vmatprep.subr.mxu0 0.0
      %550 = vmatpush1.msra.mxu0 0.0
      %551 = vmatprep.subr.mxu0 0.0
      %552 = vmatpush1.msra.mxu0 0.0
      %553 = vmatprep.mubr.f32.mxu0 0.0
      %554 = vmatmul.mubr.f32.gmra.mrb[0].mxu0 %v487
      %v555 = vpop.f32.mrb[0].mxu0
      %v556 = vadd.f32 %v484, %v555
      %v557 = vpop.f32.mrb[0].mxu0
      %558 = vdwg.mxu0
      %v559 = vld [vmem:[%s7] sm:$0xff]
      %v560 = vld [vmem:[%s7 + $0x8] sm:$0xff]
      %v561 = vld [vmem:[%s7 + $0x10] sm:$0xff]
      %v562 = vld [vmem:[%s7 + $0x18] sm:$0xff]
      %v563 = vld [vmem:[%s8] sm:$0x1]
      %v564 = vmul.f32 %v556, 0.35355338
      %566 = vrot.lane.b32.xlu0 %v556, 96
      %v567 = vpop.permute.xlu0 %566
      %vm568 = vcmask 64512
      %v570 = vsel %vm568, %v564, 0
      %v572 = vsel %vm568, %v567, 0
      %574 = vmatprep.subr.mxu0 0.0
      %575 = vmatpush1.xpose.msra.mxu0 %v572
      %576 = vmatprep.subr.mxu0 0.0
      %577 = vmatpush1.xpose.msra.mxu0 0.0
      %578 = vmatprep.subr.mxu0 0.0
      %579 = vmatpush1.xpose.msra.mxu0 0.0
      %580 = vmatprep.subr.mxu0 0.0
      %581 = vmatpush1.xpose.msra.mxu0 0.0
      %582 = vmatprep.subr.mxu0 0.0
      %583 = vmatpush1.xpose.msra.mxu0 0.0
      %584 = vmatprep.subr.mxu0 0.0
      %585 = vmatpush1.xpose.msra.mxu0 0.0
      %586 = vmatprep.subr.mxu0 0.0
      %587 = vmatpush1.xpose.msra.mxu0 0.0
      %588 = vmatprep.subr.mxu0 0.0
      %589 = vmatpush1.xpose.msra.mxu0 0.0
      %590 = vmatprep.subr.mxu0 0.0
      %591 = vmatpush1.xpose.msra.mxu0 0.0
      %592 = vmatprep.subr.mxu0 0.0
      %593 = vmatpush1.xpose.msra.mxu0 0.0
      %594 = vmatprep.subr.mxu0 0.0
      %595 = vmatpush1.xpose.msra.mxu0 0.0
      %596 = vmatprep.subr.mxu0 0.0
      %597 = vmatpush1.xpose.msra.mxu0 0.0
      %598 = vmatprep.subr.mxu0 0.0
      %599 = vmatpush1.xpose.msra.mxu0 0.0
      %600 = vmatprep.subr.mxu0 0.0
      %601 = vmatpush1.xpose.msra.mxu0 0.0
      %602 = vmatprep.subr.mxu0 0.0
      %603 = vmatpush1.xpose.msra.mxu0 0.0
      %604 = vmatprep.subr.mxu0 0.0
      %605 = vmatpush1.xpose.msra.mxu0 0.0
      %606 = vmatprep.subr.mxu0 0.0
      %607 = vmatpush1.xpose.msra.mxu0 0.0
      %608 = vmatprep.subr.mxu0 0.0
      %609 = vmatpush1.xpose.msra.mxu0 0.0
      %610 = vmatprep.subr.mxu0 0.0
      %611 = vmatpush1.xpose.msra.mxu0 0.0
      %612 = vmatprep.subr.mxu0 0.0
      %613 = vmatpush1.xpose.msra.mxu0 0.0
      %614 = vmatprep.subr.mxu0 0.0
      %615 = vmatpush1.xpose.msra.mxu0 0.0
      %616 = vmatprep.subr.mxu0 0.0
      %617 = vmatpush1.xpose.msra.mxu0 0.0
      %618 = vmatprep.subr.mxu0 0.0
      %619 = vmatpush1.xpose.msra.mxu0 0.0
      %620 = vmatprep.subr.mxu0 0.0
      %621 = vmatpush1.xpose.msra.mxu0 0.0
      %622 = vmatprep.subr.mxu0 0.0
      %623 = vmatpush1.xpose.msra.mxu0 0.0
      %624 = vmatprep.subr.mxu0 0.0
      %625 = vmatpush1.xpose.msra.mxu0 0.0
      %626 = vmatprep.subr.mxu0 0.0
      %627 = vmatpush1.xpose.msra.mxu0 0.0
      %628 = vmatprep.subr.mxu0 0.0
      %629 = vmatpush1.xpose.msra.mxu0 0.0
      %630 = vmatprep.subr.mxu0 0.0
      %631 = vmatpush1.xpose.msra.mxu0 0.0
      %632 = vmatprep.subr.mxu0 0.0
      %633 = vmatpush1.xpose.msra.mxu0 0.0
      %634 = vmatprep.subr.mxu0 0.0
      %635 = vmatpush1.xpose.msra.mxu0 0.0
      %636 = vmatprep.subr.mxu0 0.0
      %637 = vmatpush1.xpose.msra.mxu0 0.0
      %638 = vmatprep.mubr.f32.mxu0 0.0
      %639 = vmatmul.mubr.f32.gmra.mrb[0].mxu0 %v570
      %v640 = vpop.f32.mrb[0].mxu0
      %v641 = vadd.f32 0.0, %v640
      %v642 = vpop.f32.mrb[0].mxu0
      %643 = vdwg.mxu0
      %v644 = vsel %vm568, %v641, -inf
      %645 = vmax.xlane.f32.xlu0 %v644
      %v646 = vpop.xlane.xlu0 %645
      %v647 = vsub.f32 %v641, %v646
      %v648 = vmul.f32 %v647, 1.442695
      %v649 = vpow.pop %v648
      %v650 = vsel %vm568, %v649, 0.0
      %651 = vadd.xlane.f32.xlu0 %v650
      %v652 = vpop.xlane.xlu0 %651
      %v653 = vrcp.pop %v652
      %v654 = vmul.f32 %v649, %v653
      %655 = vrot.lane.b32.xlu0 %v556, 64
      %v656 = vpop.permute.xlu0 %655
      %v659 = vsel %vm568, %v654, 0
      %661 = vmatprep.subr.mxu0 0.0
      %662 = vmatpush1.msra.mxu0 %v656
      %663 = vmatprep.subr.mxu0 0.0
      %664 = vmatpush1.msra.mxu0 0.0
      %665 = vmatprep.subr.mxu0 0.0
      %666 = vmatpush1.msra.mxu0 0.0
      %667 = vmatprep.subr.mxu0 0.0
      %668 = vmatpush1.msra.mxu0 0.0
      %669 = vmatprep.subr.mxu0 0.0
      %670 = vmatpush1.msra.mxu0 0.0
      %671 = vmatprep.subr.mxu0 0.0
      %672 = vmatpush1.msra.mxu0 0.0
      %673 = vmatprep.subr.mxu0 0.0
      %674 = vmatpush1.msra.mxu0 0.0
      %675 = vmatprep.subr.mxu0 0.0
      %676 = vmatpush1.msra.mxu0 0.0
      %677 = vmatprep.subr.mxu0 0.0
      %678 = vmatpush1.msra.mxu0 0.0
      %679 = vmatprep.subr.mxu0 0.0
      %680 = vmatpush1.msra.mxu0 0.0
      %681 = vmatprep.subr.mxu0 0.0
      %682 = vmatpush1.msra.mxu0 0.0
      %683 = vmatprep.subr.mxu0 0.0
      %684 = vmatpush1.msra.mxu0 0.0
      %685 = vmatprep.subr.mxu0 0.0
      %686 = vmatpush1.msra.mxu0 0.0
      %687 = vmatprep.subr.mxu0 0.0
      %688 = vmatpush1.msra.mxu0 0.0
      %689 = vmatprep.subr.mxu0 0.0
      %690 = vmatpush1.msra.mxu0 0.0
      %691 = vmatprep.subr.mxu0 0.0
      %692 = vmatpush1.msra.mxu0 0.0
      %693 = vmatprep.subr.mxu0 0.0
      %694 = vmatpush1.msra.mxu0 0.0
      %695 = vmatprep.subr.mxu0 0.0
      %696 = vmatpush1.msra.mxu0 0.0
      %697 = vmatprep.subr.mxu0 0.0
      %698 = vmatpush1.msra.mxu0 0.0
      %699 = vmatprep.subr.mxu0 0.0
      %700 = vmatpush1.msra.mxu0 0.0
      %701 = vmatprep.subr.mxu0 0.0
      %702 = vmatpush1.msra.mxu0 0.0
      %703 = vmatprep.subr.mxu0 0.0
      %704 = vmatpush1.msra.mxu0 0.0
      %705 = vmatprep.subr.mxu0 0.0
      %706 = vmatpush1.msra.mxu0 0.0
      %707 = vmatprep.subr.mxu0 0.0
      %708 = vmatpush1.msra.mxu0 0.0
      %709 = vmatprep.subr.mxu0 0.0
      %710 = vmatpush1.msra.mxu0 0.0
      %711 = vmatprep.subr.mxu0 0.0
      %712 = vmatpush1.msra.mxu0 0.0
      %713 = vmatprep.subr.mxu0 0.0
      %714 = vmatpush1.msra.mxu0 0.0
      %715 = vmatprep.subr.mxu0 0.0
      %716 = vmatpush1.msra.mxu0 0.0
      %717 = vmatprep.subr.mxu0 0.0
      %718 = vmatpush1.msra.mxu0 0.0
      %719 = vmatprep.subr.mxu0 0.0
      %720 = vmatpush1.msra.mxu0 0.0
      %721 = vmatprep.subr.mxu0 0.0
      %722 = vmatpush1.msra.mxu0 0.0
      %723 = vmatprep.subr.mxu0 0.0
      %724 = vmatpush1.msra.mxu0 0.0
      %725 = vmatprep.mubr.f32.mxu0 0.0
      %726 = vmatmul.mubr.f32.gmra.mrb[0].mxu0 %v659
      %v727 = vpop.f32.mrb[0].mxu0
      %v728 = vadd.f32 0.0, %v727
      %v729 = vpop.f32.mrb[0].mxu0
      %730 = vdwg.mxu0
      %731 = vrot.lane.b32.xlu0 %v564, 120
      %v732 = vpop.permute.xlu0 %731
      %733 = vrot.lane.b32.xlu0 %v556, 88
      %v734 = vpop.permute.xlu0 %733
      %v735 = vsel %vm568, %v732, 0
      %v737 = vsel %vm568, %v734, 0
      %739 = vmatprep.subr.mxu0 0.0
      %740 = vmatpush1.xpose.msra.mxu0 %v737
      %741 = vmatprep.subr.mxu0 0.0
      %742 = vmatpush1.xpose.msra.mxu0 0.0
      %743 = vmatprep.subr.mxu0 0.0
      %744 = vmatpush1.xpose.msra.mxu0 0.0
      %745 = vmatprep.subr.mxu0 0.0
      %746 = vmatpush1.xpose.msra.mxu0 0.0
      %747 = vmatprep.subr.mxu0 0.0
      %748 = vmatpush1.xpose.msra.mxu0 0.0
      %749 = vmatprep.subr.mxu0 0.0
      %750 = vmatpush1.xpose.msra.mxu0 0.0
      %751 = vmatprep.subr.mxu0 0.0
      %752 = vmatpush1.xpose.msra.mxu0 0.0
      %753 = vmatprep.subr.mxu0 0.0
      %754 = vmatpush1.xpose.msra.mxu0 0.0
      %755 = vmatprep.subr.mxu0 0.0
      %756 = vmatpush1.xpose.msra.mxu0 0.0
      %757 = vmatprep.subr.mxu0 0.0
      %758 = vmatpush1.xpose.msra.mxu0 0.0
      %759 = vmatprep.subr.mxu0 0.0
      %760 = vmatpush1.xpose.msra.mxu0 0.0
      %761 = vmatprep.subr.mxu0 0.0
      %762 = vmatpush1.xpose.msra.mxu0 0.0
      %763 = vmatprep.subr.mxu0 0.0
      %764 = vmatpush1.xpose.msra.mxu0 0.0
      %765 = vmatprep.subr.mxu0 0.0
      %766 = vmatpush1.xpose.msra.mxu0 0.0
      %767 = vmatprep.subr.mxu0 0.0
      %768 = vmatpush1.xpose.msra.mxu0 0.0
      %769 = vmatprep.subr.mxu0 0.0
      %770 = vmatpush1.xpose.msra.mxu0 0.0
      %771 = vmatprep.subr.mxu0 0.0
      %772 = vmatpush1.xpose.msra.mxu0 0.0
      %773 = vmatprep.subr.mxu0 0.0
      %774 = vmatpush1.xpose.msra.mxu0 0.0
      %775 = vmatprep.subr.mxu0 0.0
      %776 = vmatpush1.xpose.msra.mxu0 0.0
      %777 = vmatprep.subr.mxu0 0.0
      %778 = vmatpush1.xpose.msra.mxu0 0.0
      %779 = vmatprep.subr.mxu0 0.0
      %780 = vmatpush1.xpose.msra.mxu0 0.0
      %781 = vmatprep.subr.mxu0 0.0
      %782 = vmatpush1.xpose.msra.mxu0 0.0
      %783 = vmatprep.subr.mxu0 0.0
      %784 = vmatpush1.xpose.msra.mxu0 0.0
      %785 = vmatprep.subr.mxu0 0.0
      %786 = vmatpush1.xpose.msra.mxu0 0.0
      %787 = vmatprep.subr.mxu0 0.0
      %788 = vmatpush1.xpose.msra.mxu0 0.0
      %789 = vmatprep.subr.mxu0 0.0
      %790 = vmatpush1.xpose.msra.mxu0 0.0
      %791 = vmatprep.subr.mxu0 0.0
      %792 = vmatpush1.xpose.msra.mxu0 0.0
      %793 = vmatprep.subr.mxu0 0.0
      %794 = vmatpush1.xpose.msra.mxu0 0.0
      %795 = vmatprep.subr.mxu0 0.0
      %796 = vmatpush1.xpose.msra.mxu0 0.0
      %797 = vmatprep.subr.mxu0 0.0
      %798 = vmatpush1.xpose.msra.mxu0 0.0
      %799 = vmatprep.subr.mxu0 0.0
      %800 = vmatpush1.xpose.msra.mxu0 0.0
      %801 = vmatprep.subr.mxu0 0.0
      %802 = vmatpush1.xpose.msra.mxu0 0.0
      %803 = vmatprep.mubr.f32.mxu0 0.0
      %804 = vmatmul.mubr.f32.gmra.mrb[0].mxu0 %v735
      %v805 = vpop.f32.mrb[0].mxu0
      %v806 = vadd.f32 0.0, %v805
      %v807 = vpop.f32.mrb[0].mxu0
      %808 = vdwg.mxu0
      %v809 = vsel %vm568, %v806, -inf
      %810 = vmax.xlane.f32.xlu0 %v809
      %v811 = vpop.xlane.xlu0 %810
      %v812 = vsub.f32 %v806, %v811
      %v813 = vmul.f32 %v812, 1.442695
      %v814 = vpow.pop %v813
      %v815 = vsel %vm568, %v814, 0.0
      %816 = vadd.xlane.f32.xlu0 %v815
      %v817 = vpop.xlane.xlu0 %816
      %v818 = vrcp.pop %v817
      %v819 = vmul.f32 %v814, %v818
      %820 = vrot.lane.b32.xlu0 %v556, 56
      %v821 = vpop.permute.xlu0 %820
      %v824 = vsel %vm568, %v819, 0
      %826 = vmatprep.subr.mxu0 0.0
      %827 = vmatpush1.msra.mxu0 %v821
      %828 = vmatprep.subr.mxu0 0.0
      %829 = vmatpush1.msra.mxu0 0.0
      %830 = vmatprep.subr.mxu0 0.0
      %831 = vmatpush1.msra.mxu0 0.0
      %832 = vmatprep.subr.mxu0 0.0
      %833 = vmatpush1.msra.mxu0 0.0
      %834 = vmatprep.subr.mxu0 0.0
      %835 = vmatpush1.msra.mxu0 0.0
      %836 = vmatprep.subr.mxu0 0.0
      %837 = vmatpush1.msra.mxu0 0.0
      %838 = vmatprep.subr.mxu0 0.0
      %839 = vmatpush1.msra.mxu0 0.0
      %840 = vmatprep.subr.mxu0 0.0
      %841 = vmatpush1.msra.mxu0 0.0
      %842 = vmatprep.subr.mxu0 0.0
      %843 = vmatpush1.msra.mxu0 0.0
      %844 = vmatprep.subr.mxu0 0.0
      %845 = vmatpush1.msra.mxu0 0.0
      %846 = vmatprep.subr.mxu0 0.0
      %847 = vmatpush1.msra.mxu0 0.0
      %848 = vmatprep.subr.mxu0 0.0
      %849 = vmatpush1.msra.mxu0 0.0
      %850 = vmatprep.subr.mxu0 0.0
      %851 = vmatpush1.msra.mxu0 0.0
      %852 = vmatprep.subr.mxu0 0.0
      %853 = vmatpush1.msra.mxu0 0.0
      %854 = vmatprep.subr.mxu0 0.0
      %855 = vmatpush1.msra.mxu0 0.0
      %856 = vmatprep.subr.mxu0 0.0
      %857 = vmatpush1.msra.mxu0 0.0
      %858 = vmatprep.subr.mxu0 0.0
      %859 = vmatpush1.msra.mxu0 0.0
      %860 = vmatprep.subr.mxu0 0.0
      %861 = vmatpush1.msra.mxu0 0.0
      %862 = vmatprep.subr.mxu0 0.0
      %863 = vmatpush1.msra.mxu0 0.0
      %864 = vmatprep.subr.mxu0 0.0
      %865 = vmatpush1.msra.mxu0 0.0
      %866 = vmatprep.subr.mxu0 0.0
      %867 = vmatpush1.msra.mxu0 0.0
      %868 = vmatprep.subr.mxu0 0.0
      %869 = vmatpush1.msra.mxu0 0.0
      %870 = vmatprep.subr.mxu0 0.0
      %871 = vmatpush1.msra.mxu0 0.0
      %872 = vmatprep.subr.mxu0 0.0
      %873 = vmatpush1.msra.mxu0 0.0
      %874 = vmatprep.subr.mxu0 0.0
      %875 = vmatpush1.msra.mxu0 0.0
      %876 = vmatprep.subr.mxu0 0.0
      %877 = vmatpush1.msra.mxu0 0.0
      %878 = vmatprep.subr.mxu0 0.0
      %879 = vmatpush1.msra.mxu0 0.0
      %880 = vmatprep.subr.mxu0 0.0
      %881 = vmatpush1.msra.mxu0 0.0
      %882 = vmatprep.subr.mxu0 0.0
      %883 = vmatpush1.msra.mxu0 0.0
      %884 = vmatprep.subr.mxu0 0.0
      %885 = vmatpush1.msra.mxu0 0.0
      %886 = vmatprep.subr.mxu0 0.0
      %887 = vmatpush1.msra.mxu0 0.0
      %888 = vmatprep.subr.mxu0 0.0
      %889 = vmatpush1.msra.mxu0 0.0
      %890 = vmatprep.mubr.f32.mxu0 0.0
      %891 = vmatmul.mubr.f32.gmra.mrb[0].mxu0 %v824
      %v892 = vpop.f32.mrb[0].mxu0
      %v893 = vadd.f32 0.0, %v892
      %v894 = vpop.f32.mrb[0].mxu0
      %895 = vdwg.mxu0
      %v897 = vsel %vm568, %v893, 0
      %899 = vmatprep.subr.mxu0 0.0
      %900 = vmatpush1.msra.mxu0 %v560
      %901 = vmatprep.subr.mxu0 0.0
      %902 = vmatpush1.msra.mxu0 0.0
      %903 = vmatprep.subr.mxu0 0.0
      %904 = vmatpush1.msra.mxu0 0.0
      %905 = vmatprep.subr.mxu0 0.0
      %906 = vmatpush1.msra.mxu0 0.0
      %907 = vmatprep.subr.mxu0 0.0
      %908 = vmatpush1.msra.mxu0 0.0
      %909 = vmatprep.subr.mxu0 0.0
      %910 = vmatpush1.msra.mxu0 0.0
      %911 = vmatprep.subr.mxu0 0.0
      %912 = vmatpush1.msra.mxu0 0.0
      %913 = vmatprep.subr.mxu0 0.0
      %914 = vmatpush1.msra.mxu0 0.0
      %915 = vmatprep.subr.mxu0 0.0
      %916 = vmatpush1.msra.mxu0 0.0
      %917 = vmatprep.subr.mxu0 0.0
      %918 = vmatpush1.msra.mxu0 0.0
      %919 = vmatprep.subr.mxu0 0.0
      %920 = vmatpush1.msra.mxu0 0.0
      %921 = vmatprep.subr.mxu0 0.0
      %922 = vmatpush1.msra.mxu0 0.0
      %923 = vmatprep.subr.mxu0 0.0
      %924 = vmatpush1.msra.mxu0 0.0
      %925 = vmatprep.subr.mxu0 0.0
      %926 = vmatpush1.msra.mxu0 0.0
      %927 = vmatprep.subr.mxu0 0.0
      %928 = vmatpush1.msra.mxu0 0.0
      %929 = vmatprep.subr.mxu0 0.0
      %930 = vmatpush1.msra.mxu0 0.0
      %931 = vmatprep.subr.mxu0 0.0
      %932 = vmatpush1.msra.mxu0 0.0
      %933 = vmatprep.subr.mxu0 0.0
      %934 = vmatpush1.msra.mxu0 0.0
      %935 = vmatprep.subr.mxu0 0.0
      %936 = vmatpush1.msra.mxu0 0.0
      %937 = vmatprep.subr.mxu0 0.0
      %938 = vmatpush1.msra.mxu0 0.0
      %939 = vmatprep.subr.mxu0 0.0
      %940 = vmatpush1.msra.mxu0 0.0
      %941 = vmatprep.subr.mxu0 0.0
      %942 = vmatpush1.msra.mxu0 0.0
      %943 = vmatprep.subr.mxu0 0.0
      %944 = vmatpush1.msra.mxu0 0.0
      %945 = vmatprep.subr.mxu0 0.0
      %946 = vmatpush1.msra.mxu0 0.0
      %947 = vmatprep.subr.mxu0 0.0
      %948 = vmatpush1.msra.mxu0 0.0
      %949 = vmatprep.subr.mxu0 0.0
      %950 = vmatpush1.msra.mxu0 0.0
      %951 = vmatprep.subr.mxu0 0.0
      %952 = vmatpush1.msra.mxu0 0.0
      %953 = vmatprep.subr.mxu0 0.0
      %954 = vmatpush1.msra.mxu0 0.0
      %955 = vmatprep.subr.mxu0 0.0
      %956 = vmatpush1.msra.mxu0 0.0
      %957 = vmatprep.subr.mxu0 0.0
      %958 = vmatpush1.msra.mxu0 0.0
      %959 = vmatprep.subr.mxu0 0.0
      %960 = vmatpush1.msra.mxu0 0.0
      %961 = vmatprep.subr.mxu0 0.0
      %962 = vmatpush1.msra.mxu0 0.0
      %963 = vmatprep.mubr.f32.mxu0 0.0
      %964 = vmatmul.mubr.f32.gmra.mrb[0].mxu0 %v897
      %v965 = vpop.f32.mrb[0].mxu0
      %v966 = vadd.f32 0.0, %v965
      %v967 = vpop.f32.mrb[0].mxu0
      %968 = vdwg.mxu0
      %v970 = vsel %vm568, %v728, 0
      %972 = vmatprep.subr.mxu0 0.0
      %973 = vmatpush1.msra.mxu0 %v559
      %974 = vmatprep.subr.mxu0 0.0
      %975 = vmatpush1.msra.mxu0 0.0
      %976 = vmatprep.subr.mxu0 0.0
      %977 = vmatpush1.msra.mxu0 0.0
      %978 = vmatprep.subr.mxu0 0.0
      %979 = vmatpush1.msra.mxu0 0.0
      %980 = vmatprep.subr.mxu0 0.0
      %981 = vmatpush1.msra.mxu0 0.0
      %982 = vmatprep.subr.mxu0 0.0
      %983 = vmatpush1.msra.mxu0 0.0
      %984 = vmatprep.subr.mxu0 0.0
      %985 = vmatpush1.msra.mxu0 0.0
      %986 = vmatprep.subr.mxu0 0.0
      %987 = vmatpush1.msra.mxu0 0.0
      %988 = vmatprep.subr.mxu0 0.0
      %989 = vmatpush1.msra.mxu0 0.0
      %990 = vmatprep.subr.mxu0 0.0
      %991 = vmatpush1.msra.mxu0 0.0
      %992 = vmatprep.subr.mxu0 0.0
      %993 = vmatpush1.msra.mxu0 0.0
      %994 = vmatprep.subr.mxu0 0.0
      %995 = vmatpush1.msra.mxu0 0.0
      %996 = vmatprep.subr.mxu0 0.0
      %997 = vmatpush1.msra.mxu0 0.0
      %998 = vmatprep.subr.mxu0 0.0
      %999 = vmatpush1.msra.mxu0 0.0
      %1000 = vmatprep.subr.mxu0 0.0
      %1001 = vmatpush1.msra.mxu0 0.0
      %1002 = vmatprep.subr.mxu0 0.0
      %1003 = vmatpush1.msra.mxu0 0.0
      %1004 = vmatprep.subr.mxu0 0.0
      %1005 = vmatpush1.msra.mxu0 0.0
      %1006 = vmatprep.subr.mxu0 0.0
      %1007 = vmatpush1.msra.mxu0 0.0
      %1008 = vmatprep.subr.mxu0 0.0
      %1009 = vmatpush1.msra.mxu0 0.0
      %1010 = vmatprep.subr.mxu0 0.0
      %1011 = vmatpush1.msra.mxu0 0.0
      %1012 = vmatprep.subr.mxu0 0.0
      %1013 = vmatpush1.msra.mxu0 0.0
      %1014 = vmatprep.subr.mxu0 0.0
      %1015 = vmatpush1.msra.mxu0 0.0
      %1016 = vmatprep.subr.mxu0 0.0
      %1017 = vmatpush1.msra.mxu0 0.0
      %1018 = vmatprep.subr.mxu0 0.0
      %1019 = vmatpush1.msra.mxu0 0.0
      %1020 = vmatprep.subr.mxu0 0.0
      %1021 = vmatpush1.msra.mxu0 0.0
      %1022 = vmatprep.subr.mxu0 0.0
      %1023 = vmatpush1.msra.mxu0 0.0
      %1024 = vmatprep.subr.mxu0 0.0
      %1025 = vmatpush1.msra.mxu0 0.0
      %1026 = vmatprep.subr.mxu0 0.0
      %1027 = vmatpush1.msra.mxu0 0.0
      %1028 = vmatprep.subr.mxu0 0.0
      %1029 = vmatpush1.msra.mxu0 0.0
      %1030 = vmatprep.subr.mxu0 0.0
      %1031 = vmatpush1.msra.mxu0 0.0
      %1032 = vmatprep.subr.mxu0 0.0
      %1033 = vmatpush1.msra.mxu0 0.0
      %1034 = vmatprep.subr.mxu0 0.0
      %1035 = vmatpush1.msra.mxu0 0.0
      %1036 = vmatprep.mubr.f32.mxu0 0.0
      %1037 = vmatmul.mubr.f32.gmra.mrb[0].mxu0 %v970
      %v1038 = vpop.f32.mrb[0].mxu0
      %v1039 = vadd.f32 %v966, %v1038
      %v1040 = vpop.f32.mrb[0].mxu0
      %1041 = vdwg.mxu0
      %1042 = vrot.lane.b32.xlu0 %v564, 112
      %v1043 = vpop.permute.xlu0 %1042
      %1044 = vrot.lane.b32.xlu0 %v556, 80
      %v1045 = vpop.permute.xlu0 %1044
      %v1046 = vsel %vm568, %v1043, 0
      %v1048 = vsel %vm568, %v1045, 0
      %1050 = vmatprep.subr.mxu0 0.0
      %1051 = vmatpush1.xpose.msra.mxu0 %v1048
      %1052 = vmatprep.subr.mxu0 0.0
      %1053 = vmatpush1.xpose.msra.mxu0 0.0
      %1054 = vmatprep.subr.mxu0 0.0
      %1055 = vmatpush1.xpose.msra.mxu0 0.0
      %1056 = vmatprep.subr.mxu0 0.0
      %1057 = vmatpush1.xpose.msra.mxu0 0.0
      %1058 = vmatprep.subr.mxu0 0.0
      %1059 = vmatpush1.xpose.msra.mxu0 0.0
      %1060 = vmatprep.subr.mxu0 0.0
      %1061 = vmatpush1.xpose.msra.mxu0 0.0
      %1062 = vmatprep.subr.mxu0 0.0
      %1063 = vmatpush1.xpose.msra.mxu0 0.0
      %1064 = vmatprep.subr.mxu0 0.0
      %1065 = vmatpush1.xpose.msra.mxu0 0.0
      %1066 = vmatprep.subr.mxu0 0.0
      %1067 = vmatpush1.xpose.msra.mxu0 0.0
      %1068 = vmatprep.subr.mxu0 0.0
      %1069 = vmatpush1.xpose.msra.mxu0 0.0
      %1070 = vmatprep.subr.mxu0 0.0
      %1071 = vmatpush1.xpose.msra.mxu0 0.0
      %1072 = vmatprep.subr.mxu0 0.0
      %1073 = vmatpush1.xpose.msra.mxu0 0.0
      %1074 = vmatprep.subr.mxu0 0.0
      %1075 = vmatpush1.xpose.msra.mxu0 0.0
      %1076 = vmatprep.subr.mxu0 0.0
      %1077 = vmatpush1.xpose.msra.mxu0 0.0
      %1078 = vmatprep.subr.mxu0 0.0
      %1079 = vmatpush1.xpose.msra.mxu0 0.0
      %1080 = vmatprep.subr.mxu0 0.0
      %1081 = vmatpush1.xpose.msra.mxu0 0.0
      %1082 = vmatprep.subr.mxu0 0.0
      %1083 = vmatpush1.xpose.msra.mxu0 0.0
      %1084 = vmatprep.subr.mxu0 0.0
      %1085 = vmatpush1.xpose.msra.mxu0 0.0
      %1086 = vmatprep.subr.mxu0 0.0
      %1087 = vmatpush1.xpose.msra.mxu0 0.0
      %1088 = vmatprep.subr.mxu0 0.0
      %1089 = vmatpush1.xpose.msra.mxu0 0.0
      %1090 = vmatprep.subr.mxu0 0.0
      %1091 = vmatpush1.xpose.msra.mxu0 0.0
      %1092 = vmatprep.subr.mxu0 0.0
      %1093 = vmatpush1.xpose.msra.mxu0 0.0
      %1094 = vmatprep.subr.mxu0 0.0
      %1095 = vmatpush1.xpose.msra.mxu0 0.0
      %1096 = vmatprep.subr.mxu0 0.0
      %1097 = vmatpush1.xpose.msra.mxu0 0.0
      %1098 = vmatprep.subr.mxu0 0.0
      %1099 = vmatpush1.xpose.msra.mxu0 0.0
      %1100 = vmatprep.subr.mxu0 0.0
      %1101 = vmatpush1.xpose.msra.mxu0 0.0
      %1102 = vmatprep.subr.mxu0 0.0
      %1103 = vmatpush1.xpose.msra.mxu0 0.0
      %1104 = vmatprep.subr.mxu0 0.0
      %1105 = vmatpush1.xpose.msra.mxu0 0.0
      %1106 = vmatprep.subr.mxu0 0.0
      %1107 = vmatpush1.xpose.msra.mxu0 0.0
      %1108 = vmatprep.subr.mxu0 0.0
      %1109 = vmatpush1.xpose.msra.mxu0 0.0
      %1110 = vmatprep.subr.mxu0 0.0
      %1111 = vmatpush1.xpose.msra.mxu0 0.0
      %1112 = vmatprep.subr.mxu0 0.0
      %1113 = vmatpush1.xpose.msra.mxu0 0.0
      %1114 = vmatprep.mubr.f32.mxu0 0.0
      %1115 = vmatmul.mubr.f32.gmra.mrb[0].mxu0 %v1046
      %v1116 = vpop.f32.mrb[0].mxu0
      %v1117 = vadd.f32 0.0, %v1116
      %v1118 = vpop.f32.mrb[0].mxu0
      %1119 = vdwg.mxu0
      %v1120 = vsel %vm568, %v1117, -inf
      %1121 = vmax.xlane.f32.xlu0 %v1120
      %v1122 = vpop.xlane.xlu0 %1121
      %v1123 = vsub.f32 %v1117, %v1122
      %v1124 = vmul.f32 %v1123, 1.442695
      %v1125 = vpow.pop %v1124
      %v1126 = vsel %vm568, %v1125, 0.0
      %1127 = vadd.xlane.f32.xlu0 %v1126
      %v1128 = vpop.xlane.xlu0 %1127
      %v1129 = vrcp.pop %v1128
      %v1130 = vmul.f32 %v1125, %v1129
      %1131 = vrot.lane.b32.xlu0 %v556, 48
      %v1132 = vpop.permute.xlu0 %1131
      %v1135 = vsel %vm568, %v1130, 0
      %1137 = vmatprep.subr.mxu0 0.0
      %1138 = vmatpush1.msra.mxu0 %v1132
      %1139 = vmatprep.subr.mxu0 0.0
      %1140 = vmatpush1.msra.mxu0 0.0
      %1141 = vmatprep.subr.mxu0 0.0
      %1142 = vmatpush1.msra.mxu0 0.0
      %1143 = vmatprep.subr.mxu0 0.0
      %1144 = vmatpush1.msra.mxu0 0.0
      %1145 = vmatprep.subr.mxu0 0.0
      %1146 = vmatpush1.msra.mxu0 0.0
      %1147 = vmatprep.subr.mxu0 0.0
      %1148 = vmatpush1.msra.mxu0 0.0
      %1149 = vmatprep.subr.mxu0 0.0
      %1150 = vmatpush1.msra.mxu0 0.0
      %1151 = vmatprep.subr.mxu0 0.0
      %1152 = vmatpush1.msra.mxu0 0.0
      %1153 = vmatprep.subr.mxu0 0.0
      %1154 = vmatpush1.msra.mxu0 0.0
      %1155 = vmatprep.subr.mxu0 0.0
      %1156 = vmatpush1.msra.mxu0 0.0
      %1157 = vmatprep.subr.mxu0 0.0
      %1158 = vmatpush1.msra.mxu0 0.0
      %1159 = vmatprep.subr.mxu0 0.0
      %1160 = vmatpush1.msra.mxu0 0.0
      %1161 = vmatprep.subr.mxu0 0.0
      %1162 = vmatpush1.msra.mxu0 0.0
      %1163 = vmatprep.subr.mxu0 0.0
      %1164 = vmatpush1.msra.mxu0 0.0
      %1165 = vmatprep.subr.mxu0 0.0
      %1166 = vmatpush1.msra.mxu0 0.0
      %1167 = vmatprep.subr.mxu0 0.0
      %1168 = vmatpush1.msra.mxu0 0.0
      %1169 = vmatprep.subr.mxu0 0.0
      %1170 = vmatpush1.msra.mxu0 0.0
      %1171 = vmatprep.subr.mxu0 0.0
      %1172 = vmatpush1.msra.mxu0 0.0
      %1173 = vmatprep.subr.mxu0 0.0
      %1174 = vmatpush1.msra.mxu0 0.0
      %1175 = vmatprep.subr.mxu0 0.0
      %1176 = vmatpush1.msra.mxu0 0.0
      %1177 = vmatprep.subr.mxu0 0.0
      %1178 = vmatpush1.msra.mxu0 0.0
      %1179 = vmatprep.subr.mxu0 0.0
      %1180 = vmatpush1.msra.mxu0 0.0
      %1181 = vmatprep.subr.mxu0 0.0
      %1182 = vmatpush1.msra.mxu0 0.0
      %1183 = vmatprep.subr.mxu0 0.0
      %1184 = vmatpush1.msra.mxu0 0.0
      %1185 = vmatprep.subr.mxu0 0.0
      %1186 = vmatpush1.msra.mxu0 0.0
      %1187 = vmatprep.subr.mxu0 0.0
      %1188 = vmatpush1.msra.mxu0 0.0
      %1189 = vmatprep.subr.mxu0 0.0
      %1190 = vmatpush1.msra.mxu0 0.0
      %1191 = vmatprep.subr.mxu0 0.0
      %1192 = vmatpush1.msra.mxu0 0.0
      %1193 = vmatprep.subr.mxu0 0.0
      %1194 = vmatpush1.msra.mxu0 0.0
      %1195 = vmatprep.subr.mxu0 0.0
      %1196 = vmatpush1.msra.mxu0 0.0
      %1197 = vmatprep.subr.mxu0 0.0
      %1198 = vmatpush1.msra.mxu0 0.0
      %1199 = vmatprep.subr.mxu0 0.0
      %1200 = vmatpush1.msra.mxu0 0.0
      %1201 = vmatprep.mubr.f32.mxu0 0.0
      %1202 = vmatmul.mubr.f32.gmra.mrb[0].mxu0 %v1135
      %v1203 = vpop.f32.mrb[0].mxu0
      %v1204 = vadd.f32 0.0, %v1203
      %v1205 = vpop.f32.mrb[0].mxu0
      %1206 = vdwg.mxu0
      %v1208 = vsel %vm568, %v1204, 0
      %1210 = vmatprep.subr.mxu0 0.0
      %1211 = vmatpush1.msra.mxu0 %v561
      %1212 = vmatprep.subr.mxu0 0.0
      %1213 = vmatpush1.msra.mxu0 0.0
      %1214 = vmatprep.subr.mxu0 0.0
      %1215 = vmatpush1.msra.mxu0 0.0
      %1216 = vmatprep.subr.mxu0 0.0
      %1217 = vmatpush1.msra.mxu0 0.0
      %1218 = vmatprep.subr.mxu0 0.0
      %1219 = vmatpush1.msra.mxu0 0.0
      %1220 = vmatprep.subr.mxu0 0.0
      %1221 = vmatpush1.msra.mxu0 0.0
      %1222 = vmatprep.subr.mxu0 0.0
      %1223 = vmatpush1.msra.mxu0 0.0
      %1224 = vmatprep.subr.mxu0 0.0
      %1225 = vmatpush1.msra.mxu0 0.0
      %1226 = vmatprep.subr.mxu0 0.0
      %1227 = vmatpush1.msra.mxu0 0.0
      %1228 = vmatprep.subr.mxu0 0.0
      %1229 = vmatpush1.msra.mxu0 0.0
      %1230 = vmatprep.subr.mxu0 0.0
      %1231 = vmatpush1.msra.mxu0 0.0
      %1232 = vmatprep.subr.mxu0 0.0
      %1233 = vmatpush1.msra.mxu0 0.0
      %1234 = vmatprep.subr.mxu0 0.0
      %1235 = vmatpush1.msra.mxu0 0.0
      %1236 = vmatprep.subr.mxu0 0.0
      %1237 = vmatpush1.msra.mxu0 0.0
      %1238 = vmatprep.subr.mxu0 0.0
      %1239 = vmatpush1.msra.mxu0 0.0
      %1240 = vmatprep.subr.mxu0 0.0
      %1241 = vmatpush1.msra.mxu0 0.0
      %1242 = vmatprep.subr.mxu0 0.0
      %1243 = vmatpush1.msra.mxu0 0.0
      %1244 = vmatprep.subr.mxu0 0.0
      %1245 = vmatpush1.msra.mxu0 0.0
      %1246 = vmatprep.subr.mxu0 0.0
      %1247 = vmatpush1.msra.mxu0 0.0
      %1248 = vmatprep.subr.mxu0 0.0
      %1249 = vmatpush1.msra.mxu0 0.0
      %1250 = vmatprep.subr.mxu0 0.0
      %1251 = vmatpush1.msra.mxu0 0.0
      %1252 = vmatprep.subr.mxu0 0.0
      %1253 = vmatpush1.msra.mxu0 0.0
      %1254 = vmatprep.subr.mxu0 0.0
      %1255 = vmatpush1.msra.mxu0 0.0
      %1256 = vmatprep.subr.mxu0 0.0
      %1257 = vmatpush1.msra.mxu0 0.0
      %1258 = vmatprep.subr.mxu0 0.0
      %1259 = vmatpush1.msra.mxu0 0.0
      %1260 = vmatprep.subr.mxu0 0.0
      %1261 = vmatpush1.msra.mxu0 0.0
      %1262 = vmatprep.subr.mxu0 0.0
      %1263 = vmatpush1.msra.mxu0 0.0
      %1264 = vmatprep.subr.mxu0 0.0
      %1265 = vmatpush1.msra.mxu0 0.0
      %1266 = vmatprep.subr.mxu0 0.0
      %1267 = vmatpush1.msra.mxu0 0.0
      %1268 = vmatprep.subr.mxu0 0.0
      %1269 = vmatpush1.msra.mxu0 0.0
      %1270 = vmatprep.subr.mxu0 0.0
      %1271 = vmatpush1.msra.mxu0 0.0
      %1272 = vmatprep.subr.mxu0 0.0
      %1273 = vmatpush1.msra.mxu0 0.0
      %1274 = vmatprep.mubr.f32.mxu0 0.0
      %1275 = vmatmul.mubr.f32.gmra.mrb[0].mxu0 %v1208
      %v1276 = vpop.f32.mrb[0].mxu0
      %v1277 = vadd.f32 0.0, %v1276
      %v1278 = vpop.f32.mrb[0].mxu0
      %1279 = vdwg.mxu0
      %v1280 = vadd.f32 %v1039, %v1277
      %1281 = vrot.lane.b32.xlu0 %v564, 104
      %v1282 = vpop.permute.xlu0 %1281
      %1283 = vrot.lane.b32.xlu0 %v556, 72
      %v1284 = vpop.permute.xlu0 %1283
      %v1285 = vsel %vm568, %v1282, 0
      %v1287 = vsel %vm568, %v1284, 0
      %1289 = vmatprep.subr.mxu0 0.0
      %1290 = vmatpush1.xpose.msra.mxu0 %v1287
      %1291 = vmatprep.subr.mxu0 0.0
      %1292 = vmatpush1.xpose.msra.mxu0 0.0
      %1293 = vmatprep.subr.mxu0 0.0
      %1294 = vmatpush1.xpose.msra.mxu0 0.0
      %1295 = vmatprep.subr.mxu0 0.0
      %1296 = vmatpush1.xpose.msra.mxu0 0.0
      %1297 = vmatprep.subr.mxu0 0.0
      %1298 = vmatpush1.xpose.msra.mxu0 0.0
      %1299 = vmatprep.subr.mxu0 0.0
      %1300 = vmatpush1.xpose.msra.mxu0 0.0
      %1301 = vmatprep.subr.mxu0 0.0
      %1302 = vmatpush1.xpose.msra.mxu0 0.0
      %1303 = vmatprep.subr.mxu0 0.0
      %1304 = vmatpush1.xpose.msra.mxu0 0.0
      %1305 = vmatprep.subr.mxu0 0.0
      %1306 = vmatpush1.xpose.msra.mxu0 0.0
      %1307 = vmatprep.subr.mxu0 0.0
      %1308 = vmatpush1.xpose.msra.mxu0 0.0
      %1309 = vmatprep.subr.mxu0 0.0
      %1310 = vmatpush1.xpose.msra.mxu0 0.0
      %1311 = vmatprep.subr.mxu0 0.0
      %1312 = vmatpush1.xpose.msra.mxu0 0.0
      %1313 = vmatprep.subr.mxu0 0.0
      %1314 = vmatpush1.xpose.msra.mxu0 0.0
      %1315 = vmatprep.subr.mxu0 0.0
      %1316 = vmatpush1.xpose.msra.mxu0 0.0
      %1317 = vmatprep.subr.mxu0 0.0
      %1318 = vmatpush1.xpose.msra.mxu0 0.0
      %1319 = vmatprep.subr.mxu0 0.0
      %1320 = vmatpush1.xpose.msra.mxu0 0.0
      %1321 = vmatprep.subr.mxu0 0.0
      %1322 = vmatpush1.xpose.msra.mxu0 0.0
      %1323 = vmatprep.subr.mxu0 0.0
      %1324 = vmatpush1.xpose.msra.mxu0 0.0
      %1325 = vmatprep.subr.mxu0 0.0
      %1326 = vmatpush1.xpose.msra.mxu0 0.0
      %1327 = vmatprep.subr.mxu0 0.0
      %1328 = vmatpush1.xpose.msra.mxu0 0.0
      %1329 = vmatprep.subr.mxu0 0.0
      %1330 = vmatpush1.xpose.msra.mxu0 0.0
      %1331 = vmatprep.subr.mxu0 0.0
      %1332 = vmatpush1.xpose.msra.mxu0 0.0
      %1333 = vmatprep.subr.mxu0 0.0
      %1334 = vmatpush1.xpose.msra.mxu0 0.0
      %1335 = vmatprep.subr.mxu0 0.0
      %1336 = vmatpush1.xpose.msra.mxu0 0.0
      %1337 = vmatprep.subr.mxu0 0.0
      %1338 = vmatpush1.xpose.msra.mxu0 0.0
      %1339 = vmatprep.subr.mxu0 0.0
      %1340 = vmatpush1.xpose.msra.mxu0 0.0
      %1341 = vmatprep.subr.mxu0 0.0
      %1342 = vmatpush1.xpose.msra.mxu0 0.0
      %1343 = vmatprep.subr.mxu0 0.0
      %1344 = vmatpush1.xpose.msra.mxu0 0.0
      %1345 = vmatprep.subr.mxu0 0.0
      %1346 = vmatpush1.xpose.msra.mxu0 0.0
      %1347 = vmatprep.subr.mxu0 0.0
      %1348 = vmatpush1.xpose.msra.mxu0 0.0
      %1349 = vmatprep.subr.mxu0 0.0
      %1350 = vmatpush1.xpose.msra.mxu0 0.0
      %1351 = vmatprep.subr.mxu0 0.0
      %1352 = vmatpush1.xpose.msra.mxu0 0.0
      %1353 = vmatprep.mubr.f32.mxu0 0.0
      %1354 = vmatmul.mubr.f32.gmra.mrb[0].mxu0 %v1285
      %v1355 = vpop.f32.mrb[0].mxu0
      %v1356 = vadd.f32 0.0, %v1355
      %v1357 = vpop.f32.mrb[0].mxu0
      %1358 = vdwg.mxu0
      %v1359 = vsel %vm568, %v1356, -inf
      %1360 = vmax.xlane.f32.xlu0 %v1359
      %v1361 = vpop.xlane.xlu0 %1360
      %v1362 = vsub.f32 %v1356, %v1361
      %v1363 = vmul.f32 %v1362, 1.442695
      %v1364 = vpow.pop %v1363
      %v1365 = vsel %vm568, %v1364, 0.0
      %1366 = vadd.xlane.f32.xlu0 %v1365
      %v1367 = vpop.xlane.xlu0 %1366
      %v1368 = vrcp.pop %v1367
      %v1369 = vmul.f32 %v1364, %v1368
      %1370 = vrot.lane.b32.xlu0 %v556, 40
      %v1371 = vpop.permute.xlu0 %1370
      %v1374 = vsel %vm568, %v1369, 0
      %1376 = vmatprep.subr.mxu0 0.0
      %1377 = vmatpush1.msra.mxu0 %v1371
      %1378 = vmatprep.subr.mxu0 0.0
      %1379 = vmatpush1.msra.mxu0 0.0
      %1380 = vmatprep.subr.mxu0 0.0
      %1381 = vmatpush1.msra.mxu0 0.0
      %1382 = vmatprep.subr.mxu0 0.0
      %1383 = vmatpush1.msra.mxu0 0.0
      %1384 = vmatprep.subr.mxu0 0.0
      %1385 = vmatpush1.msra.mxu0 0.0
      %1386 = vmatprep.subr.mxu0 0.0
      %1387 = vmatpush1.msra.mxu0 0.0
      %1388 = vmatprep.subr.mxu0 0.0
      %1389 = vmatpush1.msra.mxu0 0.0
      %1390 = vmatprep.subr.mxu0 0.0
      %1391 = vmatpush1.msra.mxu0 0.0
      %1392 = vmatprep.subr.mxu0 0.0
      %1393 = vmatpush1.msra.mxu0 0.0
      %1394 = vmatprep.subr.mxu0 0.0
      %1395 = vmatpush1.msra.mxu0 0.0
      %1396 = vmatprep.subr.mxu0 0.0
      %1397 = vmatpush1.msra.mxu0 0.0
      %1398 = vmatprep.subr.mxu0 0.0
      %1399 = vmatpush1.msra.mxu0 0.0
      %1400 = vmatprep.subr.mxu0 0.0
      %1401 = vmatpush1.msra.mxu0 0.0
      %1402 = vmatprep.subr.mxu0 0.0
      %1403 = vmatpush1.msra.mxu0 0.0
      %1404 = vmatprep.subr.mxu0 0.0
      %1405 = vmatpush1.msra.mxu0 0.0
      %1406 = vmatprep.subr.mxu0 0.0
      %1407 = vmatpush1.msra.mxu0 0.0
      %1408 = vmatprep.subr.mxu0 0.0
      %1409 = vmatpush1.msra.mxu0 0.0
      %1410 = vmatprep.subr.mxu0 0.0
      %1411 = vmatpush1.msra.mxu0 0.0
      %1412 = vmatprep.subr.mxu0 0.0
      %1413 = vmatpush1.msra.mxu0 0.0
      %1414 = vmatprep.subr.mxu0 0.0
      %1415 = vmatpush1.msra.mxu0 0.0
      %1416 = vmatprep.subr.mxu0 0.0
      %1417 = vmatpush1.msra.mxu0 0.0
      %1418 = vmatprep.subr.mxu0 0.0
      %1419 = vmatpush1.msra.mxu0 0.0
      %1420 = vmatprep.subr.mxu0 0.0
      %1421 = vmatpush1.msra.mxu0 0.0
      %1422 = vmatprep.subr.mxu0 0.0
      %1423 = vmatpush1.msra.mxu0 0.0
      %1424 = vmatprep.subr.mxu0 0.0
      %1425 = vmatpush1.msra.mxu0 0.0
      %1426 = vmatprep.subr.mxu0 0.0
      %1427 = vmatpush1.msra.mxu0 0.0
      %1428 = vmatprep.subr.mxu0 0.0
      %1429 = vmatpush1.msra.mxu0 0.0
      %1430 = vmatprep.subr.mxu0 0.0
      %1431 = vmatpush1.msra.mxu0 0.0
      %1432 = vmatprep.subr.mxu0 0.0
      %1433 = vmatpush1.msra.mxu0 0.0
      %1434 = vmatprep.subr.mxu0 0.0
      %1435 = vmatpush1.msra.mxu0 0.0
      %1436 = vmatprep.subr.mxu0 0.0
      %1437 = vmatpush1.msra.mxu0 0.0
      %1438 = vmatprep.subr.mxu0 0.0
      %1439 = vmatpush1.msra.mxu0 0.0
      %1440 = vmatprep.mubr.f32.mxu0 0.0
      %1441 = vmatmul.mubr.f32.gmra.mrb[0].mxu0 %v1374
      %v1442 = vpop.f32.mrb[0].mxu0
      %v1443 = vadd.f32 0.0, %v1442
      %v1444 = vpop.f32.mrb[0].mxu0
      %1445 = vdwg.mxu0
      %v1447 = vsel %vm568, %v1443, 0
      %1449 = vmatprep.subr.mxu0 0.0
      %1450 = vmatpush1.msra.mxu0 %v562
      %1451 = vmatprep.subr.mxu0 0.0
      %1452 = vmatpush1.msra.mxu0 0.0
      %1453 = vmatprep.subr.mxu0 0.0
      %1454 = vmatpush1.msra.mxu0 0.0
      %1455 = vmatprep.subr.mxu0 0.0
      %1456 = vmatpush1.msra.mxu0 0.0
      %1457 = vmatprep.subr.mxu0 0.0
      %1458 = vmatpush1.msra.mxu0 0.0
      %1459 = vmatprep.subr.mxu0 0.0
      %1460 = vmatpush1.msra.mxu0 0.0
      %1461 = vmatprep.subr.mxu0 0.0
      %1462 = vmatpush1.msra.mxu0 0.0
      %1463 = vmatprep.subr.mxu0 0.0
      %1464 = vmatpush1.msra.mxu0 0.0
      %1465 = vmatprep.subr.mxu0 0.0
      %1466 = vmatpush1.msra.mxu0 0.0
      %1467 = vmatprep.subr.mxu0 0.0
      %1468 = vmatpush1.msra.mxu0 0.0
      %1469 = vmatprep.subr.mxu0 0.0
      %1470 = vmatpush1.msra.mxu0 0.0
      %1471 = vmatprep.subr.mxu0 0.0
      %1472 = vmatpush1.msra.mxu0 0.0
      %1473 = vmatprep.subr.mxu0 0.0
      %1474 = vmatpush1.msra.mxu0 0.0
      %1475 = vmatprep.subr.mxu0 0.0
      %1476 = vmatpush1.msra.mxu0 0.0
      %1477 = vmatprep.subr.mxu0 0.0
      %1478 = vmatpush1.msra.mxu0 0.0
      %1479 = vmatprep.subr.mxu0 0.0
      %1480 = vmatpush1.msra.mxu0 0.0
      %1481 = vmatprep.subr.mxu0 0.0
      %1482 = vmatpush1.msra.mxu0 0.0
      %1483 = vmatprep.subr.mxu0 0.0
      %1484 = vmatpush1.msra.mxu0 0.0
      %1485 = vmatprep.subr.mxu0 0.0
      %1486 = vmatpush1.msra.mxu0 0.0
      %1487 = vmatprep.subr.mxu0 0.0
      %1488 = vmatpush1.msra.mxu0 0.0
      %1489 = vmatprep.subr.mxu0 0.0
      %1490 = vmatpush1.msra.mxu0 0.0
      %1491 = vmatprep.subr.mxu0 0.0
      %1492 = vmatpush1.msra.mxu0 0.0
      %1493 = vmatprep.subr.mxu0 0.0
      %1494 = vmatpush1.msra.mxu0 0.0
      %1495 = vmatprep.subr.mxu0 0.0
      %1496 = vmatpush1.msra.mxu0 0.0
      %1497 = vmatprep.subr.mxu0 0.0
      %1498 = vmatpush1.msra.mxu0 0.0
      %1499 = vmatprep.subr.mxu0 0.0
      %1500 = vmatpush1.msra.mxu0 0.0
      %1501 = vmatprep.subr.mxu0 0.0
      %1502 = vmatpush1.msra.mxu0 0.0
      %1503 = vmatprep.subr.mxu0 0.0
      %1504 = vmatpush1.msra.mxu0 0.0
      %1505 = vmatprep.subr.mxu0 0.0
      %1506 = vmatpush1.msra.mxu0 0.0
      %1507 = vmatprep.subr.mxu0 0.0
      %1508 = vmatpush1.msra.mxu0 0.0
      %1509 = vmatprep.subr.mxu0 0.0
      %1510 = vmatpush1.msra.mxu0 0.0
      %1511 = vmatprep.subr.mxu0 0.0
      %1512 = vmatpush1.msra.mxu0 0.0
      %1513 = vmatprep.mubr.f32.mxu0 0.0
      %1514 = vmatmul.mubr.f32.gmra.mrb[0].mxu0 %v1447
      %v1515 = vpop.f32.mrb[0].mxu0
      %v1516 = vadd.f32 0.0, %v1515
      %v1517 = vpop.f32.mrb[0].mxu0
      %1518 = vdwg.mxu0
      %v1519 = vadd.f32 %v1280, %v1516
      %v1521 = vlaneseq
      %v1522 = vshrl.u32 %v1521, 7
      %v1523 = vsub.s32 0, %v1522
      %v1524 = vrot.slane %v563, %v1523
      %v1526 = vadd.f32 %v1519, %v1524
      %v1527 = vadd.f32 %v436, %v1526
      %v1528 = vld [vmem:[%s3] sm:$0x1]
      %v1529 = vld [vmem:[%s4] sm:$0x1]
      %v1530 = vsel %vm439, %v1527, 0.0
      %1531 = vadd.xlane.f32.xlu0 %v1530
      %v1532 = vpop.xlane.xlu0 %1531
      %v1533 = vmul.f32 %v1532, %v443
      %v1534 = vsub.f32 %v1527, %v1533
      %v1535 = vmul.f32 %v1534, %v1534
      %v1536 = vsel %vm439, %v1535, 0.0
      %1537 = vadd.xlane.f32.xlu0 %v1536
      %v1538 = vpop.xlane.xlu0 %1537
      %v1539 = vmul.f32 %v1538, 0.032258064
      %v1540 = vrsqrt.pop %v1539
      %v1541 = vmul.f32 %v1539, %v1540
      %vm1542 = vcmp.eq.f32.partialorder %v1539, inf
      %v1543 = vsel %vm1542, %v1539, %v1541
      %vm1544 = vcmp.eq.f32.partialorder %v1539, 0.0
      %v1545 = vand.u32 %v1539, 2147483648
      %v1546 = vsel %vm1544, %v1545, %v1543
      %v1547 = vadd.f32 %v1546, 1e-06
      %v1548 = vrcp.pop %v1547
      %v1549 = vmul.f32 %v1534, %v1548
      %v1551 = vlaneseq
      %v1552 = vshrl.u32 %v1551, 7
      %v1553 = vsub.s32 0, %v1552
      %v1554 = vrot.slane %v1528, %v1553
      %v1556 = vmul.f32 %v1554, %v1549
      %v1558 = vlaneseq
      %v1559 = vshrl.u32 %v1558, 7
      %v1560 = vsub.s32 0, %v1559
      %v1561 = vrot.slane %v1529, %v1560
      %v1563 = vadd.f32 %v1556, %v1561
      %v1564 = vld [vmem:[%s9] sm:$0xff]
      %v1565 = vld [vmem:[%s9 + $0x8] sm:$0xff]
      %v1566 = vld [vmem:[%s9 + $0x10] sm:$0xff]
      %v1567 = vld [vmem:[%s9 + $0x18] sm:$0xff]
      %v1568 = vld [vmem:[%s10] sm:$0x1]
      %v1569 = vld [vmem:[%s11] sm:$0xff]
      %v1570 = vld [vmem:[%s11 + $0x8] sm:$0xff]
      %v1571 = vld [vmem:[%s11 + $0x10] sm:$0xff]
      %v1572 = vld [vmem:[%s11 + $0x18] sm:$0xff]
      %v1573 = vld [vmem:[%s11 + $0x20] sm:$0xff]
      %v1574 = vld [vmem:[%s11 + $0x28] sm:$0xff]
      %v1575 = vld [vmem:[%s11 + $0x30] sm:$0xff]
      %v1576 = vld [vmem:[%s11 + $0x38] sm:$0xff]
      %v1577 = vld [vmem:[%s12] sm:$0x1]
      %v1579 = vlaneseq
      %v1580 = vshrl.u32 %v1579, 7
      %v1581 = vsub.s32 0, %v1580
      %v1582 = vrot.slane %v1568, %v1581
      %v1585 = vsel %vm439, %v1563, 0
      %1587 = vmatprep.subr.mxu0 0.0
      %1588 = vmatpush1.msra.mxu0 %v1564
      %1589 = vmatprep.subr.mxu0 0.0
      %1590 = vmatpush1.msra.mxu0 %v1565
      %1591 = vmatprep.subr.mxu0 0.0
      %1592 = vmatpush1.msra.mxu0 %v1566
      %1593 = vmatprep.subr.mxu0 0.0
      %1594 = vmatpush1.msra.mxu0 %v1567
      %1595 = vmatprep.subr.mxu0 0.0
      %1596 = vmatpush1.msra.mxu0 0.0
      %1597 = vmatprep.subr.mxu0 0.0
      %1598 = vmatpush1.msra.mxu0 0.0
      %1599 = vmatprep.subr.mxu0 0.0
      %1600 = vmatpush1.msra.mxu0 0.0
      %1601 = vmatprep.subr.mxu0 0.0
      %1602 = vmatpush1.msra.mxu0 0.0
      %1603 = vmatprep.subr.mxu0 0.0
      %1604 = vmatpush1.msra.mxu0 0.0
      %1605 = vmatprep.subr.mxu0 0.0
      %1606 = vmatpush1.msra.mxu0 0.0
      %1607 = vmatprep.subr.mxu0 0.0
      %1608 = vmatpush1.msra.mxu0 0.0
      %1609 = vmatprep.subr.mxu0 0.0
      %1610 = vmatpush1.msra.mxu0 0.0
      %1611 = vmatprep.subr.mxu0 0.0
      %1612 = vmatpush1.msra.mxu0 0.0
      %1613 = vmatprep.subr.mxu0 0.0
      %1614 = vmatpush1.msra.mxu0 0.0
      %1615 = vmatprep.subr.mxu0 0.0
      %1616 = vmatpush1.msra.mxu0 0.0
      %1617 = vmatprep.subr.mxu0 0.0
      %1618 = vmatpush1.msra.mxu0 0.0
      %1619 = vmatprep.subr.mxu0 0.0
      %1620 = vmatpush1.msra.mxu0 0.0
      %1621 = vmatprep.subr.mxu0 0.0
      %1622 = vmatpush1.msra.mxu0 0.0
      %1623 = vmatprep.subr.mxu0 0.0
      %1624 = vmatpush1.msra.mxu0 0.0
      %1625 = vmatprep.subr.mxu0 0.0
      %1626 = vmatpush1.msra.mxu0 0.0
      %1627 = vmatprep.subr.mxu0 0.0
      %1628 = vmatpush1.msra.mxu0 0.0
      %1629 = vmatprep.subr.mxu0 0.0
      %1630 = vmatpush1.msra.mxu0 0.0
      %1631 = vmatprep.subr.mxu0 0.0
      %1632 = vmatpush1.msra.mxu0 0.0
      %1633 = vmatprep.subr.mxu0 0.0
      %1634 = vmatpush1.msra.mxu0 0.0
      %1635 = vmatprep.subr.mxu0 0.0
      %1636 = vmatpush1.msra.mxu0 0.0
      %1637 = vmatprep.subr.mxu0 0.0
      %1638 = vmatpush1.msra.mxu0 0.0
      %1639 = vmatprep.subr.mxu0 0.0
      %1640 = vmatpush1.msra.mxu0 0.0
      %1641 = vmatprep.subr.mxu0 0.0
      %1642 = vmatpush1.msra.mxu0 0.0
      %1643 = vmatprep.subr.mxu0 0.0
      %1644 = vmatpush1.msra.mxu0 0.0
      %1645 = vmatprep.subr.mxu0 0.0
      %1646 = vmatpush1.msra.mxu0 0.0
      %1647 = vmatprep.subr.mxu0 0.0
      %1648 = vmatpush1.msra.mxu0 0.0
      %1649 = vmatprep.subr.mxu0 0.0
      %1650 = vmatpush1.msra.mxu0 0.0
      %1651 = vmatprep.mubr.f32.mxu0 0.0
      %1652 = vmatmul.mubr.f32.gmra.mrb[0].mxu0 %v1585
      %v1653 = vpop.f32.mrb[0].mxu0
      %v1654 = vadd.f32 %v1582, %v1653
      %v1655 = vpop.f32.mrb[0].mxu0
      %1656 = vdwg.mxu0
      %v1657 = vmax.f32 %v1654, 0.0
      %v1659 = vlaneseq
      %v1660 = vshrl.u32 %v1659, 7
      %v1661 = vsub.s32 0, %v1660
      %v1662 = vrot.slane %v1577, %v1661
      %vm1664 = vcmask 523264
      %v1666 = vsel %vm1664, %v1657, 0
      %1668 = vmatprep.subr.mxu0 0.0
      %1669 = vmatpush1.msra.mxu0 %v1569
      %1670 = vmatprep.subr.mxu0 0.0
      %1671 = vmatpush1.msra.mxu0 %v1570
      %1672 = vmatprep.subr.mxu0 0.0
      %1673 = vmatpush1.msra.mxu0 %v1571
      %1674 = vmatprep.subr.mxu0 0.0
      %1675 = vmatpush1.msra.mxu0 %v1572
      %1676 = vmatprep.subr.mxu0 0.0
      %1677 = vmatpush1.msra.mxu0 %v1573
      %1678 = vmatprep.subr.mxu0 0.0
      %1679 = vmatpush1.msra.mxu0 %v1574
      %1680 = vmatprep.subr.mxu0 0.0
      %1681 = vmatpush1.msra.mxu0 %v1575
      %1682 = vmatprep.subr.mxu0 0.0
      %1683 = vmatpush1.msra.mxu0 %v1576
      %1684 = vmatprep.subr.mxu0 0.0
      %1685 = vmatpush1.msra.mxu0 0.0
      %1686 = vmatprep.subr.mxu0 0.0
      %1687 = vmatpush1.msra.mxu0 0.0
      %1688 = vmatprep.subr.mxu0 0.0
      %1689 = vmatpush1.msra.mxu0 0.0
      %1690 = vmatprep.subr.mxu0 0.0
      %1691 = vmatpush1.msra.mxu0 0.0
      %1692 = vmatprep.subr.mxu0 0.0
      %1693 = vmatpush1.msra.mxu0 0.0
      %1694 = vmatprep.subr.mxu0 0.0
      %1695 = vmatpush1.msra.mxu0 0.0
      %1696 = vmatprep.subr.mxu0 0.0
      %1697 = vmatpush1.msra.mxu0 0.0
      %1698 = vmatprep.subr.mxu0 0.0
      %1699 = vmatpush1.msra.mxu0 0.0
      %1700 = vmatprep.subr.mxu0 0.0
      %1701 = vmatpush1.msra.mxu0 0.0
      %1702 = vmatprep.subr.mxu0 0.0
      %1703 = vmatpush1.msra.mxu0 0.0
      %1704 = vmatprep.subr.mxu0 0.0
      %1705 = vmatpush1.msra.mxu0 0.0
      %1706 = vmatprep.subr.mxu0 0.0
      %1707 = vmatpush1.msra.mxu0 0.0
      %1708 = vmatprep.subr.mxu0 0.0
      %1709 = vmatpush1.msra.mxu0 0.0
      %1710 = vmatprep.subr.mxu0 0.0
      %1711 = vmatpush1.msra.mxu0 0.0
      %1712 = vmatprep.subr.mxu0 0.0
      %1713 = vmatpush1.msra.mxu0 0.0
      %1714 = vmatprep.subr.mxu0 0.0
      %1715 = vmatpush1.msra.mxu0 0.0
      %1716 = vmatprep.subr.mxu0 0.0
      %1717 = vmatpush1.msra.mxu0 0.0
      %1718 = vmatprep.subr.mxu0 0.0
      %1719 = vmatpush1.msra.mxu0 0.0
      %1720 = vmatprep.subr.mxu0 0.0
      %1721 = vmatpush1.msra.mxu0 0.0
      %1722 = vmatprep.subr.mxu0 0.0
      %1723 = vmatpush1.msra.mxu0 0.0
      %1724 = vmatprep.subr.mxu0 0.0
      %1725 = vmatpush1.msra.mxu0 0.0
      %1726 = vmatprep.subr.mxu0 0.0
      %1727 = vmatpush1.msra.mxu0 0.0
      %1728 = vmatprep.subr.mxu0 0.0
      %1729 = vmatpush1.msra.mxu0 0.0
      %1730 = vmatprep.subr.mxu0 0.0
      %1731 = vmatpush1.msra.mxu0 0.0
      %1732 = vmatprep.mubr.f32.mxu0 0.0
      %1733 = vmatmul.mubr.f32.gmra.mrb[0].mxu0 %v1666
      %v1734 = vpop.f32.mrb[0].mxu0
      %v1735 = vadd.f32 %v1662, %v1734
      %v1736 = vpop.f32.mrb[0].mxu0
      %1737 = vdwg.mxu0
      %v1738 = vadd.f32 %v1735, %v1563
      %1739 = vst.msk [vmem:[%s435] sm:$0xff] %vm439, %v1738
      %p1740 = scmp.lt.s32.totalorder %s24, 1
      %s1741 = scalar_select %p1740, %s24, 1
      %s1742 = smul.addr %s1741, 8
      %s1743 = scalar_lea.vmem %s13, %s1742
      // Predicated region
      $region73: #{transformer_forward.6} parent=71 // pred_check
        %p1744 = pneg %p320
      $region74: #{transformer_forward.6} parent=71 // pred_check_branch
        %1746 = sbr.rel (%p1744) target = $region76
      $region75: #{transformer_forward.6} parent=71 // pred_region
        _
      $region76: #{transformer_forward.6} parent=71 // pred_fallthru
        _
    $region72: #{transformer_forward.6} parent=5 // pred_fallthru
      _
    %p1747 = scmp.le.s32.totalorder 2, %s19
    // Predicated region
    $region77: #{transformer_forward.6} parent=5 // pred_check
      %p1748 = pneg %p1747
    $region78: #{transformer_forward.6} parent=5 // pred_check_branch
      %1750 = sbr.rel (%p1748) target = $region80
    $region79: #{transformer_forward.6} parent=5 // pred_region
      %s1751 = ssub.s32 %s19, 2
      // Predicated region
      $region81: #{transformer_forward.6} parent=79 // pred_check
        %p1752 = pneg %p326
      $region82: #{transformer_forward.6} parent=79 // pred_check_branch
        %1754 = sbr.rel (%p1752) target = $region84
      $region83: #{transformer_forward.6} parent=79 // pred_region
        %p1755 = scmp.lt.s32.totalorder %s25, 1
        %s1756 = scalar_select %p1755, %s25, 1
        %s1757 = smul.addr %s1756, 8
        %s1758 = scalar_lea.vmem %s13, %s1757
      $region84: #{transformer_forward.6} parent=79 // pred_fallthru
        _
    $region80: #{transformer_forward.6} parent=5 // pred_fallthru
      _
  $region6: #{transformer_forward.6} parent=0 // loop_footer
    %s23 = sadd.s32 1, %s19
  $region7: #{transformer_forward.6} parent=0 // loop_footer_branch
    %18 = sbr.rel target = $region3
  $region8: #{transformer_forward.6} parent=0 // loop_exit
    _

// kernel: transformer_forward.11
$region0: #{transformer_forward.11}
  #allocation0 [shape = 'u32[]', space=smem, size = 0x4, offset = 0x4, fixed_abs, tag = 'smem constant byte address 0x4 - core index']
  #allocation1 [shape = 'u32[144,128]{1,0:T(1,128)}', space=vmem, size = 0x12000, scoped, tag = 'internal scratch']
  %s0 = inlined_call_operand.vmem [shape: f32[16,32], index: 0, kind: input, shape index: {}]
  %s1 = inlined_call_operand.vmem [shape: f32[1,32], index: 1, kind: input, shape index: {}]
  %s2 = inlined_call_operand.vmem [shape: f32[1,32], index: 2, kind: input, shape index: {}]
  %s3 = inlined_call_operand.vmem [shape: f32[32,128], index: 3, kind: input, shape index: {}]
  %s4 = inlined_call_operand.vmem [shape: f32[1,128], index: 4, kind: input, shape index: {}]
  %s5 = inlined_call_operand.vmem [shape: f32[16,128], index: 5, kind: output, shape index: {}]
  %s6 = sld [smem:[#allocation0]]
  $region30: #{transformer_forward.11} parent=0
    _
  %s8 = ssub.s32 1, %s6
  %s9 = scalar_select 0, %s8, %s6
  // Predicated region
  $region2: #{transformer_forward.11} parent=0 // pred_check
    _
  $region3: #{transformer_forward.11} parent=0 // pred_check_branch
    %11 = sbr.rel (0) target = $region5
  $region4: #{transformer_forward.11} parent=0 // pred_region
    _
  $region5: #{transformer_forward.11} parent=0 // pred_fallthru
    _
  // Predicated region
  $region6: #{transformer_forward.11} parent=0 // pred_check
    _
  $region7: #{transformer_forward.11} parent=0 // pred_check_branch
    %13 = sbr.rel (0) target = $region9
  $region8: #{transformer_forward.11} parent=0 // pred_region
    _
  $region9: #{transformer_forward.11} parent=0 // pred_fallthru
    _
  // Predicated region
  $region10: #{transformer_forward.11} parent=0 // pred_check
    _
  $region11: #{transformer_forward.11} parent=0 // pred_check_branch
    %15 = sbr.rel (0) target = $region13
  $region12: #{transformer_forward.11} parent=0 // pred_region
    _
  $region13: #{transformer_forward.11} parent=0 // pred_fallthru
    _
  // Predicated region
  $region14: #{transformer_forward.11} parent=0 // pred_check
    _
  $region15: #{transformer_forward.11} parent=0 // pred_check_branch
    %17 = sbr.rel (0) target = $region17
  $region16: #{transformer_forward.11} parent=0 // pred_region
    _
  $region17: #{transformer_forward.11} parent=0 // pred_fallthru
    _
  // Predicated region
  $region18: #{transformer_forward.11} parent=0 // pred_check
    _
  $region19: #{transformer_forward.11} parent=0 // pred_check_branch
    %19 = sbr.rel (0) target = $region21
  $region20: #{transformer_forward.11} parent=0 // pred_region
    _
  $region21: #{transformer_forward.11} parent=0 // pred_fallthru
    _
  %v20 = vld [vmem:[%s0] sm:$0xff]
  %v21 = vld [vmem:[%s0 + $0x8] sm:$0xff]
  %v22 = vld [vmem:[%s1] sm:$0x1]
  %v23 = vld [vmem:[%s2] sm:$0x1]
  %vm24 = vcmask 261120
  %v25 = vsel %vm24, %v20, 0.0
  %26 = vadd.xlane.f32.xlu0 %v25
  %v27 = vpop.xlane.xlu0 %26
  %v28 = vsel %vm24, %v21, 0.0
  %29 = vadd.xlane.f32.xlu0 %v28
  %v30 = vpop.xlane.xlu0 %29
  %v31 = vrcp.pop 32.0
  %v32 = vmul.f32 %v27, %v31
  %v33 = vmul.f32 %v30, %v31
  %v34 = vsub.f32 %v20, %v32
  %v35 = vsub.f32 %v21, %v33
  %v36 = vmul.f32 %v34, %v34
  %v37 = vmul.f32 %v35, %v35
  %v38 = vsel %vm24, %v36, 0.0
  %39 = vadd.xlane.f32.xlu0 %v38
  %v40 = vpop.xlane.xlu0 %39
  %v41 = vsel %vm24, %v37, 0.0
  %42 = vadd.xlane.f32.xlu0 %v41
  %v43 = vpop.xlane.xlu0 %42
  %v44 = vmul.f32 %v40, 0.032258064
  %v45 = vmul.f32 %v43, 0.032258064
  %v46 = vrsqrt.pop %v44
  %v47 = vmul.f32 %v44, %v46
  %vm48 = vcmp.eq.f32.partialorder %v44, inf
  %v49 = vsel %vm48, %v44, %v47
  %vm50 = vcmp.eq.f32.partialorder %v44, 0.0
  %v51 = vand.u32 %v44, 2147483648
  %v52 = vsel %vm50, %v51, %v49
  %v53 = vrsqrt.pop %v45
  %v54 = vmul.f32 %v45, %v53
  %vm55 = vcmp.eq.f32.partialorder %v45, inf
  %v56 = vsel %vm55, %v45, %v54
  %vm57 = vcmp.eq.f32.partialorder %v45, 0.0
  %v58 = vand.u32 %v45, 2147483648
  %v59 = vsel %vm57, %v58, %v56
  %v60 = vadd.f32 %v52, 1e-06
  %v61 = vadd.f32 %v59, 1e-06
  %v62 = vrcp.pop %v60
  %v63 = vmul.f32 %v34, %v62
  %v64 = vrcp.pop %v61
  %v65 = vmul.f32 %v35, %v64
  %v67 = vlaneseq
  %v68 = vshrl.u32 %v67, 7
  %v69 = vsub.s32 0, %v68
  %v70 = vrot.slane %v22, %v69
  %v72 = vmul.f32 %v70, %v63
  %v73 = vmul.f32 %v70, %v65
  %v75 = vlaneseq
  %v76 = vshrl.u32 %v75, 7
  %v77 = vsub.s32 0, %v76
  %v78 = vrot.slane %v23, %v77
  %v80 = vadd.f32 %v72, %v78
  %v81 = vadd.f32 %v73, %v78
  %v82 = vld [vmem:[%s3] sm:$0xff]
  %v83 = vld [vmem:[%s3 + $0x8] sm:$0xff]
  %v84 = vld [vmem:[%s3 + $0x10] sm:$0xff]
  %v85 = vld [vmem:[%s3 + $0x18] sm:$0xff]
  %v86 = vld [vmem:[%s4] sm:$0x1]
  %v88 = vlaneseq
  %v89 = vshrl.u32 %v88, 7
  %v90 = vsub.s32 0, %v89
  %v91 = vrot.slane %v86, %v90
  %v94 = vsel %vm24, %v80, 0
  %v97 = vsel %vm24, %v81, 0
  %99 = vmatprep.subr.mxu0 0.0
  %100 = vmatpush1.msra.mxu0 %v82
  %101 = vmatprep.subr.mxu0 0.0
  %102 = vmatpush1.msra.mxu0 %v83
  %103 = vmatprep.subr.mxu0 0.0
  %104 = vmatpush1.msra.mxu0 %v84
  %105 = vmatprep.subr.mxu0 0.0
  %106 = vmatpush1.msra.mxu0 %v85
  %107 = vmatprep.subr.mxu0 0.0
  %108 = vmatpush1.msra.mxu0 0.0
  %109 = vmatprep.subr.mxu0 0.0
  %110 = vmatpush1.msra.mxu0 0.0
  %111 = vmatprep.subr.mxu0 0.0
  %112 = vmatpush1.msra.mxu0 0.0
  %113 = vmatprep.subr.mxu0 0.0
  %114 = vmatpush1.msra.mxu0 0.0
  %115 = vmatprep.subr.mxu0 0.0
  %116 = vmatpush1.msra.mxu0 0.0
  %117 = vmatprep.subr.mxu0 0.0
  %118 = vmatpush1.msra.mxu0 0.0
  %119 = vmatprep.subr.mxu0 0.0
  %120 = vmatpush1.msra.mxu0 0.0
  %121 = vmatprep.subr.mxu0 0.0
  %122 = vmatpush1.msra.mxu0 0.0
  %123 = vmatprep.subr.mxu0 0.0
  %124 = vmatpush1.msra.mxu0 0.0
  %125 = vmatprep.subr.mxu0 0.0
  %126 = vmatpush1.msra.mxu0 0.0
  %127 = vmatprep.subr.mxu0 0.0
  %128 = vmatpush1.msra.mxu0 0.0
  %129 = vmatprep.subr.mxu0 0.0
  %130 = vmatpush1.msra.mxu0 0.0
  %131 = vmatprep.subr.mxu0 0.0
  %132 = vmatpush1.msra.mxu0 0.0
  %133 = vmatprep.subr.mxu0 0.0
  %134 = vmatpush1.msra.mxu0 0.0
  %135 = vmatprep.subr.mxu0 0.0
  %136 = vmatpush1.msra.mxu0 0.0
  %137 = vmatprep.subr.mxu0 0.0
  %138 = vmatpush1.msra.mxu0 0.0
  %139 = vmatprep.subr.mxu0 0.0
  %140 = vmatpush1.msra.mxu0 0.0
  %141 = vmatprep.subr.mxu0 0.0
  %142 = vmatpush1.msra.mxu0 0.0
  %143 = vmatprep.subr.mxu0 0.0
  %144 = vmatpush1.msra.mxu0 0.0
  %145 = vmatprep.subr.mxu0 0.0
  %146 = vmatpush1.msra.mxu0 0.0
  %147 = vmatprep.subr.mxu0 0.0
  %148 = vmatpush1.msra.mxu0 0.0
  %149 = vmatprep.subr.mxu0 0.0
  %150 = vmatpush1.msra.mxu0 0.0
  %151 = vmatprep.subr.mxu0 0.0
  %152 = vmatpush1.msra.mxu0 0.0
  %153 = vmatprep.subr.mxu0 0.0
  %154 = vmatpush1.msra.mxu0 0.0
  %155 = vmatprep.subr.mxu0 0.0
  %156 = vmatpush1.msra.mxu0 0.0
  %157 = vmatprep.subr.mxu0 0.0
  %158 = vmatpush1.msra.mxu0 0.0
  %159 = vmatprep.subr.mxu0 0.0
  %160 = vmatpush1.msra.mxu0 0.0
  %161 = vmatprep.subr.mxu0 0.0
  %162 = vmatpush1.msra.mxu0 0.0
  %163 = vmatprep.mubr.f32.mxu0 0.0
  %164 = vmatmul.mubr.f32.gmra.mrb[0].mxu0 %v94
  %v165 = vpop.f32.mrb[0].mxu0
  %v166 = vadd.f32 %v91, %v165
  %v167 = vpop.f32.mrb[0].mxu0
  %168 = vmatprep.mubr.f32.mxu0 0.0
  %169 = vmatmul.mubr.f32.gmra.mrb[0].mxu0 %v97
  %v170 = vpop.f32.mrb[0].mxu0
  %v171 = vadd.f32 %v91, %v170
  %v172 = vpop.f32.mrb[0].mxu0
  %173 = vdwg.mxu0
  %v174 = vlaneseq
  %v175 = vand.u32 %v174, 127
  %vm176 = vcmp.lt.s32.totalorder %v175, 16
  %v177 = vsel %vm176, %v166, -1e+30
  %v178 = vsel %vm176, %v171, -1e+30
  %179 = vmax.xlane.f32.xlu0 %v177
  %v180 = vpop.xlane.xlu0 %179
  %181 = vmax.xlane.f32.xlu0 %v178
  %v182 = vpop.xlane.xlu0 %181
  %v183 = vsub.f32 %v177, %v180
  %v184 = vsub.f32 %v178, %v182
  %v185 = vmul.f32 %v183, 1.442695
  %v186 = vpow.pop %v185
  %v187 = vmul.f32 %v184, 1.442695
  %v188 = vpow.pop %v187
  %189 = vadd.xlane.f32.xlu0 %v186
  %v190 = vpop.xlane.xlu0 %189
  %191 = vadd.xlane.f32.xlu0 %v188
  %v192 = vpop.xlane.xlu0 %191
  %v193 = vrcp.pop %v190
  %v194 = vmul.f32 %v186, %v193
  %v195 = vrcp.pop %v192
  %v196 = vmul.f32 %v188, %v195
  %197 = vst [vmem:[%s5] sm:$0xff] %v194
  %198 = vst [vmem:[%s5 + $0x8] sm:$0xff] %v196
  // Predicated region
  $region22: #{transformer_forward.11} parent=0 // pred_check
    _
  $region23: #{transformer_forward.11} parent=0 // pred_check_branch
    %200 = sbr.rel (0) target = $region25
  $region24: #{transformer_forward.11} parent=0 // pred_region
    _
  $region25: #{transformer_forward.11} parent=0 // pred_fallthru
    _
  // Predicated region
  $region26: #{transformer_forward.11} parent=0 // pred_check
    _
  $region27: #{transformer_forward.11} parent=0 // pred_check_branch
    %202 = sbr.rel (0) target = $region29
  $region28: #{transformer_forward.11} parent=0 // pred_region
    _
  $region29: #{transformer_forward.11} parent=0 // pred_fallthru
    _

// kernel: transformer_forward.10
$region0: #{transformer_forward.10}
  #allocation0 [shape = 'u32[]', space=smem, size = 0x4, offset = 0x4, fixed_abs, tag = 'smem constant byte address 0x4 - core index']
  #allocation1 [shape = 'u32[144,128]{1,0:T(1,128)}', space=vmem, size = 0x12000, scoped, tag = 'internal scratch']
  %s0 = inlined_call_operand.vmem [shape: f32[2,8,32], index: 0, kind: input, shape index: {}]
  %s1 = inlined_call_operand.vmem [shape: f32[2,8,32], index: 1, kind: input, shape index: {}]
  %s2 = inlined_call_operand.vmem [shape: f32[1,32], index: 2, kind: input, shape index: {}]
  %s3 = inlined_call_operand.vmem [shape: f32[1,32], index: 3, kind: input, shape index: {}]
  %s4 = inlined_call_operand.vmem [shape: f32[1,32], index: 4, kind: input, shape index: {}]
  %s5 = inlined_call_operand.vmem [shape: f32[1,32], index: 5, kind: input, shape index: {}]
  %s6 = inlined_call_operand.vmem [shape: f32[1,32], index: 6, kind: input, shape index: {}]
  %s7 = inlined_call_operand.vmem [shape: f32[1,32], index: 7, kind: input, shape index: {}]
  %s8 = inlined_call_operand.vmem [shape: f32[32,96], index: 8, kind: input, shape index: {}]
  %s9 = inlined_call_operand.vmem [shape: f32[1,96], index: 9, kind: input, shape index: {}]
  %s10 = inlined_call_operand.vmem [shape: f32[32,32], index: 10, kind: input, shape index: {}]
  %s11 = inlined_call_operand.vmem [shape: f32[1,32], index: 11, kind: input, shape index: {}]
  %s12 = inlined_call_operand.vmem [shape: f32[32,32], index: 12, kind: input, shape index: {}]
  %s13 = inlined_call_operand.vmem [shape: f32[1,32], index: 13, kind: input, shape index: {}]
  %s14 = inlined_call_operand.vmem [shape: f32[32,64], index: 14, kind: input, shape index: {}]
  %s15 = inlined_call_operand.vmem [shape: f32[1,64], index: 15, kind: input, shape index: {}]
  %s16 = inlined_call_operand.vmem [shape: f32[32,32], index: 16, kind: input, shape index: {}]
  %s17 = inlined_call_operand.vmem [shape: f32[1,32], index: 17, kind: input, shape index: {}]
  %s18 = inlined_call_operand.vmem [shape: f32[32,64], index: 18, kind: input, shape index: {}]
  %s19 = inlined_call_operand.hbm [shape: f32[1,64], index: 19, kind: input, shape index: {}]
  %s20 = inlined_call_operand.vmem [shape: f32[64,32], index: 20, kind: input, shape index: {}]
  %s21 = inlined_call_operand.hbm [shape: f32[1,32], index: 21, kind: input, shape index: {}]
  %s22 = inlined_call_operand.vmem [shape: f32[2,8,32], index: 22, kind: output, shape index: {}]
  %s23 = sld [smem:[#allocation0]]
  $region129: #{transformer_forward.10} parent=0
    _
  %s25 = ssub.s32 1, %s23
  %s26 = scalar_select 0, %s25, %s23
  $region1: #{transformer_forward.10} parent=0
    #allocation2 [shape = 'u8[512]{0}', space=vmem, size = 0x400, scoped, tag = 'input window, operand 19, single buffered']
    #allocation3 [shape = 's32[2]{0}', space=sflag, size = 0x8, scoped, tag = 'scoped memory for transformer_forward.10']
    #allocation4 [shape = 'u8[512]{0}', space=vmem, size = 0x400, scoped, tag = 'input window, operand 21, single buffered']
    #allocation5 [shape = 's32[1]{0}', space=sflag, size = 0x4, scoped, tag = 'scoped memory for transformer_forward.10']
    %27 = vsyncpa [#allocation3], 0
    %28 = vsyncpa [#allocation5], 0
    loop: start=0, step=1, limit=4
    $region2: #{transformer_forward.10} parent=1 // loop_pre_header
      _
    $region3: #{transformer_forward.10} parent=1 // loop_header
      %s30 = sphi 0, %s34
      %p31 = scmp.ge.s32.totalorder %s30, 4
      %s40 = sphi 0, %s42
      %s43 = sphi 0, %s40
      %s44 = sphi 0, %s43
      %s60 = sphi 0, %s44
      %s66 = sphi 0, %s68
      %s69 = sphi 0, %s66
      %s70 = sphi 0, %s69
      %s86 = sphi 0, %s70
      %s90 = sphi 0, %s90
      %s92 = sphi 0, %s90
      %s93 = sphi 0, %s92
      %s107 = sphi 0, %s93
      %s111 = sphi 0, %s111
      %s113 = sphi 0, %s111
      %s114 = sphi 0, %s113
      %s128 = sphi 0, %s114
      %s132 = sphi 0, %s132
      %s134 = sphi 0, %s132
      %s135 = sphi 0, %s134
      %s149 = sphi 0, %s135
      %s153 = sphi 0, %s153
      %s155 = sphi 0, %s153
      %s156 = sphi 0, %s155
      %s170 = sphi 0, %s156
      %s174 = sphi 0, %s174
      %s176 = sphi 0, %s174
      %s177 = sphi 0, %s176
      %s191 = sphi 0, %s177
      %s195 = sphi 0, %s195
      %s197 = sphi 0, %s195
      %s198 = sphi 0, %s197
      %s212 = sphi 0, %s198
      %s216 = sphi 0, %s216
      %s218 = sphi 0, %s216
      %s219 = sphi 0, %s218
      %s233 = sphi 0, %s219
      %s237 = sphi 0, %s237
      %s239 = sphi 0, %s237
      %s240 = sphi 0, %s239
      %s254 = sphi 0, %s240
      %s258 = sphi 0, %s258
      %s260 = sphi 0, %s258
      %s261 = sphi 0, %s260
      %s275 = sphi 0, %s261
      %s279 = sphi 0, %s279
      %s281 = sphi 0, %s279
      %s282 = sphi 0, %s281
      %s296 = sphi 0, %s282
      %s300 = sphi 0, %s300
      %s302 = sphi 0, %s300
      %s303 = sphi 0, %s302
      %s317 = sphi 0, %s303
      %s321 = sphi 0, %s321
      %s323 = sphi 0, %s321
      %s324 = sphi 0, %s323
      %s338 = sphi 0, %s324
      %s342 = sphi 0, %s342
      %s344 = sphi 0, %s342
      %s345 = sphi 0, %s344
      %s359 = sphi 0, %s345
      %s363 = sphi 0, %s363
      %s365 = sphi 0, %s363
      %s366 = sphi 0, %s365
      %s380 = sphi 0, %s366
      %s384 = sphi 0, %s384
      %s386 = sphi 0, %s384
      %s387 = sphi 0, %s386
      %s401 = sphi 0, %s387
      %s405 = sphi 0, %s405
      %s407 = sphi 0, %s405
      %s408 = sphi 0, %s407
      %s422 = sphi 0, %s408
      %s426 = sphi 0, %s426
      %s428 = sphi 0, %s426
      %s429 = sphi 0, %s428
      %s443 = sphi 0, %s429
      %s447 = sphi 0, %s447
      %s449 = sphi 0, %s447
      %s450 = sphi 0, %s449
      %s464 = sphi 0, %s450
      %s468 = sphi 0, %s468
      %s470 = sphi 0, %s468
      %s471 = sphi 0, %s470
      %s485 = sphi 0, %s471
      %s489 = sphi 0, %s489
      %s491 = sphi 0, %s489
      %s492 = sphi 0, %s491
      %s506 = sphi 0, %s492
      %s512 = sphi 0, %s514
      %s515 = sphi 0, %s512
      %s516 = sphi 0, %s515
      %s532 = sphi 0, %s516
    $region4: #{transformer_forward.10} parent=1 // loop_header_branch
      %33 = sbr.rel (%p31) target = $region8
    $region5: #{transformer_forward.10} parent=1 // loop_body
      %s35 = ssub.s32 %s30, 1
      %s36 = ssub.s32 %s30, 2
      %s37 = sadd.s32 %s30, 1
      %s38 = ssub.s32 %s30, %s37
      %p39 = scmp.eq.s32.totalorder %s38, 0
      %s41 = sadd.s32 %s40, 1
      %s42 = scalar_select %p39, %s40, %s41
      %p45 = pneg %p39
      %p46 = scmp.eq.s32.totalorder %s30, 1
      %p47 = por %p45, %p46
      %p48 = scmp.ne.s32.totalorder %s40, %s43
      %p49 = scmp.eq.s32.totalorder %s30, 0
      %p50 = por %p48, %p49
      %p51 = scmp.ne.s32.totalorder %s40, %s43
      %p52 = scmp.eq.s32.totalorder %s35, 1
      %p53 = por %p51, %p52
      %p54 = scmp.ne.s32.totalorder %s43, %s44
      %p55 = scmp.eq.s32.totalorder %s35, 0
      %p56 = por %p54, %p55
      %p57 = scmp.ne.s32.totalorder %s43, %s44
      %p58 = scmp.eq.s32.totalorder %s36, 1
      %p59 = por %p57, %p58
      %p61 = scmp.ne.s32.totalorder %s44, %s60
      %p62 = scmp.eq.s32.totalorder %s36, 0
      %p63 = por %p61, %p62
      %s64 = ssub.s32 %s30, %s37
      %p65 = scmp.eq.s32.totalorder %s64, 0
      %s67 = sadd.s32 %s66, 1
      %s68 = scalar_select %p65, %s66, %s67
      %p71 = pneg %p65
      %p72 = scmp.eq.s32.totalorder %s30, 1
      %p73 = por %p71, %p72
      %p74 = scmp.ne.s32.totalorder %s66, %s69
      %p75 = scmp.eq.s32.totalorder %s30, 0
      %p76 = por %p74, %p75
      %p77 = scmp.ne.s32.totalorder %s66, %s69
      %p78 = scmp.eq.s32.totalorder %s35, 1
      %p79 = por %p77, %p78
      %p80 = scmp.ne.s32.totalorder %s69, %s70
      %p81 = scmp.eq.s32.totalorder %s35, 0
      %p82 = por %p80, %p81
      %p83 = scmp.ne.s32.totalorder %s69, %s70
      %p84 = scmp.eq.s32.totalorder %s36, 1
      %p85 = por %p83, %p84
      %p87 = scmp.ne.s32.totalorder %s70, %s86
      %p88 = scmp.eq.s32.totalorder %s36, 0
      %p89 = por %p87, %p88
      %s91 = sadd.s32 %s90, 1
      %p94 = scmp.eq.s32.totalorder %s30, 1
      %p95 = scmp.ne.s32.totalorder %s90, %s92
      %p96 = scmp.eq.s32.totalorder %s30, 0
      %p97 = por %p95, %p96
      %p98 = scmp.ne.s32.totalorder %s90, %s92
      %p99 = scmp.eq.s32.totalorder %s35, 1
      %p100 = por %p98, %p99
      %p101 = scmp.ne.s32.totalorder %s92, %s93
      %p102 = scmp.eq.s32.totalorder %s35, 0
      %p103 = por %p101, %p102
      %p104 = scmp.ne.s32.totalorder %s92, %s93
      %p105 = scmp.eq.s32.totalorder %s36, 1
      %p106 = por %p104, %p105
      %p108 = scmp.ne.s32.totalorder %s93, %s107
      %p109 = scmp.eq.s32.totalorder %s36, 0
      %p110 = por %p108, %p109
      %s112 = sadd.s32 %s111, 1
      %p115 = scmp.eq.s32.totalorder %s30, 1
      %p116 = scmp.ne.s32.totalorder %s111, %s113
      %p117 = scmp.eq.s32.totalorder %s30, 0
      %p118 = por %p116, %p117
      %p119 = scmp.ne.s32.totalorder %s111, %s113
      %p120 = scmp.eq.s32.totalorder %s35, 1
      %p121 = por %p119, %p120
      %p122 = scmp.ne.s32.totalorder %s113, %s114
      %p123 = scmp.eq.s32.totalorder %s35, 0
      %p124 = por %p122, %p123
      %p125 = scmp.ne.s32.totalorder %s113, %s114
      %p126 = scmp.eq.s32.totalorder %s36, 1
      %p127 = por %p125, %p126
      %p129 = scmp.ne.s32.totalorder %s114, %s128
      %p130 = scmp.eq.s32.totalorder %s36, 0
      %p131 = por %p129, %p130
      %s133 = sadd.s32 %s132, 1
      %p136 = scmp.eq.s32.totalorder %s30, 1
      %p137 = scmp.ne.s32.totalorder %s132, %s134
      %p138 = scmp.eq.s32.totalorder %s30, 0
      %p139 = por %p137, %p138
      %p140 = scmp.ne.s32.totalorder %s132, %s134
      %p141 = scmp.eq.s32.totalorder %s35, 1
      %p142 = por %p140, %p141
      %p143 = scmp.ne.s32.totalorder %s134, %s135
      %p144 = scmp.eq.s32.totalorder %s35, 0
      %p145 = por %p143, %p144
      %p146 = scmp.ne.s32.totalorder %s134, %s135
      %p147 = scmp.eq.s32.totalorder %s36, 1
      %p148 = por %p146, %p147
      %p150 = scmp.ne.s32.totalorder %s135, %s149
      %p151 = scmp.eq.s32.totalorder %s36, 0
      %p152 = por %p150, %p151
      %s154 = sadd.s32 %s153, 1
      %p157 = scmp.eq.s32.totalorder %s30, 1
      %p158 = scmp.ne.s32.totalorder %s153, %s155
      %p159 = scmp.eq.s32.totalorder %s30, 0
      %p160 = por %p158, %p159
      %p161 = scmp.ne.s32.totalorder %s153, %s155
      %p162 = scmp.eq.s32.totalorder %s35, 1
      %p163 = por %p161, %p162
      %p164 = scmp.ne.s32.totalorder %s155, %s156
      %p165 = scmp.eq.s32.totalorder %s35, 0
      %p166 = por %p164, %p165
      %p167 = scmp.ne.s32.totalorder %s155, %s156
      %p168 = scmp.eq.s32.totalorder %s36, 1
      %p169 = por %p167, %p168
      %p171 = scmp.ne.s32.totalorder %s156, %s170
      %p172 = scmp.eq.s32.totalorder %s36, 0
      %p173 = por %p171, %p172
      %s175 = sadd.s32 %s174, 1
      %p178 = scmp.eq.s32.totalorder %s30, 1
      %p179 = scmp.ne.s32.totalorder %s174, %s176
      %p180 = scmp.eq.s32.totalorder %s30, 0
      %p181 = por %p179, %p180
      %p182 = scmp.ne.s32.totalorder %s174, %s176
      %p183 = scmp.eq.s32.totalorder %s35, 1
      %p184 = por %p182, %p183
      %p185 = scmp.ne.s32.totalorder %s176, %s177
      %p186 = scmp.eq.s32.totalorder %s35, 0
      %p187 = por %p185, %p186
      %p188 = scmp.ne.s32.totalorder %s176, %s177
      %p189 = scmp.eq.s32.totalorder %s36, 1
      %p190 = por %p188, %p189
      %p192 = scmp.ne.s32.totalorder %s177, %s191
      %p193 = scmp.eq.s32.totalorder %s36, 0
      %p194 = por %p192, %p193
      %s196 = sadd.s32 %s195, 1
      %p199 = scmp.eq.s32.totalorder %s30, 1
      %p200 = scmp.ne.s32.totalorder %s195, %s197
      %p201 = scmp.eq.s32.totalorder %s30, 0
      %p202 = por %p200, %p201
      %p203 = scmp.ne.s32.totalorder %s195, %s197
      %p204 = scmp.eq.s32.totalorder %s35, 1
      %p205 = por %p203, %p204
      %p206 = scmp.ne.s32.totalorder %s197, %s198
      %p207 = scmp.eq.s32.totalorder %s35, 0
      %p208 = por %p206, %p207
      %p209 = scmp.ne.s32.totalorder %s197, %s198
      %p210 = scmp.eq.s32.totalorder %s36, 1
      %p211 = por %p209, %p210
      %p213 = scmp.ne.s32.totalorder %s198, %s212
      %p214 = scmp.eq.s32.totalorder %s36, 0
      %p215 = por %p213, %p214
      %s217 = sadd.s32 %s216, 1
      %p220 = scmp.eq.s32.totalorder %s30, 1
      %p221 = scmp.ne.s32.totalorder %s216, %s218
      %p222 = scmp.eq.s32.totalorder %s30, 0
      %p223 = por %p221, %p222
      %p224 = scmp.ne.s32.totalorder %s216, %s218
      %p225 = scmp.eq.s32.totalorder %s35, 1
      %p226 = por %p224, %p225
      %p227 = scmp.ne.s32.totalorder %s218, %s219
      %p228 = scmp.eq.s32.totalorder %s35, 0
      %p229 = por %p227, %p228
      %p230 = scmp.ne.s32.totalorder %s218, %s219
      %p231 = scmp.eq.s32.totalorder %s36, 1
      %p232 = por %p230, %p231
      %p234 = scmp.ne.s32.totalorder %s219, %s233
      %p235 = scmp.eq.s32.totalorder %s36, 0
      %p236 = por %p234, %p235
      %s238 = sadd.s32 %s237, 1
      %p241 = scmp.eq.s32.totalorder %s30, 1
      %p242 = scmp.ne.s32.totalorder %s237, %s239
      %p243 = scmp.eq.s32.totalorder %s30, 0
      %p244 = por %p242, %p243
      %p245 = scmp.ne.s32.totalorder %s237, %s239
      %p246 = scmp.eq.s32.totalorder %s35, 1
      %p247 = por %p245, %p246
      %p248 = scmp.ne.s32.totalorder %s239, %s240
      %p249 = scmp.eq.s32.totalorder %s35, 0
      %p250 = por %p248, %p249
      %p251 = scmp.ne.s32.totalorder %s239, %s240
      %p252 = scmp.eq.s32.totalorder %s36, 1
      %p253 = por %p251, %p252
      %p255 = scmp.ne.s32.totalorder %s240, %s254
      %p256 = scmp.eq.s32.totalorder %s36, 0
      %p257 = por %p255, %p256
      %s259 = sadd.s32 %s258, 1
      %p262 = scmp.eq.s32.totalorder %s30, 1
      %p263 = scmp.ne.s32.totalorder %s258, %s260
      %p264 = scmp.eq.s32.totalorder %s30, 0
      %p265 = por %p263, %p264
      %p266 = scmp.ne.s32.totalorder %s258, %s260
      %p267 = scmp.eq.s32.totalorder %s35, 1
      %p268 = por %p266, %p267
      %p269 = scmp.ne.s32.totalorder %s260, %s261
      %p270 = scmp.eq.s32.totalorder %s35, 0
      %p271 = por %p269, %p270
      %p272 = scmp.ne.s32.totalorder %s260, %s261
      %p273 = scmp.eq.s32.totalorder %s36, 1
      %p274 = por %p272, %p273
      %p276 = scmp.ne.s32.totalorder %s261, %s275
      %p277 = scmp.eq.s32.totalorder %s36, 0
      %p278 = por %p276, %p277
      %s280 = sadd.s32 %s279, 1
      %p283 = scmp.eq.s32.totalorder %s30, 1
      %p284 = scmp.ne.s32.totalorder %s279, %s281
      %p285 = scmp.eq.s32.totalorder %s30, 0
      %p286 = por %p284, %p285
      %p287 = scmp.ne.s32.totalorder %s279, %s281
      %p288 = scmp.eq.s32.totalorder %s35, 1
      %p289 = por %p287, %p288
      %p290 = scmp.ne.s32.totalorder %s281, %s282
      %p291 = scmp.eq.s32.totalorder %s35, 0
      %p292 = por %p290, %p291
      %p293 = scmp.ne.s32.totalorder %s281, %s282
      %p294 = scmp.eq.s32.totalorder %s36, 1
      %p295 = por %p293, %p294
      %p297 = scmp.ne.s32.totalorder %s282, %s296
      %p298 = scmp.eq.s32.totalorder %s36, 0
      %p299 = por %p297, %p298
      %s301 = sadd.s32 %s300, 1
      %p304 = scmp.eq.s32.totalorder %s30, 1
      %p305 = scmp.ne.s32.totalorder %s300, %s302
      %p306 = scmp.eq.s32.totalorder %s30, 0
      %p307 = por %p305, %p306
      %p308 = scmp.ne.s32.totalorder %s300, %s302
      %p309 = scmp.eq.s32.totalorder %s35, 1
      %p310 = por %p308, %p309
      %p311 = scmp.ne.s32.totalorder %s302, %s303
      %p312 = scmp.eq.s32.totalorder %s35, 0
      %p313 = por %p311, %p312
      %p314 = scmp.ne.s32.totalorder %s302, %s303
      %p315 = scmp.eq.s32.totalorder %s36, 1
      %p316 = por %p314, %p315
      %p318 = scmp.ne.s32.totalorder %s303, %s317
      %p319 = scmp.eq.s32.totalorder %s36, 0
      %p320 = por %p318, %p319
      %s322 = sadd.s32 %s321, 1
      %p325 = scmp.eq.s32.totalorder %s30, 1
      %p326 = scmp.ne.s32.totalorder %s321, %s323
      %p327 = scmp.eq.s32.totalorder %s30, 0
      %p328 = por %p326, %p327
      %p329 = scmp.ne.s32.totalorder %s321, %s323
      %p330 = scmp.eq.s32.totalorder %s35, 1
      %p331 = por %p329, %p330
      %p332 = scmp.ne.s32.totalorder %s323, %s324
      %p333 = scmp.eq.s32.totalorder %s35, 0
      %p334 = por %p332, %p333
      %p335 = scmp.ne.s32.totalorder %s323, %s324
      %p336 = scmp.eq.s32.totalorder %s36, 1
      %p337 = por %p335, %p336
      %p339 = scmp.ne.s32.totalorder %s324, %s338
      %p340 = scmp.eq.s32.totalorder %s36, 0
      %p341 = por %p339, %p340
      %s343 = sadd.s32 %s342, 1
      %p346 = scmp.eq.s32.totalorder %s30, 1
      %p347 = scmp.ne.s32.totalorder %s342, %s344
      %p348 = scmp.eq.s32.totalorder %s30, 0
      %p349 = por %p347, %p348
      %p350 = scmp.ne.s32.totalorder %s342, %s344
      %p351 = scmp.eq.s32.totalorder %s35, 1
      %p352 = por %p350, %p351
      %p353 = scmp.ne.s32.totalorder %s344, %s345
      %p354 = scmp.eq.s32.totalorder %s35, 0
      %p355 = por %p353, %p354
      %p356 = scmp.ne.s32.totalorder %s344, %s345
      %p357 = scmp.eq.s32.totalorder %s36, 1
      %p358 = por %p356, %p357
      %p360 = scmp.ne.s32.totalorder %s345, %s359
      %p361 = scmp.eq.s32.totalorder %s36, 0
      %p362 = por %p360, %p361
      %s364 = sadd.s32 %s363, 1
      %p367 = scmp.eq.s32.totalorder %s30, 1
      %p368 = scmp.ne.s32.totalorder %s363, %s365
      %p369 = scmp.eq.s32.totalorder %s30, 0
      %p370 = por %p368, %p369
      %p371 = scmp.ne.s32.totalorder %s363, %s365
      %p372 = scmp.eq.s32.totalorder %s35, 1
      %p373 = por %p371, %p372
      %p374 = scmp.ne.s32.totalorder %s365, %s366
      %p375 = scmp.eq.s32.totalorder %s35, 0
      %p376 = por %p374, %p375
      %p377 = scmp.ne.s32.totalorder %s365, %s366
      %p378 = scmp.eq.s32.totalorder %s36, 1
      %p379 = por %p377, %p378
      %p381 = scmp.ne.s32.totalorder %s366, %s380
      %p382 = scmp.eq.s32.totalorder %s36, 0
      %p383 = por %p381, %p382
      %s385 = sadd.s32 %s384, 1
      %p388 = scmp.eq.s32.totalorder %s30, 1
      %p389 = scmp.ne.s32.totalorder %s384, %s386
      %p390 = scmp.eq.s32.totalorder %s30, 0
      %p391 = por %p389, %p390
      %p392 = scmp.ne.s32.totalorder %s384, %s386
      %p393 = scmp.eq.s32.totalorder %s35, 1
      %p394 = por %p392, %p393
      %p395 = scmp.ne.s32.totalorder %s386, %s387
      %p396 = scmp.eq.s32.totalorder %s35, 0
      %p397 = por %p395, %p396
      %p398 = scmp.ne.s32.totalorder %s386, %s387
      %p399 = scmp.eq.s32.totalorder %s36, 1
      %p400 = por %p398, %p399
      %p402 = scmp.ne.s32.totalorder %s387, %s401
      %p403 = scmp.eq.s32.totalorder %s36, 0
      %p404 = por %p402, %p403
      %s406 = sadd.s32 %s405, 1
      %p409 = scmp.eq.s32.totalorder %s30, 1
      %p410 = scmp.ne.s32.totalorder %s405, %s407
      %p411 = scmp.eq.s32.totalorder %s30, 0
      %p412 = por %p410, %p411
      %p413 = scmp.ne.s32.totalorder %s405, %s407
      %p414 = scmp.eq.s32.totalorder %s35, 1
      %p415 = por %p413, %p414
      %p416 = scmp.ne.s32.totalorder %s407, %s408
      %p417 = scmp.eq.s32.totalorder %s35, 0
      %p418 = por %p416, %p417
      %p419 = scmp.ne.s32.totalorder %s407, %s408
      %p420 = scmp.eq.s32.totalorder %s36, 1
      %p421 = por %p419, %p420
      %p423 = scmp.ne.s32.totalorder %s408, %s422
      %p424 = scmp.eq.s32.totalorder %s36, 0
      %p425 = por %p423, %p424
      %s427 = sadd.s32 %s426, 1
      %p430 = scmp.eq.s32.totalorder %s30, 1
      %p431 = scmp.ne.s32.totalorder %s426, %s428
      %p432 = scmp.eq.s32.totalorder %s30, 0
      %p433 = por %p431, %p432
      %p434 = scmp.ne.s32.totalorder %s426, %s428
      %p435 = scmp.eq.s32.totalorder %s35, 1
      %p436 = por %p434, %p435
      %p437 = scmp.ne.s32.totalorder %s428, %s429
      %p438 = scmp.eq.s32.totalorder %s35, 0
      %p439 = por %p437, %p438
      %p440 = scmp.ne.s32.totalorder %s428, %s429
      %p441 = scmp.eq.s32.totalorder %s36, 1
      %p442 = por %p440, %p441
      %p444 = scmp.ne.s32.totalorder %s429, %s443
      %p445 = scmp.eq.s32.totalorder %s36, 0
      %p446 = por %p444, %p445
      %s448 = sadd.s32 %s447, 1
      %p451 = scmp.eq.s32.totalorder %s30, 1
      %p452 = scmp.ne.s32.totalorder %s447, %s449
      %p453 = scmp.eq.s32.totalorder %s30, 0
      %p454 = por %p452, %p453
      %p455 = scmp.ne.s32.totalorder %s447, %s449
      %p456 = scmp.eq.s32.totalorder %s35, 1
      %p457 = por %p455, %p456
      %p458 = scmp.ne.s32.totalorder %s449, %s450
      %p459 = scmp.eq.s32.totalorder %s35, 0
      %p460 = por %p458, %p459
      %p461 = scmp.ne.s32.totalorder %s449, %s450
      %p462 = scmp.eq.s32.totalorder %s36, 1
      %p463 = por %p461, %p462
      %p465 = scmp.ne.s32.totalorder %s450, %s464
      %p466 = scmp.eq.s32.totalorder %s36, 0
      %p467 = por %p465, %p466
      %s469 = sadd.s32 %s468, 1
      %p472 = scmp.eq.s32.totalorder %s30, 1
      %p473 = scmp.ne.s32.totalorder %s468, %s470
      %p474 = scmp.eq.s32.totalorder %s30, 0
      %p475 = por %p473, %p474
      %p476 = scmp.ne.s32.totalorder %s468, %s470
      %p477 = scmp.eq.s32.totalorder %s35, 1
      %p478 = por %p476, %p477
      %p479 = scmp.ne.s32.totalorder %s470, %s471
      %p480 = scmp.eq.s32.totalorder %s35, 0
      %p481 = por %p479, %p480
      %p482 = scmp.ne.s32.totalorder %s470, %s471
      %p483 = scmp.eq.s32.totalorder %s36, 1
      %p484 = por %p482, %p483
      %p486 = scmp.ne.s32.totalorder %s471, %s485
      %p487 = scmp.eq.s32.totalorder %s36, 0
      %p488 = por %p486, %p487
      %s490 = sadd.s32 %s489, 1
      %p493 = scmp.eq.s32.totalorder %s30, 1
      %p494 = scmp.ne.s32.totalorder %s489, %s491
      %p495 = scmp.eq.s32.totalorder %s30, 0
      %p496 = por %p494, %p495
      %p497 = scmp.ne.s32.totalorder %s489, %s491
      %p498 = scmp.eq.s32.totalorder %s35, 1
      %p499 = por %p497, %p498
      %p500 = scmp.ne.s32.totalorder %s491, %s492
      %p501 = scmp.eq.s32.totalorder %s35, 0
      %p502 = por %p500, %p501
      %p503 = scmp.ne.s32.totalorder %s491, %s492
      %p504 = scmp.eq.s32.totalorder %s36, 1
      %p505 = por %p503, %p504
      %p507 = scmp.ne.s32.totalorder %s492, %s506
      %p508 = scmp.eq.s32.totalorder %s36, 0
      %p509 = por %p507, %p508
      %s510 = ssub.s32 %s30, %s37
      %p511 = scmp.eq.s32.totalorder %s510, 0
      %s513 = sadd.s32 %s512, 1
      %s514 = scalar_select %p511, %s512, %s513
      %p517 = pneg %p511
      %p518 = scmp.eq.s32.totalorder %s30, 1
      %p519 = por %p517, %p518
      %p520 = scmp.ne.s32.totalorder %s512, %s515
      %p521 = scmp.eq.s32.totalorder %s30, 0
      %p522 = por %p520, %p521
      %p523 = scmp.ne.s32.totalorder %s512, %s515
      %p524 = scmp.eq.s32.totalorder %s35, 1
      %p525 = por %p523, %p524
      %p526 = scmp.ne.s32.totalorder %s515, %s516
      %p527 = scmp.eq.s32.totalorder %s35, 0
      %p528 = por %p526, %p527
      %p529 = scmp.ne.s32.totalorder %s515, %s516
      %p530 = scmp.eq.s32.totalorder %s36, 1
      %p531 = por %p529, %p530
      %p533 = scmp.ne.s32.totalorder %s516, %s532
      %p534 = scmp.eq.s32.totalorder %s36, 0
      %p535 = por %p533, %p534
      %p536 = scmp.le.s32.totalorder 1, %s30
      %p537 = scmp.lt.s32.totalorder %s30, 3
      %p538 = pnand %p536, %p537
      %p539 = pneg %p538
      // Predicated region
      $region9: #{transformer_forward.10} parent=5 // pred_check
        _
      $region10: #{transformer_forward.10} parent=5 // pred_check_branch
        %541 = sbr.rel (%p538) target = $region12
      $region11: #{transformer_forward.10} parent=5 // pred_region
        %s542 = ssub.s32 %s30, 1
        // Predicated region
        $region13: #{transformer_forward.10} parent=11 // pred_check
          %p543 = pneg %p103
        $region14: #{transformer_forward.10} parent=11 // pred_check_branch
          %545 = sbr.rel (%p543) target = $region16
        $region15: #{transformer_forward.10} parent=11 // pred_region
          _
        $region16: #{transformer_forward.10} parent=11 // pred_fallthru
          _
        // Predicated region
        $region17: #{transformer_forward.10} parent=11 // pred_check
          %p546 = pneg %p124
        $region18: #{transformer_forward.10} parent=11 // pred_check_branch
          %548 = sbr.rel (%p546) target = $region20
        $region19: #{transformer_forward.10} parent=11 // pred_region
          _
        $region20: #{transformer_forward.10} parent=11 // pred_fallthru
          _
        // Predicated region
        $region21: #{transformer_forward.10} parent=11 // pred_check
          %p549 = pneg %p145
        $region22: #{transformer_forward.10} parent=11 // pred_check_branch
          %551 = sbr.rel (%p549) target = $region24
        $region23: #{transformer_forward.10} parent=11 // pred_region
          _
        $region24: #{transformer_forward.10} parent=11 // pred_fallthru
          _
        // Predicated region
        $region25: #{transformer_forward.10} parent=11 // pred_check
          %p552 = pneg %p166
        $region26: #{transformer_forward.10} parent=11 // pred_check_branch
          %554 = sbr.rel (%p552) target = $region28
        $region27: #{transformer_forward.10} parent=11 // pred_region
          _
        $region28: #{transformer_forward.10} parent=11 // pred_fallthru
          _
        // Predicated region
        $region29: #{transformer_forward.10} parent=11 // pred_check
          %p555 = pneg %p187
        $region30: #{transformer_forward.10} parent=11 // pred_check_branch
          %557 = sbr.rel (%p555) target = $region32
        $region31: #{transformer_forward.10} parent=11 // pred_region
          _
        $region32: #{transformer_forward.10} parent=11 // pred_fallthru
          _
        // Predicated region
        $region33: #{transformer_forward.10} parent=11 // pred_check
          %p558 = pneg %p208
        $region34: #{transformer_forward.10} parent=11 // pred_check_branch
          %560 = sbr.rel (%p558) target = $region36
        $region35: #{transformer_forward.10} parent=11 // pred_region
          _
        $region36: #{transformer_forward.10} parent=11 // pred_fallthru
          _
        // Predicated region
        $region37: #{transformer_forward.10} parent=11 // pred_check
          %p561 = pneg %p229
        $region38: #{transformer_forward.10} parent=11 // pred_check_branch
          %563 = sbr.rel (%p561) target = $region40
        $region39: #{transformer_forward.10} parent=11 // pred_region
          _
        $region40: #{transformer_forward.10} parent=11 // pred_fallthru
          _
        // Predicated region
        $region41: #{transformer_forward.10} parent=11 // pred_check
          %p564 = pneg %p250
        $region42: #{transformer_forward.10} parent=11 // pred_check_branch
          %566 = sbr.rel (%p564) target = $region44
        $region43: #{transformer_forward.10} parent=11 // pred_region
          _
        $region44: #{transformer_forward.10} parent=11 // pred_fallthru
          _
        // Predicated region
        $region45: #{transformer_forward.10} parent=11 // pred_check
          %p567 = pneg %p271
        $region46: #{transformer_forward.10} parent=11 // pred_check_branch
          %569 = sbr.rel (%p567) target = $region48
        $region47: #{transformer_forward.10} parent=11 // pred_region
          _
        $region48: #{transformer_forward.10} parent=11 // pred_fallthru
          _
        // Predicated region
        $region49: #{transformer_forward.10} parent=11 // pred_check
          %p570 = pneg %p292
        $region50: #{transformer_forward.10} parent=11 // pred_check_branch
          %572 = sbr.rel (%p570) target = $region52
        $region51: #{transformer_forward.10} parent=11 // pred_region
          _
        $region52: #{transformer_forward.10} parent=11 // pred_fallthru
          _
        // Predicated region
        $region53: #{transformer_forward.10} parent=11 // pred_check
          %p573 = pneg %p313
        $region54: #{transformer_forward.10} parent=11 // pred_check_branch
          %575 = sbr.rel (%p573) target = $region56
        $region55: #{transformer_forward.10} parent=11 // pred_region
          _
        $region56: #{transformer_forward.10} parent=11 // pred_fallthru
          _
        // Predicated region
        $region57: #{transformer_forward.10} parent=11 // pred_check
          %p576 = pneg %p334
        $region58: #{transformer_forward.10} parent=11 // pred_check_branch
          %578 = sbr.rel (%p576) target = $region60
        $region59: #{transformer_forward.10} parent=11 // pred_region
          _
        $region60: #{transformer_forward.10} parent=11 // pred_fallthru
          _
        // Predicated region
        $region61: #{transformer_forward.10} parent=11 // pred_check
          %p579 = pneg %p355
        $region62: #{transformer_forward.10} parent=11 // pred_check_branch
          %581 = sbr.rel (%p579) target = $region64
        $region63: #{transformer_forward.10} parent=11 // pred_region
          _
        $region64: #{transformer_forward.10} parent=11 // pred_fallthru
          _
        // Predicated region
        $region65: #{transformer_forward.10} parent=11 // pred_check
          %p582 = pneg %p376
        $region66: #{transformer_forward.10} parent=11 // pred_check_branch
          %584 = sbr.rel (%p582) target = $region68
        $region67: #{transformer_forward.10} parent=11 // pred_region
          _
        $region68: #{transformer_forward.10} parent=11 // pred_fallthru
          _
        // Predicated region
        $region69: #{transformer_forward.10} parent=11 // pred_check
          %p585 = pneg %p397
        $region70: #{transformer_forward.10} parent=11 // pred_check_branch
          %587 = sbr.rel (%p585) target = $region72
        $region71: #{transformer_forward.10} parent=11 // pred_region
          _
        $region72: #{transformer_forward.10} parent=11 // pred_fallthru
          _
        // Predicated region
        $region73: #{transformer_forward.10} parent=11 // pred_check
          %p588 = pneg %p418
        $region74: #{transformer_forward.10} parent=11 // pred_check_branch
          %590 = sbr.rel (%p588) target = $region76
        $region75: #{transformer_forward.10} parent=11 // pred_region
          _
        $region76: #{transformer_forward.10} parent=11 // pred_fallthru
          _
        // Predicated region
        $region77: #{transformer_forward.10} parent=11 // pred_check
          %p591 = pneg %p439
        $region78: #{transformer_forward.10} parent=11 // pred_check_branch
          %593 = sbr.rel (%p591) target = $region80
        $region79: #{transformer_forward.10} parent=11 // pred_region
          _
        $region80: #{transformer_forward.10} parent=11 // pred_fallthru
          _
        // Predicated region
        $region81: #{transformer_forward.10} parent=11 // pred_check
          %p594 = pneg %p460
        $region82: #{transformer_forward.10} parent=11 // pred_check_branch
          %596 = sbr.rel (%p594) target = $region84
        $region83: #{transformer_forward.10} parent=11 // pred_region
          %s598 = ssub.s32 16, 16
          %599 = vsyncadd [#allocation3], %s598
          %s601 = sshll.u32 [#allocation2], 4
          %s602 = int_to_ptr.vmem [resolvable:$true] %s601
          %604 = dma.hbm_to_vmem [thread:$0]  %s19, 16, %s602, [#allocation3]
        $region84: #{transformer_forward.10} parent=11 // pred_fallthru
          _
        // Predicated region
        $region85: #{transformer_forward.10} parent=11 // pred_check
          %p605 = pneg %p481
        $region86: #{transformer_forward.10} parent=11 // pred_check_branch
          %607 = sbr.rel (%p605) target = $region88
        $region87: #{transformer_forward.10} parent=11 // pred_region
          _
        $region88: #{transformer_forward.10} parent=11 // pred_fallthru
          _
        // Predicated region
        $region89: #{transformer_forward.10} parent=11 // pred_check
          %p608 = pneg %p502
        $region90: #{transformer_forward.10} parent=11 // pred_check_branch
          %610 = sbr.rel (%p608) target = $region92
        $region91: #{transformer_forward.10} parent=11 // pred_region
          %s612 = ssub.s32 16, 16
          %613 = vsyncadd [#allocation5], %s612
          %s615 = sshll.u32 [#allocation4], 4
          %s616 = int_to_ptr.vmem [resolvable:$true] %s615
          %618 = dma.hbm_to_vmem [thread:$0]  %s21, 16, %s616, [#allocation5]
        $region92: #{transformer_forward.10} parent=11 // pred_fallthru
          _
      $region12: #{transformer_forward.10} parent=5 // pred_fallthru
        _
      %p619 = scmp.lt.s32.totalorder %s30, 2
      // Predicated region
      $region93: #{transformer_forward.10} parent=5 // pred_check
        %p620 = pneg %p619
      $region94: #{transformer_forward.10} parent=5 // pred_check_branch
        %622 = sbr.rel (%p620) target = $region96
      $region95: #{transformer_forward.10} parent=5 // pred_region
        // Predicated region
        $region97: #{transformer_forward.10} parent=95 // pred_check
          %p623 = pneg %p50
        $region98: #{transformer_forward.10} parent=95 // pred_check_branch
          %625 = sbr.rel (%p623) target = $region100
        $region99: #{transformer_forward.10} parent=95 // pred_region
          %p626 = scmp.lt.s32.totalorder %s30, 1
          %s627 = scalar_select %p626, %s30, 1
          %s628 = smul.addr %s627, 8
          %s629 = scalar_lea.vmem %s0, %s628
        $region100: #{transformer_forward.10} parent=95 // pred_fallthru
          _
        // Predicated region
        $region101: #{transformer_forward.10} parent=95 // pred_check
          %p630 = pneg %p76
        $region102: #{transformer_forward.10} parent=95 // pred_check_branch
          %632 = sbr.rel (%p630) target = $region104
        $region103: #{transformer_forward.10} parent=95 // pred_region
          %p633 = scmp.lt.s32.totalorder %s30, 1
          %s634 = scalar_select %p633, %s30, 1
          %s635 = smul.addr %s634, 8
          %s636 = scalar_lea.vmem %s1, %s635
        $region104: #{transformer_forward.10} parent=95 // pred_fallthru
          _
      $region96: #{transformer_forward.10} parent=5 // pred_fallthru
        _
      %p637 = scmp.le.s32.totalorder 1, %s30
      %p638 = scmp.lt.s32.totalorder %s30, 3
      %p639 = pnand %p637, %p638
      %p640 = pneg %p639
      // Predicated region
      $region105: #{transformer_forward.10} parent=5 // pred_check
        _
      $region106: #{transformer_forward.10} parent=5 // pred_check_branch
        %642 = sbr.rel (%p639) target = $region108
      $region107: #{transformer_forward.10} parent=5 // pred_region
        %s643 = ssub.s32 %s30, 1
        // Predicated region
        $region109: #{transformer_forward.10} parent=107 // pred_check
          %p644 = pneg %p460
        $region110: #{transformer_forward.10} parent=107 // pred_check_branch
          %646 = sbr.rel (%p644) target = $region112
        $region111: #{transformer_forward.10} parent=107 // pred_region
          %647 = dma.done [#allocation3], 16
        $region112: #{transformer_forward.10} parent=107 // pred_fallthru
          _
        // Predicated region
        $region113: #{transformer_forward.10} parent=107 // pred_check
          %p648 = pneg %p502
        $region114: #{transformer_forward.10} parent=107 // pred_check_branch
          %650 = sbr.rel (%p648) target = $region116
        $region115: #{transformer_forward.10} parent=107 // pred_region
          %651 = dma.done [#allocation5], 16
        $region116: #{transformer_forward.10} parent=107 // pred_fallthru
          _
        %p652 = scmp.lt.s32.totalorder %s35, 1
        %s653 = scalar_select %p652, %s35, 1
        %s654 = smul.addr %s653, 8
        %s655 = scalar_lea.vmem %s0, %s654
        %p656 = pneg %p56
        %p657 = pneg %p53
        %p658 = scmp.lt.s32.totalorder %s35, 1
        %s659 = scalar_select %p658, %s35, 1
        %s660 = smul.addr %s659, 8
        %s661 = scalar_lea.vmem %s1, %s660
        %p662 = pneg %p82
        %p663 = pneg %p79
        %p664 = pneg %p103
        %p665 = pneg %p100
        %p666 = pneg %p124
        %p667 = pneg %p121
        %p668 = pneg %p145
        %p669 = pneg %p142
        %p670 = pneg %p166
        %p671 = pneg %p163
        %p672 = pneg %p187
        %p673 = pneg %p184
        %p674 = pneg %p208
        %p675 = pneg %p205
        %p676 = pneg %p229
        %p677 = pneg %p226
        %p678 = pneg %p250
        %p679 = pneg %p247
        %p680 = pneg %p271
        %p681 = pneg %p268
        %p682 = pneg %p292
        %p683 = pneg %p289
        %p684 = pneg %p313
        %p685 = pneg %p310
        %p686 = pneg %p334
        %p687 = pneg %p331
        %p688 = pneg %p355
        %p689 = pneg %p352
        %p690 = pneg %p376
        %p691 = pneg %p373
        %p692 = pneg %p397
        %p693 = pneg %p394
        %p694 = pneg %p418
        %p695 = pneg %p415
        %p696 = pneg %p439
        %p697 = pneg %p436
        %p698 = pneg %p460
        %p699 = pneg %p457
        %p700 = pneg %p481
        %p701 = pneg %p478
        %p702 = pneg %p502
        %p703 = pneg %p499
        %p704 = pneg %p528
        %p705 = pneg %p525
        %p706 = scmp.lt.s32.totalorder %s35, 1
        %s707 = scalar_select %p706, %s35, 1
        %s708 = smul.addr %s707, 8
        %s709 = scalar_lea.vmem %s22, %s708
        %p710 = scmp.lt.s32.totalorder %s35, 1
        %s711 = scalar_select %p710, %s35, 1
        %s712 = smul.addr %s711, 8
        %s713 = scalar_lea.vmem %s0, %s712
        %p714 = scmp.lt.s32.totalorder %s35, 1
        %s715 = scalar_select %p714, %s35, 1
        %s716 = smul.addr %s715, 8
        %s717 = scalar_lea.vmem %s1, %s716
        %p718 = scmp.lt.s32.totalorder %s35, 1
        %s719 = scalar_select %p718, %s35, 1
        %s720 = smul.addr %s719, 8
        %s721 = scalar_lea.vmem %s22, %s720
        %v722 = vld [vmem:[%s713] sm:$0xff]
        %v723 = vld [vmem:[%s717] sm:$0xff]
        %v724 = vld [vmem:[%s2] sm:$0x1]
        %v725 = vld [vmem:[%s3] sm:$0x1]
        %vm726 = vcmask 261120
        %v727 = vsel %vm726, %v722, 0.0
        %728 = vadd.xlane.f32.xlu0 %v727
        %v729 = vpop.xlane.xlu0 %728
        %v730 = vrcp.pop 32.0
        %v731 = vmul.f32 %v729, %v730
        %v732 = vsub.f32 %v722, %v731
        %v733 = vmul.f32 %v732, %v732
        %v734 = vsel %vm726, %v733, 0.0
        %735 = vadd.xlane.f32.xlu0 %v734
        %v736 = vpop.xlane.xlu0 %735
        %v737 = vmul.f32 %v736, 0.032258064
        %v738 = vrsqrt.pop %v737
        %v739 = vmul.f32 %v737, %v738
        %vm740 = vcmp.eq.f32.partialorder %v737, inf
        %v741 = vsel %vm740, %v737, %v739
        %vm742 = vcmp.eq.f32.partialorder %v737, 0.0
        %v743 = vand.u32 %v737, 2147483648
        %v744 = vsel %vm742, %v743, %v741
        %v745 = vadd.f32 %v744, 1e-06
        %v746 = vrcp.pop %v745
        %v747 = vmul.f32 %v732, %v746
        %v749 = vlaneseq
        %v750 = vshrl.u32 %v749, 7
        %v751 = vsub.s32 0, %v750
        %v752 = vrot.slane %v724, %v751
        %v754 = vmul.f32 %v752, %v747
        %v756 = vlaneseq
        %v757 = vshrl.u32 %v756, 7
        %v758 = vsub.s32 0, %v757
        %v759 = vrot.slane %v725, %v758
        %v761 = vadd.f32 %v754, %v759
        %v762 = vld [vmem:[%s8] sm:$0xff]
        %v763 = vld [vmem:[%s8 + $0x8] sm:$0xff]
        %v764 = vld [vmem:[%s8 + $0x10] sm:$0xff]
        %v765 = vld [vmem:[%s8 + $0x18] sm:$0xff]
        %v766 = vld [vmem:[%s9] sm:$0x1]
        %v768 = vlaneseq
        %v769 = vshrl.u32 %v768, 7
        %v770 = vsub.s32 0, %v769
        %v771 = vrot.slane %v766, %v770
        %v774 = vsel %vm726, %v761, 0
        %776 = vmatprep.subr.mxu0 0.0
        %777 = vmatpush1.msra.mxu0 %v762
        %778 = vmatprep.subr.mxu0 0.0
        %779 = vmatpush1.msra.mxu0 %v763
        %780 = vmatprep.subr.mxu0 0.0
        %781 = vmatpush1.msra.mxu0 %v764
        %782 = vmatprep.subr.mxu0 0.0
        %783 = vmatpush1.msra.mxu0 %v765
        %784 = vmatprep.subr.mxu0 0.0
        %785 = vmatpush1.msra.mxu0 0.0
        %786 = vmatprep.subr.mxu0 0.0
        %787 = vmatpush1.msra.mxu0 0.0
        %788 = vmatprep.subr.mxu0 0.0
        %789 = vmatpush1.msra.mxu0 0.0
        %790 = vmatprep.subr.mxu0 0.0
        %791 = vmatpush1.msra.mxu0 0.0
        %792 = vmatprep.subr.mxu0 0.0
        %793 = vmatpush1.msra.mxu0 0.0
        %794 = vmatprep.subr.mxu0 0.0
        %795 = vmatpush1.msra.mxu0 0.0
        %796 = vmatprep.subr.mxu0 0.0
        %797 = vmatpush1.msra.mxu0 0.0
        %798 = vmatprep.subr.mxu0 0.0
        %799 = vmatpush1.msra.mxu0 0.0
        %800 = vmatprep.subr.mxu0 0.0
        %801 = vmatpush1.msra.mxu0 0.0
        %802 = vmatprep.subr.mxu0 0.0
        %803 = vmatpush1.msra.mxu0 0.0
        %804 = vmatprep.subr.mxu0 0.0
        %805 = vmatpush1.msra.mxu0 0.0
        %806 = vmatprep.subr.mxu0 0.0
        %807 = vmatpush1.msra.mxu0 0.0
        %808 = vmatprep.subr.mxu0 0.0
        %809 = vmatpush1.msra.mxu0 0.0
        %810 = vmatprep.subr.mxu0 0.0
        %811 = vmatpush1.msra.mxu0 0.0
        %812 = vmatprep.subr.mxu0 0.0
        %813 = vmatpush1.msra.mxu0 0.0
        %814 = vmatprep.subr.mxu0 0.0
        %815 = vmatpush1.msra.mxu0 0.0
        %816 = vmatprep.subr.mxu0 0.0
        %817 = vmatpush1.msra.mxu0 0.0
        %818 = vmatprep.subr.mxu0 0.0
        %819 = vmatpush1.msra.mxu0 0.0
        %820 = vmatprep.subr.mxu0 0.0
        %821 = vmatpush1.msra.mxu0 0.0
        %822 = vmatprep.subr.mxu0 0.0
        %823 = vmatpush1.msra.mxu0 0.0
        %824 = vmatprep.subr.mxu0 0.0
        %825 = vmatpush1.msra.mxu0 0.0
        %826 = vmatprep.subr.mxu0 0.0
        %827 = vmatpush1.msra.mxu0 0.0
        %828 = vmatprep.subr.mxu0 0.0
        %829 = vmatpush1.msra.mxu0 0.0
        %830 = vmatprep.subr.mxu0 0.0
        %831 = vmatpush1.msra.mxu0 0.0
        %832 = vmatprep.subr.mxu0 0.0
        %833 = vmatpush1.msra.mxu0 0.0
        %834 = vmatprep.subr.mxu0 0.0
        %835 = vmatpush1.msra.mxu0 0.0
        %836 = vmatprep.subr.mxu0 0.0
        %837 = vmatpush1.msra.mxu0 0.0
        %838 = vmatprep.subr.mxu0 0.0
        %839 = vmatpush1.msra.mxu0 0.0
        %840 = vmatprep.mubr.f32.mxu0 0.0
        %841 = vmatmul.mubr.f32.gmra.mrb[0].mxu0 %v774
        %v842 = vpop.f32.mrb[0].mxu0
        %v843 = vadd.f32 %v771, %v842
        %v844 = vpop.f32.mrb[0].mxu0
        %845 = vdwg.mxu0
        %v846 = vld [vmem:[%s10] sm:$0xff]
        %v847 = vld [vmem:[%s10 + $0x8] sm:$0xff]
        %v848 = vld [vmem:[%s10 + $0x10] sm:$0xff]
        %v849 = vld [vmem:[%s10 + $0x18] sm:$0xff]
        %v850 = vld [vmem:[%s11] sm:$0x1]
        %v851 = vmul.f32 %v843, 0.35355338
        %853 = vrot.lane.b32.xlu0 %v843, 96
        %v854 = vpop.permute.xlu0 %853
        %vm855 = vcmask 64512
        %v857 = vsel %vm855, %v851, 0
        %v859 = vsel %vm855, %v854, 0
        %861 = vmatprep.subr.mxu0 0.0
        %862 = vmatpush1.xpose.msra.mxu0 %v859
        %863 = vmatprep.subr.mxu0 0.0
        %864 = vmatpush1.xpose.msra.mxu0 0.0
        %865 = vmatprep.subr.mxu0 0.0
        %866 = vmatpush1.xpose.msra.mxu0 0.0
        %867 = vmatprep.subr.mxu0 0.0
        %868 = vmatpush1.xpose.msra.mxu0 0.0
        %869 = vmatprep.subr.mxu0 0.0
        %870 = vmatpush1.xpose.msra.mxu0 0.0
        %871 = vmatprep.subr.mxu0 0.0
        %872 = vmatpush1.xpose.msra.mxu0 0.0
        %873 = vmatprep.subr.mxu0 0.0
        %874 = vmatpush1.xpose.msra.mxu0 0.0
        %875 = vmatprep.subr.mxu0 0.0
        %876 = vmatpush1.xpose.msra.mxu0 0.0
        %877 = vmatprep.subr.mxu0 0.0
        %878 = vmatpush1.xpose.msra.mxu0 0.0
        %879 = vmatprep.subr.mxu0 0.0
        %880 = vmatpush1.xpose.msra.mxu0 0.0
        %881 = vmatprep.subr.mxu0 0.0
        %882 = vmatpush1.xpose.msra.mxu0 0.0
        %883 = vmatprep.subr.mxu0 0.0
        %884 = vmatpush1.xpose.msra.mxu0 0.0
        %885 = vmatprep.subr.mxu0 0.0
        %886 = vmatpush1.xpose.msra.mxu0 0.0
        %887 = vmatprep.subr.mxu0 0.0
        %888 = vmatpush1.xpose.msra.mxu0 0.0
        %889 = vmatprep.subr.mxu0 0.0
        %890 = vmatpush1.xpose.msra.mxu0 0.0
        %891 = vmatprep.subr.mxu0 0.0
        %892 = vmatpush1.xpose.msra.mxu0 0.0
        %893 = vmatprep.subr.mxu0 0.0
        %894 = vmatpush1.xpose.msra.mxu0 0.0
        %895 = vmatprep.subr.mxu0 0.0
        %896 = vmatpush1.xpose.msra.mxu0 0.0
        %897 = vmatprep.subr.mxu0 0.0
        %898 = vmatpush1.xpose.msra.mxu0 0.0
        %899 = vmatprep.subr.mxu0 0.0
        %900 = vmatpush1.xpose.msra.mxu0 0.0
        %901 = vmatprep.subr.mxu0 0.0
        %902 = vmatpush1.xpose.msra.mxu0 0.0
        %903 = vmatprep.subr.mxu0 0.0
        %904 = vmatpush1.xpose.msra.mxu0 0.0
        %905 = vmatprep.subr.mxu0 0.0
        %906 = vmatpush1.xpose.msra.mxu0 0.0
        %907 = vmatprep.subr.mxu0 0.0
        %908 = vmatpush1.xpose.msra.mxu0 0.0
        %909 = vmatprep.subr.mxu0 0.0
        %910 = vmatpush1.xpose.msra.mxu0 0.0
        %911 = vmatprep.subr.mxu0 0.0
        %912 = vmatpush1.xpose.msra.mxu0 0.0
        %913 = vmatprep.subr.mxu0 0.0
        %914 = vmatpush1.xpose.msra.mxu0 0.0
        %915 = vmatprep.subr.mxu0 0.0
        %916 = vmatpush1.xpose.msra.mxu0 0.0
        %917 = vmatprep.subr.mxu0 0.0
        %918 = vmatpush1.xpose.msra.mxu0 0.0
        %919 = vmatprep.subr.mxu0 0.0
        %920 = vmatpush1.xpose.msra.mxu0 0.0
        %921 = vmatprep.subr.mxu0 0.0
        %922 = vmatpush1.xpose.msra.mxu0 0.0
        %923 = vmatprep.subr.mxu0 0.0
        %924 = vmatpush1.xpose.msra.mxu0 0.0
        %925 = vmatprep.mubr.f32.mxu0 0.0
        %926 = vmatmul.mubr.f32.gmra.mrb[0].mxu0 %v857
        %v927 = vpop.f32.mrb[0].mxu0
        %v928 = vadd.f32 0.0, %v927
        %v929 = vpop.f32.mrb[0].mxu0
        %930 = vdwg.mxu0
        %v931 = vsel %vm855, %v928, -inf
        %932 = vmax.xlane.f32.xlu0 %v931
        %v933 = vpop.xlane.xlu0 %932
        %v934 = vsub.f32 %v928, %v933
        %v935 = vmul.f32 %v934, 1.442695
        %v936 = vpow.pop %v935
        %v937 = vsel %vm855, %v936, 0.0
        %938 = vadd.xlane.f32.xlu0 %v937
        %v939 = vpop.xlane.xlu0 %938
        %v940 = vrcp.pop %v939
        %v941 = vmul.f32 %v936, %v940
        %942 = vrot.lane.b32.xlu0 %v843, 64
        %v943 = vpop.permute.xlu0 %942
        %v946 = vsel %vm855, %v941, 0
        %948 = vmatprep.subr.mxu0 0.0
        %949 = vmatpush1.msra.mxu0 %v943
        %950 = vmatprep.subr.mxu0 0.0
        %951 = vmatpush1.msra.mxu0 0.0
        %952 = vmatprep.subr.mxu0 0.0
        %953 = vmatpush1.msra.mxu0 0.0
        %954 = vmatprep.subr.mxu0 0.0
        %955 = vmatpush1.msra.mxu0 0.0
        %956 = vmatprep.subr.mxu0 0.0
        %957 = vmatpush1.msra.mxu0 0.0
        %958 = vmatprep.subr.mxu0 0.0
        %959 = vmatpush1.msra.mxu0 0.0
        %960 = vmatprep.subr.mxu0 0.0
        %961 = vmatpush1.msra.mxu0 0.0
        %962 = vmatprep.subr.mxu0 0.0
        %963 = vmatpush1.msra.mxu0 0.0
        %964 = vmatprep.subr.mxu0 0.0
        %965 = vmatpush1.msra.mxu0 0.0
        %966 = vmatprep.subr.mxu0 0.0
        %967 = vmatpush1.msra.mxu0 0.0
        %968 = vmatprep.subr.mxu0 0.0
        %969 = vmatpush1.msra.mxu0 0.0
        %970 = vmatprep.subr.mxu0 0.0
        %971 = vmatpush1.msra.mxu0 0.0
        %972 = vmatprep.subr.mxu0 0.0
        %973 = vmatpush1.msra.mxu0 0.0
        %974 = vmatprep.subr.mxu0 0.0
        %975 = vmatpush1.msra.mxu0 0.0
        %976 = vmatprep.subr.mxu0 0.0
        %977 = vmatpush1.msra.mxu0 0.0
        %978 = vmatprep.subr.mxu0 0.0
        %979 = vmatpush1.msra.mxu0 0.0
        %980 = vmatprep.subr.mxu0 0.0
        %981 = vmatpush1.msra.mxu0 0.0
        %982 = vmatprep.subr.mxu0 0.0
        %983 = vmatpush1.msra.mxu0 0.0
        %984 = vmatprep.subr.mxu0 0.0
        %985 = vmatpush1.msra.mxu0 0.0
        %986 = vmatprep.subr.mxu0 0.0
        %987 = vmatpush1.msra.mxu0 0.0
        %988 = vmatprep.subr.mxu0 0.0
        %989 = vmatpush1.msra.mxu0 0.0
        %990 = vmatprep.subr.mxu0 0.0
        %991 = vmatpush1.msra.mxu0 0.0
        %992 = vmatprep.subr.mxu0 0.0
        %993 = vmatpush1.msra.mxu0 0.0
        %994 = vmatprep.subr.mxu0 0.0
        %995 = vmatpush1.msra.mxu0 0.0
        %996 = vmatprep.subr.mxu0 0.0
        %997 = vmatpush1.msra.mxu0 0.0
        %998 = vmatprep.subr.mxu0 0.0
        %999 = vmatpush1.msra.mxu0 0.0
        %1000 = vmatprep.subr.mxu0 0.0
        %1001 = vmatpush1.msra.mxu0 0.0
        %1002 = vmatprep.subr.mxu0 0.0
        %1003 = vmatpush1.msra.mxu0 0.0
        %1004 = vmatprep.subr.mxu0 0.0
        %1005 = vmatpush1.msra.mxu0 0.0
        %1006 = vmatprep.subr.mxu0 0.0
        %1007 = vmatpush1.msra.mxu0 0.0
        %1008 = vmatprep.subr.mxu0 0.0
        %1009 = vmatpush1.msra.mxu0 0.0
        %1010 = vmatprep.subr.mxu0 0.0
        %1011 = vmatpush1.msra.mxu0 0.0
        %1012 = vmatprep.mubr.f32.mxu0 0.0
        %1013 = vmatmul.mubr.f32.gmra.mrb[0].mxu0 %v946
        %v1014 = vpop.f32.mrb[0].mxu0
        %v1015 = vadd.f32 0.0, %v1014
        %v1016 = vpop.f32.mrb[0].mxu0
        %1017 = vdwg.mxu0
        %1018 = vrot.lane.b32.xlu0 %v851, 120
        %v1019 = vpop.permute.xlu0 %1018
        %1020 = vrot.lane.b32.xlu0 %v843, 88
        %v1021 = vpop.permute.xlu0 %1020
        %v1022 = vsel %vm855, %v1019, 0
        %v1024 = vsel %vm855, %v1021, 0
        %1026 = vmatprep.subr.mxu0 0.0
        %1027 = vmatpush1.xpose.msra.mxu0 %v1024
        %1028 = vmatprep.subr.mxu0 0.0
        %1029 = vmatpush1.xpose.msra.mxu0 0.0
        %1030 = vmatprep.subr.mxu0 0.0
        %1031 = vmatpush1.xpose.msra.mxu0 0.0
        %1032 = vmatprep.subr.mxu0 0.0
        %1033 = vmatpush1.xpose.msra.mxu0 0.0
        %1034 = vmatprep.subr.mxu0 0.0
        %1035 = vmatpush1.xpose.msra.mxu0 0.0
        %1036 = vmatprep.subr.mxu0 0.0
        %1037 = vmatpush1.xpose.msra.mxu0 0.0
        %1038 = vmatprep.subr.mxu0 0.0
        %1039 = vmatpush1.xpose.msra.mxu0 0.0
        %1040 = vmatprep.subr.mxu0 0.0
        %1041 = vmatpush1.xpose.msra.mxu0 0.0
        %1042 = vmatprep.subr.mxu0 0.0
        %1043 = vmatpush1.xpose.msra.mxu0 0.0
        %1044 = vmatprep.subr.mxu0 0.0
        %1045 = vmatpush1.xpose.msra.mxu0 0.0
        %1046 = vmatprep.subr.mxu0 0.0
        %1047 = vmatpush1.xpose.msra.mxu0 0.0
        %1048 = vmatprep.subr.mxu0 0.0
        %1049 = vmatpush1.xpose.msra.mxu0 0.0
        %1050 = vmatprep.subr.mxu0 0.0
        %1051 = vmatpush1.xpose.msra.mxu0 0.0
        %1052 = vmatprep.subr.mxu0 0.0
        %1053 = vmatpush1.xpose.msra.mxu0 0.0
        %1054 = vmatprep.subr.mxu0 0.0
        %1055 = vmatpush1.xpose.msra.mxu0 0.0
        %1056 = vmatprep.subr.mxu0 0.0
        %1057 = vmatpush1.xpose.msra.mxu0 0.0
        %1058 = vmatprep.subr.mxu0 0.0
        %1059 = vmatpush1.xpose.msra.mxu0 0.0
        %1060 = vmatprep.subr.mxu0 0.0
        %1061 = vmatpush1.xpose.msra.mxu0 0.0
        %1062 = vmatprep.subr.mxu0 0.0
        %1063 = vmatpush1.xpose.msra.mxu0 0.0
        %1064 = vmatprep.subr.mxu0 0.0
        %1065 = vmatpush1.xpose.msra.mxu0 0.0
        %1066 = vmatprep.subr.mxu0 0.0
        %1067 = vmatpush1.xpose.msra.mxu0 0.0
        %1068 = vmatprep.subr.mxu0 0.0
        %1069 = vmatpush1.xpose.msra.mxu0 0.0
        %1070 = vmatprep.subr.mxu0 0.0
        %1071 = vmatpush1.xpose.msra.mxu0 0.0
        %1072 = vmatprep.subr.mxu0 0.0
        %1073 = vmatpush1.xpose.msra.mxu0 0.0
        %1074 = vmatprep.subr.mxu0 0.0
        %1075 = vmatpush1.xpose.msra.mxu0 0.0
        %1076 = vmatprep.subr.mxu0 0.0
        %1077 = vmatpush1.xpose.msra.mxu0 0.0
        %1078 = vmatprep.subr.mxu0 0.0
        %1079 = vmatpush1.xpose.msra.mxu0 0.0
        %1080 = vmatprep.subr.mxu0 0.0
        %1081 = vmatpush1.xpose.msra.mxu0 0.0
        %1082 = vmatprep.subr.mxu0 0.0
        %1083 = vmatpush1.xpose.msra.mxu0 0.0
        %1084 = vmatprep.subr.mxu0 0.0
        %1085 = vmatpush1.xpose.msra.mxu0 0.0
        %1086 = vmatprep.subr.mxu0 0.0
        %1087 = vmatpush1.xpose.msra.mxu0 0.0
        %1088 = vmatprep.subr.mxu0 0.0
        %1089 = vmatpush1.xpose.msra.mxu0 0.0
        %1090 = vmatprep.mubr.f32.mxu0 0.0
        %1091 = vmatmul.mubr.f32.gmra.mrb[0].mxu0 %v1022
        %v1092 = vpop.f32.mrb[0].mxu0
        %v1093 = vadd.f32 0.0, %v1092
        %v1094 = vpop.f32.mrb[0].mxu0
        %1095 = vdwg.mxu0
        %v1096 = vsel %vm855, %v1093, -inf
        %1097 = vmax.xlane.f32.xlu0 %v1096
        %v1098 = vpop.xlane.xlu0 %1097
        %v1099 = vsub.f32 %v1093, %v1098
        %v1100 = vmul.f32 %v1099, 1.442695
        %v1101 = vpow.pop %v1100
        %v1102 = vsel %vm855, %v1101, 0.0
        %1103 = vadd.xlane.f32.xlu0 %v1102
        %v1104 = vpop.xlane.xlu0 %1103
        %v1105 = vrcp.pop %v1104
        %v1106 = vmul.f32 %v1101, %v1105
        %1107 = vrot.lane.b32.xlu0 %v843, 56
        %v1108 = vpop.permute.xlu0 %1107
        %v1111 = vsel %vm855, %v1106, 0
        %1113 = vmatprep.subr.mxu0 0.0
        %1114 = vmatpush1.msra.mxu0 %v1108
        %1115 = vmatprep.subr.mxu0 0.0
        %1116 = vmatpush1.msra.mxu0 0.0
        %1117 = vmatprep.subr.mxu0 0.0
        %1118 = vmatpush1.msra.mxu0 0.0
        %1119 = vmatprep.subr.mxu0 0.0
        %1120 = vmatpush1.msra.mxu0 0.0
        %1121 = vmatprep.subr.mxu0 0.0
        %1122 = vmatpush1.msra.mxu0 0.0
        %1123 = vmatprep.subr.mxu0 0.0
        %1124 = vmatpush1.msra.mxu0 0.0
        %1125 = vmatprep.subr.mxu0 0.0
        %1126 = vmatpush1.msra.mxu0 0.0
        %1127 = vmatprep.subr.mxu0 0.0
        %1128 = vmatpush1.msra.mxu0 0.0
        %1129 = vmatprep.subr.mxu0 0.0
        %1130 = vmatpush1.msra.mxu0 0.0
        %1131 = vmatprep.subr.mxu0 0.0
        %1132 = vmatpush1.msra.mxu0 0.0
        %1133 = vmatprep.subr.mxu0 0.0
        %1134 = vmatpush1.msra.mxu0 0.0
        %1135 = vmatprep.subr.mxu0 0.0
        %1136 = vmatpush1.msra.mxu0 0.0
        %1137 = vmatprep.subr.mxu0 0.0
        %1138 = vmatpush1.msra.mxu0 0.0
        %1139 = vmatprep.subr.mxu0 0.0
        %1140 = vmatpush1.msra.mxu0 0.0
        %1141 = vmatprep.subr.mxu0 0.0
        %1142 = vmatpush1.msra.mxu0 0.0
        %1143 = vmatprep.subr.mxu0 0.0
        %1144 = vmatpush1.msra.mxu0 0.0
        %1145 = vmatprep.subr.mxu0 0.0
        %1146 = vmatpush1.msra.mxu0 0.0
        %1147 = vmatprep.subr.mxu0 0.0
        %1148 = vmatpush1.msra.mxu0 0.0
        %1149 = vmatprep.subr.mxu0 0.0
        %1150 = vmatpush1.msra.mxu0 0.0
        %1151 = vmatprep.subr.mxu0 0.0
        %1152 = vmatpush1.msra.mxu0 0.0
        %1153 = vmatprep.subr.mxu0 0.0
        %1154 = vmatpush1.msra.mxu0 0.0
        %1155 = vmatprep.subr.mxu0 0.0
        %1156 = vmatpush1.msra.mxu0 0.0
        %1157 = vmatprep.subr.mxu0 0.0
        %1158 = vmatpush1.msra.mxu0 0.0
        %1159 = vmatprep.subr.mxu0 0.0
        %1160 = vmatpush1.msra.mxu0 0.0
        %1161 = vmatprep.subr.mxu0 0.0
        %1162 = vmatpush1.msra.mxu0 0.0
        %1163 = vmatprep.subr.mxu0 0.0
        %1164 = vmatpush1.msra.mxu0 0.0
        %1165 = vmatprep.subr.mxu0 0.0
        %1166 = vmatpush1.msra.mxu0 0.0
        %1167 = vmatprep.subr.mxu0 0.0
        %1168 = vmatpush1.msra.mxu0 0.0
        %1169 = vmatprep.subr.mxu0 0.0
        %1170 = vmatpush1.msra.mxu0 0.0
        %1171 = vmatprep.subr.mxu0 0.0
        %1172 = vmatpush1.msra.mxu0 0.0
        %1173 = vmatprep.subr.mxu0 0.0
        %1174 = vmatpush1.msra.mxu0 0.0
        %1175 = vmatprep.subr.mxu0 0.0
        %1176 = vmatpush1.msra.mxu0 0.0
        %1177 = vmatprep.mubr.f32.mxu0 0.0
        %1178 = vmatmul.mubr.f32.gmra.mrb[0].mxu0 %v1111
        %v1179 = vpop.f32.mrb[0].mxu0
        %v1180 = vadd.f32 0.0, %v1179
        %v1181 = vpop.f32.mrb[0].mxu0
        %1182 = vdwg.mxu0
        %v1184 = vsel %vm855, %v1180, 0
        %1186 = vmatprep.subr.mxu0 0.0
        %1187 = vmatpush1.msra.mxu0 %v847
        %1188 = vmatprep.subr.mxu0 0.0
        %1189 = vmatpush1.msra.mxu0 0.0
        %1190 = vmatprep.subr.mxu0 0.0
        %1191 = vmatpush1.msra.mxu0 0.0
        %1192 = vmatprep.subr.mxu0 0.0
        %1193 = vmatpush1.msra.mxu0 0.0
        %1194 = vmatprep.subr.mxu0 0.0
        %1195 = vmatpush1.msra.mxu0 0.0
        %1196 = vmatprep.subr.mxu0 0.0
        %1197 = vmatpush1.msra.mxu0 0.0
        %1198 = vmatprep.subr.mxu0 0.0
        %1199 = vmatpush1.msra.mxu0 0.0
        %1200 = vmatprep.subr.mxu0 0.0
        %1201 = vmatpush1.msra.mxu0 0.0
        %1202 = vmatprep.subr.mxu0 0.0
        %1203 = vmatpush1.msra.mxu0 0.0
        %1204 = vmatprep.subr.mxu0 0.0
        %1205 = vmatpush1.msra.mxu0 0.0
        %1206 = vmatprep.subr.mxu0 0.0
        %1207 = vmatpush1.msra.mxu0 0.0
        %1208 = vmatprep.subr.mxu0 0.0
        %1209 = vmatpush1.msra.mxu0 0.0
        %1210 = vmatprep.subr.mxu0 0.0
        %1211 = vmatpush1.msra.mxu0 0.0
        %1212 = vmatprep.subr.mxu0 0.0
        %1213 = vmatpush1.msra.mxu0 0.0
        %1214 = vmatprep.subr.mxu0 0.0
        %1215 = vmatpush1.msra.mxu0 0.0
        %1216 = vmatprep.subr.mxu0 0.0
        %1217 = vmatpush1.msra.mxu0 0.0
        %1218 = vmatprep.subr.mxu0 0.0
        %1219 = vmatpush1.msra.mxu0 0.0
        %1220 = vmatprep.subr.mxu0 0.0
        %1221 = vmatpush1.msra.mxu0 0.0
        %1222 = vmatprep.subr.mxu0 0.0
        %1223 = vmatpush1.msra.mxu0 0.0
        %1224 = vmatprep.subr.mxu0 0.0
        %1225 = vmatpush1.msra.mxu0 0.0
        %1226 = vmatprep.subr.mxu0 0.0
        %1227 = vmatpush1.msra.mxu0 0.0
        %1228 = vmatprep.subr.mxu0 0.0
        %1229 = vmatpush1.msra.mxu0 0.0
        %1230 = vmatprep.subr.mxu0 0.0
        %1231 = vmatpush1.msra.mxu0 0.0
        %1232 = vmatprep.subr.mxu0 0.0
        %1233 = vmatpush1.msra.mxu0 0.0
        %1234 = vmatprep.subr.mxu0 0.0
        %1235 = vmatpush1.msra.mxu0 0.0
        %1236 = vmatprep.subr.mxu0 0.0
        %1237 = vmatpush1.msra.mxu0 0.0
        %1238 = vmatprep.subr.mxu0 0.0
        %1239 = vmatpush1.msra.mxu0 0.0
        %1240 = vmatprep.subr.mxu0 0.0
        %1241 = vmatpush1.msra.mxu0 0.0
        %1242 = vmatprep.subr.mxu0 0.0
        %1243 = vmatpush1.msra.mxu0 0.0
        %1244 = vmatprep.subr.mxu0 0.0
        %1245 = vmatpush1.msra.mxu0 0.0
        %1246 = vmatprep.subr.mxu0 0.0
        %1247 = vmatpush1.msra.mxu0 0.0
        %1248 = vmatprep.subr.mxu0 0.0
        %1249 = vmatpush1.msra.mxu0 0.0
        %1250 = vmatprep.mubr.f32.mxu0 0.0
        %1251 = vmatmul.mubr.f32.gmra.mrb[0].mxu0 %v1184
        %v1252 = vpop.f32.mrb[0].mxu0
        %v1253 = vadd.f32 0.0, %v1252
        %v1254 = vpop.f32.mrb[0].mxu0
        %1255 = vdwg.mxu0
        %v1257 = vsel %vm855, %v1015, 0
        %1259 = vmatprep.subr.mxu0 0.0
        %1260 = vmatpush1.msra.mxu0 %v846
        %1261 = vmatprep.subr.mxu0 0.0
        %1262 = vmatpush1.msra.mxu0 0.0
        %1263 = vmatprep.subr.mxu0 0.0
        %1264 = vmatpush1.msra.mxu0 0.0
        %1265 = vmatprep.subr.mxu0 0.0
        %1266 = vmatpush1.msra.mxu0 0.0
        %1267 = vmatprep.subr.mxu0 0.0
        %1268 = vmatpush1.msra.mxu0 0.0
        %1269 = vmatprep.subr.mxu0 0.0
        %1270 = vmatpush1.msra.mxu0 0.0
        %1271 = vmatprep.subr.mxu0 0.0
        %1272 = vmatpush1.msra.mxu0 0.0
        %1273 = vmatprep.subr.mxu0 0.0
        %1274 = vmatpush1.msra.mxu0 0.0
        %1275 = vmatprep.subr.mxu0 0.0
        %1276 = vmatpush1.msra.mxu0 0.0
        %1277 = vmatprep.subr.mxu0 0.0
        %1278 = vmatpush1.msra.mxu0 0.0
        %1279 = vmatprep.subr.mxu0 0.0
        %1280 = vmatpush1.msra.mxu0 0.0
        %1281 = vmatprep.subr.mxu0 0.0
        %1282 = vmatpush1.msra.mxu0 0.0
        %1283 = vmatprep.subr.mxu0 0.0
        %1284 = vmatpush1.msra.mxu0 0.0
        %1285 = vmatprep.subr.mxu0 0.0
        %1286 = vmatpush1.msra.mxu0 0.0
        %1287 = vmatprep.subr.mxu0 0.0
        %1288 = vmatpush1.msra.mxu0 0.0
        %1289 = vmatprep.subr.mxu0 0.0
        %1290 = vmatpush1.msra.mxu0 0.0
        %1291 = vmatprep.subr.mxu0 0.0
        %1292 = vmatpush1.msra.mxu0 0.0
        %1293 = vmatprep.subr.mxu0 0.0
        %1294 = vmatpush1.msra.mxu0 0.0
        %1295 = vmatprep.subr.mxu0 0.0
        %1296 = vmatpush1.msra.mxu0 0.0
        %1297 = vmatprep.subr.mxu0 0.0
        %1298 = vmatpush1.msra.mxu0 0.0
        %1299 = vmatprep.subr.mxu0 0.0
        %1300 = vmatpush1.msra.mxu0 0.0
        %1301 = vmatprep.subr.mxu0 0.0
        %1302 = vmatpush1.msra.mxu0 0.0
        %1303 = vmatprep.subr.mxu0 0.0
        %1304 = vmatpush1.msra.mxu0 0.0
        %1305 = vmatprep.subr.mxu0 0.0
        %1306 = vmatpush1.msra.mxu0 0.0
        %1307 = vmatprep.subr.mxu0 0.0
        %1308 = vmatpush1.msra.mxu0 0.0
        %1309 = vmatprep.subr.mxu0 0.0
        %1310 = vmatpush1.msra.mxu0 0.0
        %1311 = vmatprep.subr.mxu0 0.0
        %1312 = vmatpush1.msra.mxu0 0.0
        %1313 = vmatprep.subr.mxu0 0.0
        %1314 = vmatpush1.msra.mxu0 0.0
        %1315 = vmatprep.subr.mxu0 0.0
        %1316 = vmatpush1.msra.mxu0 0.0
        %1317 = vmatprep.subr.mxu0 0.0
        %1318 = vmatpush1.msra.mxu0 0.0
        %1319 = vmatprep.subr.mxu0 0.0
        %1320 = vmatpush1.msra.mxu0 0.0
        %1321 = vmatprep.subr.mxu0 0.0
        %1322 = vmatpush1.msra.mxu0 0.0
        %1323 = vmatprep.mubr.f32.mxu0 0.0
        %1324 = vmatmul.mubr.f32.gmra.mrb[0].mxu0 %v1257
        %v1325 = vpop.f32.mrb[0].mxu0
        %v1326 = vadd.f32 %v1253, %v1325
        %v1327 = vpop.f32.mrb[0].mxu0
        %1328 = vdwg.mxu0
        %1329 = vrot.lane.b32.xlu0 %v851, 112
        %v1330 = vpop.permute.xlu0 %1329
        %1331 = vrot.lane.b32.xlu0 %v843, 80
        %v1332 = vpop.permute.xlu0 %1331
        %v1333 = vsel %vm855, %v1330, 0
        %v1335 = vsel %vm855, %v1332, 0
        %1337 = vmatprep.subr.mxu0 0.0
        %1338 = vmatpush1.xpose.msra.mxu0 %v1335
        %1339 = vmatprep.subr.mxu0 0.0
        %1340 = vmatpush1.xpose.msra.mxu0 0.0
        %1341 = vmatprep.subr.mxu0 0.0
        %1342 = vmatpush1.xpose.msra.mxu0 0.0
        %1343 = vmatprep.subr.mxu0 0.0
        %1344 = vmatpush1.xpose.msra.mxu0 0.0
        %1345 = vmatprep.subr.mxu0 0.0
        %1346 = vmatpush1.xpose.msra.mxu0 0.0
        %1347 = vmatprep.subr.mxu0 0.0
        %1348 = vmatpush1.xpose.msra.mxu0 0.0
        %1349 = vmatprep.subr.mxu0 0.0
        %1350 = vmatpush1.xpose.msra.mxu0 0.0
        %1351 = vmatprep.subr.mxu0 0.0
        %1352 = vmatpush1.xpose.msra.mxu0 0.0
        %1353 = vmatprep.subr.mxu0 0.0
        %1354 = vmatpush1.xpose.msra.mxu0 0.0
        %1355 = vmatprep.subr.mxu0 0.0
        %1356 = vmatpush1.xpose.msra.mxu0 0.0
        %1357 = vmatprep.subr.mxu0 0.0
        %1358 = vmatpush1.xpose.msra.mxu0 0.0
        %1359 = vmatprep.subr.mxu0 0.0
        %1360 = vmatpush1.xpose.msra.mxu0 0.0
        %1361 = vmatprep.subr.mxu0 0.0
        %1362 = vmatpush1.xpose.msra.mxu0 0.0
        %1363 = vmatprep.subr.mxu0 0.0
        %1364 = vmatpush1.xpose.msra.mxu0 0.0
        %1365 = vmatprep.subr.mxu0 0.0
        %1366 = vmatpush1.xpose.msra.mxu0 0.0
        %1367 = vmatprep.subr.mxu0 0.0
        %1368 = vmatpush1.xpose.msra.mxu0 0.0
        %1369 = vmatprep.subr.mxu0 0.0
        %1370 = vmatpush1.xpose.msra.mxu0 0.0
        %1371 = vmatprep.subr.mxu0 0.0
        %1372 = vmatpush1.xpose.msra.mxu0 0.0
        %1373 = vmatprep.subr.mxu0 0.0
        %1374 = vmatpush1.xpose.msra.mxu0 0.0
        %1375 = vmatprep.subr.mxu0 0.0
        %1376 = vmatpush1.xpose.msra.mxu0 0.0
        %1377 = vmatprep.subr.mxu0 0.0
        %1378 = vmatpush1.xpose.msra.mxu0 0.0
        %1379 = vmatprep.subr.mxu0 0.0
        %1380 = vmatpush1.xpose.msra.mxu0 0.0
        %1381 = vmatprep.subr.mxu0 0.0
        %1382 = vmatpush1.xpose.msra.mxu0 0.0
        %1383 = vmatprep.subr.mxu0 0.0
        %1384 = vmatpush1.xpose.msra.mxu0 0.0
        %1385 = vmatprep.subr.mxu0 0.0
        %1386 = vmatpush1.xpose.msra.mxu0 0.0
        %1387 = vmatprep.subr.mxu0 0.0
        %1388 = vmatpush1.xpose.msra.mxu0 0.0
        %1389 = vmatprep.subr.mxu0 0.0
        %1390 = vmatpush1.xpose.msra.mxu0 0.0
        %1391 = vmatprep.subr.mxu0 0.0
        %1392 = vmatpush1.xpose.msra.mxu0 0.0
        %1393 = vmatprep.subr.mxu0 0.0
        %1394 = vmatpush1.xpose.msra.mxu0 0.0
        %1395 = vmatprep.subr.mxu0 0.0
        %1396 = vmatpush1.xpose.msra.mxu0 0.0
        %1397 = vmatprep.subr.mxu0 0.0
        %1398 = vmatpush1.xpose.msra.mxu0 0.0
        %1399 = vmatprep.subr.mxu0 0.0
        %1400 = vmatpush1.xpose.msra.mxu0 0.0
        %1401 = vmatprep.mubr.f32.mxu0 0.0
        %1402 = vmatmul.mubr.f32.gmra.mrb[0].mxu0 %v1333
        %v1403 = vpop.f32.mrb[0].mxu0
        %v1404 = vadd.f32 0.0, %v1403
        %v1405 = vpop.f32.mrb[0].mxu0
        %1406 = vdwg.mxu0
        %v1407 = vsel %vm855, %v1404, -inf
        %1408 = vmax.xlane.f32.xlu0 %v1407
        %v1409 = vpop.xlane.xlu0 %1408
        %v1410 = vsub.f32 %v1404, %v1409
        %v1411 = vmul.f32 %v1410, 1.442695
        %v1412 = vpow.pop %v1411
        %v1413 = vsel %vm855, %v1412, 0.0
        %1414 = vadd.xlane.f32.xlu0 %v1413
        %v1415 = vpop.xlane.xlu0 %1414
        %v1416 = vrcp.pop %v1415
        %v1417 = vmul.f32 %v1412, %v1416
        %1418 = vrot.lane.b32.xlu0 %v843, 48
        %v1419 = vpop.permute.xlu0 %1418
        %v1422 = vsel %vm855, %v1417, 0
        %1424 = vmatprep.subr.mxu0 0.0
        %1425 = vmatpush1.msra.mxu0 %v1419
        %1426 = vmatprep.subr.mxu0 0.0
        %1427 = vmatpush1.msra.mxu0 0.0
        %1428 = vmatprep.subr.mxu0 0.0
        %1429 = vmatpush1.msra.mxu0 0.0
        %1430 = vmatprep.subr.mxu0 0.0
        %1431 = vmatpush1.msra.mxu0 0.0
        %1432 = vmatprep.subr.mxu0 0.0
        %1433 = vmatpush1.msra.mxu0 0.0
        %1434 = vmatprep.subr.mxu0 0.0
        %1435 = vmatpush1.msra.mxu0 0.0
        %1436 = vmatprep.subr.mxu0 0.0
        %1437 = vmatpush1.msra.mxu0 0.0
        %1438 = vmatprep.subr.mxu0 0.0
        %1439 = vmatpush1.msra.mxu0 0.0
        %1440 = vmatprep.subr.mxu0 0.0
        %1441 = vmatpush1.msra.mxu0 0.0
        %1442 = vmatprep.subr.mxu0 0.0
        %1443 = vmatpush1.msra.mxu0 0.0
        %1444 = vmatprep.subr.mxu0 0.0
        %1445 = vmatpush1.msra.mxu0 0.0
        %1446 = vmatprep.subr.mxu0 0.0
        %1447 = vmatpush1.msra.mxu0 0.0
        %1448 = vmatprep.subr.mxu0 0.0
        %1449 = vmatpush1.msra.mxu0 0.0
        %1450 = vmatprep.subr.mxu0 0.0
        %1451 = vmatpush1.msra.mxu0 0.0
        %1452 = vmatprep.subr.mxu0 0.0
        %1453 = vmatpush1.msra.mxu0 0.0
        %1454 = vmatprep.subr.mxu0 0.0
        %1455 = vmatpush1.msra.mxu0 0.0
        %1456 = vmatprep.subr.mxu0 0.0
        %1457 = vmatpush1.msra.mxu0 0.0
        %1458 = vmatprep.subr.mxu0 0.0
        %1459 = vmatpush1.msra.mxu0 0.0
        %1460 = vmatprep.subr.mxu0 0.0
        %1461 = vmatpush1.msra.mxu0 0.0
        %1462 = vmatprep.subr.mxu0 0.0
        %1463 = vmatpush1.msra.mxu0 0.0
        %1464 = vmatprep.subr.mxu0 0.0
        %1465 = vmatpush1.msra.mxu0 0.0
        %1466 = vmatprep.subr.mxu0 0.0
        %1467 = vmatpush1.msra.mxu0 0.0
        %1468 = vmatprep.subr.mxu0 0.0
        %1469 = vmatpush1.msra.mxu0 0.0
        %1470 = vmatprep.subr.mxu0 0.0
        %1471 = vmatpush1.msra.mxu0 0.0
        %1472 = vmatprep.subr.mxu0 0.0
        %1473 = vmatpush1.msra.mxu0 0.0
        %1474 = vmatprep.subr.mxu0 0.0
        %1475 = vmatpush1.msra.mxu0 0.0
        %1476 = vmatprep.subr.mxu0 0.0
        %1477 = vmatpush1.msra.mxu0 0.0
        %1478 = vmatprep.subr.mxu0 0.0
        %1479 = vmatpush1.msra.mxu0 0.0
        %1480 = vmatprep.subr.mxu0 0.0
        %1481 = vmatpush1.msra.mxu0 0.0
        %1482 = vmatprep.subr.mxu0 0.0
        %1483 = vmatpush1.msra.mxu0 0.0
        %1484 = vmatprep.subr.mxu0 0.0
        %1485 = vmatpush1.msra.mxu0 0.0
        %1486 = vmatprep.subr.mxu0 0.0
        %1487 = vmatpush1.msra.mxu0 0.0
        %1488 = vmatprep.mubr.f32.mxu0 0.0
        %1489 = vmatmul.mubr.f32.gmra.mrb[0].mxu0 %v1422
        %v1490 = vpop.f32.mrb[0].mxu0
        %v1491 = vadd.f32 0.0, %v1490
        %v1492 = vpop.f32.mrb[0].mxu0
        %1493 = vdwg.mxu0
        %v1495 = vsel %vm855, %v1491, 0
        %1497 = vmatprep.subr.mxu0 0.0
        %1498 = vmatpush1.msra.mxu0 %v848
        %1499 = vmatprep.subr.mxu0 0.0
        %1500 = vmatpush1.msra.mxu0 0.0
        %1501 = vmatprep.subr.mxu0 0.0
        %1502 = vmatpush1.msra.mxu0 0.0
        %1503 = vmatprep.subr.mxu0 0.0
        %1504 = vmatpush1.msra.mxu0 0.0
        %1505 = vmatprep.subr.mxu0 0.0
        %1506 = vmatpush1.msra.mxu0 0.0
        %1507 = vmatprep.subr.mxu0 0.0
        %1508 = vmatpush1.msra.mxu0 0.0
        %1509 = vmatprep.subr.mxu0 0.0
        %1510 = vmatpush1.msra.mxu0 0.0
        %1511 = vmatprep.subr.mxu0 0.0
        %1512 = vmatpush1.msra.mxu0 0.0
        %1513 = vmatprep.subr.mxu0 0.0
        %1514 = vmatpush1.msra.mxu0 0.0
        %1515 = vmatprep.subr.mxu0 0.0
        %1516 = vmatpush1.msra.mxu0 0.0
        %1517 = vmatprep.subr.mxu0 0.0
        %1518 = vmatpush1.msra.mxu0 0.0
        %1519 = vmatprep.subr.mxu0 0.0
        %1520 = vmatpush1.msra.mxu0 0.0
        %1521 = vmatprep.subr.mxu0 0.0
        %1522 = vmatpush1.msra.mxu0 0.0
        %1523 = vmatprep.subr.mxu0 0.0
        %1524 = vmatpush1.msra.mxu0 0.0
        %1525 = vmatprep.subr.mxu0 0.0
        %1526 = vmatpush1.msra.mxu0 0.0
        %1527 = vmatprep.subr.mxu0 0.0
        %1528 = vmatpush1.msra.mxu0 0.0
        %1529 = vmatprep.subr.mxu0 0.0
        %1530 = vmatpush1.msra.mxu0 0.0
        %1531 = vmatprep.subr.mxu0 0.0
        %1532 = vmatpush1.msra.mxu0 0.0
        %1533 = vmatprep.subr.mxu0 0.0
        %1534 = vmatpush1.msra.mxu0 0.0
        %1535 = vmatprep.subr.mxu0 0.0
        %1536 = vmatpush1.msra.mxu0 0.0
        %1537 = vmatprep.subr.mxu0 0.0
        %1538 = vmatpush1.msra.mxu0 0.0
        %1539 = vmatprep.subr.mxu0 0.0
        %1540 = vmatpush1.msra.mxu0 0.0
        %1541 = vmatprep.subr.mxu0 0.0
        %1542 = vmatpush1.msra.mxu0 0.0
        %1543 = vmatprep.subr.mxu0 0.0
        %1544 = vmatpush1.msra.mxu0 0.0
        %1545 = vmatprep.subr.mxu0 0.0
        %1546 = vmatpush1.msra.mxu0 0.0
        %1547 = vmatprep.subr.mxu0 0.0
        %1548 = vmatpush1.msra.mxu0 0.0
        %1549 = vmatprep.subr.mxu0 0.0
        %1550 = vmatpush1.msra.mxu0 0.0
        %1551 = vmatprep.subr.mxu0 0.0
        %1552 = vmatpush1.msra.mxu0 0.0
        %1553 = vmatprep.subr.mxu0 0.0
        %1554 = vmatpush1.msra.mxu0 0.0
        %1555 = vmatprep.subr.mxu0 0.0
        %1556 = vmatpush1.msra.mxu0 0.0
        %1557 = vmatprep.subr.mxu0 0.0
        %1558 = vmatpush1.msra.mxu0 0.0
        %1559 = vmatprep.subr.mxu0 0.0
        %1560 = vmatpush1.msra.mxu0 0.0
        %1561 = vmatprep.mubr.f32.mxu0 0.0
        %1562 = vmatmul.mubr.f32.gmra.mrb[0].mxu0 %v1495
        %v1563 = vpop.f32.mrb[0].mxu0
        %v1564 = vadd.f32 0.0, %v1563
        %v1565 = vpop.f32.mrb[0].mxu0
        %1566 = vdwg.mxu0
        %v1567 = vadd.f32 %v1326, %v1564
        %1568 = vrot.lane.b32.xlu0 %v851, 104
        %v1569 = vpop.permute.xlu0 %1568
        %1570 = vrot.lane.b32.xlu0 %v843, 72
        %v1571 = vpop.permute.xlu0 %1570
        %v1572 = vsel %vm855, %v1569, 0
        %v1574 = vsel %vm855, %v1571, 0
        %1576 = vmatprep.subr.mxu0 0.0
        %1577 = vmatpush1.xpose.msra.mxu0 %v1574
        %1578 = vmatprep.subr.mxu0 0.0
        %1579 = vmatpush1.xpose.msra.mxu0 0.0
        %1580 = vmatprep.subr.mxu0 0.0
        %1581 = vmatpush1.xpose.msra.mxu0 0.0
        %1582 = vmatprep.subr.mxu0 0.0
        %1583 = vmatpush1.xpose.msra.mxu0 0.0
        %1584 = vmatprep.subr.mxu0 0.0
        %1585 = vmatpush1.xpose.msra.mxu0 0.0
        %1586 = vmatprep.subr.mxu0 0.0
        %1587 = vmatpush1.xpose.msra.mxu0 0.0
        %1588 = vmatprep.subr.mxu0 0.0
        %1589 = vmatpush1.xpose.msra.mxu0 0.0
        %1590 = vmatprep.subr.mxu0 0.0
        %1591 = vmatpush1.xpose.msra.mxu0 0.0
        %1592 = vmatprep.subr.mxu0 0.0
        %1593 = vmatpush1.xpose.msra.mxu0 0.0
        %1594 = vmatprep.subr.mxu0 0.0
        %1595 = vmatpush1.xpose.msra.mxu0 0.0
        %1596 = vmatprep.subr.mxu0 0.0
        %1597 = vmatpush1.xpose.msra.mxu0 0.0
        %1598 = vmatprep.subr.mxu0 0.0
        %1599 = vmatpush1.xpose.msra.mxu0 0.0
        %1600 = vmatprep.subr.mxu0 0.0
        %1601 = vmatpush1.xpose.msra.mxu0 0.0
        %1602 = vmatprep.subr.mxu0 0.0
        %1603 = vmatpush1.xpose.msra.mxu0 0.0
        %1604 = vmatprep.subr.mxu0 0.0
        %1605 = vmatpush1.xpose.msra.mxu0 0.0
        %1606 = vmatprep.subr.mxu0 0.0
        %1607 = vmatpush1.xpose.msra.mxu0 0.0
        %1608 = vmatprep.subr.mxu0 0.0
        %1609 = vmatpush1.xpose.msra.mxu0 0.0
        %1610 = vmatprep.subr.mxu0 0.0
        %1611 = vmatpush1.xpose.msra.mxu0 0.0
        %1612 = vmatprep.subr.mxu0 0.0
        %1613 = vmatpush1.xpose.msra.mxu0 0.0
        %1614 = vmatprep.subr.mxu0 0.0
        %1615 = vmatpush1.xpose.msra.mxu0 0.0
        %1616 = vmatprep.subr.mxu0 0.0
        %1617 = vmatpush1.xpose.msra.mxu0 0.0
        %1618 = vmatprep.subr.mxu0 0.0
        %1619 = vmatpush1.xpose.msra.mxu0 0.0
        %1620 = vmatprep.subr.mxu0 0.0
        %1621 = vmatpush1.xpose.msra.mxu0 0.0
        %1622 = vmatprep.subr.mxu0 0.0
        %1623 = vmatpush1.xpose.msra.mxu0 0.0
        %1624 = vmatprep.subr.mxu0 0.0
        %1625 = vmatpush1.xpose.msra.mxu0 0.0
        %1626 = vmatprep.subr.mxu0 0.0
        %1627 = vmatpush1.xpose.msra.mxu0 0.0
        %1628 = vmatprep.subr.mxu0 0.0
        %1629 = vmatpush1.xpose.msra.mxu0 0.0
        %1630 = vmatprep.subr.mxu0 0.0
        %1631 = vmatpush1.xpose.msra.mxu0 0.0
        %1632 = vmatprep.subr.mxu0 0.0
        %1633 = vmatpush1.xpose.msra.mxu0 0.0
        %1634 = vmatprep.subr.mxu0 0.0
        %1635 = vmatpush1.xpose.msra.mxu0 0.0
        %1636 = vmatprep.subr.mxu0 0.0
        %1637 = vmatpush1.xpose.msra.mxu0 0.0
        %1638 = vmatprep.subr.mxu0 0.0
        %1639 = vmatpush1.xpose.msra.mxu0 0.0
        %1640 = vmatprep.mubr.f32.mxu0 0.0
        %1641 = vmatmul.mubr.f32.gmra.mrb[0].mxu0 %v1572
        %v1642 = vpop.f32.mrb[0].mxu0
        %v1643 = vadd.f32 0.0, %v1642
        %v1644 = vpop.f32.mrb[0].mxu0
        %1645 = vdwg.mxu0
        %v1646 = vsel %vm855, %v1643, -inf
        %1647 = vmax.xlane.f32.xlu0 %v1646
        %v1648 = vpop.xlane.xlu0 %1647
        %v1649 = vsub.f32 %v1643, %v1648
        %v1650 = vmul.f32 %v1649, 1.442695
        %v1651 = vpow.pop %v1650
        %v1652 = vsel %vm855, %v1651, 0.0
        %1653 = vadd.xlane.f32.xlu0 %v1652
        %v1654 = vpop.xlane.xlu0 %1653
        %v1655 = vrcp.pop %v1654
        %v1656 = vmul.f32 %v1651, %v1655
        %1657 = vrot.lane.b32.xlu0 %v843, 40
        %v1658 = vpop.permute.xlu0 %1657
        %v1661 = vsel %vm855, %v1656, 0
        %1663 = vmatprep.subr.mxu0 0.0
        %1664 = vmatpush1.msra.mxu0 %v1658
        %1665 = vmatprep.subr.mxu0 0.0
        %1666 = vmatpush1.msra.mxu0 0.0
        %1667 = vmatprep.subr.mxu0 0.0
        %1668 = vmatpush1.msra.mxu0 0.0
        %1669 = vmatprep.subr.mxu0 0.0
        %1670 = vmatpush1.msra.mxu0 0.0
        %1671 = vmatprep.subr.mxu0 0.0
        %1672 = vmatpush1.msra.mxu0 0.0
        %1673 = vmatprep.subr.mxu0 0.0
        %1674 = vmatpush1.msra.mxu0 0.0
        %1675 = vmatprep.subr.mxu0 0.0
        %1676 = vmatpush1.msra.mxu0 0.0
        %1677 = vmatprep.subr.mxu0 0.0
        %1678 = vmatpush1.msra.mxu0 0.0
        %1679 = vmatprep.subr.mxu0 0.0
        %1680 = vmatpush1.msra.mxu0 0.0
        %1681 = vmatprep.subr.mxu0 0.0
        %1682 = vmatpush1.msra.mxu0 0.0
        %1683 = vmatprep.subr.mxu0 0.0
        %1684 = vmatpush1.msra.mxu0 0.0
        %1685 = vmatprep.subr.mxu0 0.0
        %1686 = vmatpush1.msra.mxu0 0.0
        %1687 = vmatprep.subr.mxu0 0.0
        %1688 = vmatpush1.msra.mxu0 0.0
        %1689 = vmatprep.subr.mxu0 0.0
        %1690 = vmatpush1.msra.mxu0 0.0
        %1691 = vmatprep.subr.mxu0 0.0
        %1692 = vmatpush1.msra.mxu0 0.0
        %1693 = vmatprep.subr.mxu0 0.0
        %1694 = vmatpush1.msra.mxu0 0.0
        %1695 = vmatprep.subr.mxu0 0.0
        %1696 = vmatpush1.msra.mxu0 0.0
        %1697 = vmatprep.subr.mxu0 0.0
        %1698 = vmatpush1.msra.mxu0 0.0
        %1699 = vmatprep.subr.mxu0 0.0
        %1700 = vmatpush1.msra.mxu0 0.0
        %1701 = vmatprep.subr.mxu0 0.0
        %1702 = vmatpush1.msra.mxu0 0.0
        %1703 = vmatprep.subr.mxu0 0.0
        %1704 = vmatpush1.msra.mxu0 0.0
        %1705 = vmatprep.subr.mxu0 0.0
        %1706 = vmatpush1.msra.mxu0 0.0
        %1707 = vmatprep.subr.mxu0 0.0
        %1708 = vmatpush1.msra.mxu0 0.0
        %1709 = vmatprep.subr.mxu0 0.0
        %1710 = vmatpush1.msra.mxu0 0.0
        %1711 = vmatprep.subr.mxu0 0.0
        %1712 = vmatpush1.msra.mxu0 0.0
        %1713 = vmatprep.subr.mxu0 0.0
        %1714 = vmatpush1.msra.mxu0 0.0
        %1715 = vmatprep.subr.mxu0 0.0
        %1716 = vmatpush1.msra.mxu0 0.0
        %1717 = vmatprep.subr.mxu0 0.0
        %1718 = vmatpush1.msra.mxu0 0.0
        %1719 = vmatprep.subr.mxu0 0.0
        %1720 = vmatpush1.msra.mxu0 0.0
        %1721 = vmatprep.subr.mxu0 0.0
        %1722 = vmatpush1.msra.mxu0 0.0
        %1723 = vmatprep.subr.mxu0 0.0
        %1724 = vmatpush1.msra.mxu0 0.0
        %1725 = vmatprep.subr.mxu0 0.0
        %1726 = vmatpush1.msra.mxu0 0.0
        %1727 = vmatprep.mubr.f32.mxu0 0.0
        %1728 = vmatmul.mubr.f32.gmra.mrb[0].mxu0 %v1661
        %v1729 = vpop.f32.mrb[0].mxu0
        %v1730 = vadd.f32 0.0, %v1729
        %v1731 = vpop.f32.mrb[0].mxu0
        %1732 = vdwg.mxu0
        %v1734 = vsel %vm855, %v1730, 0
        %1736 = vmatprep.subr.mxu0 0.0
        %1737 = vmatpush1.msra.mxu0 %v849
        %1738 = vmatprep.subr.mxu0 0.0
        %1739 = vmatpush1.msra.mxu0 0.0
        %1740 = vmatprep.subr.mxu0 0.0
        %1741 = vmatpush1.msra.mxu0 0.0
        %1742 = vmatprep.subr.mxu0 0.0
        %1743 = vmatpush1.msra.mxu0 0.0
        %1744 = vmatprep.subr.mxu0 0.0
        %1745 = vmatpush1.msra.mxu0 0.0
        %1746 = vmatprep.subr.mxu0 0.0
        %1747 = vmatpush1.msra.mxu0 0.0
        %1748 = vmatprep.subr.mxu0 0.0
        %1749 = vmatpush1.msra.mxu0 0.0
        %1750 = vmatprep.subr.mxu0 0.0
        %1751 = vmatpush1.msra.mxu0 0.0
        %1752 = vmatprep.subr.mxu0 0.0
        %1753 = vmatpush1.msra.mxu0 0.0
        %1754 = vmatprep.subr.mxu0 0.0
        %1755 = vmatpush1.msra.mxu0 0.0
        %1756 = vmatprep.subr.mxu0 0.0
        %1757 = vmatpush1.msra.mxu0 0.0
        %1758 = vmatprep.subr.mxu0 0.0
        %1759 = vmatpush1.msra.mxu0 0.0
        %1760 = vmatprep.subr.mxu0 0.0
        %1761 = vmatpush1.msra.mxu0 0.0
        %1762 = vmatprep.subr.mxu0 0.0
        %1763 = vmatpush1.msra.mxu0 0.0
        %1764 = vmatprep.subr.mxu0 0.0
        %1765 = vmatpush1.msra.mxu0 0.0
        %1766 = vmatprep.subr.mxu0 0.0
        %1767 = vmatpush1.msra.mxu0 0.0
        %1768 = vmatprep.subr.mxu0 0.0
        %1769 = vmatpush1.msra.mxu0 0.0
        %1770 = vmatprep.subr.mxu0 0.0
        %1771 = vmatpush1.msra.mxu0 0.0
        %1772 = vmatprep.subr.mxu0 0.0
        %1773 = vmatpush1.msra.mxu0 0.0
        %1774 = vmatprep.subr.mxu0 0.0
        %1775 = vmatpush1.msra.mxu0 0.0
        %1776 = vmatprep.subr.mxu0 0.0
        %1777 = vmatpush1.msra.mxu0 0.0
        %1778 = vmatprep.subr.mxu0 0.0
        %1779 = vmatpush1.msra.mxu0 0.0
        %1780 = vmatprep.subr.mxu0 0.0
        %1781 = vmatpush1.msra.mxu0 0.0
        %1782 = vmatprep.subr.mxu0 0.0
        %1783 = vmatpush1.msra.mxu0 0.0
        %1784 = vmatprep.subr.mxu0 0.0
        %1785 = vmatpush1.msra.mxu0 0.0
        %1786 = vmatprep.subr.mxu0 0.0
        %1787 = vmatpush1.msra.mxu0 0.0
        %1788 = vmatprep.subr.mxu0 0.0
        %1789 = vmatpush1.msra.mxu0 0.0
        %1790 = vmatprep.subr.mxu0 0.0
        %1791 = vmatpush1.msra.mxu0 0.0
        %1792 = vmatprep.subr.mxu0 0.0
        %1793 = vmatpush1.msra.mxu0 0.0
        %1794 = vmatprep.subr.mxu0 0.0
        %1795 = vmatpush1.msra.mxu0 0.0
        %1796 = vmatprep.subr.mxu0 0.0
        %1797 = vmatpush1.msra.mxu0 0.0
        %1798 = vmatprep.subr.mxu0 0.0
        %1799 = vmatpush1.msra.mxu0 0.0
        %1800 = vmatprep.mubr.f32.mxu0 0.0
        %1801 = vmatmul.mubr.f32.gmra.mrb[0].mxu0 %v1734
        %v1802 = vpop.f32.mrb[0].mxu0
        %v1803 = vadd.f32 0.0, %v1802
        %v1804 = vpop.f32.mrb[0].mxu0
        %1805 = vdwg.mxu0
        %v1806 = vadd.f32 %v1567, %v1803
        %v1808 = vlaneseq
        %v1809 = vshrl.u32 %v1808, 7
        %v1810 = vsub.s32 0, %v1809
        %v1811 = vrot.slane %v850, %v1810
        %v1813 = vadd.f32 %v1806, %v1811
        %v1814 = vadd.f32 %v1813, %v722
        %v1815 = vld [vmem:[%s4] sm:$0x1]
        %v1816 = vld [vmem:[%s5] sm:$0x1]
        %v1817 = vsel %vm726, %v1814, 0.0
        %1818 = vadd.xlane.f32.xlu0 %v1817
        %v1819 = vpop.xlane.xlu0 %1818
        %v1820 = vmul.f32 %v1819, %v730
        %v1821 = vsub.f32 %v1814, %v1820
        %v1822 = vmul.f32 %v1821, %v1821
        %v1823 = vsel %vm726, %v1822, 0.0
        %1824 = vadd.xlane.f32.xlu0 %v1823
        %v1825 = vpop.xlane.xlu0 %1824
        %v1826 = vmul.f32 %v1825, 0.032258064
        %v1827 = vrsqrt.pop %v1826
        %v1828 = vmul.f32 %v1826, %v1827
        %vm1829 = vcmp.eq.f32.partialorder %v1826, inf
        %v1830 = vsel %vm1829, %v1826, %v1828
        %vm1831 = vcmp.eq.f32.partialorder %v1826, 0.0
        %v1832 = vand.u32 %v1826, 2147483648
        %v1833 = vsel %vm1831, %v1832, %v1830
        %v1834 = vadd.f32 %v1833, 1e-06
        %v1835 = vrcp.pop %v1834
        %v1836 = vmul.f32 %v1821, %v1835
        %v1838 = vlaneseq
        %v1839 = vshrl.u32 %v1838, 7
        %v1840 = vsub.s32 0, %v1839
        %v1841 = vrot.slane %v1815, %v1840
        %v1843 = vmul.f32 %v1841, %v1836
        %v1845 = vlaneseq
        %v1846 = vshrl.u32 %v1845, 7
        %v1847 = vsub.s32 0, %v1846
        %v1848 = vrot.slane %v1816, %v1847
        %v1850 = vadd.f32 %v1843, %v1848
        %v1851 = vld [vmem:[%s12] sm:$0xff]
        %v1852 = vld [vmem:[%s12 + $0x8] sm:$0xff]
        %v1853 = vld [vmem:[%s12 + $0x10] sm:$0xff]
        %v1854 = vld [vmem:[%s12 + $0x18] sm:$0xff]
        %v1855 = vld [vmem:[%s13] sm:$0x1]
        %v1857 = vlaneseq
        %v1858 = vshrl.u32 %v1857, 7
        %v1859 = vsub.s32 0, %v1858
        %v1860 = vrot.slane %v1855, %v1859
        %v1863 = vsel %vm726, %v1850, 0
        %1865 = vmatprep.subr.mxu0 0.0
        %1866 = vmatpush1.msra.mxu0 %v1851
        %1867 = vmatprep.subr.mxu0 0.0
        %1868 = vmatpush1.msra.mxu0 %v1852
        %1869 = vmatprep.subr.mxu0 0.0
        %1870 = vmatpush1.msra.mxu0 %v1853
        %1871 = vmatprep.subr.mxu0 0.0
        %1872 = vmatpush1.msra.mxu0 %v1854
        %1873 = vmatprep.subr.mxu0 0.0
        %1874 = vmatpush1.msra.mxu0 0.0
        %1875 = vmatprep.subr.mxu0 0.0
        %1876 = vmatpush1.msra.mxu0 0.0
        %1877 = vmatprep.subr.mxu0 0.0
        %1878 = vmatpush1.msra.mxu0 0.0
        %1879 = vmatprep.subr.mxu0 0.0
        %1880 = vmatpush1.msra.mxu0 0.0
        %1881 = vmatprep.subr.mxu0 0.0
        %1882 = vmatpush1.msra.mxu0 0.0
        %1883 = vmatprep.subr.mxu0 0.0
        %1884 = vmatpush1.msra.mxu0 0.0
        %1885 = vmatprep.subr.mxu0 0.0
        %1886 = vmatpush1.msra.mxu0 0.0
        %1887 = vmatprep.subr.mxu0 0.0
        %1888 = vmatpush1.msra.mxu0 0.0
        %1889 = vmatprep.subr.mxu0 0.0
        %1890 = vmatpush1.msra.mxu0 0.0
        %1891 = vmatprep.subr.mxu0 0.0
        %1892 = vmatpush1.msra.mxu0 0.0
        %1893 = vmatprep.subr.mxu0 0.0
        %1894 = vmatpush1.msra.mxu0 0.0
        %1895 = vmatprep.subr.mxu0 0.0
        %1896 = vmatpush1.msra.mxu0 0.0
        %1897 = vmatprep.subr.mxu0 0.0
        %1898 = vmatpush1.msra.mxu0 0.0
        %1899 = vmatprep.subr.mxu0 0.0
        %1900 = vmatpush1.msra.mxu0 0.0
        %1901 = vmatprep.subr.mxu0 0.0
        %1902 = vmatpush1.msra.mxu0 0.0
        %1903 = vmatprep.subr.mxu0 0.0
        %1904 = vmatpush1.msra.mxu0 0.0
        %1905 = vmatprep.subr.mxu0 0.0
        %1906 = vmatpush1.msra.mxu0 0.0
        %1907 = vmatprep.subr.mxu0 0.0
        %1908 = vmatpush1.msra.mxu0 0.0
        %1909 = vmatprep.subr.mxu0 0.0
        %1910 = vmatpush1.msra.mxu0 0.0
        %1911 = vmatprep.subr.mxu0 0.0
        %1912 = vmatpush1.msra.mxu0 0.0
        %1913 = vmatprep.subr.mxu0 0.0
        %1914 = vmatpush1.msra.mxu0 0.0
        %1915 = vmatprep.subr.mxu0 0.0
        %1916 = vmatpush1.msra.mxu0 0.0
        %1917 = vmatprep.subr.mxu0 0.0
        %1918 = vmatpush1.msra.mxu0 0.0
        %1919 = vmatprep.subr.mxu0 0.0
        %1920 = vmatpush1.msra.mxu0 0.0
        %1921 = vmatprep.subr.mxu0 0.0
        %1922 = vmatpush1.msra.mxu0 0.0
        %1923 = vmatprep.subr.mxu0 0.0
        %1924 = vmatpush1.msra.mxu0 0.0
        %1925 = vmatprep.subr.mxu0 0.0
        %1926 = vmatpush1.msra.mxu0 0.0
        %1927 = vmatprep.subr.mxu0 0.0
        %1928 = vmatpush1.msra.mxu0 0.0
        %1929 = vmatprep.mubr.f32.mxu0 0.0
        %1930 = vmatmul.mubr.f32.gmra.mrb[0].mxu0 %v1863
        %v1931 = vpop.f32.mrb[0].mxu0
        %v1932 = vadd.f32 %v1860, %v1931
        %v1933 = vpop.f32.mrb[0].mxu0
        %1934 = vdwg.mxu0
        %v1935 = vld [vmem:[%s14] sm:$0xff]
        %v1936 = vld [vmem:[%s14 + $0x8] sm:$0xff]
        %v1937 = vld [vmem:[%s14 + $0x10] sm:$0xff]
        %v1938 = vld [vmem:[%s14 + $0x18] sm:$0xff]
        %v1939 = vld [vmem:[%s15] sm:$0x1]
        %v1941 = vlaneseq
        %v1942 = vshrl.u32 %v1941, 7
        %v1943 = vsub.s32 0, %v1942
        %v1944 = vrot.slane %v1939, %v1943
        %v1947 = vsel %vm726, %v723, 0
        %1949 = vmatprep.subr.mxu0 0.0
        %1950 = vmatpush1.msra.mxu0 %v1935
        %1951 = vmatprep.subr.mxu0 0.0
        %1952 = vmatpush1.msra.mxu0 %v1936
        %1953 = vmatprep.subr.mxu0 0.0
        %1954 = vmatpush1.msra.mxu0 %v1937
        %1955 = vmatprep.subr.mxu0 0.0
        %1956 = vmatpush1.msra.mxu0 %v1938
        %1957 = vmatprep.subr.mxu0 0.0
        %1958 = vmatpush1.msra.mxu0 0.0
        %1959 = vmatprep.subr.mxu0 0.0
        %1960 = vmatpush1.msra.mxu0 0.0
        %1961 = vmatprep.subr.mxu0 0.0
        %1962 = vmatpush1.msra.mxu0 0.0
        %1963 = vmatprep.subr.mxu0 0.0
        %1964 = vmatpush1.msra.mxu0 0.0
        %1965 = vmatprep.subr.mxu0 0.0
        %1966 = vmatpush1.msra.mxu0 0.0
        %1967 = vmatprep.subr.mxu0 0.0
        %1968 = vmatpush1.msra.mxu0 0.0
        %1969 = vmatprep.subr.mxu0 0.0
        %1970 = vmatpush1.msra.mxu0 0.0
        %1971 = vmatprep.subr.mxu0 0.0
        %1972 = vmatpush1.msra.mxu0 0.0
        %1973 = vmatprep.subr.mxu0 0.0
        %1974 = vmatpush1.msra.mxu0 0.0
        %1975 = vmatprep.subr.mxu0 0.0
        %1976 = vmatpush1.msra.mxu0 0.0
        %1977 = vmatprep.subr.mxu0 0.0
        %1978 = vmatpush1.msra.mxu0 0.0
        %1979 = vmatprep.subr.mxu0 0.0
        %1980 = vmatpush1.msra.mxu0 0.0
        %1981 = vmatprep.subr.mxu0 0.0
        %1982 = vmatpush1.msra.mxu0 0.0
        %1983 = vmatprep.subr.mxu0 0.0
        %1984 = vmatpush1.msra.mxu0 0.0
        %1985 = vmatprep.subr.mxu0 0.0
        %1986 = vmatpush1.msra.mxu0 0.0
        %1987 = vmatprep.subr.mxu0 0.0
        %1988 = vmatpush1.msra.mxu0 0.0
        %1989 = vmatprep.subr.mxu0 0.0
        %1990 = vmatpush1.msra.mxu0 0.0
        %1991 = vmatprep.subr.mxu0 0.0
        %1992 = vmatpush1.msra.mxu0 0.0
        %1993 = vmatprep.subr.mxu0 0.0
        %1994 = vmatpush1.msra.mxu0 0.0
        %1995 = vmatprep.subr.mxu0 0.0
        %1996 = vmatpush1.msra.mxu0 0.0
        %1997 = vmatprep.subr.mxu0 0.0
        %1998 = vmatpush1.msra.mxu0 0.0
        %1999 = vmatprep.subr.mxu0 0.0
        %2000 = vmatpush1.msra.mxu0 0.0
        %2001 = vmatprep.subr.mxu0 0.0
        %2002 = vmatpush1.msra.mxu0 0.0
        %2003 = vmatprep.subr.mxu0 0.0
        %2004 = vmatpush1.msra.mxu0 0.0
        %2005 = vmatprep.subr.mxu0 0.0
        %2006 = vmatpush1.msra.mxu0 0.0
        %2007 = vmatprep.subr.mxu0 0.0
        %2008 = vmatpush1.msra.mxu0 0.0
        %2009 = vmatprep.subr.mxu0 0.0
        %2010 = vmatpush1.msra.mxu0 0.0
        %2011 = vmatprep.subr.mxu0 0.0
        %2012 = vmatpush1.msra.mxu0 0.0
        %2013 = vmatprep.mubr.f32.mxu0 0.0
        %2014 = vmatmul.mubr.f32.gmra.mrb[0].mxu0 %v1947
        %v2015 = vpop.f32.mrb[0].mxu0
        %v2016 = vadd.f32 %v1944, %v2015
        %v2017 = vpop.f32.mrb[0].mxu0
        %2018 = vdwg.mxu0
        %v2019 = vld [vmem:[%s16] sm:$0xff]
        %v2020 = vld [vmem:[%s16 + $0x8] sm:$0xff]
        %v2021 = vld [vmem:[%s16 + $0x10] sm:$0xff]
        %v2022 = vld [vmem:[%s16 + $0x18] sm:$0xff]
        %v2023 = vld [vmem:[%s17] sm:$0x1]
        %v2024 = vmul.f32 %v1932, 0.35355338
        %v2026 = vsel %vm855, %v2024, 0
        %v2029 = vsel %vm855, %v2016, 0
        %2031 = vmatprep.subr.mxu0 0.0
        %2032 = vmatpush1.xpose.msra.mxu0 %v2029
        %2033 = vmatprep.subr.mxu0 0.0
        %2034 = vmatpush1.xpose.msra.mxu0 0.0
        %2035 = vmatprep.subr.mxu0 0.0
        %2036 = vmatpush1.xpose.msra.mxu0 0.0
        %2037 = vmatprep.subr.mxu0 0.0
        %2038 = vmatpush1.xpose.msra.mxu0 0.0
        %2039 = vmatprep.subr.mxu0 0.0
        %2040 = vmatpush1.xpose.msra.mxu0 0.0
        %2041 = vmatprep.subr.mxu0 0.0
        %2042 = vmatpush1.xpose.msra.mxu0 0.0
        %2043 = vmatprep.subr.mxu0 0.0
        %2044 = vmatpush1.xpose.msra.mxu0 0.0
        %2045 = vmatprep.subr.mxu0 0.0
        %2046 = vmatpush1.xpose.msra.mxu0 0.0
        %2047 = vmatprep.subr.mxu0 0.0
        %2048 = vmatpush1.xpose.msra.mxu0 0.0
        %2049 = vmatprep.subr.mxu0 0.0
        %2050 = vmatpush1.xpose.msra.mxu0 0.0
        %2051 = vmatprep.subr.mxu0 0.0
        %2052 = vmatpush1.xpose.msra.mxu0 0.0
        %2053 = vmatprep.subr.mxu0 0.0
        %2054 = vmatpush1.xpose.msra.mxu0 0.0
        %2055 = vmatprep.subr.mxu0 0.0
        %2056 = vmatpush1.xpose.msra.mxu0 0.0
        %2057 = vmatprep.subr.mxu0 0.0
        %2058 = vmatpush1.xpose.msra.mxu0 0.0
        %2059 = vmatprep.subr.mxu0 0.0
        %2060 = vmatpush1.xpose.msra.mxu0 0.0
        %2061 = vmatprep.subr.mxu0 0.0
        %2062 = vmatpush1.xpose.msra.mxu0 0.0
        %2063 = vmatprep.subr.mxu0 0.0
        %2064 = vmatpush1.xpose.msra.mxu0 0.0
        %2065 = vmatprep.subr.mxu0 0.0
        %2066 = vmatpush1.xpose.msra.mxu0 0.0
        %2067 = vmatprep.subr.mxu0 0.0
        %2068 = vmatpush1.xpose.msra.mxu0 0.0
        %2069 = vmatprep.subr.mxu0 0.0
        %2070 = vmatpush1.xpose.msra.mxu0 0.0
        %2071 = vmatprep.subr.mxu0 0.0
        %2072 = vmatpush1.xpose.msra.mxu0 0.0
        %2073 = vmatprep.subr.mxu0 0.0
        %2074 = vmatpush1.xpose.msra.mxu0 0.0
        %2075 = vmatprep.subr.mxu0 0.0
        %2076 = vmatpush1.xpose.msra.mxu0 0.0
        %2077 = vmatprep.subr.mxu0 0.0
        %2078 = vmatpush1.xpose.msra.mxu0 0.0
        %2079 = vmatprep.subr.mxu0 0.0
        %2080 = vmatpush1.xpose.msra.mxu0 0.0
        %2081 = vmatprep.subr.mxu0 0.0
        %2082 = vmatpush1.xpose.msra.mxu0 0.0
        %2083 = vmatprep.subr.mxu0 0.0
        %2084 = vmatpush1.xpose.msra.mxu0 0.0
        %2085 = vmatprep.subr.mxu0 0.0
        %2086 = vmatpush1.xpose.msra.mxu0 0.0
        %2087 = vmatprep.subr.mxu0 0.0
        %2088 = vmatpush1.xpose.msra.mxu0 0.0
        %2089 = vmatprep.subr.mxu0 0.0
        %2090 = vmatpush1.xpose.msra.mxu0 0.0
        %2091 = vmatprep.subr.mxu0 0.0
        %2092 = vmatpush1.xpose.msra.mxu0 0.0
        %2093 = vmatprep.subr.mxu0 0.0
        %2094 = vmatpush1.xpose.msra.mxu0 0.0
        %2095 = vmatprep.mubr.f32.mxu0 0.0
        %2096 = vmatmul.mubr.f32.gmra.mrb[0].mxu0 %v2026
        %v2097 = vpop.f32.mrb[0].mxu0
        %v2098 = vadd.f32 0.0, %v2097
        %v2099 = vpop.f32.mrb[0].mxu0
        %2100 = vdwg.mxu0
        %v2101 = vsel %vm855, %v2098, -inf
        %2102 = vmax.xlane.f32.xlu0 %v2101
        %v2103 = vpop.xlane.xlu0 %2102
        %v2104 = vsub.f32 %v2098, %v2103
        %v2105 = vmul.f32 %v2104, 1.442695
        %v2106 = vpow.pop %v2105
        %v2107 = vsel %vm855, %v2106, 0.0
        %2108 = vadd.xlane.f32.xlu0 %v2107
        %v2109 = vpop.xlane.xlu0 %2108
        %v2110 = vrcp.pop %v2109
        %v2111 = vmul.f32 %v2106, %v2110
        %2112 = vrot.lane.b32.xlu0 %v2016, 96
        %v2113 = vpop.permute.xlu0 %2112
        %v2116 = vsel %vm855, %v2111, 0
        %2118 = vmatprep.subr.mxu0 0.0
        %2119 = vmatpush1.msra.mxu0 %v2113
        %2120 = vmatprep.subr.mxu0 0.0
        %2121 = vmatpush1.msra.mxu0 0.0
        %2122 = vmatprep.subr.mxu0 0.0
        %2123 = vmatpush1.msra.mxu0 0.0
        %2124 = vmatprep.subr.mxu0 0.0
        %2125 = vmatpush1.msra.mxu0 0.0
        %2126 = vmatprep.subr.mxu0 0.0
        %2127 = vmatpush1.msra.mxu0 0.0
        %2128 = vmatprep.subr.mxu0 0.0
        %2129 = vmatpush1.msra.mxu0 0.0
        %2130 = vmatprep.subr.mxu0 0.0
        %2131 = vmatpush1.msra.mxu0 0.0
        %2132 = vmatprep.subr.mxu0 0.0
        %2133 = vmatpush1.msra.mxu0 0.0
        %2134 = vmatprep.subr.mxu0 0.0
        %2135 = vmatpush1.msra.mxu0 0.0
        %2136 = vmatprep.subr.mxu0 0.0
        %2137 = vmatpush1.msra.mxu0 0.0
        %2138 = vmatprep.subr.mxu0 0.0
        %2139 = vmatpush1.msra.mxu0 0.0
        %2140 = vmatprep.subr.mxu0 0.0
        %2141 = vmatpush1.msra.mxu0 0.0
        %2142 = vmatprep.subr.mxu0 0.0
        %2143 = vmatpush1.msra.mxu0 0.0
        %2144 = vmatprep.subr.mxu0 0.0
        %2145 = vmatpush1.msra.mxu0 0.0
        %2146 = vmatprep.subr.mxu0 0.0
        %2147 = vmatpush1.msra.mxu0 0.0
        %2148 = vmatprep.subr.mxu0 0.0
        %2149 = vmatpush1.msra.mxu0 0.0
        %2150 = vmatprep.subr.mxu0 0.0
        %2151 = vmatpush1.msra.mxu0 0.0
        %2152 = vmatprep.subr.mxu0 0.0
        %2153 = vmatpush1.msra.mxu0 0.0
        %2154 = vmatprep.subr.mxu0 0.0
        %2155 = vmatpush1.msra.mxu0 0.0
        %2156 = vmatprep.subr.mxu0 0.0
        %2157 = vmatpush1.msra.mxu0 0.0
        %2158 = vmatprep.subr.mxu0 0.0
        %2159 = vmatpush1.msra.mxu0 0.0
        %2160 = vmatprep.subr.mxu0 0.0
        %2161 = vmatpush1.msra.mxu0 0.0
        %2162 = vmatprep.subr.mxu0 0.0
        %2163 = vmatpush1.msra.mxu0 0.0
        %2164 = vmatprep.subr.mxu0 0.0
        %2165 = vmatpush1.msra.mxu0 0.0
        %2166 = vmatprep.subr.mxu0 0.0
        %2167 = vmatpush1.msra.mxu0 0.0
        %2168 = vmatprep.subr.mxu0 0.0
        %2169 = vmatpush1.msra.mxu0 0.0
        %2170 = vmatprep.subr.mxu0 0.0
        %2171 = vmatpush1.msra.mxu0 0.0
        %2172 = vmatprep.subr.mxu0 0.0
        %2173 = vmatpush1.msra.mxu0 0.0
        %2174 = vmatprep.subr.mxu0 0.0
        %2175 = vmatpush1.msra.mxu0 0.0
        %2176 = vmatprep.subr.mxu0 0.0
        %2177 = vmatpush1.msra.mxu0 0.0
        %2178 = vmatprep.subr.mxu0 0.0
        %2179 = vmatpush1.msra.mxu0 0.0
        %2180 = vmatprep.subr.mxu0 0.0
        %2181 = vmatpush1.msra.mxu0 0.0
        %2182 = vmatprep.mubr.f32.mxu0 0.0
        %2183 = vmatmul.mubr.f32.gmra.mrb[0].mxu0 %v2116
        %v2184 = vpop.f32.mrb[0].mxu0
        %v2185 = vadd.f32 0.0, %v2184
        %v2186 = vpop.f32.mrb[0].mxu0
        %2187 = vdwg.mxu0
        %2188 = vrot.lane.b32.xlu0 %v2024, 120
        %v2189 = vpop.permute.xlu0 %2188
        %2190 = vrot.lane.b32.xlu0 %v2016, 120
        %v2191 = vpop.permute.xlu0 %2190
        %v2192 = vsel %vm855, %v2189, 0
        %v2194 = vsel %vm855, %v2191, 0
        %2196 = vmatprep.subr.mxu0 0.0
        %2197 = vmatpush1.xpose.msra.mxu0 %v2194
        %2198 = vmatprep.subr.mxu0 0.0
        %2199 = vmatpush1.xpose.msra.mxu0 0.0
        %2200 = vmatprep.subr.mxu0 0.0
        %2201 = vmatpush1.xpose.msra.mxu0 0.0
        %2202 = vmatprep.subr.mxu0 0.0
        %2203 = vmatpush1.xpose.msra.mxu0 0.0
        %2204 = vmatprep.subr.mxu0 0.0
        %2205 = vmatpush1.xpose.msra.mxu0 0.0
        %2206 = vmatprep.subr.mxu0 0.0
        %2207 = vmatpush1.xpose.msra.mxu0 0.0
        %2208 = vmatprep.subr.mxu0 0.0
        %2209 = vmatpush1.xpose.msra.mxu0 0.0
        %2210 = vmatprep.subr.mxu0 0.0
        %2211 = vmatpush1.xpose.msra.mxu0 0.0
        %2212 = vmatprep.subr.mxu0 0.0
        %2213 = vmatpush1.xpose.msra.mxu0 0.0
        %2214 = vmatprep.subr.mxu0 0.0
        %2215 = vmatpush1.xpose.msra.mxu0 0.0
        %2216 = vmatprep.subr.mxu0 0.0
        %2217 = vmatpush1.xpose.msra.mxu0 0.0
        %2218 = vmatprep.subr.mxu0 0.0
        %2219 = vmatpush1.xpose.msra.mxu0 0.0
        %2220 = vmatprep.subr.mxu0 0.0
        %2221 = vmatpush1.xpose.msra.mxu0 0.0
        %2222 = vmatprep.subr.mxu0 0.0
        %2223 = vmatpush1.xpose.msra.mxu0 0.0
        %2224 = vmatprep.subr.mxu0 0.0
        %2225 = vmatpush1.xpose.msra.mxu0 0.0
        %2226 = vmatprep.subr.mxu0 0.0
        %2227 = vmatpush1.xpose.msra.mxu0 0.0
        %2228 = vmatprep.subr.mxu0 0.0
        %2229 = vmatpush1.xpose.msra.mxu0 0.0
        %2230 = vmatprep.subr.mxu0 0.0
        %2231 = vmatpush1.xpose.msra.mxu0 0.0
        %2232 = vmatprep.subr.mxu0 0.0
        %2233 = vmatpush1.xpose.msra.mxu0 0.0
        %2234 = vmatprep.subr.mxu0 0.0
        %2235 = vmatpush1.xpose.msra.mxu0 0.0
        %2236 = vmatprep.subr.mxu0 0.0
        %2237 = vmatpush1.xpose.msra.mxu0 0.0
        %2238 = vmatprep.subr.mxu0 0.0
        %2239 = vmatpush1.xpose.msra.mxu0 0.0
        %2240 = vmatprep.subr.mxu0 0.0
        %2241 = vmatpush1.xpose.msra.mxu0 0.0
        %2242 = vmatprep.subr.mxu0 0.0
        %2243 = vmatpush1.xpose.msra.mxu0 0.0
        %2244 = vmatprep.subr.mxu0 0.0
        %2245 = vmatpush1.xpose.msra.mxu0 0.0
        %2246 = vmatprep.subr.mxu0 0.0
        %2247 = vmatpush1.xpose.msra.mxu0 0.0
        %2248 = vmatprep.subr.mxu0 0.0
        %2249 = vmatpush1.xpose.msra.mxu0 0.0
        %2250 = vmatprep.subr.mxu0 0.0
        %2251 = vmatpush1.xpose.msra.mxu0 0.0
        %2252 = vmatprep.subr.mxu0 0.0
        %2253 = vmatpush1.xpose.msra.mxu0 0.0
        %2254 = vmatprep.subr.mxu0 0.0
        %2255 = vmatpush1.xpose.msra.mxu0 0.0
        %2256 = vmatprep.subr.mxu0 0.0
        %2257 = vmatpush1.xpose.msra.mxu0 0.0
        %2258 = vmatprep.subr.mxu0 0.0
        %2259 = vmatpush1.xpose.msra.mxu0 0.0
        %2260 = vmatprep.mubr.f32.mxu0 0.0
        %2261 = vmatmul.mubr.f32.gmra.mrb[0].mxu0 %v2192
        %v2262 = vpop.f32.mrb[0].mxu0
        %v2263 = vadd.f32 0.0, %v2262
        %v2264 = vpop.f32.mrb[0].mxu0
        %2265 = vdwg.mxu0
        %v2266 = vsel %vm855, %v2263, -inf
        %2267 = vmax.xlane.f32.xlu0 %v2266
        %v2268 = vpop.xlane.xlu0 %2267
        %v2269 = vsub.f32 %v2263, %v2268
        %v2270 = vmul.f32 %v2269, 1.442695
        %v2271 = vpow.pop %v2270
        %v2272 = vsel %vm855, %v2271, 0.0
        %2273 = vadd.xlane.f32.xlu0 %v2272
        %v2274 = vpop.xlane.xlu0 %2273
        %v2275 = vrcp.pop %v2274
        %v2276 = vmul.f32 %v2271, %v2275
        %2277 = vrot.lane.b32.xlu0 %v2016, 88
        %v2278 = vpop.permute.xlu0 %2277
        %v2281 = vsel %vm855, %v2276, 0
        %2283 = vmatprep.subr.mxu0 0.0
        %2284 = vmatpush1.msra.mxu0 %v2278
        %2285 = vmatprep.subr.mxu0 0.0
        %2286 = vmatpush1.msra.mxu0 0.0
        %2287 = vmatprep.subr.mxu0 0.0
        %2288 = vmatpush1.msra.mxu0 0.0
        %2289 = vmatprep.subr.mxu0 0.0
        %2290 = vmatpush1.msra.mxu0 0.0
        %2291 = vmatprep.subr.mxu0 0.0
        %2292 = vmatpush1.msra.mxu0 0.0
        %2293 = vmatprep.subr.mxu0 0.0
        %2294 = vmatpush1.msra.mxu0 0.0
        %2295 = vmatprep.subr.mxu0 0.0
        %2296 = vmatpush1.msra.mxu0 0.0
        %2297 = vmatprep.subr.mxu0 0.0
        %2298 = vmatpush1.msra.mxu0 0.0
        %2299 = vmatprep.subr.mxu0 0.0
        %2300 = vmatpush1.msra.mxu0 0.0
        %2301 = vmatprep.subr.mxu0 0.0
        %2302 = vmatpush1.msra.mxu0 0.0
        %2303 = vmatprep.subr.mxu0 0.0
        %2304 = vmatpush1.msra.mxu0 0.0
        %2305 = vmatprep.subr.mxu0 0.0
        %2306 = vmatpush1.msra.mxu0 0.0
        %2307 = vmatprep.subr.mxu0 0.0
        %2308 = vmatpush1.msra.mxu0 0.0
        %2309 = vmatprep.subr.mxu0 0.0
        %2310 = vmatpush1.msra.mxu0 0.0
        %2311 = vmatprep.subr.mxu0 0.0
        %2312 = vmatpush1.msra.mxu0 0.0
        %2313 = vmatprep.subr.mxu0 0.0
        %2314 = vmatpush1.msra.mxu0 0.0
        %2315 = vmatprep.subr.mxu0 0.0
        %2316 = vmatpush1.msra.mxu0 0.0
        %2317 = vmatprep.subr.mxu0 0.0
        %2318 = vmatpush1.msra.mxu0 0.0
        %2319 = vmatprep.subr.mxu0 0.0
        %2320 = vmatpush1.msra.mxu0 0.0
        %2321 = vmatprep.subr.mxu0 0.0
        %2322 = vmatpush1.msra.mxu0 0.0
        %2323 = vmatprep.subr.mxu0 0.0
        %2324 = vmatpush1.msra.mxu0 0.0
        %2325 = vmatprep.subr.mxu0 0.0
        %2326 = vmatpush1.msra.mxu0 0.0
        %2327 = vmatprep.subr.mxu0 0.0
        %2328 = vmatpush1.msra.mxu0 0.0
        %2329 = vmatprep.subr.mxu0 0.0
        %2330 = vmatpush1.msra.mxu0 0.0
        %2331 = vmatprep.subr.mxu0 0.0
        %2332 = vmatpush1.msra.mxu0 0.0
        %2333 = vmatprep.subr.mxu0 0.0
        %2334 = vmatpush1.msra.mxu0 0.0
        %2335 = vmatprep.subr.mxu0 0.0
        %2336 = vmatpush1.msra.mxu0 0.0
        %2337 = vmatprep.subr.mxu0 0.0
        %2338 = vmatpush1.msra.mxu0 0.0
        %2339 = vmatprep.subr.mxu0 0.0
        %2340 = vmatpush1.msra.mxu0 0.0
        %2341 = vmatprep.subr.mxu0 0.0
        %2342 = vmatpush1.msra.mxu0 0.0
        %2343 = vmatprep.subr.mxu0 0.0
        %2344 = vmatpush1.msra.mxu0 0.0
        %2345 = vmatprep.subr.mxu0 0.0
        %2346 = vmatpush1.msra.mxu0 0.0
        %2347 = vmatprep.mubr.f32.mxu0 0.0
        %2348 = vmatmul.mubr.f32.gmra.mrb[0].mxu0 %v2281
        %v2349 = vpop.f32.mrb[0].mxu0
        %v2350 = vadd.f32 0.0, %v2349
        %v2351 = vpop.f32.mrb[0].mxu0
        %2352 = vdwg.mxu0
        %v2354 = vsel %vm855, %v2350, 0
        %2356 = vmatprep.subr.mxu0 0.0
        %2357 = vmatpush1.msra.mxu0 %v2020
        %2358 = vmatprep.subr.mxu0 0.0
        %2359 = vmatpush1.msra.mxu0 0.0
        %2360 = vmatprep.subr.mxu0 0.0
        %2361 = vmatpush1.msra.mxu0 0.0
        %2362 = vmatprep.subr.mxu0 0.0
        %2363 = vmatpush1.msra.mxu0 0.0
        %2364 = vmatprep.subr.mxu0 0.0
        %2365 = vmatpush1.msra.mxu0 0.0
        %2366 = vmatprep.subr.mxu0 0.0
        %2367 = vmatpush1.msra.mxu0 0.0
        %2368 = vmatprep.subr.mxu0 0.0
        %2369 = vmatpush1.msra.mxu0 0.0
        %2370 = vmatprep.subr.mxu0 0.0
        %2371 = vmatpush1.msra.mxu0 0.0
        %2372 = vmatprep.subr.mxu0 0.0
        %2373 = vmatpush1.msra.mxu0 0.0
        %2374 = vmatprep.subr.mxu0 0.0
        %2375 = vmatpush1.msra.mxu0 0.0
        %2376 = vmatprep.subr.mxu0 0.0
        %2377 = vmatpush1.msra.mxu0 0.0
        %2378 = vmatprep.subr.mxu0 0.0
        %2379 = vmatpush1.msra.mxu0 0.0
        %2380 = vmatprep.subr.mxu0 0.0
        %2381 = vmatpush1.msra.mxu0 0.0
        %2382 = vmatprep.subr.mxu0 0.0
        %2383 = vmatpush1.msra.mxu0 0.0
        %2384 = vmatprep.subr.mxu0 0.0
        %2385 = vmatpush1.msra.mxu0 0.0
        %2386 = vmatprep.subr.mxu0 0.0
        %2387 = vmatpush1.msra.mxu0 0.0
        %2388 = vmatprep.subr.mxu0 0.0
        %2389 = vmatpush1.msra.mxu0 0.0
        %2390 = vmatprep.subr.mxu0 0.0
        %2391 = vmatpush1.msra.mxu0 0.0
        %2392 = vmatprep.subr.mxu0 0.0
        %2393 = vmatpush1.msra.mxu0 0.0
        %2394 = vmatprep.subr.mxu0 0.0
        %2395 = vmatpush1.msra.mxu0 0.0
        %2396 = vmatprep.subr.mxu0 0.0
        %2397 = vmatpush1.msra.mxu0 0.0
        %2398 = vmatprep.subr.mxu0 0.0
        %2399 = vmatpush1.msra.mxu0 0.0
        %2400 = vmatprep.subr.mxu0 0.0
        %2401 = vmatpush1.msra.mxu0 0.0
        %2402 = vmatprep.subr.mxu0 0.0
        %2403 = vmatpush1.msra.mxu0 0.0
        %2404 = vmatprep.subr.mxu0 0.0
        %2405 = vmatpush1.msra.mxu0 0.0
        %2406 = vmatprep.subr.mxu0 0.0
        %2407 = vmatpush1.msra.mxu0 0.0
        %2408 = vmatprep.subr.mxu0 0.0
        %2409 = vmatpush1.msra.mxu0 0.0
        %2410 = vmatprep.subr.mxu0 0.0
        %2411 = vmatpush1.msra.mxu0 0.0
        %2412 = vmatprep.subr.mxu0 0.0
        %2413 = vmatpush1.msra.mxu0 0.0
        %2414 = vmatprep.subr.mxu0 0.0
        %2415 = vmatpush1.msra.mxu0 0.0
        %2416 = vmatprep.subr.mxu0 0.0
        %2417 = vmatpush1.msra.mxu0 0.0
        %2418 = vmatprep.subr.mxu0 0.0
        %2419 = vmatpush1.msra.mxu0 0.0
        %2420 = vmatprep.mubr.f32.mxu0 0.0
        %2421 = vmatmul.mubr.f32.gmra.mrb[0].mxu0 %v2354
        %v2422 = vpop.f32.mrb[0].mxu0
        %v2423 = vadd.f32 0.0, %v2422
        %v2424 = vpop.f32.mrb[0].mxu0
        %2425 = vdwg.mxu0
        %v2427 = vsel %vm855, %v2185, 0
        %2429 = vmatprep.subr.mxu0 0.0
        %2430 = vmatpush1.msra.mxu0 %v2019
        %2431 = vmatprep.subr.mxu0 0.0
        %2432 = vmatpush1.msra.mxu0 0.0
        %2433 = vmatprep.subr.mxu0 0.0
        %2434 = vmatpush1.msra.mxu0 0.0
        %2435 = vmatprep.subr.mxu0 0.0
        %2436 = vmatpush1.msra.mxu0 0.0
        %2437 = vmatprep.subr.mxu0 0.0
        %2438 = vmatpush1.msra.mxu0 0.0
        %2439 = vmatprep.subr.mxu0 0.0
        %2440 = vmatpush1.msra.mxu0 0.0
        %2441 = vmatprep.subr.mxu0 0.0
        %2442 = vmatpush1.msra.mxu0 0.0
        %2443 = vmatprep.subr.mxu0 0.0
        %2444 = vmatpush1.msra.mxu0 0.0
        %2445 = vmatprep.subr.mxu0 0.0
        %2446 = vmatpush1.msra.mxu0 0.0
        %2447 = vmatprep.subr.mxu0 0.0
        %2448 = vmatpush1.msra.mxu0 0.0
        %2449 = vmatprep.subr.mxu0 0.0
        %2450 = vmatpush1.msra.mxu0 0.0
        %2451 = vmatprep.subr.mxu0 0.0
        %2452 = vmatpush1.msra.mxu0 0.0
        %2453 = vmatprep.subr.mxu0 0.0
        %2454 = vmatpush1.msra.mxu0 0.0
        %2455 = vmatprep.subr.mxu0 0.0
        %2456 = vmatpush1.msra.mxu0 0.0
        %2457 = vmatprep.subr.mxu0 0.0
        %2458 = vmatpush1.msra.mxu0 0.0
        %2459 = vmatprep.subr.mxu0 0.0
        %2460 = vmatpush1.msra.mxu0 0.0
        %2461 = vmatprep.subr.mxu0 0.0
        %2462 = vmatpush1.msra.mxu0 0.0
        %2463 = vmatprep.subr.mxu0 0.0
        %2464 = vmatpush1.msra.mxu0 0.0
        %2465 = vmatprep.subr.mxu0 0.0
        %2466 = vmatpush1.msra.mxu0 0.0
        %2467 = vmatprep.subr.mxu0 0.0
        %2468 = vmatpush1.msra.mxu0 0.0
        %2469 = vmatprep.subr.mxu0 0.0
        %2470 = vmatpush1.msra.mxu0 0.0
        %2471 = vmatprep.subr.mxu0 0.0
        %2472 = vmatpush1.msra.mxu0 0.0
        %2473 = vmatprep.subr.mxu0 0.0
        %2474 = vmatpush1.msra.mxu0 0.0
        %2475 = vmatprep.subr.mxu0 0.0
        %2476 = vmatpush1.msra.mxu0 0.0
        %2477 = vmatprep.subr.mxu0 0.0
        %2478 = vmatpush1.msra.mxu0 0.0
        %2479 = vmatprep.subr.mxu0 0.0
        %2480 = vmatpush1.msra.mxu0 0.0
        %2481 = vmatprep.subr.mxu0 0.0
        %2482 = vmatpush1.msra.mxu0 0.0
        %2483 = vmatprep.subr.mxu0 0.0
        %2484 = vmatpush1.msra.mxu0 0.0
        %2485 = vmatprep.subr.mxu0 0.0
        %2486 = vmatpush1.msra.mxu0 0.0
        %2487 = vmatprep.subr.mxu0 0.0
        %2488 = vmatpush1.msra.mxu0 0.0
        %2489 = vmatprep.subr.mxu0 0.0
        %2490 = vmatpush1.msra.mxu0 0.0
        %2491 = vmatprep.subr.mxu0 0.0
        %2492 = vmatpush1.msra.mxu0 0.0
        %2493 = vmatprep.mubr.f32.mxu0 0.0
        %2494 = vmatmul.mubr.f32.gmra.mrb[0].mxu0 %v2427
        %v2495 = vpop.f32.mrb[0].mxu0
        %v2496 = vadd.f32 %v2423, %v2495
        %v2497 = vpop.f32.mrb[0].mxu0
        %2498 = vdwg.mxu0
        %2499 = vrot.lane.b32.xlu0 %v2024, 112
        %v2500 = vpop.permute.xlu0 %2499
        %2501 = vrot.lane.b32.xlu0 %v2016, 112
        %v2502 = vpop.permute.xlu0 %2501
        %v2503 = vsel %vm855, %v2500, 0
        %v2505 = vsel %vm855, %v2502, 0
        %2507 = vmatprep.subr.mxu0 0.0
        %2508 = vmatpush1.xpose.msra.mxu0 %v2505
        %2509 = vmatprep.subr.mxu0 0.0
        %2510 = vmatpush1.xpose.msra.mxu0 0.0
        %2511 = vmatprep.subr.mxu0 0.0
        %2512 = vmatpush1.xpose.msra.mxu0 0.0
        %2513 = vmatprep.subr.mxu0 0.0
        %2514 = vmatpush1.xpose.msra.mxu0 0.0
        %2515 = vmatprep.subr.mxu0 0.0
        %2516 = vmatpush1.xpose.msra.mxu0 0.0
        %2517 = vmatprep.subr.mxu0 0.0
        %2518 = vmatpush1.xpose.msra.mxu0 0.0
        %2519 = vmatprep.subr.mxu0 0.0
        %2520 = vmatpush1.xpose.msra.mxu0 0.0
        %2521 = vmatprep.subr.mxu0 0.0
        %2522 = vmatpush1.xpose.msra.mxu0 0.0
        %2523 = vmatprep.subr.mxu0 0.0
        %2524 = vmatpush1.xpose.msra.mxu0 0.0
        %2525 = vmatprep.subr.mxu0 0.0
        %2526 = vmatpush1.xpose.msra.mxu0 0.0
        %2527 = vmatprep.subr.mxu0 0.0
        %2528 = vmatpush1.xpose.msra.mxu0 0.0
        %2529 = vmatprep.subr.mxu0 0.0
        %2530 = vmatpush1.xpose.msra.mxu0 0.0
        %2531 = vmatprep.subr.mxu0 0.0
        %2532 = vmatpush1.xpose.msra.mxu0 0.0
        %2533 = vmatprep.subr.mxu0 0.0
        %2534 = vmatpush1.xpose.msra.mxu0 0.0
        %2535 = vmatprep.subr.mxu0 0.0
        %2536 = vmatpush1.xpose.msra.mxu0 0.0
        %2537 = vmatprep.subr.mxu0 0.0
        %2538 = vmatpush1.xpose.msra.mxu0 0.0
        %2539 = vmatprep.subr.mxu0 0.0
        %2540 = vmatpush1.xpose.msra.mxu0 0.0
        %2541 = vmatprep.subr.mxu0 0.0
        %2542 = vmatpush1.xpose.msra.mxu0 0.0
        %2543 = vmatprep.subr.mxu0 0.0
        %2544 = vmatpush1.xpose.msra.mxu0 0.0
        %2545 = vmatprep.subr.mxu0 0.0
        %2546 = vmatpush1.xpose.msra.mxu0 0.0
        %2547 = vmatprep.subr.mxu0 0.0
        %2548 = vmatpush1.xpose.msra.mxu0 0.0
        %2549 = vmatprep.subr.mxu0 0.0
        %2550 = vmatpush1.xpose.msra.mxu0 0.0
        %2551 = vmatprep.subr.mxu0 0.0
        %2552 = vmatpush1.xpose.msra.mxu0 0.0
        %2553 = vmatprep.subr.mxu0 0.0
        %2554 = vmatpush1.xpose.msra.mxu0 0.0
        %2555 = vmatprep.subr.mxu0 0.0
        %2556 = vmatpush1.xpose.msra.mxu0 0.0
        %2557 = vmatprep.subr.mxu0 0.0
        %2558 = vmatpush1.xpose.msra.mxu0 0.0
        %2559 = vmatprep.subr.mxu0 0.0
        %2560 = vmatpush1.xpose.msra.mxu0 0.0
        %2561 = vmatprep.subr.mxu0 0.0
        %2562 = vmatpush1.xpose.msra.mxu0 0.0
        %2563 = vmatprep.subr.mxu0 0.0
        %2564 = vmatpush1.xpose.msra.mxu0 0.0
        %2565 = vmatprep.subr.mxu0 0.0
        %2566 = vmatpush1.xpose.msra.mxu0 0.0
        %2567 = vmatprep.subr.mxu0 0.0
        %2568 = vmatpush1.xpose.msra.mxu0 0.0
        %2569 = vmatprep.subr.mxu0 0.0
        %2570 = vmatpush1.xpose.msra.mxu0 0.0
        %2571 = vmatprep.mubr.f32.mxu0 0.0
        %2572 = vmatmul.mubr.f32.gmra.mrb[0].mxu0 %v2503
        %v2573 = vpop.f32.mrb[0].mxu0
        %v2574 = vadd.f32 0.0, %v2573
        %v2575 = vpop.f32.mrb[0].mxu0
        %2576 = vdwg.mxu0
        %v2577 = vsel %vm855, %v2574, -inf
        %2578 = vmax.xlane.f32.xlu0 %v2577
        %v2579 = vpop.xlane.xlu0 %2578
        %v2580 = vsub.f32 %v2574, %v2579
        %v2581 = vmul.f32 %v2580, 1.442695
        %v2582 = vpow.pop %v2581
        %v2583 = vsel %vm855, %v2582, 0.0
        %2584 = vadd.xlane.f32.xlu0 %v2583
        %v2585 = vpop.xlane.xlu0 %2584
        %v2586 = vrcp.pop %v2585
        %v2587 = vmul.f32 %v2582, %v2586
        %2588 = vrot.lane.b32.xlu0 %v2016, 80
        %v2589 = vpop.permute.xlu0 %2588
        %v2592 = vsel %vm855, %v2587, 0
        %2594 = vmatprep.subr.mxu0 0.0
        %2595 = vmatpush1.msra.mxu0 %v2589
        %2596 = vmatprep.subr.mxu0 0.0
        %2597 = vmatpush1.msra.mxu0 0.0
        %2598 = vmatprep.subr.mxu0 0.0
        %2599 = vmatpush1.msra.mxu0 0.0
        %2600 = vmatprep.subr.mxu0 0.0
        %2601 = vmatpush1.msra.mxu0 0.0
        %2602 = vmatprep.subr.mxu0 0.0
        %2603 = vmatpush1.msra.mxu0 0.0
        %2604 = vmatprep.subr.mxu0 0.0
        %2605 = vmatpush1.msra.mxu0 0.0
        %2606 = vmatprep.subr.mxu0 0.0
        %2607 = vmatpush1.msra.mxu0 0.0
        %2608 = vmatprep.subr.mxu0 0.0
        %2609 = vmatpush1.msra.mxu0 0.0
        %2610 = vmatprep.subr.mxu0 0.0
        %2611 = vmatpush1.msra.mxu0 0.0
        %2612 = vmatprep.subr.mxu0 0.0
        %2613 = vmatpush1.msra.mxu0 0.0
        %2614 = vmatprep.subr.mxu0 0.0
        %2615 = vmatpush1.msra.mxu0 0.0
        %2616 = vmatprep.subr.mxu0 0.0
        %2617 = vmatpush1.msra.mxu0 0.0
        %2618 = vmatprep.subr.mxu0 0.0
        %2619 = vmatpush1.msra.mxu0 0.0
        %2620 = vmatprep.subr.mxu0 0.0
        %2621 = vmatpush1.msra.mxu0 0.0
        %2622 = vmatprep.subr.mxu0 0.0
        %2623 = vmatpush1.msra.mxu0 0.0
        %2624 = vmatprep.subr.mxu0 0.0
        %2625 = vmatpush1.msra.mxu0 0.0
        %2626 = vmatprep.subr.mxu0 0.0
        %2627 = vmatpush1.msra.mxu0 0.0
        %2628 = vmatprep.subr.mxu0 0.0
        %2629 = vmatpush1.msra.mxu0 0.0
        %2630 = vmatprep.subr.mxu0 0.0
        %2631 = vmatpush1.msra.mxu0 0.0
        %2632 = vmatprep.subr.mxu0 0.0
        %2633 = vmatpush1.msra.mxu0 0.0
        %2634 = vmatprep.subr.mxu0 0.0
        %2635 = vmatpush1.msra.mxu0 0.0
        %2636 = vmatprep.subr.mxu0 0.0
        %2637 = vmatpush1.msra.mxu0 0.0
        %2638 = vmatprep.subr.mxu0 0.0
        %2639 = vmatpush1.msra.mxu0 0.0
        %2640 = vmatprep.subr.mxu0 0.0
        %2641 = vmatpush1.msra.mxu0 0.0
        %2642 = vmatprep.subr.mxu0 0.0
        %2643 = vmatpush1.msra.mxu0 0.0
        %2644 = vmatprep.subr.mxu0 0.0
        %2645 = vmatpush1.msra.mxu0 0.0
        %2646 = vmatprep.subr.mxu0 0.0
        %2647 = vmatpush1.msra.mxu0 0.0
        %2648 = vmatprep.subr.mxu0 0.0
        %2649 = vmatpush1.msra.mxu0 0.0
        %2650 = vmatprep.subr.mxu0 0.0
        %2651 = vmatpush1.msra.mxu0 0.0
        %2652 = vmatprep.subr.mxu0 0.0
        %2653 = vmatpush1.msra.mxu0 0.0
        %2654 = vmatprep.subr.mxu0 0.0
        %2655 = vmatpush1.msra.mxu0 0.0
        %2656 = vmatprep.subr.mxu0 0.0
        %2657 = vmatpush1.msra.mxu0 0.0
        %2658 = vmatprep.mubr.f32.mxu0 0.0
        %2659 = vmatmul.mubr.f32.gmra.mrb[0].mxu0 %v2592
        %v2660 = vpop.f32.mrb[0].mxu0
        %v2661 = vadd.f32 0.0, %v2660
        %v2662 = vpop.f32.mrb[0].mxu0
        %2663 = vdwg.mxu0
        %v2665 = vsel %vm855, %v2661, 0
        %2667 = vmatprep.subr.mxu0 0.0
        %2668 = vmatpush1.msra.mxu0 %v2021
        %2669 = vmatprep.subr.mxu0 0.0
        %2670 = vmatpush1.msra.mxu0 0.0
        %2671 = vmatprep.subr.mxu0 0.0
        %2672 = vmatpush1.msra.mxu0 0.0
        %2673 = vmatprep.subr.mxu0 0.0
        %2674 = vmatpush1.msra.mxu0 0.0
        %2675 = vmatprep.subr.mxu0 0.0
        %2676 = vmatpush1.msra.mxu0 0.0
        %2677 = vmatprep.subr.mxu0 0.0
        %2678 = vmatpush1.msra.mxu0 0.0
        %2679 = vmatprep.subr.mxu0 0.0
        %2680 = vmatpush1.msra.mxu0 0.0
        %2681 = vmatprep.subr.mxu0 0.0
        %2682 = vmatpush1.msra.mxu0 0.0
        %2683 = vmatprep.subr.mxu0 0.0
        %2684 = vmatpush1.msra.mxu0 0.0
        %2685 = vmatprep.subr.mxu0 0.0
        %2686 = vmatpush1.msra.mxu0 0.0
        %2687 = vmatprep.subr.mxu0 0.0
        %2688 = vmatpush1.msra.mxu0 0.0
        %2689 = vmatprep.subr.mxu0 0.0
        %2690 = vmatpush1.msra.mxu0 0.0
        %2691 = vmatprep.subr.mxu0 0.0
        %2692 = vmatpush1.msra.mxu0 0.0
        %2693 = vmatprep.subr.mxu0 0.0
        %2694 = vmatpush1.msra.mxu0 0.0
        %2695 = vmatprep.subr.mxu0 0.0
        %2696 = vmatpush1.msra.mxu0 0.0
        %2697 = vmatprep.subr.mxu0 0.0
        %2698 = vmatpush1.msra.mxu0 0.0
        %2699 = vmatprep.subr.mxu0 0.0
        %2700 = vmatpush1.msra.mxu0 0.0
        %2701 = vmatprep.subr.mxu0 0.0
        %2702 = vmatpush1.msra.mxu0 0.0
        %2703 = vmatprep.subr.mxu0 0.0
        %2704 = vmatpush1.msra.mxu0 0.0
        %2705 = vmatprep.subr.mxu0 0.0
        %2706 = vmatpush1.msra.mxu0 0.0
        %2707 = vmatprep.subr.mxu0 0.0
        %2708 = vmatpush1.msra.mxu0 0.0
        %2709 = vmatprep.subr.mxu0 0.0
        %2710 = vmatpush1.msra.mxu0 0.0
        %2711 = vmatprep.subr.mxu0 0.0
        %2712 = vmatpush1.msra.mxu0 0.0
        %2713 = vmatprep.subr.mxu0 0.0
        %2714 = vmatpush1.msra.mxu0 0.0
        %2715 = vmatprep.subr.mxu0 0.0
        %2716 = vmatpush1.msra.mxu0 0.0
        %2717 = vmatprep.subr.mxu0 0.0
        %2718 = vmatpush1.msra.mxu0 0.0
        %2719 = vmatprep.subr.mxu0 0.0
        %2720 = vmatpush1.msra.mxu0 0.0
        %2721 = vmatprep.subr.mxu0 0.0
        %2722 = vmatpush1.msra.mxu0 0.0
        %2723 = vmatprep.subr.mxu0 0.0
        %2724 = vmatpush1.msra.mxu0 0.0
        %2725 = vmatprep.subr.mxu0 0.0
        %2726 = vmatpush1.msra.mxu0 0.0
        %2727 = vmatprep.subr.mxu0 0.0
        %2728 = vmatpush1.msra.mxu0 0.0
        %2729 = vmatprep.subr.mxu0 0.0
        %2730 = vmatpush1.msra.mxu0 0.0
        %2731 = vmatprep.mubr.f32.mxu0 0.0
        %2732 = vmatmul.mubr.f32.gmra.mrb[0].mxu0 %v2665
        %v2733 = vpop.f32.mrb[0].mxu0
        %v2734 = vadd.f32 0.0, %v2733
        %v2735 = vpop.f32.mrb[0].mxu0
        %2736 = vdwg.mxu0
        %v2737 = vadd.f32 %v2496, %v2734
        %2738 = vrot.lane.b32.xlu0 %v2024, 104
        %v2739 = vpop.permute.xlu0 %2738
        %2740 = vrot.lane.b32.xlu0 %v2016, 104
        %v2741 = vpop.permute.xlu0 %2740
        %v2742 = vsel %vm855, %v2739, 0
        %v2744 = vsel %vm855, %v2741, 0
        %2746 = vmatprep.subr.mxu0 0.0
        %2747 = vmatpush1.xpose.msra.mxu0 %v2744
        %2748 = vmatprep.subr.mxu0 0.0
        %2749 = vmatpush1.xpose.msra.mxu0 0.0
        %2750 = vmatprep.subr.mxu0 0.0
        %2751 = vmatpush1.xpose.msra.mxu0 0.0
        %2752 = vmatprep.subr.mxu0 0.0
        %2753 = vmatpush1.xpose.msra.mxu0 0.0
        %2754 = vmatprep.subr.mxu0 0.0
        %2755 = vmatpush1.xpose.msra.mxu0 0.0
        %2756 = vmatprep.subr.mxu0 0.0
        %2757 = vmatpush1.xpose.msra.mxu0 0.0
        %2758 = vmatprep.subr.mxu0 0.0
        %2759 = vmatpush1.xpose.msra.mxu0 0.0
        %2760 = vmatprep.subr.mxu0 0.0
        %2761 = vmatpush1.xpose.msra.mxu0 0.0
        %2762 = vmatprep.subr.mxu0 0.0
        %2763 = vmatpush1.xpose.msra.mxu0 0.0
        %2764 = vmatprep.subr.mxu0 0.0
        %2765 = vmatpush1.xpose.msra.mxu0 0.0
        %2766 = vmatprep.subr.mxu0 0.0
        %2767 = vmatpush1.xpose.msra.mxu0 0.0
        %2768 = vmatprep.subr.mxu0 0.0
        %2769 = vmatpush1.xpose.msra.mxu0 0.0
        %2770 = vmatprep.subr.mxu0 0.0
        %2771 = vmatpush1.xpose.msra.mxu0 0.0
        %2772 = vmatprep.subr.mxu0 0.0
        %2773 = vmatpush1.xpose.msra.mxu0 0.0
        %2774 = vmatprep.subr.mxu0 0.0
        %2775 = vmatpush1.xpose.msra.mxu0 0.0
        %2776 = vmatprep.subr.mxu0 0.0
        %2777 = vmatpush1.xpose.msra.mxu0 0.0
        %2778 = vmatprep.subr.mxu0 0.0
        %2779 = vmatpush1.xpose.msra.mxu0 0.0
        %2780 = vmatprep.subr.mxu0 0.0
        %2781 = vmatpush1.xpose.msra.mxu0 0.0
        %2782 = vmatprep.subr.mxu0 0.0
        %2783 = vmatpush1.xpose.msra.mxu0 0.0
        %2784 = vmatprep.subr.mxu0 0.0
        %2785 = vmatpush1.xpose.msra.mxu0 0.0
        %2786 = vmatprep.subr.mxu0 0.0
        %2787 = vmatpush1.xpose.msra.mxu0 0.0
        %2788 = vmatprep.subr.mxu0 0.0
        %2789 = vmatpush1.xpose.msra.mxu0 0.0
        %2790 = vmatprep.subr.mxu0 0.0
        %2791 = vmatpush1.xpose.msra.mxu0 0.0
        %2792 = vmatprep.subr.mxu0 0.0
        %2793 = vmatpush1.xpose.msra.mxu0 0.0
        %2794 = vmatprep.subr.mxu0 0.0
        %2795 = vmatpush1.xpose.msra.mxu0 0.0
        %2796 = vmatprep.subr.mxu0 0.0
        %2797 = vmatpush1.xpose.msra.mxu0 0.0
        %2798 = vmatprep.subr.mxu0 0.0
        %2799 = vmatpush1.xpose.msra.mxu0 0.0
        %2800 = vmatprep.subr.mxu0 0.0
        %2801 = vmatpush1.xpose.msra.mxu0 0.0
        %2802 = vmatprep.subr.mxu0 0.0
        %2803 = vmatpush1.xpose.msra.mxu0 0.0
        %2804 = vmatprep.subr.mxu0 0.0
        %2805 = vmatpush1.xpose.msra.mxu0 0.0
        %2806 = vmatprep.subr.mxu0 0.0
        %2807 = vmatpush1.xpose.msra.mxu0 0.0
        %2808 = vmatprep.subr.mxu0 0.0
        %2809 = vmatpush1.xpose.msra.mxu0 0.0
        %2810 = vmatprep.mubr.f32.mxu0 0.0
        %2811 = vmatmul.mubr.f32.gmra.mrb[0].mxu0 %v2742
        %v2812 = vpop.f32.mrb[0].mxu0
        %v2813 = vadd.f32 0.0, %v2812
        %v2814 = vpop.f32.mrb[0].mxu0
        %2815 = vdwg.mxu0
        %v2816 = vsel %vm855, %v2813, -inf
        %2817 = vmax.xlane.f32.xlu0 %v2816
        %v2818 = vpop.xlane.xlu0 %2817
        %v2819 = vsub.f32 %v2813, %v2818
        %v2820 = vmul.f32 %v2819, 1.442695
        %v2821 = vpow.pop %v2820
        %v2822 = vsel %vm855, %v2821, 0.0
        %2823 = vadd.xlane.f32.xlu0 %v2822
        %v2824 = vpop.xlane.xlu0 %2823
        %v2825 = vrcp.pop %v2824
        %v2826 = vmul.f32 %v2821, %v2825
        %2827 = vrot.lane.b32.xlu0 %v2016, 72
        %v2828 = vpop.permute.xlu0 %2827
        %v2831 = vsel %vm855, %v2826, 0
        %2833 = vmatprep.subr.mxu0 0.0
        %2834 = vmatpush1.msra.mxu0 %v2828
        %2835 = vmatprep.subr.mxu0 0.0
        %2836 = vmatpush1.msra.mxu0 0.0
        %2837 = vmatprep.subr.mxu0 0.0
        %2838 = vmatpush1.msra.mxu0 0.0
        %2839 = vmatprep.subr.mxu0 0.0
        %2840 = vmatpush1.msra.mxu0 0.0
        %2841 = vmatprep.subr.mxu0 0.0
        %2842 = vmatpush1.msra.mxu0 0.0
        %2843 = vmatprep.subr.mxu0 0.0
        %2844 = vmatpush1.msra.mxu0 0.0
        %2845 = vmatprep.subr.mxu0 0.0
        %2846 = vmatpush1.msra.mxu0 0.0
        %2847 = vmatprep.subr.mxu0 0.0
        %2848 = vmatpush1.msra.mxu0 0.0
        %2849 = vmatprep.subr.mxu0 0.0
        %2850 = vmatpush1.msra.mxu0 0.0
        %2851 = vmatprep.subr.mxu0 0.0
        %2852 = vmatpush1.msra.mxu0 0.0
        %2853 = vmatprep.subr.mxu0 0.0
        %2854 = vmatpush1.msra.mxu0 0.0
        %2855 = vmatprep.subr.mxu0 0.0
        %2856 = vmatpush1.msra.mxu0 0.0
        %2857 = vmatprep.subr.mxu0 0.0
        %2858 = vmatpush1.msra.mxu0 0.0
        %2859 = vmatprep.subr.mxu0 0.0
        %2860 = vmatpush1.msra.mxu0 0.0
        %2861 = vmatprep.subr.mxu0 0.0
        %2862 = vmatpush1.msra.mxu0 0.0
        %2863 = vmatprep.subr.mxu0 0.0
        %2864 = vmatpush1.msra.mxu0 0.0
        %2865 = vmatprep.subr.mxu0 0.0
        %2866 = vmatpush1.msra.mxu0 0.0
        %2867 = vmatprep.subr.mxu0 0.0
        %2868 = vmatpush1.msra.mxu0 0.0
        %2869 = vmatprep.subr.mxu0 0.0
        %2870 = vmatpush1.msra.mxu0 0.0
        %2871 = vmatprep.subr.mxu0 0.0
        %2872 = vmatpush1.msra.mxu0 0.0
        %2873 = vmatprep.subr.mxu0 0.0
        %2874 = vmatpush1.msra.mxu0 0.0
        %2875 = vmatprep.subr.mxu0 0.0
        %2876 = vmatpush1.msra.mxu0 0.0
        %2877 = vmatprep.subr.mxu0 0.0
        %2878 = vmatpush1.msra.mxu0 0.0
        %2879 = vmatprep.subr.mxu0 0.0
        %2880 = vmatpush1.msra.mxu0 0.0
        %2881 = vmatprep.subr.mxu0 0.0
        %2882 = vmatpush1.msra.mxu0 0.0
        %2883 = vmatprep.subr.mxu0 0.0
        %2884 = vmatpush1.msra.mxu0 0.0
        %2885 = vmatprep.subr.mxu0 0.0
        %2886 = vmatpush1.msra.mxu0 0.0
        %2887 = vmatprep.subr.mxu0 0.0
        %2888 = vmatpush1.msra.mxu0 0.0
        %2889 = vmatprep.subr.mxu0 0.0
        %2890 = vmatpush1.msra.mxu0 0.0
        %2891 = vmatprep.subr.mxu0 0.0
        %2892 = vmatpush1.msra.mxu0 0.0
        %2893 = vmatprep.subr.mxu0 0.0
        %2894 = vmatpush1.msra.mxu0 0.0
        %2895 = vmatprep.subr.mxu0 0.0
        %2896 = vmatpush1.msra.mxu0 0.0
        %2897 = vmatprep.mubr.f32.mxu0 0.0
        %2898 = vmatmul.mubr.f32.gmra.mrb[0].mxu0 %v2831
        %v2899 = vpop.f32.mrb[0].mxu0
        %v2900 = vadd.f32 0.0, %v2899
        %v2901 = vpop.f32.mrb[0].mxu0
        %2902 = vdwg.mxu0
        %v2904 = vsel %vm855, %v2900, 0
        %2906 = vmatprep.subr.mxu0 0.0
        %2907 = vmatpush1.msra.mxu0 %v2022
        %2908 = vmatprep.subr.mxu0 0.0
        %2909 = vmatpush1.msra.mxu0 0.0
        %2910 = vmatprep.subr.mxu0 0.0
        %2911 = vmatpush1.msra.mxu0 0.0
        %2912 = vmatprep.subr.mxu0 0.0
        %2913 = vmatpush1.msra.mxu0 0.0
        %2914 = vmatprep.subr.mxu0 0.0
        %2915 = vmatpush1.msra.mxu0 0.0
        %2916 = vmatprep.subr.mxu0 0.0
        %2917 = vmatpush1.msra.mxu0 0.0
        %2918 = vmatprep.subr.mxu0 0.0
        %2919 = vmatpush1.msra.mxu0 0.0
        %2920 = vmatprep.subr.mxu0 0.0
        %2921 = vmatpush1.msra.mxu0 0.0
        %2922 = vmatprep.subr.mxu0 0.0
        %2923 = vmatpush1.msra.mxu0 0.0
        %2924 = vmatprep.subr.mxu0 0.0
        %2925 = vmatpush1.msra.mxu0 0.0
        %2926 = vmatprep.subr.mxu0 0.0
        %2927 = vmatpush1.msra.mxu0 0.0
        %2928 = vmatprep.subr.mxu0 0.0
        %2929 = vmatpush1.msra.mxu0 0.0
        %2930 = vmatprep.subr.mxu0 0.0
        %2931 = vmatpush1.msra.mxu0 0.0
        %2932 = vmatprep.subr.mxu0 0.0
        %2933 = vmatpush1.msra.mxu0 0.0
        %2934 = vmatprep.subr.mxu0 0.0
        %2935 = vmatpush1.msra.mxu0 0.0
        %2936 = vmatprep.subr.mxu0 0.0
        %2937 = vmatpush1.msra.mxu0 0.0
        %2938 = vmatprep.subr.mxu0 0.0
        %2939 = vmatpush1.msra.mxu0 0.0
        %2940 = vmatprep.subr.mxu0 0.0
        %2941 = vmatpush1.msra.mxu0 0.0
        %2942 = vmatprep.subr.mxu0 0.0
        %2943 = vmatpush1.msra.mxu0 0.0
        %2944 = vmatprep.subr.mxu0 0.0
        %2945 = vmatpush1.msra.mxu0 0.0
        %2946 = vmatprep.subr.mxu0 0.0
        %2947 = vmatpush1.msra.mxu0 0.0
        %2948 = vmatprep.subr.mxu0 0.0
        %2949 = vmatpush1.msra.mxu0 0.0
        %2950 = vmatprep.subr.mxu0 0.0
        %2951 = vmatpush1.msra.mxu0 0.0
        %2952 = vmatprep.subr.mxu0 0.0
        %2953 = vmatpush1.msra.mxu0 0.0
        %2954 = vmatprep.subr.mxu0 0.0
        %2955 = vmatpush1.msra.mxu0 0.0
        %2956 = vmatprep.subr.mxu0 0.0
        %2957 = vmatpush1.msra.mxu0 0.0
        %2958 = vmatprep.subr.mxu0 0.0
        %2959 = vmatpush1.msra.mxu0 0.0
        %2960 = vmatprep.subr.mxu0 0.0
        %2961 = vmatpush1.msra.mxu0 0.0
        %2962 = vmatprep.subr.mxu0 0.0
        %2963 = vmatpush1.msra.mxu0 0.0
        %2964 = vmatprep.subr.mxu0 0.0
        %2965 = vmatpush1.msra.mxu0 0.0
        %2966 = vmatprep.subr.mxu0 0.0
        %2967 = vmatpush1.msra.mxu0 0.0
        %2968 = vmatprep.subr.mxu0 0.0
        %2969 = vmatpush1.msra.mxu0 0.0
        %2970 = vmatprep.mubr.f32.mxu0 0.0
        %2971 = vmatmul.mubr.f32.gmra.mrb[0].mxu0 %v2904
        %v2972 = vpop.f32.mrb[0].mxu0
        %v2973 = vadd.f32 0.0, %v2972
        %v2974 = vpop.f32.mrb[0].mxu0
        %2975 = vdwg.mxu0
        %v2976 = vadd.f32 %v2737, %v2973
        %v2978 = vlaneseq
        %v2979 = vshrl.u32 %v2978, 7
        %v2980 = vsub.s32 0, %v2979
        %v2981 = vrot.slane %v2023, %v2980
        %v2983 = vadd.f32 %v2976, %v2981
        %v2984 = vadd.f32 %v2983, %v1850
        %v2985 = vld [vmem:[%s6] sm:$0x1]
        %v2986 = vld [vmem:[%s7] sm:$0x1]
        %v2987 = vsel %vm726, %v2984, 0.0
        %2988 = vadd.xlane.f32.xlu0 %v2987
        %v2989 = vpop.xlane.xlu0 %2988
        %v2990 = vmul.f32 %v2989, %v730
        %v2991 = vsub.f32 %v2984, %v2990
        %v2992 = vmul.f32 %v2991, %v2991
        %v2993 = vsel %vm726, %v2992, 0.0
        %2994 = vadd.xlane.f32.xlu0 %v2993
        %v2995 = vpop.xlane.xlu0 %2994
        %v2996 = vmul.f32 %v2995, 0.032258064
        %v2997 = vrsqrt.pop %v2996
        %v2998 = vmul.f32 %v2996, %v2997
        %vm2999 = vcmp.eq.f32.partialorder %v2996, inf
        %v3000 = vsel %vm2999, %v2996, %v2998
        %vm3001 = vcmp.eq.f32.partialorder %v2996, 0.0
        %v3002 = vand.u32 %v2996, 2147483648
        %v3003 = vsel %vm3001, %v3002, %v3000
        %v3004 = vadd.f32 %v3003, 1e-06
        %v3005 = vrcp.pop %v3004
        %v3006 = vmul.f32 %v2991, %v3005
        %v3008 = vlaneseq
        %v3009 = vshrl.u32 %v3008, 7
        %v3010 = vsub.s32 0, %v3009
        %v3011 = vrot.slane %v2985, %v3010
        %v3013 = vmul.f32 %v3011, %v3006
        %v3015 = vlaneseq
        %v3016 = vshrl.u32 %v3015, 7
        %v3017 = vsub.s32 0, %v3016
        %v3018 = vrot.slane %v2986, %v3017
        %v3020 = vadd.f32 %v3013, %v3018
        %v3021 = vld [vmem:[%s18] sm:$0xff]
        %v3022 = vld [vmem:[%s18 + $0x8] sm:$0xff]
        %v3023 = vld [vmem:[%s18 + $0x10] sm:$0xff]
        %v3024 = vld [vmem:[%s18 + $0x18] sm:$0xff]
        %v3025 = vld [vmem:[#allocation2] sm:$0x1]
        %v3026 = vld [vmem:[%s20] sm:$0xff]
        %v3027 = vld [vmem:[%s20 + $0x8] sm:$0xff]
        %v3028 = vld [vmem:[%s20 + $0x10] sm:$0xff]
        %v3029 = vld [vmem:[%s20 + $0x18] sm:$0xff]
        %v3030 = vld [vmem:[%s20 + $0x20] sm:$0xff]
        %v3031 = vld [vmem:[%s20 + $0x28] sm:$0xff]
        %v3032 = vld [vmem:[%s20 + $0x30] sm:$0xff]
        %v3033 = vld [vmem:[%s20 + $0x38] sm:$0xff]
        %v3034 = vld [vmem:[#allocation4] sm:$0x1]
        %v3036 = vlaneseq
        %v3037 = vshrl.u32 %v3036, 7
        %v3038 = vsub.s32 0, %v3037
        %v3039 = vrot.slane %v3025, %v3038
        %v3042 = vsel %vm726, %v3020, 0
        %3044 = vmatprep.subr.mxu0 0.0
        %3045 = vmatpush1.msra.mxu0 %v3021
        %3046 = vmatprep.subr.mxu0 0.0
        %3047 = vmatpush1.msra.mxu0 %v3022
        %3048 = vmatprep.subr.mxu0 0.0
        %3049 = vmatpush1.msra.mxu0 %v3023
        %3050 = vmatprep.subr.mxu0 0.0
        %3051 = vmatpush1.msra.mxu0 %v3024
        %3052 = vmatprep.subr.mxu0 0.0
        %3053 = vmatpush1.msra.mxu0 0.0
        %3054 = vmatprep.subr.mxu0 0.0
        %3055 = vmatpush1.msra.mxu0 0.0
        %3056 = vmatprep.subr.mxu0 0.0
        %3057 = vmatpush1.msra.mxu0 0.0
        %3058 = vmatprep.subr.mxu0 0.0
        %3059 = vmatpush1.msra.mxu0 0.0
        %3060 = vmatprep.subr.mxu0 0.0
        %3061 = vmatpush1.msra.mxu0 0.0
        %3062 = vmatprep.subr.mxu0 0.0
        %3063 = vmatpush1.msra.mxu0 0.0
        %3064 = vmatprep.subr.mxu0 0.0
        %3065 = vmatpush1.msra.mxu0 0.0
        %3066 = vmatprep.subr.mxu0 0.0
        %3067 = vmatpush1.msra.mxu0 0.0
        %3068 = vmatprep.subr.mxu0 0.0
        %3069 = vmatpush1.msra.mxu0 0.0
        %3070 = vmatprep.subr.mxu0 0.0
        %3071 = vmatpush1.msra.mxu0 0.0
        %3072 = vmatprep.subr.mxu0 0.0
        %3073 = vmatpush1.msra.mxu0 0.0
        %3074 = vmatprep.subr.mxu0 0.0
        %3075 = vmatpush1.msra.mxu0 0.0
        %3076 = vmatprep.subr.mxu0 0.0
        %3077 = vmatpush1.msra.mxu0 0.0
        %3078 = vmatprep.subr.mxu0 0.0
        %3079 = vmatpush1.msra.mxu0 0.0
        %3080 = vmatprep.subr.mxu0 0.0
        %3081 = vmatpush1.msra.mxu0 0.0
        %3082 = vmatprep.subr.mxu0 0.0
        %3083 = vmatpush1.msra.mxu0 0.0
        %3084 = vmatprep.subr.mxu0 0.0
        %3085 = vmatpush1.msra.mxu0 0.0
        %3086 = vmatprep.subr.mxu0 0.0
        %3087 = vmatpush1.msra.mxu0 0.0
        %3088 = vmatprep.subr.mxu0 0.0
        %3089 = vmatpush1.msra.mxu0 0.0
        %3090 = vmatprep.subr.mxu0 0.0
        %3091 = vmatpush1.msra.mxu0 0.0
        %3092 = vmatprep.subr.mxu0 0.0
        %3093 = vmatpush1.msra.mxu0 0.0
        %3094 = vmatprep.subr.mxu0 0.0
        %3095 = vmatpush1.msra.mxu0 0.0
        %3096 = vmatprep.subr.mxu0 0.0
        %3097 = vmatpush1.msra.mxu0 0.0
        %3098 = vmatprep.subr.mxu0 0.0
        %3099 = vmatpush1.msra.mxu0 0.0
        %3100 = vmatprep.subr.mxu0 0.0
        %3101 = vmatpush1.msra.mxu0 0.0
        %3102 = vmatprep.subr.mxu0 0.0
        %3103 = vmatpush1.msra.mxu0 0.0
        %3104 = vmatprep.subr.mxu0 0.0
        %3105 = vmatpush1.msra.mxu0 0.0
        %3106 = vmatprep.subr.mxu0 0.0
        %3107 = vmatpush1.msra.mxu0 0.0
        %3108 = vmatprep.mubr.f32.mxu0 0.0
        %3109 = vmatmul.mubr.f32.gmra.mrb[0].mxu0 %v3042
        %v3110 = vpop.f32.mrb[0].mxu0
        %v3111 = vadd.f32 %v3039, %v3110
        %v3112 = vpop.f32.mrb[0].mxu0
        %3113 = vdwg.mxu0
        %v3114 = vmax.f32 %v3111, 0.0
        %v3116 = vlaneseq
        %v3117 = vshrl.u32 %v3116, 7
        %v3118 = vsub.s32 0, %v3117
        %v3119 = vrot.slane %v3034, %v3118
        %vm3121 = vcmask 523264
        %v3123 = vsel %vm3121, %v3114, 0
        %3125 = vmatprep.subr.mxu0 0.0
        %3126 = vmatpush1.msra.mxu0 %v3026
        %3127 = vmatprep.subr.mxu0 0.0
        %3128 = vmatpush1.msra.mxu0 %v3027
        %3129 = vmatprep.subr.mxu0 0.0
        %3130 = vmatpush1.msra.mxu0 %v3028
        %3131 = vmatprep.subr.mxu0 0.0
        %3132 = vmatpush1.msra.mxu0 %v3029
        %3133 = vmatprep.subr.mxu0 0.0
        %3134 = vmatpush1.msra.mxu0 %v3030
        %3135 = vmatprep.subr.mxu0 0.0
        %3136 = vmatpush1.msra.mxu0 %v3031
        %3137 = vmatprep.subr.mxu0 0.0
        %3138 = vmatpush1.msra.mxu0 %v3032
        %3139 = vmatprep.subr.mxu0 0.0
        %3140 = vmatpush1.msra.mxu0 %v3033
        %3141 = vmatprep.subr.mxu0 0.0
        %3142 = vmatpush1.msra.mxu0 0.0
        %3143 = vmatprep.subr.mxu0 0.0
        %3144 = vmatpush1.msra.mxu0 0.0
        %3145 = vmatprep.subr.mxu0 0.0
        %3146 = vmatpush1.msra.mxu0 0.0
        %3147 = vmatprep.subr.mxu0 0.0
        %3148 = vmatpush1.msra.mxu0 0.0
        %3149 = vmatprep.subr.mxu0 0.0
        %3150 = vmatpush1.msra.mxu0 0.0
        %3151 = vmatprep.subr.mxu0 0.0
        %3152 = vmatpush1.msra.mxu0 0.0
        %3153 = vmatprep.subr.mxu0 0.0
        %3154 = vmatpush1.msra.mxu0 0.0
        %3155 = vmatprep.subr.mxu0 0.0
        %3156 = vmatpush1.msra.mxu0 0.0
        %3157 = vmatprep.subr.mxu0 0.0
        %3158 = vmatpush1.msra.mxu0 0.0
        %3159 = vmatprep.subr.mxu0 0.0
        %3160 = vmatpush1.msra.mxu0 0.0
        %3161 = vmatprep.subr.mxu0 0.0
        %3162 = vmatpush1.msra.mxu0 0.0
        %3163 = vmatprep.subr.mxu0 0.0
        %3164 = vmatpush1.msra.mxu0 0.0
        %3165 = vmatprep.subr.mxu0 0.0
        %3166 = vmatpush1.msra.mxu0 0.0
        %3167 = vmatprep.subr.mxu0 0.0
        %3168 = vmatpush1.msra.mxu0 0.0
        %3169 = vmatprep.subr.mxu0 0.0
        %3170 = vmatpush1.msra.mxu0 0.0
        %3171 = vmatprep.subr.mxu0 0.0
        %3172 = vmatpush1.msra.mxu0 0.0
        %3173 = vmatprep.subr.mxu0 0.0
        %3174 = vmatpush1.msra.mxu0 0.0
        %3175 = vmatprep.subr.mxu0 0.0
        %3176 = vmatpush1.msra.mxu0 0.0
        %3177 = vmatprep.subr.mxu0 0.0
        %3178 = vmatpush1.msra.mxu0 0.0
        %3179 = vmatprep.subr.mxu0 0.0
        %3180 = vmatpush1.msra.mxu0 0.0
        %3181 = vmatprep.subr.mxu0 0.0
        %3182 = vmatpush1.msra.mxu0 0.0
        %3183 = vmatprep.subr.mxu0 0.0
        %3184 = vmatpush1.msra.mxu0 0.0
        %3185 = vmatprep.subr.mxu0 0.0
        %3186 = vmatpush1.msra.mxu0 0.0
        %3187 = vmatprep.subr.mxu0 0.0
        %3188 = vmatpush1.msra.mxu0 0.0
        %3189 = vmatprep.mubr.f32.mxu0 0.0
        %3190 = vmatmul.mubr.f32.gmra.mrb[0].mxu0 %v3123
        %v3191 = vpop.f32.mrb[0].mxu0
        %v3192 = vadd.f32 %v3119, %v3191
        %v3193 = vpop.f32.mrb[0].mxu0
        %3194 = vdwg.mxu0
        %v3195 = vadd.f32 %v3192, %v3020
        %3196 = vst.msk [vmem:[%s721] sm:$0xff] %vm726, %v3195
        %p3197 = scmp.lt.s32.totalorder %s35, 1
        %s3198 = scalar_select %p3197, %s35, 1
        %s3199 = smul.addr %s3198, 8
        %s3200 = scalar_lea.vmem %s22, %s3199
        // Predicated region
        $region117: #{transformer_forward.10} parent=107 // pred_check
          %p3201 = pneg %p525
        $region118: #{transformer_forward.10} parent=107 // pred_check_branch
          %3203 = sbr.rel (%p3201) target = $region120
        $region119: #{transformer_forward.10} parent=107 // pred_region
          _
        $region120: #{transformer_forward.10} parent=107 // pred_fallthru
          _
      $region108: #{transformer_forward.10} parent=5 // pred_fallthru
        _
      %p3204 = scmp.le.s32.totalorder 2, %s30
      // Predicated region
      $region121: #{transformer_forward.10} parent=5 // pred_check
        %p3205 = pneg %p3204
      $region122: #{transformer_forward.10} parent=5 // pred_check_branch
        %3207 = sbr.rel (%p3205) target = $region124
      $region123: #{transformer_forward.10} parent=5 // pred_region
        %s3208 = ssub.s32 %s30, 2
        // Predicated region
        $region125: #{transformer_forward.10} parent=123 // pred_check
          %p3209 = pneg %p531
        $region126: #{transformer_forward.10} parent=123 // pred_check_branch
          %3211 = sbr.rel (%p3209) target = $region128
        $region127: #{transformer_forward.10} parent=123 // pred_region
          %p3212 = scmp.lt.s32.totalorder %s36, 1
          %s3213 = scalar_select %p3212, %s36, 1
          %s3214 = smul.addr %s3213, 8
          %s3215 = scalar_lea.vmem %s22, %s3214
        $region128: #{transformer_forward.10} parent=123 // pred_fallthru
          _
      $region124: #{transformer_forward.10} parent=5 // pred_fallthru
        _
    $region6: #{transformer_forward.10} parent=1 // loop_footer
      %s34 = sadd.s32 1, %s30
    $region7: #{transformer_forward.10} parent=1 // loop_footer_branch
      %29 = sbr.rel target = $region3
    $region8: #{transformer_forward.10} parent=1 // loop_exit
      _
    %3216 = vsyncpa [#allocation3], 1
    %s3217 = scalar_lea.sflag [#allocation3], 1
    %3218 = vsyncpa %s3217, 1
    %3219 = vsyncpa [#allocation5], 1

// kernel: transformer_forward.9
$region0: #{transformer_forward.9}
  #allocation0 [shape = 'u32[]', space=smem, size = 0x4, offset = 0x4, fixed_abs, tag = 'smem constant byte address 0x4 - core index']
  #allocation1 [shape = 'u32[144,128]{1,0:T(1,128)}', space=vmem, size = 0x12000, scoped, tag = 'internal scratch']
  %s0 = inlined_call_operand.vmem [shape: f32[2,8,32], index: 0, kind: input, shape index: {}]
  %s1 = inlined_call_operand.vmem [shape: f32[2,8,32], index: 1, kind: input, shape index: {}]
  %s2 = inlined_call_operand.vmem [shape: f32[1,32], index: 2, kind: input, shape index: {}]
  %s3 = inlined_call_operand.vmem [shape: f32[1,32], index: 3, kind: input, shape index: {}]
  %s4 = inlined_call_operand.vmem [shape: f32[1,32], index: 4, kind: input, shape index: {}]
  %s5 = inlined_call_operand.vmem [shape: f32[1,32], index: 5, kind: input, shape index: {}]
  %s6 = inlined_call_operand.vmem [shape: f32[1,32], index: 6, kind: input, shape index: {}]
  %s7 = inlined_call_operand.vmem [shape: f32[1,32], index: 7, kind: input, shape index: {}]
  %s8 = inlined_call_operand.vmem [shape: f32[32,96], index: 8, kind: input, shape index: {}]
  %s9 = inlined_call_operand.vmem [shape: f32[1,96], index: 9, kind: input, shape index: {}]
  %s10 = inlined_call_operand.vmem [shape: f32[32,32], index: 10, kind: input, shape index: {}]
  %s11 = inlined_call_operand.vmem [shape: f32[1,32], index: 11, kind: input, shape index: {}]
  %s12 = inlined_call_operand.vmem [shape: f32[32,32], index: 12, kind: input, shape index: {}]
  %s13 = inlined_call_operand.vmem [shape: f32[1,32], index: 13, kind: input, shape index: {}]
  %s14 = inlined_call_operand.vmem [shape: f32[32,64], index: 14, kind: input, shape index: {}]
  %s15 = inlined_call_operand.vmem [shape: f32[1,64], index: 15, kind: input, shape index: {}]
  %s16 = inlined_call_operand.vmem [shape: f32[32,32], index: 16, kind: input, shape index: {}]
  %s17 = inlined_call_operand.vmem [shape: f32[1,32], index: 17, kind: input, shape index: {}]
  %s18 = inlined_call_operand.vmem [shape: f32[32,64], index: 18, kind: input, shape index: {}]
  %s19 = inlined_call_operand.vmem [shape: f32[1,64], index: 19, kind: input, shape index: {}]
  %s20 = inlined_call_operand.vmem [shape: f32[64,32], index: 20, kind: input, shape index: {}]
  %s21 = inlined_call_operand.vmem [shape: f32[1,32], index: 21, kind: input, shape index: {}]
  %s22 = inlined_call_operand.vmem [shape: f32[2,8,32], index: 22, kind: output, shape index: {}]
  %s23 = sld [smem:[#allocation0]]
  $region121: #{transformer_forward.9} parent=0
    _
  %s25 = ssub.s32 1, %s23
  %s26 = scalar_select 0, %s25, %s23
  loop: start=0, step=1, limit=4
  $region2: #{transformer_forward.9} parent=0 // loop_pre_header
    _
  $region3: #{transformer_forward.9} parent=0 // loop_header
    %s28 = sphi 0, %s32
    %p29 = scmp.ge.s32.totalorder %s28, 4
    %s38 = sphi 0, %s40
    %s41 = sphi 0, %s38
    %s42 = sphi 0, %s41
    %s58 = sphi 0, %s42
    %s64 = sphi 0, %s66
    %s67 = sphi 0, %s64
    %s68 = sphi 0, %s67
    %s84 = sphi 0, %s68
    %s88 = sphi 0, %s88
    %s90 = sphi 0, %s88
    %s91 = sphi 0, %s90
    %s105 = sphi 0, %s91
    %s109 = sphi 0, %s109
    %s111 = sphi 0, %s109
    %s112 = sphi 0, %s111
    %s126 = sphi 0, %s112
    %s130 = sphi 0, %s130
    %s132 = sphi 0, %s130
    %s133 = sphi 0, %s132
    %s147 = sphi 0, %s133
    %s151 = sphi 0, %s151
    %s153 = sphi 0, %s151
    %s154 = sphi 0, %s153
    %s168 = sphi 0, %s154
    %s172 = sphi 0, %s172
    %s174 = sphi 0, %s172
    %s175 = sphi 0, %s174
    %s189 = sphi 0, %s175
    %s193 = sphi 0, %s193
    %s195 = sphi 0, %s193
    %s196 = sphi 0, %s195
    %s210 = sphi 0, %s196
    %s214 = sphi 0, %s214
    %s216 = sphi 0, %s214
    %s217 = sphi 0, %s216
    %s231 = sphi 0, %s217
    %s235 = sphi 0, %s235
    %s237 = sphi 0, %s235
    %s238 = sphi 0, %s237
    %s252 = sphi 0, %s238
    %s256 = sphi 0, %s256
    %s258 = sphi 0, %s256
    %s259 = sphi 0, %s258
    %s273 = sphi 0, %s259
    %s277 = sphi 0, %s277
    %s279 = sphi 0, %s277
    %s280 = sphi 0, %s279
    %s294 = sphi 0, %s280
    %s298 = sphi 0, %s298
    %s300 = sphi 0, %s298
    %s301 = sphi 0, %s300
    %s315 = sphi 0, %s301
    %s319 = sphi 0, %s319
    %s321 = sphi 0, %s319
    %s322 = sphi 0, %s321
    %s336 = sphi 0, %s322
    %s340 = sphi 0, %s340
    %s342 = sphi 0, %s340
    %s343 = sphi 0, %s342
    %s357 = sphi 0, %s343
    %s361 = sphi 0, %s361
    %s363 = sphi 0, %s361
    %s364 = sphi 0, %s363
    %s378 = sphi 0, %s364
    %s382 = sphi 0, %s382
    %s384 = sphi 0, %s382
    %s385 = sphi 0, %s384
    %s399 = sphi 0, %s385
    %s403 = sphi 0, %s403
    %s405 = sphi 0, %s403
    %s406 = sphi 0, %s405
    %s420 = sphi 0, %s406
    %s424 = sphi 0, %s424
    %s426 = sphi 0, %s424
    %s427 = sphi 0, %s426
    %s441 = sphi 0, %s427
    %s445 = sphi 0, %s445
    %s447 = sphi 0, %s445
    %s448 = sphi 0, %s447
    %s462 = sphi 0, %s448
    %s466 = sphi 0, %s466
    %s468 = sphi 0, %s466
    %s469 = sphi 0, %s468
    %s483 = sphi 0, %s469
    %s487 = sphi 0, %s487
    %s489 = sphi 0, %s487
    %s490 = sphi 0, %s489
    %s504 = sphi 0, %s490
    %s510 = sphi 0, %s512
    %s513 = sphi 0, %s510
    %s514 = sphi 0, %s513
    %s530 = sphi 0, %s514
  $region4: #{transformer_forward.9} parent=0 // loop_header_branch
    %31 = sbr.rel (%p29) target = $region8
  $region5: #{transformer_forward.9} parent=0 // loop_body
    %s33 = ssub.s32 %s28, 1
    %s34 = ssub.s32 %s28, 2
    %s35 = sadd.s32 %s28, 1
    %s36 = ssub.s32 %s28, %s35
    %p37 = scmp.eq.s32.totalorder %s36, 0
    %s39 = sadd.s32 %s38, 1
    %s40 = scalar_select %p37, %s38, %s39
    %p43 = pneg %p37
    %p44 = scmp.eq.s32.totalorder %s28, 1
    %p45 = por %p43, %p44
    %p46 = scmp.ne.s32.totalorder %s38, %s41
    %p47 = scmp.eq.s32.totalorder %s28, 0
    %p48 = por %p46, %p47
    %p49 = scmp.ne.s32.totalorder %s38, %s41
    %p50 = scmp.eq.s32.totalorder %s33, 1
    %p51 = por %p49, %p50
    %p52 = scmp.ne.s32.totalorder %s41, %s42
    %p53 = scmp.eq.s32.totalorder %s33, 0
    %p54 = por %p52, %p53
    %p55 = scmp.ne.s32.totalorder %s41, %s42
    %p56 = scmp.eq.s32.totalorder %s34, 1
    %p57 = por %p55, %p56
    %p59 = scmp.ne.s32.totalorder %s42, %s58
    %p60 = scmp.eq.s32.totalorder %s34, 0
    %p61 = por %p59, %p60
    %s62 = ssub.s32 %s28, %s35
    %p63 = scmp.eq.s32.totalorder %s62, 0
    %s65 = sadd.s32 %s64, 1
    %s66 = scalar_select %p63, %s64, %s65
    %p69 = pneg %p63
    %p70 = scmp.eq.s32.totalorder %s28, 1
    %p71 = por %p69, %p70
    %p72 = scmp.ne.s32.totalorder %s64, %s67
    %p73 = scmp.eq.s32.totalorder %s28, 0
    %p74 = por %p72, %p73
    %p75 = scmp.ne.s32.totalorder %s64, %s67
    %p76 = scmp.eq.s32.totalorder %s33, 1
    %p77 = por %p75, %p76
    %p78 = scmp.ne.s32.totalorder %s67, %s68
    %p79 = scmp.eq.s32.totalorder %s33, 0
    %p80 = por %p78, %p79
    %p81 = scmp.ne.s32.totalorder %s67, %s68
    %p82 = scmp.eq.s32.totalorder %s34, 1
    %p83 = por %p81, %p82
    %p85 = scmp.ne.s32.totalorder %s68, %s84
    %p86 = scmp.eq.s32.totalorder %s34, 0
    %p87 = por %p85, %p86
    %s89 = sadd.s32 %s88, 1
    %p92 = scmp.eq.s32.totalorder %s28, 1
    %p93 = scmp.ne.s32.totalorder %s88, %s90
    %p94 = scmp.eq.s32.totalorder %s28, 0
    %p95 = por %p93, %p94
    %p96 = scmp.ne.s32.totalorder %s88, %s90
    %p97 = scmp.eq.s32.totalorder %s33, 1
    %p98 = por %p96, %p97
    %p99 = scmp.ne.s32.totalorder %s90, %s91
    %p100 = scmp.eq.s32.totalorder %s33, 0
    %p101 = por %p99, %p100
    %p102 = scmp.ne.s32.totalorder %s90, %s91
    %p103 = scmp.eq.s32.totalorder %s34, 1
    %p104 = por %p102, %p103
    %p106 = scmp.ne.s32.totalorder %s91, %s105
    %p107 = scmp.eq.s32.totalorder %s34, 0
    %p108 = por %p106, %p107
    %s110 = sadd.s32 %s109, 1
    %p113 = scmp.eq.s32.totalorder %s28, 1
    %p114 = scmp.ne.s32.totalorder %s109, %s111
    %p115 = scmp.eq.s32.totalorder %s28, 0
    %p116 = por %p114, %p115
    %p117 = scmp.ne.s32.totalorder %s109, %s111
    %p118 = scmp.eq.s32.totalorder %s33, 1
    %p119 = por %p117, %p118
    %p120 = scmp.ne.s32.totalorder %s111, %s112
    %p121 = scmp.eq.s32.totalorder %s33, 0
    %p122 = por %p120, %p121
    %p123 = scmp.ne.s32.totalorder %s111, %s112
    %p124 = scmp.eq.s32.totalorder %s34, 1
    %p125 = por %p123, %p124
    %p127 = scmp.ne.s32.totalorder %s112, %s126
    %p128 = scmp.eq.s32.totalorder %s34, 0
    %p129 = por %p127, %p128
    %s131 = sadd.s32 %s130, 1
    %p134 = scmp.eq.s32.totalorder %s28, 1
    %p135 = scmp.ne.s32.totalorder %s130, %s132
    %p136 = scmp.eq.s32.totalorder %s28, 0
    %p137 = por %p135, %p136
    %p138 = scmp.ne.s32.totalorder %s130, %s132
    %p139 = scmp.eq.s32.totalorder %s33, 1
    %p140 = por %p138, %p139
    %p141 = scmp.ne.s32.totalorder %s132, %s133
    %p142 = scmp.eq.s32.totalorder %s33, 0
    %p143 = por %p141, %p142
    %p144 = scmp.ne.s32.totalorder %s132, %s133
    %p145 = scmp.eq.s32.totalorder %s34, 1
    %p146 = por %p144, %p145
    %p148 = scmp.ne.s32.totalorder %s133, %s147
    %p149 = scmp.eq.s32.totalorder %s34, 0
    %p150 = por %p148, %p149
    %s152 = sadd.s32 %s151, 1
    %p155 = scmp.eq.s32.totalorder %s28, 1
    %p156 = scmp.ne.s32.totalorder %s151, %s153
    %p157 = scmp.eq.s32.totalorder %s28, 0
    %p158 = por %p156, %p157
    %p159 = scmp.ne.s32.totalorder %s151, %s153
    %p160 = scmp.eq.s32.totalorder %s33, 1
    %p161 = por %p159, %p160
    %p162 = scmp.ne.s32.totalorder %s153, %s154
    %p163 = scmp.eq.s32.totalorder %s33, 0
    %p164 = por %p162, %p163
    %p165 = scmp.ne.s32.totalorder %s153, %s154
    %p166 = scmp.eq.s32.totalorder %s34, 1
    %p167 = por %p165, %p166
    %p169 = scmp.ne.s32.totalorder %s154, %s168
    %p170 = scmp.eq.s32.totalorder %s34, 0
    %p171 = por %p169, %p170
    %s173 = sadd.s32 %s172, 1
    %p176 = scmp.eq.s32.totalorder %s28, 1
    %p177 = scmp.ne.s32.totalorder %s172, %s174
    %p178 = scmp.eq.s32.totalorder %s28, 0
    %p179 = por %p177, %p178
    %p180 = scmp.ne.s32.totalorder %s172, %s174
    %p181 = scmp.eq.s32.totalorder %s33, 1
    %p182 = por %p180, %p181
    %p183 = scmp.ne.s32.totalorder %s174, %s175
    %p184 = scmp.eq.s32.totalorder %s33, 0
    %p185 = por %p183, %p184
    %p186 = scmp.ne.s32.totalorder %s174, %s175
    %p187 = scmp.eq.s32.totalorder %s34, 1
    %p188 = por %p186, %p187
    %p190 = scmp.ne.s32.totalorder %s175, %s189
    %p191 = scmp.eq.s32.totalorder %s34, 0
    %p192 = por %p190, %p191
    %s194 = sadd.s32 %s193, 1
    %p197 = scmp.eq.s32.totalorder %s28, 1
    %p198 = scmp.ne.s32.totalorder %s193, %s195
    %p199 = scmp.eq.s32.totalorder %s28, 0
    %p200 = por %p198, %p199
    %p201 = scmp.ne.s32.totalorder %s193, %s195
    %p202 = scmp.eq.s32.totalorder %s33, 1
    %p203 = por %p201, %p202
    %p204 = scmp.ne.s32.totalorder %s195, %s196
    %p205 = scmp.eq.s32.totalorder %s33, 0
    %p206 = por %p204, %p205
    %p207 = scmp.ne.s32.totalorder %s195, %s196
    %p208 = scmp.eq.s32.totalorder %s34, 1
    %p209 = por %p207, %p208
    %p211 = scmp.ne.s32.totalorder %s196, %s210
    %p212 = scmp.eq.s32.totalorder %s34, 0
    %p213 = por %p211, %p212
    %s215 = sadd.s32 %s214, 1
    %p218 = scmp.eq.s32.totalorder %s28, 1
    %p219 = scmp.ne.s32.totalorder %s214, %s216
    %p220 = scmp.eq.s32.totalorder %s28, 0
    %p221 = por %p219, %p220
    %p222 = scmp.ne.s32.totalorder %s214, %s216
    %p223 = scmp.eq.s32.totalorder %s33, 1
    %p224 = por %p222, %p223
    %p225 = scmp.ne.s32.totalorder %s216, %s217
    %p226 = scmp.eq.s32.totalorder %s33, 0
    %p227 = por %p225, %p226
    %p228 = scmp.ne.s32.totalorder %s216, %s217
    %p229 = scmp.eq.s32.totalorder %s34, 1
    %p230 = por %p228, %p229
    %p232 = scmp.ne.s32.totalorder %s217, %s231
    %p233 = scmp.eq.s32.totalorder %s34, 0
    %p234 = por %p232, %p233
    %s236 = sadd.s32 %s235, 1
    %p239 = scmp.eq.s32.totalorder %s28, 1
    %p240 = scmp.ne.s32.totalorder %s235, %s237
    %p241 = scmp.eq.s32.totalorder %s28, 0
    %p242 = por %p240, %p241
    %p243 = scmp.ne.s32.totalorder %s235, %s237
    %p244 = scmp.eq.s32.totalorder %s33, 1
    %p245 = por %p243, %p244
    %p246 = scmp.ne.s32.totalorder %s237, %s238
    %p247 = scmp.eq.s32.totalorder %s33, 0
    %p248 = por %p246, %p247
    %p249 = scmp.ne.s32.totalorder %s237, %s238
    %p250 = scmp.eq.s32.totalorder %s34, 1
    %p251 = por %p249, %p250
    %p253 = scmp.ne.s32.totalorder %s238, %s252
    %p254 = scmp.eq.s32.totalorder %s34, 0
    %p255 = por %p253, %p254
    %s257 = sadd.s32 %s256, 1
    %p260 = scmp.eq.s32.totalorder %s28, 1
    %p261 = scmp.ne.s32.totalorder %s256, %s258
    %p262 = scmp.eq.s32.totalorder %s28, 0
    %p263 = por %p261, %p262
    %p264 = scmp.ne.s32.totalorder %s256, %s258
    %p265 = scmp.eq.s32.totalorder %s33, 1
    %p266 = por %p264, %p265
    %p267 = scmp.ne.s32.totalorder %s258, %s259
    %p268 = scmp.eq.s32.totalorder %s33, 0
    %p269 = por %p267, %p268
    %p270 = scmp.ne.s32.totalorder %s258, %s259
    %p271 = scmp.eq.s32.totalorder %s34, 1
    %p272 = por %p270, %p271
    %p274 = scmp.ne.s32.totalorder %s259, %s273
    %p275 = scmp.eq.s32.totalorder %s34, 0
    %p276 = por %p274, %p275
    %s278 = sadd.s32 %s277, 1
    %p281 = scmp.eq.s32.totalorder %s28, 1
    %p282 = scmp.ne.s32.totalorder %s277, %s279
    %p283 = scmp.eq.s32.totalorder %s28, 0
    %p284 = por %p282, %p283
    %p285 = scmp.ne.s32.totalorder %s277, %s279
    %p286 = scmp.eq.s32.totalorder %s33, 1
    %p287 = por %p285, %p286
    %p288 = scmp.ne.s32.totalorder %s279, %s280
    %p289 = scmp.eq.s32.totalorder %s33, 0
    %p290 = por %p288, %p289
    %p291 = scmp.ne.s32.totalorder %s279, %s280
    %p292 = scmp.eq.s32.totalorder %s34, 1
    %p293 = por %p291, %p292
    %p295 = scmp.ne.s32.totalorder %s280, %s294
    %p296 = scmp.eq.s32.totalorder %s34, 0
    %p297 = por %p295, %p296
    %s299 = sadd.s32 %s298, 1
    %p302 = scmp.eq.s32.totalorder %s28, 1
    %p303 = scmp.ne.s32.totalorder %s298, %s300
    %p304 = scmp.eq.s32.totalorder %s28, 0
    %p305 = por %p303, %p304
    %p306 = scmp.ne.s32.totalorder %s298, %s300
    %p307 = scmp.eq.s32.totalorder %s33, 1
    %p308 = por %p306, %p307
    %p309 = scmp.ne.s32.totalorder %s300, %s301
    %p310 = scmp.eq.s32.totalorder %s33, 0
    %p311 = por %p309, %p310
    %p312 = scmp.ne.s32.totalorder %s300, %s301
    %p313 = scmp.eq.s32.totalorder %s34, 1
    %p314 = por %p312, %p313
    %p316 = scmp.ne.s32.totalorder %s301, %s315
    %p317 = scmp.eq.s32.totalorder %s34, 0
    %p318 = por %p316, %p317
    %s320 = sadd.s32 %s319, 1
    %p323 = scmp.eq.s32.totalorder %s28, 1
    %p324 = scmp.ne.s32.totalorder %s319, %s321
    %p325 = scmp.eq.s32.totalorder %s28, 0
    %p326 = por %p324, %p325
    %p327 = scmp.ne.s32.totalorder %s319, %s321
    %p328 = scmp.eq.s32.totalorder %s33, 1
    %p329 = por %p327, %p328
    %p330 = scmp.ne.s32.totalorder %s321, %s322
    %p331 = scmp.eq.s32.totalorder %s33, 0
    %p332 = por %p330, %p331
    %p333 = scmp.ne.s32.totalorder %s321, %s322
    %p334 = scmp.eq.s32.totalorder %s34, 1
    %p335 = por %p333, %p334
    %p337 = scmp.ne.s32.totalorder %s322, %s336
    %p338 = scmp.eq.s32.totalorder %s34, 0
    %p339 = por %p337, %p338
    %s341 = sadd.s32 %s340, 1
    %p344 = scmp.eq.s32.totalorder %s28, 1
    %p345 = scmp.ne.s32.totalorder %s340, %s342
    %p346 = scmp.eq.s32.totalorder %s28, 0
    %p347 = por %p345, %p346
    %p348 = scmp.ne.s32.totalorder %s340, %s342
    %p349 = scmp.eq.s32.totalorder %s33, 1
    %p350 = por %p348, %p349
    %p351 = scmp.ne.s32.totalorder %s342, %s343
    %p352 = scmp.eq.s32.totalorder %s33, 0
    %p353 = por %p351, %p352
    %p354 = scmp.ne.s32.totalorder %s342, %s343
    %p355 = scmp.eq.s32.totalorder %s34, 1
    %p356 = por %p354, %p355
    %p358 = scmp.ne.s32.totalorder %s343, %s357
    %p359 = scmp.eq.s32.totalorder %s34, 0
    %p360 = por %p358, %p359
    %s362 = sadd.s32 %s361, 1
    %p365 = scmp.eq.s32.totalorder %s28, 1
    %p366 = scmp.ne.s32.totalorder %s361, %s363
    %p367 = scmp.eq.s32.totalorder %s28, 0
    %p368 = por %p366, %p367
    %p369 = scmp.ne.s32.totalorder %s361, %s363
    %p370 = scmp.eq.s32.totalorder %s33, 1
    %p371 = por %p369, %p370
    %p372 = scmp.ne.s32.totalorder %s363, %s364
    %p373 = scmp.eq.s32.totalorder %s33, 0
    %p374 = por %p372, %p373
    %p375 = scmp.ne.s32.totalorder %s363, %s364
    %p376 = scmp.eq.s32.totalorder %s34, 1
    %p377 = por %p375, %p376
    %p379 = scmp.ne.s32.totalorder %s364, %s378
    %p380 = scmp.eq.s32.totalorder %s34, 0
    %p381 = por %p379, %p380
    %s383 = sadd.s32 %s382, 1
    %p386 = scmp.eq.s32.totalorder %s28, 1
    %p387 = scmp.ne.s32.totalorder %s382, %s384
    %p388 = scmp.eq.s32.totalorder %s28, 0
    %p389 = por %p387, %p388
    %p390 = scmp.ne.s32.totalorder %s382, %s384
    %p391 = scmp.eq.s32.totalorder %s33, 1
    %p392 = por %p390, %p391
    %p393 = scmp.ne.s32.totalorder %s384, %s385
    %p394 = scmp.eq.s32.totalorder %s33, 0
    %p395 = por %p393, %p394
    %p396 = scmp.ne.s32.totalorder %s384, %s385
    %p397 = scmp.eq.s32.totalorder %s34, 1
    %p398 = por %p396, %p397
    %p400 = scmp.ne.s32.totalorder %s385, %s399
    %p401 = scmp.eq.s32.totalorder %s34, 0
    %p402 = por %p400, %p401
    %s404 = sadd.s32 %s403, 1
    %p407 = scmp.eq.s32.totalorder %s28, 1
    %p408 = scmp.ne.s32.totalorder %s403, %s405
    %p409 = scmp.eq.s32.totalorder %s28, 0
    %p410 = por %p408, %p409
    %p411 = scmp.ne.s32.totalorder %s403, %s405
    %p412 = scmp.eq.s32.totalorder %s33, 1
    %p413 = por %p411, %p412
    %p414 = scmp.ne.s32.totalorder %s405, %s406
    %p415 = scmp.eq.s32.totalorder %s33, 0
    %p416 = por %p414, %p415
    %p417 = scmp.ne.s32.totalorder %s405, %s406
    %p418 = scmp.eq.s32.totalorder %s34, 1
    %p419 = por %p417, %p418
    %p421 = scmp.ne.s32.totalorder %s406, %s420
    %p422 = scmp.eq.s32.totalorder %s34, 0
    %p423 = por %p421, %p422
    %s425 = sadd.s32 %s424, 1
    %p428 = scmp.eq.s32.totalorder %s28, 1
    %p429 = scmp.ne.s32.totalorder %s424, %s426
    %p430 = scmp.eq.s32.totalorder %s28, 0
    %p431 = por %p429, %p430
    %p432 = scmp.ne.s32.totalorder %s424, %s426
    %p433 = scmp.eq.s32.totalorder %s33, 1
    %p434 = por %p432, %p433
    %p435 = scmp.ne.s32.totalorder %s426, %s427
    %p436 = scmp.eq.s32.totalorder %s33, 0
    %p437 = por %p435, %p436
    %p438 = scmp.ne.s32.totalorder %s426, %s427
    %p439 = scmp.eq.s32.totalorder %s34, 1
    %p440 = por %p438, %p439
    %p442 = scmp.ne.s32.totalorder %s427, %s441
    %p443 = scmp.eq.s32.totalorder %s34, 0
    %p444 = por %p442, %p443
    %s446 = sadd.s32 %s445, 1
    %p449 = scmp.eq.s32.totalorder %s28, 1
    %p450 = scmp.ne.s32.totalorder %s445, %s447
    %p451 = scmp.eq.s32.totalorder %s28, 0
    %p452 = por %p450, %p451
    %p453 = scmp.ne.s32.totalorder %s445, %s447
    %p454 = scmp.eq.s32.totalorder %s33, 1
    %p455 = por %p453, %p454
    %p456 = scmp.ne.s32.totalorder %s447, %s448
    %p457 = scmp.eq.s32.totalorder %s33, 0
    %p458 = por %p456, %p457
    %p459 = scmp.ne.s32.totalorder %s447, %s448
    %p460 = scmp.eq.s32.totalorder %s34, 1
    %p461 = por %p459, %p460
    %p463 = scmp.ne.s32.totalorder %s448, %s462
    %p464 = scmp.eq.s32.totalorder %s34, 0
    %p465 = por %p463, %p464
    %s467 = sadd.s32 %s466, 1
    %p470 = scmp.eq.s32.totalorder %s28, 1
    %p471 = scmp.ne.s32.totalorder %s466, %s468
    %p472 = scmp.eq.s32.totalorder %s28, 0
    %p473 = por %p471, %p472
    %p474 = scmp.ne.s32.totalorder %s466, %s468
    %p475 = scmp.eq.s32.totalorder %s33, 1
    %p476 = por %p474, %p475
    %p477 = scmp.ne.s32.totalorder %s468, %s469
    %p478 = scmp.eq.s32.totalorder %s33, 0
    %p479 = por %p477, %p478
    %p480 = scmp.ne.s32.totalorder %s468, %s469
    %p481 = scmp.eq.s32.totalorder %s34, 1
    %p482 = por %p480, %p481
    %p484 = scmp.ne.s32.totalorder %s469, %s483
    %p485 = scmp.eq.s32.totalorder %s34, 0
    %p486 = por %p484, %p485
    %s488 = sadd.s32 %s487, 1
    %p491 = scmp.eq.s32.totalorder %s28, 1
    %p492 = scmp.ne.s32.totalorder %s487, %s489
    %p493 = scmp.eq.s32.totalorder %s28, 0
    %p494 = por %p492, %p493
    %p495 = scmp.ne.s32.totalorder %s487, %s489
    %p496 = scmp.eq.s32.totalorder %s33, 1
    %p497 = por %p495, %p496
    %p498 = scmp.ne.s32.totalorder %s489, %s490
    %p499 = scmp.eq.s32.totalorder %s33, 0
    %p500 = por %p498, %p499
    %p501 = scmp.ne.s32.totalorder %s489, %s490
    %p502 = scmp.eq.s32.totalorder %s34, 1
    %p503 = por %p501, %p502
    %p505 = scmp.ne.s32.totalorder %s490, %s504
    %p506 = scmp.eq.s32.totalorder %s34, 0
    %p507 = por %p505, %p506
    %s508 = ssub.s32 %s28, %s35
    %p509 = scmp.eq.s32.totalorder %s508, 0
    %s511 = sadd.s32 %s510, 1
    %s512 = scalar_select %p509, %s510, %s511
    %p515 = pneg %p509
    %p516 = scmp.eq.s32.totalorder %s28, 1
    %p517 = por %p515, %p516
    %p518 = scmp.ne.s32.totalorder %s510, %s513
    %p519 = scmp.eq.s32.totalorder %s28, 0
    %p520 = por %p518, %p519
    %p521 = scmp.ne.s32.totalorder %s510, %s513
    %p522 = scmp.eq.s32.totalorder %s33, 1
    %p523 = por %p521, %p522
    %p524 = scmp.ne.s32.totalorder %s513, %s514
    %p525 = scmp.eq.s32.totalorder %s33, 0
    %p526 = por %p524, %p525
    %p527 = scmp.ne.s32.totalorder %s513, %s514
    %p528 = scmp.eq.s32.totalorder %s34, 1
    %p529 = por %p527, %p528
    %p531 = scmp.ne.s32.totalorder %s514, %s530
    %p532 = scmp.eq.s32.totalorder %s34, 0
    %p533 = por %p531, %p532
    %p534 = scmp.le.s32.totalorder 1, %s28
    %p535 = scmp.lt.s32.totalorder %s28, 3
    %p536 = pnand %p534, %p535
    %p537 = pneg %p536
    // Predicated region
    $region9: #{transformer_forward.9} parent=5 // pred_check
      _
    $region10: #{transformer_forward.9} parent=5 // pred_check_branch
      %539 = sbr.rel (%p536) target = $region12
    $region11: #{transformer_forward.9} parent=5 // pred_region
      %s540 = ssub.s32 %s28, 1
      // Predicated region
      $region13: #{transformer_forward.9} parent=11 // pred_check
        %p541 = pneg %p101
      $region14: #{transformer_forward.9} parent=11 // pred_check_branch
        %543 = sbr.rel (%p541) target = $region16
      $region15: #{transformer_forward.9} parent=11 // pred_region
        _
      $region16: #{transformer_forward.9} parent=11 // pred_fallthru
        _
      // Predicated region
      $region17: #{transformer_forward.9} parent=11 // pred_check
        %p544 = pneg %p122
      $region18: #{transformer_forward.9} parent=11 // pred_check_branch
        %546 = sbr.rel (%p544) target = $region20
      $region19: #{transformer_forward.9} parent=11 // pred_region
        _
      $region20: #{transformer_forward.9} parent=11 // pred_fallthru
        _
      // Predicated region
      $region21: #{transformer_forward.9} parent=11 // pred_check
        %p547 = pneg %p143
      $region22: #{transformer_forward.9} parent=11 // pred_check_branch
        %549 = sbr.rel (%p547) target = $region24
      $region23: #{transformer_forward.9} parent=11 // pred_region
        _
      $region24: #{transformer_forward.9} parent=11 // pred_fallthru
        _
      // Predicated region
      $region25: #{transformer_forward.9} parent=11 // pred_check
        %p550 = pneg %p164
      $region26: #{transformer_forward.9} parent=11 // pred_check_branch
        %552 = sbr.rel (%p550) target = $region28
      $region27: #{transformer_forward.9} parent=11 // pred_region
        _
      $region28: #{transformer_forward.9} parent=11 // pred_fallthru
        _
      // Predicated region
      $region29: #{transformer_forward.9} parent=11 // pred_check
        %p553 = pneg %p185
      $region30: #{transformer_forward.9} parent=11 // pred_check_branch
        %555 = sbr.rel (%p553) target = $region32
      $region31: #{transformer_forward.9} parent=11 // pred_region
        _
      $region32: #{transformer_forward.9} parent=11 // pred_fallthru
        _
      // Predicated region
      $region33: #{transformer_forward.9} parent=11 // pred_check
        %p556 = pneg %p206
      $region34: #{transformer_forward.9} parent=11 // pred_check_branch
        %558 = sbr.rel (%p556) target = $region36
      $region35: #{transformer_forward.9} parent=11 // pred_region
        _
      $region36: #{transformer_forward.9} parent=11 // pred_fallthru
        _
      // Predicated region
      $region37: #{transformer_forward.9} parent=11 // pred_check
        %p559 = pneg %p227
      $region38: #{transformer_forward.9} parent=11 // pred_check_branch
        %561 = sbr.rel (%p559) target = $region40
      $region39: #{transformer_forward.9} parent=11 // pred_region
        _
      $region40: #{transformer_forward.9} parent=11 // pred_fallthru
        _
      // Predicated region
      $region41: #{transformer_forward.9} parent=11 // pred_check
        %p562 = pneg %p248
      $region42: #{transformer_forward.9} parent=11 // pred_check_branch
        %564 = sbr.rel (%p562) target = $region44
      $region43: #{transformer_forward.9} parent=11 // pred_region
        _
      $region44: #{transformer_forward.9} parent=11 // pred_fallthru
        _
      // Predicated region
      $region45: #{transformer_forward.9} parent=11 // pred_check
        %p565 = pneg %p269
      $region46: #{transformer_forward.9} parent=11 // pred_check_branch
        %567 = sbr.rel (%p565) target = $region48
      $region47: #{transformer_forward.9} parent=11 // pred_region
        _
      $region48: #{transformer_forward.9} parent=11 // pred_fallthru
        _
      // Predicated region
      $region49: #{transformer_forward.9} parent=11 // pred_check
        %p568 = pneg %p290
      $region50: #{transformer_forward.9} parent=11 // pred_check_branch
        %570 = sbr.rel (%p568) target = $region52
      $region51: #{transformer_forward.9} parent=11 // pred_region
        _
      $region52: #{transformer_forward.9} parent=11 // pred_fallthru
        _
      // Predicated region
      $region53: #{transformer_forward.9} parent=11 // pred_check
        %p571 = pneg %p311
      $region54: #{transformer_forward.9} parent=11 // pred_check_branch
        %573 = sbr.rel (%p571) target = $region56
      $region55: #{transformer_forward.9} parent=11 // pred_region
        _
      $region56: #{transformer_forward.9} parent=11 // pred_fallthru
        _
      // Predicated region
      $region57: #{transformer_forward.9} parent=11 // pred_check
        %p574 = pneg %p332
      $region58: #{transformer_forward.9} parent=11 // pred_check_branch
        %576 = sbr.rel (%p574) target = $region60
      $region59: #{transformer_forward.9} parent=11 // pred_region
        _
      $region60: #{transformer_forward.9} parent=11 // pred_fallthru
        _
      // Predicated region
      $region61: #{transformer_forward.9} parent=11 // pred_check
        %p577 = pneg %p353
      $region62: #{transformer_forward.9} parent=11 // pred_check_branch
        %579 = sbr.rel (%p577) target = $region64
      $region63: #{transformer_forward.9} parent=11 // pred_region
        _
      $region64: #{transformer_forward.9} parent=11 // pred_fallthru
        _
      // Predicated region
      $region65: #{transformer_forward.9} parent=11 // pred_check
        %p580 = pneg %p374
      $region66: #{transformer_forward.9} parent=11 // pred_check_branch
        %582 = sbr.rel (%p580) target = $region68
      $region67: #{transformer_forward.9} parent=11 // pred_region
        _
      $region68: #{transformer_forward.9} parent=11 // pred_fallthru
        _
      // Predicated region
      $region69: #{transformer_forward.9} parent=11 // pred_check
        %p583 = pneg %p395
      $region70: #{transformer_forward.9} parent=11 // pred_check_branch
        %585 = sbr.rel (%p583) target = $region72
      $region71: #{transformer_forward.9} parent=11 // pred_region
        _
      $region72: #{transformer_forward.9} parent=11 // pred_fallthru
        _
      // Predicated region
      $region73: #{transformer_forward.9} parent=11 // pred_check
        %p586 = pneg %p416
      $region74: #{transformer_forward.9} parent=11 // pred_check_branch
        %588 = sbr.rel (%p586) target = $region76
      $region75: #{transformer_forward.9} parent=11 // pred_region
        _
      $region76: #{transformer_forward.9} parent=11 // pred_fallthru
        _
      // Predicated region
      $region77: #{transformer_forward.9} parent=11 // pred_check
        %p589 = pneg %p437
      $region78: #{transformer_forward.9} parent=11 // pred_check_branch
        %591 = sbr.rel (%p589) target = $region80
      $region79: #{transformer_forward.9} parent=11 // pred_region
        _
      $region80: #{transformer_forward.9} parent=11 // pred_fallthru
        _
      // Predicated region
      $region81: #{transformer_forward.9} parent=11 // pred_check
        %p592 = pneg %p458
      $region82: #{transformer_forward.9} parent=11 // pred_check_branch
        %594 = sbr.rel (%p592) target = $region84
      $region83: #{transformer_forward.9} parent=11 // pred_region
        _
      $region84: #{transformer_forward.9} parent=11 // pred_fallthru
        _
      // Predicated region
      $region85: #{transformer_forward.9} parent=11 // pred_check
        %p595 = pneg %p479
      $region86: #{transformer_forward.9} parent=11 // pred_check_branch
        %597 = sbr.rel (%p595) target = $region88
      $region87: #{transformer_forward.9} parent=11 // pred_region
        _
      $region88: #{transformer_forward.9} parent=11 // pred_fallthru
        _
      // Predicated region
      $region89: #{transformer_forward.9} parent=11 // pred_check
        %p598 = pneg %p500
      $region90: #{transformer_forward.9} parent=11 // pred_check_branch
        %600 = sbr.rel (%p598) target = $region92
      $region91: #{transformer_forward.9} parent=11 // pred_region
        _
      $region92: #{transformer_forward.9} parent=11 // pred_fallthru
        _
    $region12: #{transformer_forward.9} parent=5 // pred_fallthru
      _
    %p601 = scmp.lt.s32.totalorder %s28, 2
    // Predicated region
    $region93: #{transformer_forward.9} parent=5 // pred_check
      %p602 = pneg %p601
    $region94: #{transformer_forward.9} parent=5 // pred_check_branch
      %604 = sbr.rel (%p602) target = $region96
    $region95: #{transformer_forward.9} parent=5 // pred_region
      // Predicated region
      $region97: #{transformer_forward.9} parent=95 // pred_check
        %p605 = pneg %p48
      $region98: #{transformer_forward.9} parent=95 // pred_check_branch
        %607 = sbr.rel (%p605) target = $region100
      $region99: #{transformer_forward.9} parent=95 // pred_region
        %p608 = scmp.lt.s32.totalorder %s28, 1
        %s609 = scalar_select %p608, %s28, 1
        %s610 = smul.addr %s609, 8
        %s611 = scalar_lea.vmem %s0, %s610
      $region100: #{transformer_forward.9} parent=95 // pred_fallthru
        _
      // Predicated region
      $region101: #{transformer_forward.9} parent=95 // pred_check
        %p612 = pneg %p74
      $region102: #{transformer_forward.9} parent=95 // pred_check_branch
        %614 = sbr.rel (%p612) target = $region104
      $region103: #{transformer_forward.9} parent=95 // pred_region
        %p615 = scmp.lt.s32.totalorder %s28, 1
        %s616 = scalar_select %p615, %s28, 1
        %s617 = smul.addr %s616, 8
        %s618 = scalar_lea.vmem %s1, %s617
      $region104: #{transformer_forward.9} parent=95 // pred_fallthru
        _
    $region96: #{transformer_forward.9} parent=5 // pred_fallthru
      _
    %p619 = scmp.le.s32.totalorder 1, %s28
    %p620 = scmp.lt.s32.totalorder %s28, 3
    %p621 = pnand %p619, %p620
    %p622 = pneg %p621
    // Predicated region
    $region105: #{transformer_forward.9} parent=5 // pred_check
      _
    $region106: #{transformer_forward.9} parent=5 // pred_check_branch
      %624 = sbr.rel (%p621) target = $region108
    $region107: #{transformer_forward.9} parent=5 // pred_region
      %s625 = ssub.s32 %s28, 1
      %p626 = scmp.lt.s32.totalorder %s33, 1
      %s627 = scalar_select %p626, %s33, 1
      %s628 = smul.addr %s627, 8
      %s629 = scalar_lea.vmem %s0, %s628
      %p630 = pneg %p54
      %p631 = pneg %p51
      %p632 = scmp.lt.s32.totalorder %s33, 1
      %s633 = scalar_select %p632, %s33, 1
      %s634 = smul.addr %s633, 8
      %s635 = scalar_lea.vmem %s1, %s634
      %p636 = pneg %p80
      %p637 = pneg %p77
      %p638 = pneg %p101
      %p639 = pneg %p98
      %p640 = pneg %p122
      %p641 = pneg %p119
      %p642 = pneg %p143
      %p643 = pneg %p140
      %p644 = pneg %p164
      %p645 = pneg %p161
      %p646 = pneg %p185
      %p647 = pneg %p182
      %p648 = pneg %p206
      %p649 = pneg %p203
      %p650 = pneg %p227
      %p651 = pneg %p224
      %p652 = pneg %p248
      %p653 = pneg %p245
      %p654 = pneg %p269
      %p655 = pneg %p266
      %p656 = pneg %p290
      %p657 = pneg %p287
      %p658 = pneg %p311
      %p659 = pneg %p308
      %p660 = pneg %p332
      %p661 = pneg %p329
      %p662 = pneg %p353
      %p663 = pneg %p350
      %p664 = pneg %p374
      %p665 = pneg %p371
      %p666 = pneg %p395
      %p667 = pneg %p392
      %p668 = pneg %p416
      %p669 = pneg %p413
      %p670 = pneg %p437
      %p671 = pneg %p434
      %p672 = pneg %p458
      %p673 = pneg %p455
      %p674 = pneg %p479
      %p675 = pneg %p476
      %p676 = pneg %p500
      %p677 = pneg %p497
      %p678 = pneg %p526
      %p679 = pneg %p523
      %p680 = scmp.lt.s32.totalorder %s33, 1
      %s681 = scalar_select %p680, %s33, 1
      %s682 = smul.addr %s681, 8
      %s683 = scalar_lea.vmem %s22, %s682
      %p684 = scmp.lt.s32.totalorder %s33, 1
      %s685 = scalar_select %p684, %s33, 1
      %s686 = smul.addr %s685, 8
      %s687 = scalar_lea.vmem %s0, %s686
      %p688 = scmp.lt.s32.totalorder %s33, 1
      %s689 = scalar_select %p688, %s33, 1
      %s690 = smul.addr %s689, 8
      %s691 = scalar_lea.vmem %s1, %s690
      %p692 = scmp.lt.s32.totalorder %s33, 1
      %s693 = scalar_select %p692, %s33, 1
      %s694 = smul.addr %s693, 8
      %s695 = scalar_lea.vmem %s22, %s694
      %v696 = vld [vmem:[%s687] sm:$0xff]
      %v697 = vld [vmem:[%s691] sm:$0xff]
      %v698 = vld [vmem:[%s2] sm:$0x1]
      %v699 = vld [vmem:[%s3] sm:$0x1]
      %vm700 = vcmask 261120
      %v701 = vsel %vm700, %v696, 0.0
      %702 = vadd.xlane.f32.xlu0 %v701
      %v703 = vpop.xlane.xlu0 %702
      %v704 = vrcp.pop 32.0
      %v705 = vmul.f32 %v703, %v704
      %v706 = vsub.f32 %v696, %v705
      %v707 = vmul.f32 %v706, %v706
      %v708 = vsel %vm700, %v707, 0.0
      %709 = vadd.xlane.f32.xlu0 %v708
      %v710 = vpop.xlane.xlu0 %709
      %v711 = vmul.f32 %v710, 0.032258064
      %v712 = vrsqrt.pop %v711
      %v713 = vmul.f32 %v711, %v712
      %vm714 = vcmp.eq.f32.partialorder %v711, inf
      %v715 = vsel %vm714, %v711, %v713
      %vm716 = vcmp.eq.f32.partialorder %v711, 0.0
      %v717 = vand.u32 %v711, 2147483648
      %v718 = vsel %vm716, %v717, %v715
      %v719 = vadd.f32 %v718, 1e-06
      %v720 = vrcp.pop %v719
      %v721 = vmul.f32 %v706, %v720
      %v723 = vlaneseq
      %v724 = vshrl.u32 %v723, 7
      %v725 = vsub.s32 0, %v724
      %v726 = vrot.slane %v698, %v725
      %v728 = vmul.f32 %v726, %v721
      %v730 = vlaneseq
      %v731 = vshrl.u32 %v730, 7
      %v732 = vsub.s32 0, %v731
      %v733 = vrot.slane %v699, %v732
      %v735 = vadd.f32 %v728, %v733
      %v736 = vld [vmem:[%s8] sm:$0xff]
      %v737 = vld [vmem:[%s8 + $0x8] sm:$0xff]
      %v738 = vld [vmem:[%s8 + $0x10] sm:$0xff]
      %v739 = vld [vmem:[%s8 + $0x18] sm:$0xff]
      %v740 = vld [vmem:[%s9] sm:$0x1]
      %v742 = vlaneseq
      %v743 = vshrl.u32 %v742, 7
      %v744 = vsub.s32 0, %v743
      %v745 = vrot.slane %v740, %v744
      %v748 = vsel %vm700, %v735, 0
      %750 = vmatprep.subr.mxu0 0.0
      %751 = vmatpush1.msra.mxu0 %v736
      %752 = vmatprep.subr.mxu0 0.0
      %753 = vmatpush1.msra.mxu0 %v737
      %754 = vmatprep.subr.mxu0 0.0
      %755 = vmatpush1.msra.mxu0 %v738
      %756 = vmatprep.subr.mxu0 0.0
      %757 = vmatpush1.msra.mxu0 %v739
      %758 = vmatprep.subr.mxu0 0.0
      %759 = vmatpush1.msra.mxu0 0.0
      %760 = vmatprep.subr.mxu0 0.0
      %761 = vmatpush1.msra.mxu0 0.0
      %762 = vmatprep.subr.mxu0 0.0
      %763 = vmatpush1.msra.mxu0 0.0
      %764 = vmatprep.subr.mxu0 0.0
      %765 = vmatpush1.msra.mxu0 0.0
      %766 = vmatprep.subr.mxu0 0.0
      %767 = vmatpush1.msra.mxu0 0.0
      %768 = vmatprep.subr.mxu0 0.0
      %769 = vmatpush1.msra.mxu0 0.0
      %770 = vmatprep.subr.mxu0 0.0
      %771 = vmatpush1.msra.mxu0 0.0
      %772 = vmatprep.subr.mxu0 0.0
      %773 = vmatpush1.msra.mxu0 0.0
      %774 = vmatprep.subr.mxu0 0.0
      %775 = vmatpush1.msra.mxu0 0.0
      %776 = vmatprep.subr.mxu0 0.0
      %777 = vmatpush1.msra.mxu0 0.0
      %778 = vmatprep.subr.mxu0 0.0
      %779 = vmatpush1.msra.mxu0 0.0
      %780 = vmatprep.subr.mxu0 0.0
      %781 = vmatpush1.msra.mxu0 0.0
      %782 = vmatprep.subr.mxu0 0.0
      %783 = vmatpush1.msra.mxu0 0.0
      %784 = vmatprep.subr.mxu0 0.0
      %785 = vmatpush1.msra.mxu0 0.0
      %786 = vmatprep.subr.mxu0 0.0
      %787 = vmatpush1.msra.mxu0 0.0
      %788 = vmatprep.subr.mxu0 0.0
      %789 = vmatpush1.msra.mxu0 0.0
      %790 = vmatprep.subr.mxu0 0.0
      %791 = vmatpush1.msra.mxu0 0.0
      %792 = vmatprep.subr.mxu0 0.0
      %793 = vmatpush1.msra.mxu0 0.0
      %794 = vmatprep.subr.mxu0 0.0
      %795 = vmatpush1.msra.mxu0 0.0
      %796 = vmatprep.subr.mxu0 0.0
      %797 = vmatpush1.msra.mxu0 0.0
      %798 = vmatprep.subr.mxu0 0.0
      %799 = vmatpush1.msra.mxu0 0.0
      %800 = vmatprep.subr.mxu0 0.0
      %801 = vmatpush1.msra.mxu0 0.0
      %802 = vmatprep.subr.mxu0 0.0
      %803 = vmatpush1.msra.mxu0 0.0
      %804 = vmatprep.subr.mxu0 0.0
      %805 = vmatpush1.msra.mxu0 0.0
      %806 = vmatprep.subr.mxu0 0.0
      %807 = vmatpush1.msra.mxu0 0.0
      %808 = vmatprep.subr.mxu0 0.0
      %809 = vmatpush1.msra.mxu0 0.0
      %810 = vmatprep.subr.mxu0 0.0
      %811 = vmatpush1.msra.mxu0 0.0
      %812 = vmatprep.subr.mxu0 0.0
      %813 = vmatpush1.msra.mxu0 0.0
      %814 = vmatprep.mubr.f32.mxu0 0.0
      %815 = vmatmul.mubr.f32.gmra.mrb[0].mxu0 %v748
      %v816 = vpop.f32.mrb[0].mxu0
      %v817 = vadd.f32 %v745, %v816
      %v818 = vpop.f32.mrb[0].mxu0
      %819 = vdwg.mxu0
      %v820 = vld [vmem:[%s10] sm:$0xff]
      %v821 = vld [vmem:[%s10 + $0x8] sm:$0xff]
      %v822 = vld [vmem:[%s10 + $0x10] sm:$0xff]
      %v823 = vld [vmem:[%s10 + $0x18] sm:$0xff]
      %v824 = vld [vmem:[%s11] sm:$0x1]
      %v825 = vmul.f32 %v817, 0.35355338
      %827 = vrot.lane.b32.xlu0 %v817, 96
      %v828 = vpop.permute.xlu0 %827
      %vm829 = vcmask 64512
      %v831 = vsel %vm829, %v825, 0
      %v833 = vsel %vm829, %v828, 0
      %835 = vmatprep.subr.mxu0 0.0
      %836 = vmatpush1.xpose.msra.mxu0 %v833
      %837 = vmatprep.subr.mxu0 0.0
      %838 = vmatpush1.xpose.msra.mxu0 0.0
      %839 = vmatprep.subr.mxu0 0.0
      %840 = vmatpush1.xpose.msra.mxu0 0.0
      %841 = vmatprep.subr.mxu0 0.0
      %842 = vmatpush1.xpose.msra.mxu0 0.0
      %843 = vmatprep.subr.mxu0 0.0
      %844 = vmatpush1.xpose.msra.mxu0 0.0
      %845 = vmatprep.subr.mxu0 0.0
      %846 = vmatpush1.xpose.msra.mxu0 0.0
      %847 = vmatprep.subr.mxu0 0.0
      %848 = vmatpush1.xpose.msra.mxu0 0.0
      %849 = vmatprep.subr.mxu0 0.0
      %850 = vmatpush1.xpose.msra.mxu0 0.0
      %851 = vmatprep.subr.mxu0 0.0
      %852 = vmatpush1.xpose.msra.mxu0 0.0
      %853 = vmatprep.subr.mxu0 0.0
      %854 = vmatpush1.xpose.msra.mxu0 0.0
      %855 = vmatprep.subr.mxu0 0.0
      %856 = vmatpush1.xpose.msra.mxu0 0.0
      %857 = vmatprep.subr.mxu0 0.0
      %858 = vmatpush1.xpose.msra.mxu0 0.0
      %859 = vmatprep.subr.mxu0 0.0
      %860 = vmatpush1.xpose.msra.mxu0 0.0
      %861 = vmatprep.subr.mxu0 0.0
      %862 = vmatpush1.xpose.msra.mxu0 0.0
      %863 = vmatprep.subr.mxu0 0.0
      %864 = vmatpush1.xpose.msra.mxu0 0.0
      %865 = vmatprep.subr.mxu0 0.0
      %866 = vmatpush1.xpose.msra.mxu0 0.0
      %867 = vmatprep.subr.mxu0 0.0
      %868 = vmatpush1.xpose.msra.mxu0 0.0
      %869 = vmatprep.subr.mxu0 0.0
      %870 = vmatpush1.xpose.msra.mxu0 0.0
      %871 = vmatprep.subr.mxu0 0.0
      %872 = vmatpush1.xpose.msra.mxu0 0.0
      %873 = vmatprep.subr.mxu0 0.0
      %874 = vmatpush1.xpose.msra.mxu0 0.0
      %875 = vmatprep.subr.mxu0 0.0
      %876 = vmatpush1.xpose.msra.mxu0 0.0
      %877 = vmatprep.subr.mxu0 0.0
      %878 = vmatpush1.xpose.msra.mxu0 0.0
      %879 = vmatprep.subr.mxu0 0.0
      %880 = vmatpush1.xpose.msra.mxu0 0.0
      %881 = vmatprep.subr.mxu0 0.0
      %882 = vmatpush1.xpose.msra.mxu0 0.0
      %883 = vmatprep.subr.mxu0 0.0
      %884 = vmatpush1.xpose.msra.mxu0 0.0
      %885 = vmatprep.subr.mxu0 0.0
      %886 = vmatpush1.xpose.msra.mxu0 0.0
      %887 = vmatprep.subr.mxu0 0.0
      %888 = vmatpush1.xpose.msra.mxu0 0.0
      %889 = vmatprep.subr.mxu0 0.0
      %890 = vmatpush1.xpose.msra.mxu0 0.0
      %891 = vmatprep.subr.mxu0 0.0
      %892 = vmatpush1.xpose.msra.mxu0 0.0
      %893 = vmatprep.subr.mxu0 0.0
      %894 = vmatpush1.xpose.msra.mxu0 0.0
      %895 = vmatprep.subr.mxu0 0.0
      %896 = vmatpush1.xpose.msra.mxu0 0.0
      %897 = vmatprep.subr.mxu0 0.0
      %898 = vmatpush1.xpose.msra.mxu0 0.0
      %899 = vmatprep.mubr.f32.mxu0 0.0
      %900 = vmatmul.mubr.f32.gmra.mrb[0].mxu0 %v831
      %v901 = vpop.f32.mrb[0].mxu0
      %v902 = vadd.f32 0.0, %v901
      %v903 = vpop.f32.mrb[0].mxu0
      %904 = vdwg.mxu0
      %v905 = vsel %vm829, %v902, -inf
      %906 = vmax.xlane.f32.xlu0 %v905
      %v907 = vpop.xlane.xlu0 %906
      %v908 = vsub.f32 %v902, %v907
      %v909 = vmul.f32 %v908, 1.442695
      %v910 = vpow.pop %v909
      %v911 = vsel %vm829, %v910, 0.0
      %912 = vadd.xlane.f32.xlu0 %v911
      %v913 = vpop.xlane.xlu0 %912
      %v914 = vrcp.pop %v913
      %v915 = vmul.f32 %v910, %v914
      %916 = vrot.lane.b32.xlu0 %v817, 64
      %v917 = vpop.permute.xlu0 %916
      %v920 = vsel %vm829, %v915, 0
      %922 = vmatprep.subr.mxu0 0.0
      %923 = vmatpush1.msra.mxu0 %v917
      %924 = vmatprep.subr.mxu0 0.0
      %925 = vmatpush1.msra.mxu0 0.0
      %926 = vmatprep.subr.mxu0 0.0
      %927 = vmatpush1.msra.mxu0 0.0
      %928 = vmatprep.subr.mxu0 0.0
      %929 = vmatpush1.msra.mxu0 0.0
      %930 = vmatprep.subr.mxu0 0.0
      %931 = vmatpush1.msra.mxu0 0.0
      %932 = vmatprep.subr.mxu0 0.0
      %933 = vmatpush1.msra.mxu0 0.0
      %934 = vmatprep.subr.mxu0 0.0
      %935 = vmatpush1.msra.mxu0 0.0
      %936 = vmatprep.subr.mxu0 0.0
      %937 = vmatpush1.msra.mxu0 0.0
      %938 = vmatprep.subr.mxu0 0.0
      %939 = vmatpush1.msra.mxu0 0.0
      %940 = vmatprep.subr.mxu0 0.0
      %941 = vmatpush1.msra.mxu0 0.0
      %942 = vmatprep.subr.mxu0 0.0
      %943 = vmatpush1.msra.mxu0 0.0
      %944 = vmatprep.subr.mxu0 0.0
      %945 = vmatpush1.msra.mxu0 0.0
      %946 = vmatprep.subr.mxu0 0.0
      %947 = vmatpush1.msra.mxu0 0.0
      %948 = vmatprep.subr.mxu0 0.0
      %949 = vmatpush1.msra.mxu0 0.0
      %950 = vmatprep.subr.mxu0 0.0
      %951 = vmatpush1.msra.mxu0 0.0
      %952 = vmatprep.subr.mxu0 0.0
      %953 = vmatpush1.msra.mxu0 0.0
      %954 = vmatprep.subr.mxu0 0.0
      %955 = vmatpush1.msra.mxu0 0.0
      %956 = vmatprep.subr.mxu0 0.0
      %957 = vmatpush1.msra.mxu0 0.0
      %958 = vmatprep.subr.mxu0 0.0
      %959 = vmatpush1.msra.mxu0 0.0
      %960 = vmatprep.subr.mxu0 0.0
      %961 = vmatpush1.msra.mxu0 0.0
      %962 = vmatprep.subr.mxu0 0.0
      %963 = vmatpush1.msra.mxu0 0.0
      %964 = vmatprep.subr.mxu0 0.0
      %965 = vmatpush1.msra.mxu0 0.0
      %966 = vmatprep.subr.mxu0 0.0
      %967 = vmatpush1.msra.mxu0 0.0
      %968 = vmatprep.subr.mxu0 0.0
      %969 = vmatpush1.msra.mxu0 0.0
      %970 = vmatprep.subr.mxu0 0.0
      %971 = vmatpush1.msra.mxu0 0.0
      %972 = vmatprep.subr.mxu0 0.0
      %973 = vmatpush1.msra.mxu0 0.0
      %974 = vmatprep.subr.mxu0 0.0
      %975 = vmatpush1.msra.mxu0 0.0
      %976 = vmatprep.subr.mxu0 0.0
      %977 = vmatpush1.msra.mxu0 0.0
      %978 = vmatprep.subr.mxu0 0.0
      %979 = vmatpush1.msra.mxu0 0.0
      %980 = vmatprep.subr.mxu0 0.0
      %981 = vmatpush1.msra.mxu0 0.0
      %982 = vmatprep.subr.mxu0 0.0
      %983 = vmatpush1.msra.mxu0 0.0
      %984 = vmatprep.subr.mxu0 0.0
      %985 = vmatpush1.msra.mxu0 0.0
      %986 = vmatprep.mubr.f32.mxu0 0.0
      %987 = vmatmul.mubr.f32.gmra.mrb[0].mxu0 %v920
      %v988 = vpop.f32.mrb[0].mxu0
      %v989 = vadd.f32 0.0, %v988
      %v990 = vpop.f32.mrb[0].mxu0
      %991 = vdwg.mxu0
      %992 = vrot.lane.b32.xlu0 %v825, 120
      %v993 = vpop.permute.xlu0 %992
      %994 = vrot.lane.b32.xlu0 %v817, 88
      %v995 = vpop.permute.xlu0 %994
      %v996 = vsel %vm829, %v993, 0
      %v998 = vsel %vm829, %v995, 0
      %1000 = vmatprep.subr.mxu0 0.0
      %1001 = vmatpush1.xpose.msra.mxu0 %v998
      %1002 = vmatprep.subr.mxu0 0.0
      %1003 = vmatpush1.xpose.msra.mxu0 0.0
      %1004 = vmatprep.subr.mxu0 0.0
      %1005 = vmatpush1.xpose.msra.mxu0 0.0
      %1006 = vmatprep.subr.mxu0 0.0
      %1007 = vmatpush1.xpose.msra.mxu0 0.0
      %1008 = vmatprep.subr.mxu0 0.0
      %1009 = vmatpush1.xpose.msra.mxu0 0.0
      %1010 = vmatprep.subr.mxu0 0.0
      %1011 = vmatpush1.xpose.msra.mxu0 0.0
      %1012 = vmatprep.subr.mxu0 0.0
      %1013 = vmatpush1.xpose.msra.mxu0 0.0
      %1014 = vmatprep.subr.mxu0 0.0
      %1015 = vmatpush1.xpose.msra.mxu0 0.0
      %1016 = vmatprep.subr.mxu0 0.0
      %1017 = vmatpush1.xpose.msra.mxu0 0.0
      %1018 = vmatprep.subr.mxu0 0.0
      %1019 = vmatpush1.xpose.msra.mxu0 0.0
      %1020 = vmatprep.subr.mxu0 0.0
      %1021 = vmatpush1.xpose.msra.mxu0 0.0
      %1022 = vmatprep.subr.mxu0 0.0
      %1023 = vmatpush1.xpose.msra.mxu0 0.0
      %1024 = vmatprep.subr.mxu0 0.0
      %1025 = vmatpush1.xpose.msra.mxu0 0.0
      %1026 = vmatprep.subr.mxu0 0.0
      %1027 = vmatpush1.xpose.msra.mxu0 0.0
      %1028 = vmatprep.subr.mxu0 0.0
      %1029 = vmatpush1.xpose.msra.mxu0 0.0
      %1030 = vmatprep.subr.mxu0 0.0
      %1031 = vmatpush1.xpose.msra.mxu0 0.0
      %1032 = vmatprep.subr.mxu0 0.0
      %1033 = vmatpush1.xpose.msra.mxu0 0.0
      %1034 = vmatprep.subr.mxu0 0.0
      %1035 = vmatpush1.xpose.msra.mxu0 0.0
      %1036 = vmatprep.subr.mxu0 0.0
      %1037 = vmatpush1.xpose.msra.mxu0 0.0
      %1038 = vmatprep.subr.mxu0 0.0
      %1039 = vmatpush1.xpose.msra.mxu0 0.0
      %1040 = vmatprep.subr.mxu0 0.0
      %1041 = vmatpush1.xpose.msra.mxu0 0.0
      %1042 = vmatprep.subr.mxu0 0.0
      %1043 = vmatpush1.xpose.msra.mxu0 0.0
      %1044 = vmatprep.subr.mxu0 0.0
      %1045 = vmatpush1.xpose.msra.mxu0 0.0
      %1046 = vmatprep.subr.mxu0 0.0
      %1047 = vmatpush1.xpose.msra.mxu0 0.0
      %1048 = vmatprep.subr.mxu0 0.0
      %1049 = vmatpush1.xpose.msra.mxu0 0.0
      %1050 = vmatprep.subr.mxu0 0.0
      %1051 = vmatpush1.xpose.msra.mxu0 0.0
      %1052 = vmatprep.subr.mxu0 0.0
      %1053 = vmatpush1.xpose.msra.mxu0 0.0
      %1054 = vmatprep.subr.mxu0 0.0
      %1055 = vmatpush1.xpose.msra.mxu0 0.0
      %1056 = vmatprep.subr.mxu0 0.0
      %1057 = vmatpush1.xpose.msra.mxu0 0.0
      %1058 = vmatprep.subr.mxu0 0.0
      %1059 = vmatpush1.xpose.msra.mxu0 0.0
      %1060 = vmatprep.subr.mxu0 0.0
      %1061 = vmatpush1.xpose.msra.mxu0 0.0
      %1062 = vmatprep.subr.mxu0 0.0
      %1063 = vmatpush1.xpose.msra.mxu0 0.0
      %1064 = vmatprep.mubr.f32.mxu0 0.0
      %1065 = vmatmul.mubr.f32.gmra.mrb[0].mxu0 %v996
      %v1066 = vpop.f32.mrb[0].mxu0
      %v1067 = vadd.f32 0.0, %v1066
      %v1068 = vpop.f32.mrb[0].mxu0
      %1069 = vdwg.mxu0
      %v1070 = vsel %vm829, %v1067, -inf
      %1071 = vmax.xlane.f32.xlu0 %v1070
      %v1072 = vpop.xlane.xlu0 %1071
      %v1073 = vsub.f32 %v1067, %v1072
      %v1074 = vmul.f32 %v1073, 1.442695
      %v1075 = vpow.pop %v1074
      %v1076 = vsel %vm829, %v1075, 0.0
      %1077 = vadd.xlane.f32.xlu0 %v1076
      %v1078 = vpop.xlane.xlu0 %1077
      %v1079 = vrcp.pop %v1078
      %v1080 = vmul.f32 %v1075, %v1079
      %1081 = vrot.lane.b32.xlu0 %v817, 56
      %v1082 = vpop.permute.xlu0 %1081
      %v1085 = vsel %vm829, %v1080, 0
      %1087 = vmatprep.subr.mxu0 0.0
      %1088 = vmatpush1.msra.mxu0 %v1082
      %1089 = vmatprep.subr.mxu0 0.0
      %1090 = vmatpush1.msra.mxu0 0.0
      %1091 = vmatprep.subr.mxu0 0.0
      %1092 = vmatpush1.msra.mxu0 0.0
      %1093 = vmatprep.subr.mxu0 0.0
      %1094 = vmatpush1.msra.mxu0 0.0
      %1095 = vmatprep.subr.mxu0 0.0
      %1096 = vmatpush1.msra.mxu0 0.0
      %1097 = vmatprep.subr.mxu0 0.0
      %1098 = vmatpush1.msra.mxu0 0.0
      %1099 = vmatprep.subr.mxu0 0.0
      %1100 = vmatpush1.msra.mxu0 0.0
      %1101 = vmatprep.subr.mxu0 0.0
      %1102 = vmatpush1.msra.mxu0 0.0
      %1103 = vmatprep.subr.mxu0 0.0
      %1104 = vmatpush1.msra.mxu0 0.0
      %1105 = vmatprep.subr.mxu0 0.0
      %1106 = vmatpush1.msra.mxu0 0.0
      %1107 = vmatprep.subr.mxu0 0.0
      %1108 = vmatpush1.msra.mxu0 0.0
      %1109 = vmatprep.subr.mxu0 0.0
      %1110 = vmatpush1.msra.mxu0 0.0
      %1111 = vmatprep.subr.mxu0 0.0
      %1112 = vmatpush1.msra.mxu0 0.0
      %1113 = vmatprep.subr.mxu0 0.0
      %1114 = vmatpush1.msra.mxu0 0.0
      %1115 = vmatprep.subr.mxu0 0.0
      %1116 = vmatpush1.msra.mxu0 0.0
      %1117 = vmatprep.subr.mxu0 0.0
      %1118 = vmatpush1.msra.mxu0 0.0
      %1119 = vmatprep.subr.mxu0 0.0
      %1120 = vmatpush1.msra.mxu0 0.0
      %1121 = vmatprep.subr.mxu0 0.0
      %1122 = vmatpush1.msra.mxu0 0.0
      %1123 = vmatprep.subr.mxu0 0.0
      %1124 = vmatpush1.msra.mxu0 0.0
      %1125 = vmatprep.subr.mxu0 0.0
      %1126 = vmatpush1.msra.mxu0 0.0
      %1127 = vmatprep.subr.mxu0 0.0
      %1128 = vmatpush1.msra.mxu0 0.0
      %1129 = vmatprep.subr.mxu0 0.0
      %1130 = vmatpush1.msra.mxu0 0.0
      %1131 = vmatprep.subr.mxu0 0.0
      %1132 = vmatpush1.msra.mxu0 0.0
      %1133 = vmatprep.subr.mxu0 0.0
      %1134 = vmatpush1.msra.mxu0 0.0
      %1135 = vmatprep.subr.mxu0 0.0
      %1136 = vmatpush1.msra.mxu0 0.0
      %1137 = vmatprep.subr.mxu0 0.0
      %1138 = vmatpush1.msra.mxu0 0.0
      %1139 = vmatprep.subr.mxu0 0.0
      %1140 = vmatpush1.msra.mxu0 0.0
      %1141 = vmatprep.subr.mxu0 0.0
      %1142 = vmatpush1.msra.mxu0 0.0
      %1143 = vmatprep.subr.mxu0 0.0
      %1144 = vmatpush1.msra.mxu0 0.0
      %1145 = vmatprep.subr.mxu0 0.0
      %1146 = vmatpush1.msra.mxu0 0.0
      %1147 = vmatprep.subr.mxu0 0.0
      %1148 = vmatpush1.msra.mxu0 0.0
      %1149 = vmatprep.subr.mxu0 0.0
      %1150 = vmatpush1.msra.mxu0 0.0
      %1151 = vmatprep.mubr.f32.mxu0 0.0
      %1152 = vmatmul.mubr.f32.gmra.mrb[0].mxu0 %v1085
      %v1153 = vpop.f32.mrb[0].mxu0
      %v1154 = vadd.f32 0.0, %v1153
      %v1155 = vpop.f32.mrb[0].mxu0
      %1156 = vdwg.mxu0
      %v1158 = vsel %vm829, %v1154, 0
      %1160 = vmatprep.subr.mxu0 0.0
      %1161 = vmatpush1.msra.mxu0 %v821
      %1162 = vmatprep.subr.mxu0 0.0
      %1163 = vmatpush1.msra.mxu0 0.0
      %1164 = vmatprep.subr.mxu0 0.0
      %1165 = vmatpush1.msra.mxu0 0.0
      %1166 = vmatprep.subr.mxu0 0.0
      %1167 = vmatpush1.msra.mxu0 0.0
      %1168 = vmatprep.subr.mxu0 0.0
      %1169 = vmatpush1.msra.mxu0 0.0
      %1170 = vmatprep.subr.mxu0 0.0
      %1171 = vmatpush1.msra.mxu0 0.0
      %1172 = vmatprep.subr.mxu0 0.0
      %1173 = vmatpush1.msra.mxu0 0.0
      %1174 = vmatprep.subr.mxu0 0.0
      %1175 = vmatpush1.msra.mxu0 0.0
      %1176 = vmatprep.subr.mxu0 0.0
      %1177 = vmatpush1.msra.mxu0 0.0
      %1178 = vmatprep.subr.mxu0 0.0
      %1179 = vmatpush1.msra.mxu0 0.0
      %1180 = vmatprep.subr.mxu0 0.0
      %1181 = vmatpush1.msra.mxu0 0.0
      %1182 = vmatprep.subr.mxu0 0.0
      %1183 = vmatpush1.msra.mxu0 0.0
      %1184 = vmatprep.subr.mxu0 0.0
      %1185 = vmatpush1.msra.mxu0 0.0
      %1186 = vmatprep.subr.mxu0 0.0
      %1187 = vmatpush1.msra.mxu0 0.0
      %1188 = vmatprep.subr.mxu0 0.0
      %1189 = vmatpush1.msra.mxu0 0.0
      %1190 = vmatprep.subr.mxu0 0.0
      %1191 = vmatpush1.msra.mxu0 0.0
      %1192 = vmatprep.subr.mxu0 0.0
      %1193 = vmatpush1.msra.mxu0 0.0
      %1194 = vmatprep.subr.mxu0 0.0
      %1195 = vmatpush1.msra.mxu0 0.0
      %1196 = vmatprep.subr.mxu0 0.0
      %1197 = vmatpush1.msra.mxu0 0.0
      %1198 = vmatprep.subr.mxu0 0.0
      %1199 = vmatpush1.msra.mxu0 0.0
      %1200 = vmatprep.subr.mxu0 0.0
      %1201 = vmatpush1.msra.mxu0 0.0
      %1202 = vmatprep.subr.mxu0 0.0
      %1203 = vmatpush1.msra.mxu0 0.0
      %1204 = vmatprep.subr.mxu0 0.0
      %1205 = vmatpush1.msra.mxu0 0.0
      %1206 = vmatprep.subr.mxu0 0.0
      %1207 = vmatpush1.msra.mxu0 0.0
      %1208 = vmatprep.subr.mxu0 0.0
      %1209 = vmatpush1.msra.mxu0 0.0
      %1210 = vmatprep.subr.mxu0 0.0
      %1211 = vmatpush1.msra.mxu0 0.0
      %1212 = vmatprep.subr.mxu0 0.0
      %1213 = vmatpush1.msra.mxu0 0.0
      %1214 = vmatprep.subr.mxu0 0.0
      %1215 = vmatpush1.msra.mxu0 0.0
      %1216 = vmatprep.subr.mxu0 0.0
      %1217 = vmatpush1.msra.mxu0 0.0
      %1218 = vmatprep.subr.mxu0 0.0
      %1219 = vmatpush1.msra.mxu0 0.0
      %1220 = vmatprep.subr.mxu0 0.0
      %1221 = vmatpush1.msra.mxu0 0.0
      %1222 = vmatprep.subr.mxu0 0.0
      %1223 = vmatpush1.msra.mxu0 0.0
      %1224 = vmatprep.mubr.f32.mxu0 0.0
      %1225 = vmatmul.mubr.f32.gmra.mrb[0].mxu0 %v1158
      %v1226 = vpop.f32.mrb[0].mxu0
      %v1227 = vadd.f32 0.0, %v1226
      %v1228 = vpop.f32.mrb[0].mxu0
      %1229 = vdwg.mxu0
      %v1231 = vsel %vm829, %v989, 0
      %1233 = vmatprep.subr.mxu0 0.0
      %1234 = vmatpush1.msra.mxu0 %v820
      %1235 = vmatprep.subr.mxu0 0.0
      %1236 = vmatpush1.msra.mxu0 0.0
      %1237 = vmatprep.subr.mxu0 0.0
      %1238 = vmatpush1.msra.mxu0 0.0
      %1239 = vmatprep.subr.mxu0 0.0
      %1240 = vmatpush1.msra.mxu0 0.0
      %1241 = vmatprep.subr.mxu0 0.0
      %1242 = vmatpush1.msra.mxu0 0.0
      %1243 = vmatprep.subr.mxu0 0.0
      %1244 = vmatpush1.msra.mxu0 0.0
      %1245 = vmatprep.subr.mxu0 0.0
      %1246 = vmatpush1.msra.mxu0 0.0
      %1247 = vmatprep.subr.mxu0 0.0
      %1248 = vmatpush1.msra.mxu0 0.0
      %1249 = vmatprep.subr.mxu0 0.0
      %1250 = vmatpush1.msra.mxu0 0.0
      %1251 = vmatprep.subr.mxu0 0.0
      %1252 = vmatpush1.msra.mxu0 0.0
      %1253 = vmatprep.subr.mxu0 0.0
      %1254 = vmatpush1.msra.mxu0 0.0
      %1255 = vmatprep.subr.mxu0 0.0
      %1256 = vmatpush1.msra.mxu0 0.0
      %1257 = vmatprep.subr.mxu0 0.0
      %1258 = vmatpush1.msra.mxu0 0.0
      %1259 = vmatprep.subr.mxu0 0.0
      %1260 = vmatpush1.msra.mxu0 0.0
      %1261 = vmatprep.subr.mxu0 0.0
      %1262 = vmatpush1.msra.mxu0 0.0
      %1263 = vmatprep.subr.mxu0 0.0
      %1264 = vmatpush1.msra.mxu0 0.0
      %1265 = vmatprep.subr.mxu0 0.0
      %1266 = vmatpush1.msra.mxu0 0.0
      %1267 = vmatprep.subr.mxu0 0.0
      %1268 = vmatpush1.msra.mxu0 0.0
      %1269 = vmatprep.subr.mxu0 0.0
      %1270 = vmatpush1.msra.mxu0 0.0
      %1271 = vmatprep.subr.mxu0 0.0
      %1272 = vmatpush1.msra.mxu0 0.0
      %1273 = vmatprep.subr.mxu0 0.0
      %1274 = vmatpush1.msra.mxu0 0.0
      %1275 = vmatprep.subr.mxu0 0.0
      %1276 = vmatpush1.msra.mxu0 0.0
      %1277 = vmatprep.subr.mxu0 0.0
      %1278 = vmatpush1.msra.mxu0 0.0
      %1279 = vmatprep.subr.mxu0 0.0
      %1280 = vmatpush1.msra.mxu0 0.0
      %1281 = vmatprep.subr.mxu0 0.0
      %1282 = vmatpush1.msra.mxu0 0.0
      %1283 = vmatprep.subr.mxu0 0.0
      %1284 = vmatpush1.msra.mxu0 0.0
      %1285 = vmatprep.subr.mxu0 0.0
      %1286 = vmatpush1.msra.mxu0 0.0
      %1287 = vmatprep.subr.mxu0 0.0
      %1288 = vmatpush1.msra.mxu0 0.0
      %1289 = vmatprep.subr.mxu0 0.0
      %1290 = vmatpush1.msra.mxu0 0.0
      %1291 = vmatprep.subr.mxu0 0.0
      %1292 = vmatpush1.msra.mxu0 0.0
      %1293 = vmatprep.subr.mxu0 0.0
      %1294 = vmatpush1.msra.mxu0 0.0
      %1295 = vmatprep.subr.mxu0 0.0
      %1296 = vmatpush1.msra.mxu0 0.0
      %1297 = vmatprep.mubr.f32.mxu0 0.0
      %1298 = vmatmul.mubr.f32.gmra.mrb[0].mxu0 %v1231
      %v1299 = vpop.f32.mrb[0].mxu0
      %v1300 = vadd.f32 %v1227, %v1299
      %v1301 = vpop.f32.mrb[0].mxu0
      %1302 = vdwg.mxu0
      %1303 = vrot.lane.b32.xlu0 %v825, 112
      %v1304 = vpop.permute.xlu0 %1303
      %1305 = vrot.lane.b32.xlu0 %v817, 80
      %v1306 = vpop.permute.xlu0 %1305
      %v1307 = vsel %vm829, %v1304, 0
      %v1309 = vsel %vm829, %v1306, 0
      %1311 = vmatprep.subr.mxu0 0.0
      %1312 = vmatpush1.xpose.msra.mxu0 %v1309
      %1313 = vmatprep.subr.mxu0 0.0
      %1314 = vmatpush1.xpose.msra.mxu0 0.0
      %1315 = vmatprep.subr.mxu0 0.0
      %1316 = vmatpush1.xpose.msra.mxu0 0.0
      %1317 = vmatprep.subr.mxu0 0.0
      %1318 = vmatpush1.xpose.msra.mxu0 0.0
      %1319 = vmatprep.subr.mxu0 0.0
      %1320 = vmatpush1.xpose.msra.mxu0 0.0
      %1321 = vmatprep.subr.mxu0 0.0
      %1322 = vmatpush1.xpose.msra.mxu0 0.0
      %1323 = vmatprep.subr.mxu0 0.0
      %1324 = vmatpush1.xpose.msra.mxu0 0.0
      %1325 = vmatprep.subr.mxu0 0.0
      %1326 = vmatpush1.xpose.msra.mxu0 0.0
      %1327 = vmatprep.subr.mxu0 0.0
      %1328 = vmatpush1.xpose.msra.mxu0 0.0
      %1329 = vmatprep.subr.mxu0 0.0
      %1330 = vmatpush1.xpose.msra.mxu0 0.0
      %1331 = vmatprep.subr.mxu0 0.0
      %1332 = vmatpush1.xpose.msra.mxu0 0.0
      %1333 = vmatprep.subr.mxu0 0.0
      %1334 = vmatpush1.xpose.msra.mxu0 0.0
      %1335 = vmatprep.subr.mxu0 0.0
      %1336 = vmatpush1.xpose.msra.mxu0 0.0
      %1337 = vmatprep.subr.mxu0 0.0
      %1338 = vmatpush1.xpose.msra.mxu0 0.0
      %1339 = vmatprep.subr.mxu0 0.0
      %1340 = vmatpush1.xpose.msra.mxu0 0.0
      %1341 = vmatprep.subr.mxu0 0.0
      %1342 = vmatpush1.xpose.msra.mxu0 0.0
      %1343 = vmatprep.subr.mxu0 0.0
      %1344 = vmatpush1.xpose.msra.mxu0 0.0
      %1345 = vmatprep.subr.mxu0 0.0
      %1346 = vmatpush1.xpose.msra.mxu0 0.0
      %1347 = vmatprep.subr.mxu0 0.0
      %1348 = vmatpush1.xpose.msra.mxu0 0.0
      %1349 = vmatprep.subr.mxu0 0.0
      %1350 = vmatpush1.xpose.msra.mxu0 0.0
      %1351 = vmatprep.subr.mxu0 0.0
      %1352 = vmatpush1.xpose.msra.mxu0 0.0
      %1353 = vmatprep.subr.mxu0 0.0
      %1354 = vmatpush1.xpose.msra.mxu0 0.0
      %1355 = vmatprep.subr.mxu0 0.0
      %1356 = vmatpush1.xpose.msra.mxu0 0.0
      %1357 = vmatprep.subr.mxu0 0.0
      %1358 = vmatpush1.xpose.msra.mxu0 0.0
      %1359 = vmatprep.subr.mxu0 0.0
      %1360 = vmatpush1.xpose.msra.mxu0 0.0
      %1361 = vmatprep.subr.mxu0 0.0
      %1362 = vmatpush1.xpose.msra.mxu0 0.0
      %1363 = vmatprep.subr.mxu0 0.0
      %1364 = vmatpush1.xpose.msra.mxu0 0.0
      %1365 = vmatprep.subr.mxu0 0.0
      %1366 = vmatpush1.xpose.msra.mxu0 0.0
      %1367 = vmatprep.subr.mxu0 0.0
      %1368 = vmatpush1.xpose.msra.mxu0 0.0
      %1369 = vmatprep.subr.mxu0 0.0
      %1370 = vmatpush1.xpose.msra.mxu0 0.0
      %1371 = vmatprep.subr.mxu0 0.0
      %1372 = vmatpush1.xpose.msra.mxu0 0.0
      %1373 = vmatprep.subr.mxu0 0.0
      %1374 = vmatpush1.xpose.msra.mxu0 0.0
      %1375 = vmatprep.mubr.f32.mxu0 0.0
      %1376 = vmatmul.mubr.f32.gmra.mrb[0].mxu0 %v1307
      %v1377 = vpop.f32.mrb[0].mxu0
      %v1378 = vadd.f32 0.0, %v1377
      %v1379 = vpop.f32.mrb[0].mxu0
      %1380 = vdwg.mxu0
      %v1381 = vsel %vm829, %v1378, -inf
      %1382 = vmax.xlane.f32.xlu0 %v1381
      %v1383 = vpop.xlane.xlu0 %1382
      %v1384 = vsub.f32 %v1378, %v1383
      %v1385 = vmul.f32 %v1384, 1.442695
      %v1386 = vpow.pop %v1385
      %v1387 = vsel %vm829, %v1386, 0.0
      %1388 = vadd.xlane.f32.xlu0 %v1387
      %v1389 = vpop.xlane.xlu0 %1388
      %v1390 = vrcp.pop %v1389
      %v1391 = vmul.f32 %v1386, %v1390
      %1392 = vrot.lane.b32.xlu0 %v817, 48
      %v1393 = vpop.permute.xlu0 %1392
      %v1396 = vsel %vm829, %v1391, 0
      %1398 = vmatprep.subr.mxu0 0.0
      %1399 = vmatpush1.msra.mxu0 %v1393
      %1400 = vmatprep.subr.mxu0 0.0
      %1401 = vmatpush1.msra.mxu0 0.0
      %1402 = vmatprep.subr.mxu0 0.0
      %1403 = vmatpush1.msra.mxu0 0.0
      %1404 = vmatprep.subr.mxu0 0.0
      %1405 = vmatpush1.msra.mxu0 0.0
      %1406 = vmatprep.subr.mxu0 0.0
      %1407 = vmatpush1.msra.mxu0 0.0
      %1408 = vmatprep.subr.mxu0 0.0
      %1409 = vmatpush1.msra.mxu0 0.0
      %1410 = vmatprep.subr.mxu0 0.0
      %1411 = vmatpush1.msra.mxu0 0.0
      %1412 = vmatprep.subr.mxu0 0.0
      %1413 = vmatpush1.msra.mxu0 0.0
      %1414 = vmatprep.subr.mxu0 0.0
      %1415 = vmatpush1.msra.mxu0 0.0
      %1416 = vmatprep.subr.mxu0 0.0
      %1417 = vmatpush1.msra.mxu0 0.0
      %1418 = vmatprep.subr.mxu0 0.0
      %1419 = vmatpush1.msra.mxu0 0.0
      %1420 = vmatprep.subr.mxu0 0.0
      %1421 = vmatpush1.msra.mxu0 0.0
      %1422 = vmatprep.subr.mxu0 0.0
      %1423 = vmatpush1.msra.mxu0 0.0
      %1424 = vmatprep.subr.mxu0 0.0
      %1425 = vmatpush1.msra.mxu0 0.0
      %1426 = vmatprep.subr.mxu0 0.0
      %1427 = vmatpush1.msra.mxu0 0.0
      %1428 = vmatprep.subr.mxu0 0.0
      %1429 = vmatpush1.msra.mxu0 0.0
      %1430 = vmatprep.subr.mxu0 0.0
      %1431 = vmatpush1.msra.mxu0 0.0
      %1432 = vmatprep.subr.mxu0 0.0
      %1433 = vmatpush1.msra.mxu0 0.0
      %1434 = vmatprep.subr.mxu0 0.0
      %1435 = vmatpush1.msra.mxu0 0.0
      %1436 = vmatprep.subr.mxu0 0.0
      %1437 = vmatpush1.msra.mxu0 0.0
      %1438 = vmatprep.subr.mxu0 0.0
      %1439 = vmatpush1.msra.mxu0 0.0
      %1440 = vmatprep.subr.mxu0 0.0
      %1441 = vmatpush1.msra.mxu0 0.0
      %1442 = vmatprep.subr.mxu0 0.0
      %1443 = vmatpush1.msra.mxu0 0.0
      %1444 = vmatprep.subr.mxu0 0.0
      %1445 = vmatpush1.msra.mxu0 0.0
      %1446 = vmatprep.subr.mxu0 0.0
      %1447 = vmatpush1.msra.mxu0 0.0
      %1448 = vmatprep.subr.mxu0 0.0
      %1449 = vmatpush1.msra.mxu0 0.0
      %1450 = vmatprep.subr.mxu0 0.0
      %1451 = vmatpush1.msra.mxu0 0.0
      %1452 = vmatprep.subr.mxu0 0.0
      %1453 = vmatpush1.msra.mxu0 0.0
      %1454 = vmatprep.subr.mxu0 0.0
      %1455 = vmatpush1.msra.mxu0 0.0
      %1456 = vmatprep.subr.mxu0 0.0
      %1457 = vmatpush1.msra.mxu0 0.0
      %1458 = vmatprep.subr.mxu0 0.0
      %1459 = vmatpush1.msra.mxu0 0.0
      %1460 = vmatprep.subr.mxu0 0.0
      %1461 = vmatpush1.msra.mxu0 0.0
      %1462 = vmatprep.mubr.f32.mxu0 0.0
      %1463 = vmatmul.mubr.f32.gmra.mrb[0].mxu0 %v1396
      %v1464 = vpop.f32.mrb[0].mxu0
      %v1465 = vadd.f32 0.0, %v1464
      %v1466 = vpop.f32.mrb[0].mxu0
      %1467 = vdwg.mxu0
      %v1469 = vsel %vm829, %v1465, 0
      %1471 = vmatprep.subr.mxu0 0.0
      %1472 = vmatpush1.msra.mxu0 %v822
      %1473 = vmatprep.subr.mxu0 0.0
      %1474 = vmatpush1.msra.mxu0 0.0
      %1475 = vmatprep.subr.mxu0 0.0
      %1476 = vmatpush1.msra.mxu0 0.0
      %1477 = vmatprep.subr.mxu0 0.0
      %1478 = vmatpush1.msra.mxu0 0.0
      %1479 = vmatprep.subr.mxu0 0.0
      %1480 = vmatpush1.msra.mxu0 0.0
      %1481 = vmatprep.subr.mxu0 0.0
      %1482 = vmatpush1.msra.mxu0 0.0
      %1483 = vmatprep.subr.mxu0 0.0
      %1484 = vmatpush1.msra.mxu0 0.0
      %1485 = vmatprep.subr.mxu0 0.0
      %1486 = vmatpush1.msra.mxu0 0.0
      %1487 = vmatprep.subr.mxu0 0.0
      %1488 = vmatpush1.msra.mxu0 0.0
      %1489 = vmatprep.subr.mxu0 0.0
      %1490 = vmatpush1.msra.mxu0 0.0
      %1491 = vmatprep.subr.mxu0 0.0
      %1492 = vmatpush1.msra.mxu0 0.0
      %1493 = vmatprep.subr.mxu0 0.0
      %1494 = vmatpush1.msra.mxu0 0.0
      %1495 = vmatprep.subr.mxu0 0.0
      %1496 = vmatpush1.msra.mxu0 0.0
      %1497 = vmatprep.subr.mxu0 0.0
      %1498 = vmatpush1.msra.mxu0 0.0
      %1499 = vmatprep.subr.mxu0 0.0
      %1500 = vmatpush1.msra.mxu0 0.0
      %1501 = vmatprep.subr.mxu0 0.0
      %1502 = vmatpush1.msra.mxu0 0.0
      %1503 = vmatprep.subr.mxu0 0.0
      %1504 = vmatpush1.msra.mxu0 0.0
      %1505 = vmatprep.subr.mxu0 0.0
      %1506 = vmatpush1.msra.mxu0 0.0
      %1507 = vmatprep.subr.mxu0 0.0
      %1508 = vmatpush1.msra.mxu0 0.0
      %1509 = vmatprep.subr.mxu0 0.0
      %1510 = vmatpush1.msra.mxu0 0.0
      %1511 = vmatprep.subr.mxu0 0.0
      %1512 = vmatpush1.msra.mxu0 0.0
      %1513 = vmatprep.subr.mxu0 0.0
      %1514 = vmatpush1.msra.mxu0 0.0
      %1515 = vmatprep.subr.mxu0 0.0
      %1516 = vmatpush1.msra.mxu0 0.0
      %1517 = vmatprep.subr.mxu0 0.0
      %1518 = vmatpush1.msra.mxu0 0.0
      %1519 = vmatprep.subr.mxu0 0.0
      %1520 = vmatpush1.msra.mxu0 0.0
      %1521 = vmatprep.subr.mxu0 0.0
      %1522 = vmatpush1.msra.mxu0 0.0
      %1523 = vmatprep.subr.mxu0 0.0
      %1524 = vmatpush1.msra.mxu0 0.0
      %1525 = vmatprep.subr.mxu0 0.0
      %1526 = vmatpush1.msra.mxu0 0.0
      %1527 = vmatprep.subr.mxu0 0.0
      %1528 = vmatpush1.msra.mxu0 0.0
      %1529 = vmatprep.subr.mxu0 0.0
      %1530 = vmatpush1.msra.mxu0 0.0
      %1531 = vmatprep.subr.mxu0 0.0
      %1532 = vmatpush1.msra.mxu0 0.0
      %1533 = vmatprep.subr.mxu0 0.0
      %1534 = vmatpush1.msra.mxu0 0.0
      %1535 = vmatprep.mubr.f32.mxu0 0.0
      %1536 = vmatmul.mubr.f32.gmra.mrb[0].mxu0 %v1469
      %v1537 = vpop.f32.mrb[0].mxu0
      %v1538 = vadd.f32 0.0, %v1537
      %v1539 = vpop.f32.mrb[0].mxu0
      %1540 = vdwg.mxu0
      %v1541 = vadd.f32 %v1300, %v1538
      %1542 = vrot.lane.b32.xlu0 %v825, 104
      %v1543 = vpop.permute.xlu0 %1542
      %1544 = vrot.lane.b32.xlu0 %v817, 72
      %v1545 = vpop.permute.xlu0 %1544
      %v1546 = vsel %vm829, %v1543, 0
      %v1548 = vsel %vm829, %v1545, 0
      %1550 = vmatprep.subr.mxu0 0.0
      %1551 = vmatpush1.xpose.msra.mxu0 %v1548
      %1552 = vmatprep.subr.mxu0 0.0
      %1553 = vmatpush1.xpose.msra.mxu0 0.0
      %1554 = vmatprep.subr.mxu0 0.0
      %1555 = vmatpush1.xpose.msra.mxu0 0.0
      %1556 = vmatprep.subr.mxu0 0.0
      %1557 = vmatpush1.xpose.msra.mxu0 0.0
      %1558 = vmatprep.subr.mxu0 0.0
      %1559 = vmatpush1.xpose.msra.mxu0 0.0
      %1560 = vmatprep.subr.mxu0 0.0
      %1561 = vmatpush1.xpose.msra.mxu0 0.0
      %1562 = vmatprep.subr.mxu0 0.0
      %1563 = vmatpush1.xpose.msra.mxu0 0.0
      %1564 = vmatprep.subr.mxu0 0.0
      %1565 = vmatpush1.xpose.msra.mxu0 0.0
      %1566 = vmatprep.subr.mxu0 0.0
      %1567 = vmatpush1.xpose.msra.mxu0 0.0
      %1568 = vmatprep.subr.mxu0 0.0
      %1569 = vmatpush1.xpose.msra.mxu0 0.0
      %1570 = vmatprep.subr.mxu0 0.0
      %1571 = vmatpush1.xpose.msra.mxu0 0.0
      %1572 = vmatprep.subr.mxu0 0.0
      %1573 = vmatpush1.xpose.msra.mxu0 0.0
      %1574 = vmatprep.subr.mxu0 0.0
      %1575 = vmatpush1.xpose.msra.mxu0 0.0
      %1576 = vmatprep.subr.mxu0 0.0
      %1577 = vmatpush1.xpose.msra.mxu0 0.0
      %1578 = vmatprep.subr.mxu0 0.0
      %1579 = vmatpush1.xpose.msra.mxu0 0.0
      %1580 = vmatprep.subr.mxu0 0.0
      %1581 = vmatpush1.xpose.msra.mxu0 0.0
      %1582 = vmatprep.subr.mxu0 0.0
      %1583 = vmatpush1.xpose.msra.mxu0 0.0
      %1584 = vmatprep.subr.mxu0 0.0
      %1585 = vmatpush1.xpose.msra.mxu0 0.0
      %1586 = vmatprep.subr.mxu0 0.0
      %1587 = vmatpush1.xpose.msra.mxu0 0.0
      %1588 = vmatprep.subr.mxu0 0.0
      %1589 = vmatpush1.xpose.msra.mxu0 0.0
      %1590 = vmatprep.subr.mxu0 0.0
      %1591 = vmatpush1.xpose.msra.mxu0 0.0
      %1592 = vmatprep.subr.mxu0 0.0
      %1593 = vmatpush1.xpose.msra.mxu0 0.0
      %1594 = vmatprep.subr.mxu0 0.0
      %1595 = vmatpush1.xpose.msra.mxu0 0.0
      %1596 = vmatprep.subr.mxu0 0.0
      %1597 = vmatpush1.xpose.msra.mxu0 0.0
      %1598 = vmatprep.subr.mxu0 0.0
      %1599 = vmatpush1.xpose.msra.mxu0 0.0
      %1600 = vmatprep.subr.mxu0 0.0
      %1601 = vmatpush1.xpose.msra.mxu0 0.0
      %1602 = vmatprep.subr.mxu0 0.0
      %1603 = vmatpush1.xpose.msra.mxu0 0.0
      %1604 = vmatprep.subr.mxu0 0.0
      %1605 = vmatpush1.xpose.msra.mxu0 0.0
      %1606 = vmatprep.subr.mxu0 0.0
      %1607 = vmatpush1.xpose.msra.mxu0 0.0
      %1608 = vmatprep.subr.mxu0 0.0
      %1609 = vmatpush1.xpose.msra.mxu0 0.0
      %1610 = vmatprep.subr.mxu0 0.0
      %1611 = vmatpush1.xpose.msra.mxu0 0.0
      %1612 = vmatprep.subr.mxu0 0.0
      %1613 = vmatpush1.xpose.msra.mxu0 0.0
      %1614 = vmatprep.mubr.f32.mxu0 0.0
      %1615 = vmatmul.mubr.f32.gmra.mrb[0].mxu0 %v1546
      %v1616 = vpop.f32.mrb[0].mxu0
      %v1617 = vadd.f32 0.0, %v1616
      %v1618 = vpop.f32.mrb[0].mxu0
      %1619 = vdwg.mxu0
      %v1620 = vsel %vm829, %v1617, -inf
      %1621 = vmax.xlane.f32.xlu0 %v1620
      %v1622 = vpop.xlane.xlu0 %1621
      %v1623 = vsub.f32 %v1617, %v1622
      %v1624 = vmul.f32 %v1623, 1.442695
      %v1625 = vpow.pop %v1624
      %v1626 = vsel %vm829, %v1625, 0.0
      %1627 = vadd.xlane.f32.xlu0 %v1626
      %v1628 = vpop.xlane.xlu0 %1627
      %v1629 = vrcp.pop %v1628
      %v1630 = vmul.f32 %v1625, %v1629
      %1631 = vrot.lane.b32.xlu0 %v817, 40
      %v1632 = vpop.permute.xlu0 %1631
      %v1635 = vsel %vm829, %v1630, 0
      %1637 = vmatprep.subr.mxu0 0.0
      %1638 = vmatpush1.msra.mxu0 %v1632
      %1639 = vmatprep.subr.mxu0 0.0
      %1640 = vmatpush1.msra.mxu0 0.0
      %1641 = vmatprep.subr.mxu0 0.0
      %1642 = vmatpush1.msra.mxu0 0.0
      %1643 = vmatprep.subr.mxu0 0.0
      %1644 = vmatpush1.msra.mxu0 0.0
      %1645 = vmatprep.subr.mxu0 0.0
      %1646 = vmatpush1.msra.mxu0 0.0
      %1647 = vmatprep.subr.mxu0 0.0
      %1648 = vmatpush1.msra.mxu0 0.0
      %1649 = vmatprep.subr.mxu0 0.0
      %1650 = vmatpush1.msra.mxu0 0.0
      %1651 = vmatprep.subr.mxu0 0.0
      %1652 = vmatpush1.msra.mxu0 0.0
      %1653 = vmatprep.subr.mxu0 0.0
      %1654 = vmatpush1.msra.mxu0 0.0
      %1655 = vmatprep.subr.mxu0 0.0
      %1656 = vmatpush1.msra.mxu0 0.0
      %1657 = vmatprep.subr.mxu0 0.0
      %1658 = vmatpush1.msra.mxu0 0.0
      %1659 = vmatprep.subr.mxu0 0.0
      %1660 = vmatpush1.msra.mxu0 0.0
      %1661 = vmatprep.subr.mxu0 0.0
      %1662 = vmatpush1.msra.mxu0 0.0
      %1663 = vmatprep.subr.mxu0 0.0
      %1664 = vmatpush1.msra.mxu0 0.0
      %1665 = vmatprep.subr.mxu0 0.0
      %1666 = vmatpush1.msra.mxu0 0.0
      %1667 = vmatprep.subr.mxu0 0.0
      %1668 = vmatpush1.msra.mxu0 0.0
      %1669 = vmatprep.subr.mxu0 0.0
      %1670 = vmatpush1.msra.mxu0 0.0
      %1671 = vmatprep.subr.mxu0 0.0
      %1672 = vmatpush1.msra.mxu0 0.0
      %1673 = vmatprep.subr.mxu0 0.0
      %1674 = vmatpush1.msra.mxu0 0.0
      %1675 = vmatprep.subr.mxu0 0.0
      %1676 = vmatpush1.msra.mxu0 0.0
      %1677 = vmatprep.subr.mxu0 0.0
      %1678 = vmatpush1.msra.mxu0 0.0
      %1679 = vmatprep.subr.mxu0 0.0
      %1680 = vmatpush1.msra.mxu0 0.0
      %1681 = vmatprep.subr.mxu0 0.0
      %1682 = vmatpush1.msra.mxu0 0.0
      %1683 = vmatprep.subr.mxu0 0.0
      %1684 = vmatpush1.msra.mxu0 0.0
      %1685 = vmatprep.subr.mxu0 0.0
      %1686 = vmatpush1.msra.mxu0 0.0
      %1687 = vmatprep.subr.mxu0 0.0
      %1688 = vmatpush1.msra.mxu0 0.0
      %1689 = vmatprep.subr.mxu0 0.0
      %1690 = vmatpush1.msra.mxu0 0.0
      %1691 = vmatprep.subr.mxu0 0.0
      %1692 = vmatpush1.msra.mxu0 0.0
      %1693 = vmatprep.subr.mxu0 0.0
      %1694 = vmatpush1.msra.mxu0 0.0
      %1695 = vmatprep.subr.mxu0 0.0
      %1696 = vmatpush1.msra.mxu0 0.0
      %1697 = vmatprep.subr.mxu0 0.0
      %1698 = vmatpush1.msra.mxu0 0.0
      %1699 = vmatprep.subr.mxu0 0.0
      %1700 = vmatpush1.msra.mxu0 0.0
      %1701 = vmatprep.mubr.f32.mxu0 0.0
      %1702 = vmatmul.mubr.f32.gmra.mrb[0].mxu0 %v1635
      %v1703 = vpop.f32.mrb[0].mxu0
      %v1704 = vadd.f32 0.0, %v1703
      %v1705 = vpop.f32.mrb[0].mxu0
      %1706 = vdwg.mxu0
      %v1708 = vsel %vm829, %v1704, 0
      %1710 = vmatprep.subr.mxu0 0.0
      %1711 = vmatpush1.msra.mxu0 %v823
      %1712 = vmatprep.subr.mxu0 0.0
      %1713 = vmatpush1.msra.mxu0 0.0
      %1714 = vmatprep.subr.mxu0 0.0
      %1715 = vmatpush1.msra.mxu0 0.0
      %1716 = vmatprep.subr.mxu0 0.0
      %1717 = vmatpush1.msra.mxu0 0.0
      %1718 = vmatprep.subr.mxu0 0.0
      %1719 = vmatpush1.msra.mxu0 0.0
      %1720 = vmatprep.subr.mxu0 0.0
      %1721 = vmatpush1.msra.mxu0 0.0
      %1722 = vmatprep.subr.mxu0 0.0
      %1723 = vmatpush1.msra.mxu0 0.0
      %1724 = vmatprep.subr.mxu0 0.0
      %1725 = vmatpush1.msra.mxu0 0.0
      %1726 = vmatprep.subr.mxu0 0.0
      %1727 = vmatpush1.msra.mxu0 0.0
      %1728 = vmatprep.subr.mxu0 0.0
      %1729 = vmatpush1.msra.mxu0 0.0
      %1730 = vmatprep.subr.mxu0 0.0
      %1731 = vmatpush1.msra.mxu0 0.0
      %1732 = vmatprep.subr.mxu0 0.0
      %1733 = vmatpush1.msra.mxu0 0.0
      %1734 = vmatprep.subr.mxu0 0.0
      %1735 = vmatpush1.msra.mxu0 0.0
      %1736 = vmatprep.subr.mxu0 0.0
      %1737 = vmatpush1.msra.mxu0 0.0
      %1738 = vmatprep.subr.mxu0 0.0
      %1739 = vmatpush1.msra.mxu0 0.0
      %1740 = vmatprep.subr.mxu0 0.0
      %1741 = vmatpush1.msra.mxu0 0.0
      %1742 = vmatprep.subr.mxu0 0.0
      %1743 = vmatpush1.msra.mxu0 0.0
      %1744 = vmatprep.subr.mxu0 0.0
      %1745 = vmatpush1.msra.mxu0 0.0
      %1746 = vmatprep.subr.mxu0 0.0
      %1747 = vmatpush1.msra.mxu0 0.0
      %1748 = vmatprep.subr.mxu0 0.0
      %1749 = vmatpush1.msra.mxu0 0.0
      %1750 = vmatprep.subr.mxu0 0.0
      %1751 = vmatpush1.msra.mxu0 0.0
      %1752 = vmatprep.subr.mxu0 0.0
      %1753 = vmatpush1.msra.mxu0 0.0
      %1754 = vmatprep.subr.mxu0 0.0
      %1755 = vmatpush1.msra.mxu0 0.0
      %1756 = vmatprep.subr.mxu0 0.0
      %1757 = vmatpush1.msra.mxu0 0.0
      %1758 = vmatprep.subr.mxu0 0.0
      %1759 = vmatpush1.msra.mxu0 0.0
      %1760 = vmatprep.subr.mxu0 0.0
      %1761 = vmatpush1.msra.mxu0 0.0
      %1762 = vmatprep.subr.mxu0 0.0
      %1763 = vmatpush1.msra.mxu0 0.0
      %1764 = vmatprep.subr.mxu0 0.0
      %1765 = vmatpush1.msra.mxu0 0.0
      %1766 = vmatprep.subr.mxu0 0.0
      %1767 = vmatpush1.msra.mxu0 0.0
      %1768 = vmatprep.subr.mxu0 0.0
      %1769 = vmatpush1.msra.mxu0 0.0
      %1770 = vmatprep.subr.mxu0 0.0
      %1771 = vmatpush1.msra.mxu0 0.0
      %1772 = vmatprep.subr.mxu0 0.0
      %1773 = vmatpush1.msra.mxu0 0.0
      %1774 = vmatprep.mubr.f32.mxu0 0.0
      %1775 = vmatmul.mubr.f32.gmra.mrb[0].mxu0 %v1708
      %v1776 = vpop.f32.mrb[0].mxu0
      %v1777 = vadd.f32 0.0, %v1776
      %v1778 = vpop.f32.mrb[0].mxu0
      %1779 = vdwg.mxu0
      %v1780 = vadd.f32 %v1541, %v1777
      %v1782 = vlaneseq
      %v1783 = vshrl.u32 %v1782, 7
      %v1784 = vsub.s32 0, %v1783
      %v1785 = vrot.slane %v824, %v1784
      %v1787 = vadd.f32 %v1780, %v1785
      %v1788 = vadd.f32 %v1787, %v696
      %v1789 = vld [vmem:[%s4] sm:$0x1]
      %v1790 = vld [vmem:[%s5] sm:$0x1]
      %v1791 = vsel %vm700, %v1788, 0.0
      %1792 = vadd.xlane.f32.xlu0 %v1791
      %v1793 = vpop.xlane.xlu0 %1792
      %v1794 = vmul.f32 %v1793, %v704
      %v1795 = vsub.f32 %v1788, %v1794
      %v1796 = vmul.f32 %v1795, %v1795
      %v1797 = vsel %vm700, %v1796, 0.0
      %1798 = vadd.xlane.f32.xlu0 %v1797
      %v1799 = vpop.xlane.xlu0 %1798
      %v1800 = vmul.f32 %v1799, 0.032258064
      %v1801 = vrsqrt.pop %v1800
      %v1802 = vmul.f32 %v1800, %v1801
      %vm1803 = vcmp.eq.f32.partialorder %v1800, inf
      %v1804 = vsel %vm1803, %v1800, %v1802
      %vm1805 = vcmp.eq.f32.partialorder %v1800, 0.0
      %v1806 = vand.u32 %v1800, 2147483648
      %v1807 = vsel %vm1805, %v1806, %v1804
      %v1808 = vadd.f32 %v1807, 1e-06
      %v1809 = vrcp.pop %v1808
      %v1810 = vmul.f32 %v1795, %v1809
      %v1812 = vlaneseq
      %v1813 = vshrl.u32 %v1812, 7
      %v1814 = vsub.s32 0, %v1813
      %v1815 = vrot.slane %v1789, %v1814
      %v1817 = vmul.f32 %v1815, %v1810
      %v1819 = vlaneseq
      %v1820 = vshrl.u32 %v1819, 7
      %v1821 = vsub.s32 0, %v1820
      %v1822 = vrot.slane %v1790, %v1821
      %v1824 = vadd.f32 %v1817, %v1822
      %v1825 = vld [vmem:[%s12] sm:$0xff]
      %v1826 = vld [vmem:[%s12 + $0x8] sm:$0xff]
      %v1827 = vld [vmem:[%s12 + $0x10] sm:$0xff]
      %v1828 = vld [vmem:[%s12 + $0x18] sm:$0xff]
      %v1829 = vld [vmem:[%s13] sm:$0x1]
      %v1831 = vlaneseq
      %v1832 = vshrl.u32 %v1831, 7
      %v1833 = vsub.s32 0, %v1832
      %v1834 = vrot.slane %v1829, %v1833
      %v1837 = vsel %vm700, %v1824, 0
      %1839 = vmatprep.subr.mxu0 0.0
      %1840 = vmatpush1.msra.mxu0 %v1825
      %1841 = vmatprep.subr.mxu0 0.0
      %1842 = vmatpush1.msra.mxu0 %v1826
      %1843 = vmatprep.subr.mxu0 0.0
      %1844 = vmatpush1.msra.mxu0 %v1827
      %1845 = vmatprep.subr.mxu0 0.0
      %1846 = vmatpush1.msra.mxu0 %v1828
      %1847 = vmatprep.subr.mxu0 0.0
      %1848 = vmatpush1.msra.mxu0 0.0
      %1849 = vmatprep.subr.mxu0 0.0
      %1850 = vmatpush1.msra.mxu0 0.0
      %1851 = vmatprep.subr.mxu0 0.0
      %1852 = vmatpush1.msra.mxu0 0.0
      %1853 = vmatprep.subr.mxu0 0.0
      %1854 = vmatpush1.msra.mxu0 0.0
      %1855 = vmatprep.subr.mxu0 0.0
      %1856 = vmatpush1.msra.mxu0 0.0
      %1857 = vmatprep.subr.mxu0 0.0
      %1858 = vmatpush1.msra.mxu0 0.0
      %1859 = vmatprep.subr.mxu0 0.0
      %1860 = vmatpush1.msra.mxu0 0.0
      %1861 = vmatprep.subr.mxu0 0.0
      %1862 = vmatpush1.msra.mxu0 0.0
      %1863 = vmatprep.subr.mxu0 0.0
      %1864 = vmatpush1.msra.mxu0 0.0
      %1865 = vmatprep.subr.mxu0 0.0
      %1866 = vmatpush1.msra.mxu0 0.0
      %1867 = vmatprep.subr.mxu0 0.0
      %1868 = vmatpush1.msra.mxu0 0.0
      %1869 = vmatprep.subr.mxu0 0.0
      %1870 = vmatpush1.msra.mxu0 0.0
      %1871 = vmatprep.subr.mxu0 0.0
      %1872 = vmatpush1.msra.mxu0 0.0
      %1873 = vmatprep.subr.mxu0 0.0
      %1874 = vmatpush1.msra.mxu0 0.0
      %1875 = vmatprep.subr.mxu0 0.0
      %1876 = vmatpush1.msra.mxu0 0.0
      %1877 = vmatprep.subr.mxu0 0.0
      %1878 = vmatpush1.msra.mxu0 0.0
      %1879 = vmatprep.subr.mxu0 0.0
      %1880 = vmatpush1.msra.mxu0 0.0
      %1881 = vmatprep.subr.mxu0 0.0
      %1882 = vmatpush1.msra.mxu0 0.0
      %1883 = vmatprep.subr.mxu0 0.0
      %1884 = vmatpush1.msra.mxu0 0.0
      %1885 = vmatprep.subr.mxu0 0.0
      %1886 = vmatpush1.msra.mxu0 0.0
      %1887 = vmatprep.subr.mxu0 0.0
      %1888 = vmatpush1.msra.mxu0 0.0
      %1889 = vmatprep.subr.mxu0 0.0
      %1890 = vmatpush1.msra.mxu0 0.0
      %1891 = vmatprep.subr.mxu0 0.0
      %1892 = vmatpush1.msra.mxu0 0.0
      %1893 = vmatprep.subr.mxu0 0.0
      %1894 = vmatpush1.msra.mxu0 0.0
      %1895 = vmatprep.subr.mxu0 0.0
      %1896 = vmatpush1.msra.mxu0 0.0
      %1897 = vmatprep.subr.mxu0 0.0
      %1898 = vmatpush1.msra.mxu0 0.0
      %1899 = vmatprep.subr.mxu0 0.0
      %1900 = vmatpush1.msra.mxu0 0.0
      %1901 = vmatprep.subr.mxu0 0.0
      %1902 = vmatpush1.msra.mxu0 0.0
      %1903 = vmatprep.mubr.f32.mxu0 0.0
      %1904 = vmatmul.mubr.f32.gmra.mrb[0].mxu0 %v1837
      %v1905 = vpop.f32.mrb[0].mxu0
      %v1906 = vadd.f32 %v1834, %v1905
      %v1907 = vpop.f32.mrb[0].mxu0
      %1908 = vdwg.mxu0
      %v1909 = vld [vmem:[%s14] sm:$0xff]
      %v1910 = vld [vmem:[%s14 + $0x8] sm:$0xff]
      %v1911 = vld [vmem:[%s14 + $0x10] sm:$0xff]
      %v1912 = vld [vmem:[%s14 + $0x18] sm:$0xff]
      %v1913 = vld [vmem:[%s15] sm:$0x1]
      %v1915 = vlaneseq
      %v1916 = vshrl.u32 %v1915, 7
      %v1917 = vsub.s32 0, %v1916
      %v1918 = vrot.slane %v1913, %v1917
      %v1921 = vsel %vm700, %v697, 0
      %1923 = vmatprep.subr.mxu0 0.0
      %1924 = vmatpush1.msra.mxu0 %v1909
      %1925 = vmatprep.subr.mxu0 0.0
      %1926 = vmatpush1.msra.mxu0 %v1910
      %1927 = vmatprep.subr.mxu0 0.0
      %1928 = vmatpush1.msra.mxu0 %v1911
      %1929 = vmatprep.subr.mxu0 0.0
      %1930 = vmatpush1.msra.mxu0 %v1912
      %1931 = vmatprep.subr.mxu0 0.0
      %1932 = vmatpush1.msra.mxu0 0.0
      %1933 = vmatprep.subr.mxu0 0.0
      %1934 = vmatpush1.msra.mxu0 0.0
      %1935 = vmatprep.subr.mxu0 0.0
      %1936 = vmatpush1.msra.mxu0 0.0
      %1937 = vmatprep.subr.mxu0 0.0
      %1938 = vmatpush1.msra.mxu0 0.0
      %1939 = vmatprep.subr.mxu0 0.0
      %1940 = vmatpush1.msra.mxu0 0.0
      %1941 = vmatprep.subr.mxu0 0.0
      %1942 = vmatpush1.msra.mxu0 0.0
      %1943 = vmatprep.subr.mxu0 0.0
      %1944 = vmatpush1.msra.mxu0 0.0
      %1945 = vmatprep.subr.mxu0 0.0
      %1946 = vmatpush1.msra.mxu0 0.0
      %1947 = vmatprep.subr.mxu0 0.0
      %1948 = vmatpush1.msra.mxu0 0.0
      %1949 = vmatprep.subr.mxu0 0.0
      %1950 = vmatpush1.msra.mxu0 0.0
      %1951 = vmatprep.subr.mxu0 0.0
      %1952 = vmatpush1.msra.mxu0 0.0
      %1953 = vmatprep.subr.mxu0 0.0
      %1954 = vmatpush1.msra.mxu0 0.0
      %1955 = vmatprep.subr.mxu0 0.0
      %1956 = vmatpush1.msra.mxu0 0.0
      %1957 = vmatprep.subr.mxu0 0.0
      %1958 = vmatpush1.msra.mxu0 0.0
      %1959 = vmatprep.subr.mxu0 0.0
      %1960 = vmatpush1.msra.mxu0 0.0
      %1961 = vmatprep.subr.mxu0 0.0
      %1962 = vmatpush1.msra.mxu0 0.0
      %1963 = vmatprep.subr.mxu0 0.0
      %1964 = vmatpush1.msra.mxu0 0.0
      %1965 = vmatprep.subr.mxu0 0.0
      %1966 = vmatpush1.msra.mxu0 0.0
      %1967 = vmatprep.subr.mxu0 0.0
      %1968 = vmatpush1.msra.mxu0 0.0
      %1969 = vmatprep.subr.mxu0 0.0
      %1970 = vmatpush1.msra.mxu0 0.0
      %1971 = vmatprep.subr.mxu0 0.0
      %1972 = vmatpush1.msra.mxu0 0.0
      %1973 = vmatprep.subr.mxu0 0.0
      %1974 = vmatpush1.msra.mxu0 0.0
      %1975 = vmatprep.subr.mxu0 0.0
      %1976 = vmatpush1.msra.mxu0 0.0
      %1977 = vmatprep.subr.mxu0 0.0
      %1978 = vmatpush1.msra.mxu0 0.0
      %1979 = vmatprep.subr.mxu0 0.0
      %1980 = vmatpush1.msra.mxu0 0.0
      %1981 = vmatprep.subr.mxu0 0.0
      %1982 = vmatpush1.msra.mxu0 0.0
      %1983 = vmatprep.subr.mxu0 0.0
      %1984 = vmatpush1.msra.mxu0 0.0
      %1985 = vmatprep.subr.mxu0 0.0
      %1986 = vmatpush1.msra.mxu0 0.0
      %1987 = vmatprep.mubr.f32.mxu0 0.0
      %1988 = vmatmul.mubr.f32.gmra.mrb[0].mxu0 %v1921
      %v1989 = vpop.f32.mrb[0].mxu0
      %v1990 = vadd.f32 %v1918, %v1989
      %v1991 = vpop.f32.mrb[0].mxu0
      %1992 = vdwg.mxu0
      %v1993 = vld [vmem:[%s16] sm:$0xff]
      %v1994 = vld [vmem:[%s16 + $0x8] sm:$0xff]
      %v1995 = vld [vmem:[%s16 + $0x10] sm:$0xff]
      %v1996 = vld [vmem:[%s16 + $0x18] sm:$0xff]
      %v1997 = vld [vmem:[%s17] sm:$0x1]
      %v1998 = vmul.f32 %v1906, 0.35355338
      %v2000 = vsel %vm829, %v1998, 0
      %v2003 = vsel %vm829, %v1990, 0
      %2005 = vmatprep.subr.mxu0 0.0
      %2006 = vmatpush1.xpose.msra.mxu0 %v2003
      %2007 = vmatprep.subr.mxu0 0.0
      %2008 = vmatpush1.xpose.msra.mxu0 0.0
      %2009 = vmatprep.subr.mxu0 0.0
      %2010 = vmatpush1.xpose.msra.mxu0 0.0
      %2011 = vmatprep.subr.mxu0 0.0
      %2012 = vmatpush1.xpose.msra.mxu0 0.0
      %2013 = vmatprep.subr.mxu0 0.0
      %2014 = vmatpush1.xpose.msra.mxu0 0.0
      %2015 = vmatprep.subr.mxu0 0.0
      %2016 = vmatpush1.xpose.msra.mxu0 0.0
      %2017 = vmatprep.subr.mxu0 0.0
      %2018 = vmatpush1.xpose.msra.mxu0 0.0
      %2019 = vmatprep.subr.mxu0 0.0
      %2020 = vmatpush1.xpose.msra.mxu0 0.0
      %2021 = vmatprep.subr.mxu0 0.0
      %2022 = vmatpush1.xpose.msra.mxu0 0.0
      %2023 = vmatprep.subr.mxu0 0.0
      %2024 = vmatpush1.xpose.msra.mxu0 0.0
      %2025 = vmatprep.subr.mxu0 0.0
      %2026 = vmatpush1.xpose.msra.mxu0 0.0
      %2027 = vmatprep.subr.mxu0 0.0
      %2028 = vmatpush1.xpose.msra.mxu0 0.0
      %2029 = vmatprep.subr.mxu0 0.0
      %2030 = vmatpush1.xpose.msra.mxu0 0.0
      %2031 = vmatprep.subr.mxu0 0.0
      %2032 = vmatpush1.xpose.msra.mxu0 0.0
      %2033 = vmatprep.subr.mxu0 0.0
      %2034 = vmatpush1.xpose.msra.mxu0 0.0
      %2035 = vmatprep.subr.mxu0 0.0
      %2036 = vmatpush1.xpose.msra.mxu0 0.0
      %2037 = vmatprep.subr.mxu0 0.0
      %2038 = vmatpush1.xpose.msra.mxu0 0.0
      %2039 = vmatprep.subr.mxu0 0.0
      %2040 = vmatpush1.xpose.msra.mxu0 0.0
      %2041 = vmatprep.subr.mxu0 0.0
      %2042 = vmatpush1.xpose.msra.mxu0 0.0
      %2043 = vmatprep.subr.mxu0 0.0
      %2044 = vmatpush1.xpose.msra.mxu0 0.0
      %2045 = vmatprep.subr.mxu0 0.0
      %2046 = vmatpush1.xpose.msra.mxu0 0.0
      %2047 = vmatprep.subr.mxu0 0.0
      %2048 = vmatpush1.xpose.msra.mxu0 0.0
      %2049 = vmatprep.subr.mxu0 0.0
      %2050 = vmatpush1.xpose.msra.mxu0 0.0
      %2051 = vmatprep.subr.mxu0 0.0
      %2052 = vmatpush1.xpose.msra.mxu0 0.0
      %2053 = vmatprep.subr.mxu0 0.0
      %2054 = vmatpush1.xpose.msra.mxu0 0.0
      %2055 = vmatprep.subr.mxu0 0.0
      %2056 = vmatpush1.xpose.msra.mxu0 0.0
      %2057 = vmatprep.subr.mxu0 0.0
      %2058 = vmatpush1.xpose.msra.mxu0 0.0
      %2059 = vmatprep.subr.mxu0 0.0
      %2060 = vmatpush1.xpose.msra.mxu0 0.0
      %2061 = vmatprep.subr.mxu0 0.0
      %2062 = vmatpush1.xpose.msra.mxu0 0.0
      %2063 = vmatprep.subr.mxu0 0.0
      %2064 = vmatpush1.xpose.msra.mxu0 0.0
      %2065 = vmatprep.subr.mxu0 0.0
      %2066 = vmatpush1.xpose.msra.mxu0 0.0
      %2067 = vmatprep.subr.mxu0 0.0
      %2068 = vmatpush1.xpose.msra.mxu0 0.0
      %2069 = vmatprep.mubr.f32.mxu0 0.0
      %2070 = vmatmul.mubr.f32.gmra.mrb[0].mxu0 %v2000
      %v2071 = vpop.f32.mrb[0].mxu0
      %v2072 = vadd.f32 0.0, %v2071
      %v2073 = vpop.f32.mrb[0].mxu0
      %2074 = vdwg.mxu0
      %v2075 = vsel %vm829, %v2072, -inf
      %2076 = vmax.xlane.f32.xlu0 %v2075
      %v2077 = vpop.xlane.xlu0 %2076
      %v2078 = vsub.f32 %v2072, %v2077
      %v2079 = vmul.f32 %v2078, 1.442695
      %v2080 = vpow.pop %v2079
      %v2081 = vsel %vm829, %v2080, 0.0
      %2082 = vadd.xlane.f32.xlu0 %v2081
      %v2083 = vpop.xlane.xlu0 %2082
      %v2084 = vrcp.pop %v2083
      %v2085 = vmul.f32 %v2080, %v2084
      %2086 = vrot.lane.b32.xlu0 %v1990, 96
      %v2087 = vpop.permute.xlu0 %2086
      %v2090 = vsel %vm829, %v2085, 0
      %2092 = vmatprep.subr.mxu0 0.0
      %2093 = vmatpush1.msra.mxu0 %v2087
      %2094 = vmatprep.subr.mxu0 0.0
      %2095 = vmatpush1.msra.mxu0 0.0
      %2096 = vmatprep.subr.mxu0 0.0
      %2097 = vmatpush1.msra.mxu0 0.0
      %2098 = vmatprep.subr.mxu0 0.0
      %2099 = vmatpush1.msra.mxu0 0.0
      %2100 = vmatprep.subr.mxu0 0.0
      %2101 = vmatpush1.msra.mxu0 0.0
      %2102 = vmatprep.subr.mxu0 0.0
      %2103 = vmatpush1.msra.mxu0 0.0
      %2104 = vmatprep.subr.mxu0 0.0
      %2105 = vmatpush1.msra.mxu0 0.0
      %2106 = vmatprep.subr.mxu0 0.0
      %2107 = vmatpush1.msra.mxu0 0.0
      %2108 = vmatprep.subr.mxu0 0.0
      %2109 = vmatpush1.msra.mxu0 0.0
      %2110 = vmatprep.subr.mxu0 0.0
      %2111 = vmatpush1.msra.mxu0 0.0
      %2112 = vmatprep.subr.mxu0 0.0
      %2113 = vmatpush1.msra.mxu0 0.0
      %2114 = vmatprep.subr.mxu0 0.0
      %2115 = vmatpush1.msra.mxu0 0.0
      %2116 = vmatprep.subr.mxu0 0.0
      %2117 = vmatpush1.msra.mxu0 0.0
      %2118 = vmatprep.subr.mxu0 0.0
      %2119 = vmatpush1.msra.mxu0 0.0
      %2120 = vmatprep.subr.mxu0 0.0
      %2121 = vmatpush1.msra.mxu0 0.0
      %2122 = vmatprep.subr.mxu0 0.0
      %2123 = vmatpush1.msra.mxu0 0.0
      %2124 = vmatprep.subr.mxu0 0.0
      %2125 = vmatpush1.msra.mxu0 0.0
      %2126 = vmatprep.subr.mxu0 0.0
      %2127 = vmatpush1.msra.mxu0 0.0
      %2128 = vmatprep.subr.mxu0 0.0
      %2129 = vmatpush1.msra.mxu0 0.0
      %2130 = vmatprep.subr.mxu0 0.0
      %2131 = vmatpush1.msra.mxu0 0.0
      %2132 = vmatprep.subr.mxu0 0.0
      %2133 = vmatpush1.msra.mxu0 0.0
      %2134 = vmatprep.subr.mxu0 0.0
      %2135 = vmatpush1.msra.mxu0 0.0
      %2136 = vmatprep.subr.mxu0 0.0
      %2137 = vmatpush1.msra.mxu0 0.0
      %2138 = vmatprep.subr.mxu0 0.0
      %2139 = vmatpush1.msra.mxu0 0.0
      %2140 = vmatprep.subr.mxu0 0.0
      %2141 = vmatpush1.msra.mxu0 0.0
      %2142 = vmatprep.subr.mxu0 0.0
      %2143 = vmatpush1.msra.mxu0 0.0
      %2144 = vmatprep.subr.mxu0 0.0
      %2145 = vmatpush1.msra.mxu0 0.0
      %2146 = vmatprep.subr.mxu0 0.0
      %2147 = vmatpush1.msra.mxu0 0.0
      %2148 = vmatprep.subr.mxu0 0.0
      %2149 = vmatpush1.msra.mxu0 0.0
      %2150 = vmatprep.subr.mxu0 0.0
      %2151 = vmatpush1.msra.mxu0 0.0
      %2152 = vmatprep.subr.mxu0 0.0
      %2153 = vmatpush1.msra.mxu0 0.0
      %2154 = vmatprep.subr.mxu0 0.0
      %2155 = vmatpush1.msra.mxu0 0.0
      %2156 = vmatprep.mubr.f32.mxu0 0.0
      %2157 = vmatmul.mubr.f32.gmra.mrb[0].mxu0 %v2090
      %v2158 = vpop.f32.mrb[0].mxu0
      %v2159 = vadd.f32 0.0, %v2158
      %v2160 = vpop.f32.mrb[0].mxu0
      %2161 = vdwg.mxu0
      %2162 = vrot.lane.b32.xlu0 %v1998, 120
      %v2163 = vpop.permute.xlu0 %2162
      %2164 = vrot.lane.b32.xlu0 %v1990, 120
      %v2165 = vpop.permute.xlu0 %2164
      %v2166 = vsel %vm829, %v2163, 0
      %v2168 = vsel %vm829, %v2165, 0
      %2170 = vmatprep.subr.mxu0 0.0
      %2171 = vmatpush1.xpose.msra.mxu0 %v2168
      %2172 = vmatprep.subr.mxu0 0.0
      %2173 = vmatpush1.xpose.msra.mxu0 0.0
      %2174 = vmatprep.subr.mxu0 0.0
      %2175 = vmatpush1.xpose.msra.mxu0 0.0
      %2176 = vmatprep.subr.mxu0 0.0
      %2177 = vmatpush1.xpose.msra.mxu0 0.0
      %2178 = vmatprep.subr.mxu0 0.0
      %2179 = vmatpush1.xpose.msra.mxu0 0.0
      %2180 = vmatprep.subr.mxu0 0.0
      %2181 = vmatpush1.xpose.msra.mxu0 0.0
      %2182 = vmatprep.subr.mxu0 0.0
      %2183 = vmatpush1.xpose.msra.mxu0 0.0
      %2184 = vmatprep.subr.mxu0 0.0
      %2185 = vmatpush1.xpose.msra.mxu0 0.0
      %2186 = vmatprep.subr.mxu0 0.0
      %2187 = vmatpush1.xpose.msra.mxu0 0.0
      %2188 = vmatprep.subr.mxu0 0.0
      %2189 = vmatpush1.xpose.msra.mxu0 0.0
      %2190 = vmatprep.subr.mxu0 0.0
      %2191 = vmatpush1.xpose.msra.mxu0 0.0
      %2192 = vmatprep.subr.mxu0 0.0
      %2193 = vmatpush1.xpose.msra.mxu0 0.0
      %2194 = vmatprep.subr.mxu0 0.0
      %2195 = vmatpush1.xpose.msra.mxu0 0.0
      %2196 = vmatprep.subr.mxu0 0.0
      %2197 = vmatpush1.xpose.msra.mxu0 0.0
      %2198 = vmatprep.subr.mxu0 0.0
      %2199 = vmatpush1.xpose.msra.mxu0 0.0
      %2200 = vmatprep.subr.mxu0 0.0
      %2201 = vmatpush1.xpose.msra.mxu0 0.0
      %2202 = vmatprep.subr.mxu0 0.0
      %2203 = vmatpush1.xpose.msra.mxu0 0.0
      %2204 = vmatprep.subr.mxu0 0.0
      %2205 = vmatpush1.xpose.msra.mxu0 0.0
      %2206 = vmatprep.subr.mxu0 0.0
      %2207 = vmatpush1.xpose.msra.mxu0 0.0
      %2208 = vmatprep.subr.mxu0 0.0
      %2209 = vmatpush1.xpose.msra.mxu0 0.0
      %2210 = vmatprep.subr.mxu0 0.0
      %2211 = vmatpush1.xpose.msra.mxu0 0.0
      %2212 = vmatprep.subr.mxu0 0.0
      %2213 = vmatpush1.xpose.msra.mxu0 0.0
      %2214 = vmatprep.subr.mxu0 0.0
      %2215 = vmatpush1.xpose.msra.mxu0 0.0
      %2216 = vmatprep.subr.mxu0 0.0
      %2217 = vmatpush1.xpose.msra.mxu0 0.0
      %2218 = vmatprep.subr.mxu0 0.0
      %2219 = vmatpush1.xpose.msra.mxu0 0.0
      %2220 = vmatprep.subr.mxu0 0.0
      %2221 = vmatpush1.xpose.msra.mxu0 0.0
      %2222 = vmatprep.subr.mxu0 0.0
      %2223 = vmatpush1.xpose.msra.mxu0 0.0
      %2224 = vmatprep.subr.mxu0 0.0
      %2225 = vmatpush1.xpose.msra.mxu0 0.0
      %2226 = vmatprep.subr.mxu0 0.0
      %2227 = vmatpush1.xpose.msra.mxu0 0.0
      %2228 = vmatprep.subr.mxu0 0.0
      %2229 = vmatpush1.xpose.msra.mxu0 0.0
      %2230 = vmatprep.subr.mxu0 0.0
      %2231 = vmatpush1.xpose.msra.mxu0 0.0
      %2232 = vmatprep.subr.mxu0 0.0
      %2233 = vmatpush1.xpose.msra.mxu0 0.0
      %2234 = vmatprep.mubr.f32.mxu0 0.0
      %2235 = vmatmul.mubr.f32.gmra.mrb[0].mxu0 %v2166
      %v2236 = vpop.f32.mrb[0].mxu0
      %v2237 = vadd.f32 0.0, %v2236
      %v2238 = vpop.f32.mrb[0].mxu0
      %2239 = vdwg.mxu0
      %v2240 = vsel %vm829, %v2237, -inf
      %2241 = vmax.xlane.f32.xlu0 %v2240
      %v2242 = vpop.xlane.xlu0 %2241
      %v2243 = vsub.f32 %v2237, %v2242
      %v2244 = vmul.f32 %v2243, 1.442695
      %v2245 = vpow.pop %v2244
      %v2246 = vsel %vm829, %v2245, 0.0
      %2247 = vadd.xlane.f32.xlu0 %v2246
      %v2248 = vpop.xlane.xlu0 %2247
      %v2249 = vrcp.pop %v2248
      %v2250 = vmul.f32 %v2245, %v2249
      %2251 = vrot.lane.b32.xlu0 %v1990, 88
      %v2252 = vpop.permute.xlu0 %2251
      %v2255 = vsel %vm829, %v2250, 0
      %2257 = vmatprep.subr.mxu0 0.0
      %2258 = vmatpush1.msra.mxu0 %v2252
      %2259 = vmatprep.subr.mxu0 0.0
      %2260 = vmatpush1.msra.mxu0 0.0
      %2261 = vmatprep.subr.mxu0 0.0
      %2262 = vmatpush1.msra.mxu0 0.0
      %2263 = vmatprep.subr.mxu0 0.0
      %2264 = vmatpush1.msra.mxu0 0.0
      %2265 = vmatprep.subr.mxu0 0.0
      %2266 = vmatpush1.msra.mxu0 0.0
      %2267 = vmatprep.subr.mxu0 0.0
      %2268 = vmatpush1.msra.mxu0 0.0
      %2269 = vmatprep.subr.mxu0 0.0
      %2270 = vmatpush1.msra.mxu0 0.0
      %2271 = vmatprep.subr.mxu0 0.0
      %2272 = vmatpush1.msra.mxu0 0.0
      %2273 = vmatprep.subr.mxu0 0.0
      %2274 = vmatpush1.msra.mxu0 0.0
      %2275 = vmatprep.subr.mxu0 0.0
      %2276 = vmatpush1.msra.mxu0 0.0
      %2277 = vmatprep.subr.mxu0 0.0
      %2278 = vmatpush1.msra.mxu0 0.0
      %2279 = vmatprep.subr.mxu0 0.0
      %2280 = vmatpush1.msra.mxu0 0.0
      %2281 = vmatprep.subr.mxu0 0.0
      %2282 = vmatpush1.msra.mxu0 0.0
      %2283 = vmatprep.subr.mxu0 0.0
      %2284 = vmatpush1.msra.mxu0 0.0
      %2285 = vmatprep.subr.mxu0 0.0
      %2286 = vmatpush1.msra.mxu0 0.0
      %2287 = vmatprep.subr.mxu0 0.0
      %2288 = vmatpush1.msra.mxu0 0.0
      %2289 = vmatprep.subr.mxu0 0.0
      %2290 = vmatpush1.msra.mxu0 0.0
      %2291 = vmatprep.subr.mxu0 0.0
      %2292 = vmatpush1.msra.mxu0 0.0
      %2293 = vmatprep.subr.mxu0 0.0
      %2294 = vmatpush1.msra.mxu0 0.0
      %2295 = vmatprep.subr.mxu0 0.0
      %2296 = vmatpush1.msra.mxu0 0.0
      %2297 = vmatprep.subr.mxu0 0.0
      %2298 = vmatpush1.msra.mxu0 0.0
      %2299 = vmatprep.subr.mxu0 0.0
      %2300 = vmatpush1.msra.mxu0 0.0
      %2301 = vmatprep.subr.mxu0 0.0
      %2302 = vmatpush1.msra.mxu0 0.0
      %2303 = vmatprep.subr.mxu0 0.0
      %2304 = vmatpush1.msra.mxu0 0.0
      %2305 = vmatprep.subr.mxu0 0.0
      %2306 = vmatpush1.msra.mxu0 0.0
      %2307 = vmatprep.subr.mxu0 0.0
      %2308 = vmatpush1.msra.mxu0 0.0
      %2309 = vmatprep.subr.mxu0 0.0
      %2310 = vmatpush1.msra.mxu0 0.0
      %2311 = vmatprep.subr.mxu0 0.0
      %2312 = vmatpush1.msra.mxu0 0.0
      %2313 = vmatprep.subr.mxu0 0.0
      %2314 = vmatpush1.msra.mxu0 0.0
      %2315 = vmatprep.subr.mxu0 0.0
      %2316 = vmatpush1.msra.mxu0 0.0
      %2317 = vmatprep.subr.mxu0 0.0
      %2318 = vmatpush1.msra.mxu0 0.0
      %2319 = vmatprep.subr.mxu0 0.0
      %2320 = vmatpush1.msra.mxu0 0.0
      %2321 = vmatprep.mubr.f32.mxu0 0.0
      %2322 = vmatmul.mubr.f32.gmra.mrb[0].mxu0 %v2255
      %v2323 = vpop.f32.mrb[0].mxu0
      %v2324 = vadd.f32 0.0, %v2323
      %v2325 = vpop.f32.mrb[0].mxu0
      %2326 = vdwg.mxu0
      %v2328 = vsel %vm829, %v2324, 0
      %2330 = vmatprep.subr.mxu0 0.0
      %2331 = vmatpush1.msra.mxu0 %v1994
      %2332 = vmatprep.subr.mxu0 0.0
      %2333 = vmatpush1.msra.mxu0 0.0
      %2334 = vmatprep.subr.mxu0 0.0
      %2335 = vmatpush1.msra.mxu0 0.0
      %2336 = vmatprep.subr.mxu0 0.0
      %2337 = vmatpush1.msra.mxu0 0.0
      %2338 = vmatprep.subr.mxu0 0.0
      %2339 = vmatpush1.msra.mxu0 0.0
      %2340 = vmatprep.subr.mxu0 0.0
      %2341 = vmatpush1.msra.mxu0 0.0
      %2342 = vmatprep.subr.mxu0 0.0
      %2343 = vmatpush1.msra.mxu0 0.0
      %2344 = vmatprep.subr.mxu0 0.0
      %2345 = vmatpush1.msra.mxu0 0.0
      %2346 = vmatprep.subr.mxu0 0.0
      %2347 = vmatpush1.msra.mxu0 0.0
      %2348 = vmatprep.subr.mxu0 0.0
      %2349 = vmatpush1.msra.mxu0 0.0
      %2350 = vmatprep.subr.mxu0 0.0
      %2351 = vmatpush1.msra.mxu0 0.0
      %2352 = vmatprep.subr.mxu0 0.0
      %2353 = vmatpush1.msra.mxu0 0.0
      %2354 = vmatprep.subr.mxu0 0.0
      %2355 = vmatpush1.msra.mxu0 0.0
      %2356 = vmatprep.subr.mxu0 0.0
      %2357 = vmatpush1.msra.mxu0 0.0
      %2358 = vmatprep.subr.mxu0 0.0
      %2359 = vmatpush1.msra.mxu0 0.0
      %2360 = vmatprep.subr.mxu0 0.0
      %2361 = vmatpush1.msra.mxu0 0.0
      %2362 = vmatprep.subr.mxu0 0.0
      %2363 = vmatpush1.msra.mxu0 0.0
      %2364 = vmatprep.subr.mxu0 0.0
      %2365 = vmatpush1.msra.mxu0 0.0
      %2366 = vmatprep.subr.mxu0 0.0
      %2367 = vmatpush1.msra.mxu0 0.0
      %2368 = vmatprep.subr.mxu0 0.0
      %2369 = vmatpush1.msra.mxu0 0.0
      %2370 = vmatprep.subr.mxu0 0.0
      %2371 = vmatpush1.msra.mxu0 0.0
      %2372 = vmatprep.subr.mxu0 0.0
      %2373 = vmatpush1.msra.mxu0 0.0
      %2374 = vmatprep.subr.mxu0 0.0
      %2375 = vmatpush1.msra.mxu0 0.0
      %2376 = vmatprep.subr.mxu0 0.0
      %2377 = vmatpush1.msra.mxu0 0.0
      %2378 = vmatprep.subr.mxu0 0.0
      %2379 = vmatpush1.msra.mxu0 0.0
      %2380 = vmatprep.subr.mxu0 0.0
      %2381 = vmatpush1.msra.mxu0 0.0
      %2382 = vmatprep.subr.mxu0 0.0
      %2383 = vmatpush1.msra.mxu0 0.0
      %2384 = vmatprep.subr.mxu0 0.0
      %2385 = vmatpush1.msra.mxu0 0.0
      %2386 = vmatprep.subr.mxu0 0.0
      %2387 = vmatpush1.msra.mxu0 0.0
      %2388 = vmatprep.subr.mxu0 0.0
      %2389 = vmatpush1.msra.mxu0 0.0
      %2390 = vmatprep.subr.mxu0 0.0
      %2391 = vmatpush1.msra.mxu0 0.0
      %2392 = vmatprep.subr.mxu0 0.0
      %2393 = vmatpush1.msra.mxu0 0.0
      %2394 = vmatprep.mubr.f32.mxu0 0.0
      %2395 = vmatmul.mubr.f32.gmra.mrb[0].mxu0 %v2328
      %v2396 = vpop.f32.mrb[0].mxu0
      %v2397 = vadd.f32 0.0, %v2396
      %v2398 = vpop.f32.mrb[0].mxu0
      %2399 = vdwg.mxu0
      %v2401 = vsel %vm829, %v2159, 0
      %2403 = vmatprep.subr.mxu0 0.0
      %2404 = vmatpush1.msra.mxu0 %v1993
      %2405 = vmatprep.subr.mxu0 0.0
      %2406 = vmatpush1.msra.mxu0 0.0
      %2407 = vmatprep.subr.mxu0 0.0
      %2408 = vmatpush1.msra.mxu0 0.0
      %2409 = vmatprep.subr.mxu0 0.0
      %2410 = vmatpush1.msra.mxu0 0.0
      %2411 = vmatprep.subr.mxu0 0.0
      %2412 = vmatpush1.msra.mxu0 0.0
      %2413 = vmatprep.subr.mxu0 0.0
      %2414 = vmatpush1.msra.mxu0 0.0
      %2415 = vmatprep.subr.mxu0 0.0
      %2416 = vmatpush1.msra.mxu0 0.0
      %2417 = vmatprep.subr.mxu0 0.0
      %2418 = vmatpush1.msra.mxu0 0.0
      %2419 = vmatprep.subr.mxu0 0.0
      %2420 = vmatpush1.msra.mxu0 0.0
      %2421 = vmatprep.subr.mxu0 0.0
      %2422 = vmatpush1.msra.mxu0 0.0
      %2423 = vmatprep.subr.mxu0 0.0
      %2424 = vmatpush1.msra.mxu0 0.0
      %2425 = vmatprep.subr.mxu0 0.0
      %2426 = vmatpush1.msra.mxu0 0.0
      %2427 = vmatprep.subr.mxu0 0.0
      %2428 = vmatpush1.msra.mxu0 0.0
      %2429 = vmatprep.subr.mxu0 0.0
      %2430 = vmatpush1.msra.mxu0 0.0
      %2431 = vmatprep.subr.mxu0 0.0
      %2432 = vmatpush1.msra.mxu0 0.0
      %2433 = vmatprep.subr.mxu0 0.0
      %2434 = vmatpush1.msra.mxu0 0.0
      %2435 = vmatprep.subr.mxu0 0.0
      %2436 = vmatpush1.msra.mxu0 0.0
      %2437 = vmatprep.subr.mxu0 0.0
      %2438 = vmatpush1.msra.mxu0 0.0
      %2439 = vmatprep.subr.mxu0 0.0
      %2440 = vmatpush1.msra.mxu0 0.0
      %2441 = vmatprep.subr.mxu0 0.0
      %2442 = vmatpush1.msra.mxu0 0.0
      %2443 = vmatprep.subr.mxu0 0.0
      %2444 = vmatpush1.msra.mxu0 0.0
      %2445 = vmatprep.subr.mxu0 0.0
      %2446 = vmatpush1.msra.mxu0 0.0
      %2447 = vmatprep.subr.mxu0 0.0
      %2448 = vmatpush1.msra.mxu0 0.0
      %2449 = vmatprep.subr.mxu0 0.0
      %2450 = vmatpush1.msra.mxu0 0.0
      %2451 = vmatprep.subr.mxu0 0.0
      %2452 = vmatpush1.msra.mxu0 0.0
      %2453 = vmatprep.subr.mxu0 0.0
      %2454 = vmatpush1.msra.mxu0 0.0
      %2455 = vmatprep.subr.mxu0 0.0
      %2456 = vmatpush1.msra.mxu0 0.0
      %2457 = vmatprep.subr.mxu0 0.0
      %2458 = vmatpush1.msra.mxu0 0.0
      %2459 = vmatprep.subr.mxu0 0.0
      %2460 = vmatpush1.msra.mxu0 0.0
      %2461 = vmatprep.subr.mxu0 0.0
      %2462 = vmatpush1.msra.mxu0 0.0
      %2463 = vmatprep.subr.mxu0 0.0
      %2464 = vmatpush1.msra.mxu0 0.0
      %2465 = vmatprep.subr.mxu0 0.0
      %2466 = vmatpush1.msra.mxu0 0.0
      %2467 = vmatprep.mubr.f32.mxu0 0.0
      %2468 = vmatmul.mubr.f32.gmra.mrb[0].mxu0 %v2401
      %v2469 = vpop.f32.mrb[0].mxu0
      %v2470 = vadd.f32 %v2397, %v2469
      %v2471 = vpop.f32.mrb[0].mxu0
      %2472 = vdwg.mxu0
      %2473 = vrot.lane.b32.xlu0 %v1998, 112
      %v2474 = vpop.permute.xlu0 %2473
      %2475 = vrot.lane.b32.xlu0 %v1990, 112
      %v2476 = vpop.permute.xlu0 %2475
      %v2477 = vsel %vm829, %v2474, 0
      %v2479 = vsel %vm829, %v2476, 0
      %2481 = vmatprep.subr.mxu0 0.0
      %2482 = vmatpush1.xpose.msra.mxu0 %v2479
      %2483 = vmatprep.subr.mxu0 0.0
      %2484 = vmatpush1.xpose.msra.mxu0 0.0
      %2485 = vmatprep.subr.mxu0 0.0
      %2486 = vmatpush1.xpose.msra.mxu0 0.0
      %2487 = vmatprep.subr.mxu0 0.0
      %2488 = vmatpush1.xpose.msra.mxu0 0.0
      %2489 = vmatprep.subr.mxu0 0.0
      %2490 = vmatpush1.xpose.msra.mxu0 0.0
      %2491 = vmatprep.subr.mxu0 0.0
      %2492 = vmatpush1.xpose.msra.mxu0 0.0
      %2493 = vmatprep.subr.mxu0 0.0
      %2494 = vmatpush1.xpose.msra.mxu0 0.0
      %2495 = vmatprep.subr.mxu0 0.0
      %2496 = vmatpush1.xpose.msra.mxu0 0.0
      %2497 = vmatprep.subr.mxu0 0.0
      %2498 = vmatpush1.xpose.msra.mxu0 0.0
      %2499 = vmatprep.subr.mxu0 0.0
      %2500 = vmatpush1.xpose.msra.mxu0 0.0
      %2501 = vmatprep.subr.mxu0 0.0
      %2502 = vmatpush1.xpose.msra.mxu0 0.0
      %2503 = vmatprep.subr.mxu0 0.0
      %2504 = vmatpush1.xpose.msra.mxu0 0.0
      %2505 = vmatprep.subr.mxu0 0.0
      %2506 = vmatpush1.xpose.msra.mxu0 0.0
      %2507 = vmatprep.subr.mxu0 0.0
      %2508 = vmatpush1.xpose.msra.mxu0 0.0
      %2509 = vmatprep.subr.mxu0 0.0
      %2510 = vmatpush1.xpose.msra.mxu0 0.0
      %2511 = vmatprep.subr.mxu0 0.0
      %2512 = vmatpush1.xpose.msra.mxu0 0.0
      %2513 = vmatprep.subr.mxu0 0.0
      %2514 = vmatpush1.xpose.msra.mxu0 0.0
      %2515 = vmatprep.subr.mxu0 0.0
      %2516 = vmatpush1.xpose.msra.mxu0 0.0
      %2517 = vmatprep.subr.mxu0 0.0
      %2518 = vmatpush1.xpose.msra.mxu0 0.0
      %2519 = vmatprep.subr.mxu0 0.0
      %2520 = vmatpush1.xpose.msra.mxu0 0.0
      %2521 = vmatprep.subr.mxu0 0.0
      %2522 = vmatpush1.xpose.msra.mxu0 0.0
      %2523 = vmatprep.subr.mxu0 0.0
      %2524 = vmatpush1.xpose.msra.mxu0 0.0
      %2525 = vmatprep.subr.mxu0 0.0
      %2526 = vmatpush1.xpose.msra.mxu0 0.0
      %2527 = vmatprep.subr.mxu0 0.0
      %2528 = vmatpush1.xpose.msra.mxu0 0.0
      %2529 = vmatprep.subr.mxu0 0.0
      %2530 = vmatpush1.xpose.msra.mxu0 0.0
      %2531 = vmatprep.subr.mxu0 0.0
      %2532 = vmatpush1.xpose.msra.mxu0 0.0
      %2533 = vmatprep.subr.mxu0 0.0
      %2534 = vmatpush1.xpose.msra.mxu0 0.0
      %2535 = vmatprep.subr.mxu0 0.0
      %2536 = vmatpush1.xpose.msra.mxu0 0.0
      %2537 = vmatprep.subr.mxu0 0.0
      %2538 = vmatpush1.xpose.msra.mxu0 0.0
      %2539 = vmatprep.subr.mxu0 0.0
      %2540 = vmatpush1.xpose.msra.mxu0 0.0
      %2541 = vmatprep.subr.mxu0 0.0
      %2542 = vmatpush1.xpose.msra.mxu0 0.0
      %2543 = vmatprep.subr.mxu0 0.0
      %2544 = vmatpush1.xpose.msra.mxu0 0.0
      %2545 = vmatprep.mubr.f32.mxu0 0.0
      %2546 = vmatmul.mubr.f32.gmra.mrb[0].mxu0 %v2477
      %v2547 = vpop.f32.mrb[0].mxu0
      %v2548 = vadd.f32 0.0, %v2547
      %v2549 = vpop.f32.mrb[0].mxu0
      %2550 = vdwg.mxu0
      %v2551 = vsel %vm829, %v2548, -inf
      %2552 = vmax.xlane.f32.xlu0 %v2551
      %v2553 = vpop.xlane.xlu0 %2552
      %v2554 = vsub.f32 %v2548, %v2553
      %v2555 = vmul.f32 %v2554, 1.442695
      %v2556 = vpow.pop %v2555
      %v2557 = vsel %vm829, %v2556, 0.0
      %2558 = vadd.xlane.f32.xlu0 %v2557
      %v2559 = vpop.xlane.xlu0 %2558
      %v2560 = vrcp.pop %v2559
      %v2561 = vmul.f32 %v2556, %v2560
      %2562 = vrot.lane.b32.xlu0 %v1990, 80
      %v2563 = vpop.permute.xlu0 %2562
      %v2566 = vsel %vm829, %v2561, 0
      %2568 = vmatprep.subr.mxu0 0.0
      %2569 = vmatpush1.msra.mxu0 %v2563
      %2570 = vmatprep.subr.mxu0 0.0
      %2571 = vmatpush1.msra.mxu0 0.0
      %2572 = vmatprep.subr.mxu0 0.0
      %2573 = vmatpush1.msra.mxu0 0.0
      %2574 = vmatprep.subr.mxu0 0.0
      %2575 = vmatpush1.msra.mxu0 0.0
      %2576 = vmatprep.subr.mxu0 0.0
      %2577 = vmatpush1.msra.mxu0 0.0
      %2578 = vmatprep.subr.mxu0 0.0
      %2579 = vmatpush1.msra.mxu0 0.0
      %2580 = vmatprep.subr.mxu0 0.0
      %2581 = vmatpush1.msra.mxu0 0.0
      %2582 = vmatprep.subr.mxu0 0.0
      %2583 = vmatpush1.msra.mxu0 0.0
      %2584 = vmatprep.subr.mxu0 0.0
      %2585 = vmatpush1.msra.mxu0 0.0
      %2586 = vmatprep.subr.mxu0 0.0
      %2587 = vmatpush1.msra.mxu0 0.0
      %2588 = vmatprep.subr.mxu0 0.0
      %2589 = vmatpush1.msra.mxu0 0.0
      %2590 = vmatprep.subr.mxu0 0.0
      %2591 = vmatpush1.msra.mxu0 0.0
      %2592 = vmatprep.subr.mxu0 0.0
      %2593 = vmatpush1.msra.mxu0 0.0
      %2594 = vmatprep.subr.mxu0 0.0
      %2595 = vmatpush1.msra.mxu0 0.0
      %2596 = vmatprep.subr.mxu0 0.0
      %2597 = vmatpush1.msra.mxu0 0.0
      %2598 = vmatprep.subr.mxu0 0.0
      %2599 = vmatpush1.msra.mxu0 0.0
      %2600 = vmatprep.subr.mxu0 0.0
      %2601 = vmatpush1.msra.mxu0 0.0
      %2602 = vmatprep.subr.mxu0 0.0
      %2603 = vmatpush1.msra.mxu0 0.0
      %2604 = vmatprep.subr.mxu0 0.0
      %2605 = vmatpush1.msra.mxu0 0.0
      %2606 = vmatprep.subr.mxu0 0.0
      %2607 = vmatpush1.msra.mxu0 0.0
      %2608 = vmatprep.subr.mxu0 0.0
      %2609 = vmatpush1.msra.mxu0 0.0
      %2610 = vmatprep.subr.mxu0 0.0
      %2611 = vmatpush1.msra.mxu0 0.0
      %2612 = vmatprep.subr.mxu0 0.0
      %2613 = vmatpush1.msra.mxu0 0.0
      %2614 = vmatprep.subr.mxu0 0.0
      %2615 = vmatpush1.msra.mxu0 0.0
      %2616 = vmatprep.subr.mxu0 0.0
      %2617 = vmatpush1.msra.mxu0 0.0
      %2618 = vmatprep.subr.mxu0 0.0
      %2619 = vmatpush1.msra.mxu0 0.0
      %2620 = vmatprep.subr.mxu0 0.0
      %2621 = vmatpush1.msra.mxu0 0.0
      %2622 = vmatprep.subr.mxu0 0.0
      %2623 = vmatpush1.msra.mxu0 0.0
      %2624 = vmatprep.subr.mxu0 0.0
      %2625 = vmatpush1.msra.mxu0 0.0
      %2626 = vmatprep.subr.mxu0 0.0
      %2627 = vmatpush1.msra.mxu0 0.0
      %2628 = vmatprep.subr.mxu0 0.0
      %2629 = vmatpush1.msra.mxu0 0.0
      %2630 = vmatprep.subr.mxu0 0.0
      %2631 = vmatpush1.msra.mxu0 0.0
      %2632 = vmatprep.mubr.f32.mxu0 0.0
      %2633 = vmatmul.mubr.f32.gmra.mrb[0].mxu0 %v2566
      %v2634 = vpop.f32.mrb[0].mxu0
      %v2635 = vadd.f32 0.0, %v2634
      %v2636 = vpop.f32.mrb[0].mxu0
      %2637 = vdwg.mxu0
      %v2639 = vsel %vm829, %v2635, 0
      %2641 = vmatprep.subr.mxu0 0.0
      %2642 = vmatpush1.msra.mxu0 %v1995
      %2643 = vmatprep.subr.mxu0 0.0
      %2644 = vmatpush1.msra.mxu0 0.0
      %2645 = vmatprep.subr.mxu0 0.0
      %2646 = vmatpush1.msra.mxu0 0.0
      %2647 = vmatprep.subr.mxu0 0.0
      %2648 = vmatpush1.msra.mxu0 0.0
      %2649 = vmatprep.subr.mxu0 0.0
      %2650 = vmatpush1.msra.mxu0 0.0
      %2651 = vmatprep.subr.mxu0 0.0
      %2652 = vmatpush1.msra.mxu0 0.0
      %2653 = vmatprep.subr.mxu0 0.0
      %2654 = vmatpush1.msra.mxu0 0.0
      %2655 = vmatprep.subr.mxu0 0.0
      %2656 = vmatpush1.msra.mxu0 0.0
      %2657 = vmatprep.subr.mxu0 0.0
      %2658 = vmatpush1.msra.mxu0 0.0
      %2659 = vmatprep.subr.mxu0 0.0
      %2660 = vmatpush1.msra.mxu0 0.0
      %2661 = vmatprep.subr.mxu0 0.0
      %2662 = vmatpush1.msra.mxu0 0.0
      %2663 = vmatprep.subr.mxu0 0.0
      %2664 = vmatpush1.msra.mxu0 0.0
      %2665 = vmatprep.subr.mxu0 0.0
      %2666 = vmatpush1.msra.mxu0 0.0
      %2667 = vmatprep.subr.mxu0 0.0
      %2668 = vmatpush1.msra.mxu0 0.0
      %2669 = vmatprep.subr.mxu0 0.0
      %2670 = vmatpush1.msra.mxu0 0.0
      %2671 = vmatprep.subr.mxu0 0.0
      %2672 = vmatpush1.msra.mxu0 0.0
      %2673 = vmatprep.subr.mxu0 0.0
      %2674 = vmatpush1.msra.mxu0 0.0
      %2675 = vmatprep.subr.mxu0 0.0
      %2676 = vmatpush1.msra.mxu0 0.0
      %2677 = vmatprep.subr.mxu0 0.0
      %2678 = vmatpush1.msra.mxu0 0.0
      %2679 = vmatprep.subr.mxu0 0.0
      %2680 = vmatpush1.msra.mxu0 0.0
      %2681 = vmatprep.subr.mxu0 0.0
      %2682 = vmatpush1.msra.mxu0 0.0
      %2683 = vmatprep.subr.mxu0 0.0
      %2684 = vmatpush1.msra.mxu0 0.0
      %2685 = vmatprep.subr.mxu0 0.0
      %2686 = vmatpush1.msra.mxu0 0.0
      %2687 = vmatprep.subr.mxu0 0.0
      %2688 = vmatpush1.msra.mxu0 0.0
      %2689 = vmatprep.subr.mxu0 0.0
      %2690 = vmatpush1.msra.mxu0 0.0
      %2691 = vmatprep.subr.mxu0 0.0
      %2692 = vmatpush1.msra.mxu0 0.0
      %2693 = vmatprep.subr.mxu0 0.0
      %2694 = vmatpush1.msra.mxu0 0.0
      %2695 = vmatprep.subr.mxu0 0.0
      %2696 = vmatpush1.msra.mxu0 0.0
      %2697 = vmatprep.subr.mxu0 0.0
      %2698 = vmatpush1.msra.mxu0 0.0
      %2699 = vmatprep.subr.mxu0 0.0
      %2700 = vmatpush1.msra.mxu0 0.0
      %2701 = vmatprep.subr.mxu0 0.0
      %2702 = vmatpush1.msra.mxu0 0.0
      %2703 = vmatprep.subr.mxu0 0.0
      %2704 = vmatpush1.msra.mxu0 0.0
      %2705 = vmatprep.mubr.f32.mxu0 0.0
      %2706 = vmatmul.mubr.f32.gmra.mrb[0].mxu0 %v2639
      %v2707 = vpop.f32.mrb[0].mxu0
      %v2708 = vadd.f32 0.0, %v2707
      %v2709 = vpop.f32.mrb[0].mxu0
      %2710 = vdwg.mxu0
      %v2711 = vadd.f32 %v2470, %v2708
      %2712 = vrot.lane.b32.xlu0 %v1998, 104
      %v2713 = vpop.permute.xlu0 %2712
      %2714 = vrot.lane.b32.xlu0 %v1990, 104
      %v2715 = vpop.permute.xlu0 %2714
      %v2716 = vsel %vm829, %v2713, 0
      %v2718 = vsel %vm829, %v2715, 0
      %2720 = vmatprep.subr.mxu0 0.0
      %2721 = vmatpush1.xpose.msra.mxu0 %v2718
      %2722 = vmatprep.subr.mxu0 0.0
      %2723 = vmatpush1.xpose.msra.mxu0 0.0
      %2724 = vmatprep.subr.mxu0 0.0
      %2725 = vmatpush1.xpose.msra.mxu0 0.0
      %2726 = vmatprep.subr.mxu0 0.0
      %2727 = vmatpush1.xpose.msra.mxu0 0.0
      %2728 = vmatprep.subr.mxu0 0.0
      %2729 = vmatpush1.xpose.msra.mxu0 0.0
      %2730 = vmatprep.subr.mxu0 0.0
      %2731 = vmatpush1.xpose.msra.mxu0 0.0
      %2732 = vmatprep.subr.mxu0 0.0
      %2733 = vmatpush1.xpose.msra.mxu0 0.0
      %2734 = vmatprep.subr.mxu0 0.0
      %2735 = vmatpush1.xpose.msra.mxu0 0.0
      %2736 = vmatprep.subr.mxu0 0.0
      %2737 = vmatpush1.xpose.msra.mxu0 0.0
      %2738 = vmatprep.subr.mxu0 0.0
      %2739 = vmatpush1.xpose.msra.mxu0 0.0
      %2740 = vmatprep.subr.mxu0 0.0
      %2741 = vmatpush1.xpose.msra.mxu0 0.0
      %2742 = vmatprep.subr.mxu0 0.0
      %2743 = vmatpush1.xpose.msra.mxu0 0.0
      %2744 = vmatprep.subr.mxu0 0.0
      %2745 = vmatpush1.xpose.msra.mxu0 0.0
      %2746 = vmatprep.subr.mxu0 0.0
      %2747 = vmatpush1.xpose.msra.mxu0 0.0
      %2748 = vmatprep.subr.mxu0 0.0
      %2749 = vmatpush1.xpose.msra.mxu0 0.0
      %2750 = vmatprep.subr.mxu0 0.0
      %2751 = vmatpush1.xpose.msra.mxu0 0.0
      %2752 = vmatprep.subr.mxu0 0.0
      %2753 = vmatpush1.xpose.msra.mxu0 0.0
      %2754 = vmatprep.subr.mxu0 0.0
      %2755 = vmatpush1.xpose.msra.mxu0 0.0
      %2756 = vmatprep.subr.mxu0 0.0
      %2757 = vmatpush1.xpose.msra.mxu0 0.0
      %2758 = vmatprep.subr.mxu0 0.0
      %2759 = vmatpush1.xpose.msra.mxu0 0.0
      %2760 = vmatprep.subr.mxu0 0.0
      %2761 = vmatpush1.xpose.msra.mxu0 0.0
      %2762 = vmatprep.subr.mxu0 0.0
      %2763 = vmatpush1.xpose.msra.mxu0 0.0
      %2764 = vmatprep.subr.mxu0 0.0
      %2765 = vmatpush1.xpose.msra.mxu0 0.0
      %2766 = vmatprep.subr.mxu0 0.0
      %2767 = vmatpush1.xpose.msra.mxu0 0.0
      %2768 = vmatprep.subr.mxu0 0.0
      %2769 = vmatpush1.xpose.msra.mxu0 0.0
      %2770 = vmatprep.subr.mxu0 0.0
      %2771 = vmatpush1.xpose.msra.mxu0 0.0
      %2772 = vmatprep.subr.mxu0 0.0
      %2773 = vmatpush1.xpose.msra.mxu0 0.0
      %2774 = vmatprep.subr.mxu0 0.0
      %2775 = vmatpush1.xpose.msra.mxu0 0.0
      %2776 = vmatprep.subr.mxu0 0.0
      %2777 = vmatpush1.xpose.msra.mxu0 0.0
      %2778 = vmatprep.subr.mxu0 0.0
      %2779 = vmatpush1.xpose.msra.mxu0 0.0
      %2780 = vmatprep.subr.mxu0 0.0
      %2781 = vmatpush1.xpose.msra.mxu0 0.0
      %2782 = vmatprep.subr.mxu0 0.0
      %2783 = vmatpush1.xpose.msra.mxu0 0.0
      %2784 = vmatprep.mubr.f32.mxu0 0.0
      %2785 = vmatmul.mubr.f32.gmra.mrb[0].mxu0 %v2716
      %v2786 = vpop.f32.mrb[0].mxu0
      %v2787 = vadd.f32 0.0, %v2786
      %v2788 = vpop.f32.mrb[0].mxu0
      %2789 = vdwg.mxu0
      %v2790 = vsel %vm829, %v2787, -inf
      %2791 = vmax.xlane.f32.xlu0 %v2790
      %v2792 = vpop.xlane.xlu0 %2791
      %v2793 = vsub.f32 %v2787, %v2792
      %v2794 = vmul.f32 %v2793, 1.442695
      %v2795 = vpow.pop %v2794
      %v2796 = vsel %vm829, %v2795, 0.0
      %2797 = vadd.xlane.f32.xlu0 %v2796
      %v2798 = vpop.xlane.xlu0 %2797
      %v2799 = vrcp.pop %v2798
      %v2800 = vmul.f32 %v2795, %v2799
      %2801 = vrot.lane.b32.xlu0 %v1990, 72
      %v2802 = vpop.permute.xlu0 %2801
      %v2805 = vsel %vm829, %v2800, 0
      %2807 = vmatprep.subr.mxu0 0.0
      %2808 = vmatpush1.msra.mxu0 %v2802
      %2809 = vmatprep.subr.mxu0 0.0
      %2810 = vmatpush1.msra.mxu0 0.0
      %2811 = vmatprep.subr.mxu0 0.0
      %2812 = vmatpush1.msra.mxu0 0.0
      %2813 = vmatprep.subr.mxu0 0.0
      %2814 = vmatpush1.msra.mxu0 0.0
      %2815 = vmatprep.subr.mxu0 0.0
      %2816 = vmatpush1.msra.mxu0 0.0
      %2817 = vmatprep.subr.mxu0 0.0
      %2818 = vmatpush1.msra.mxu0 0.0
      %2819 = vmatprep.subr.mxu0 0.0
      %2820 = vmatpush1.msra.mxu0 0.0
      %2821 = vmatprep.subr.mxu0 0.0
      %2822 = vmatpush1.msra.mxu0 0.0
      %2823 = vmatprep.subr.mxu0 0.0
      %2824 = vmatpush1.msra.mxu0 0.0
      %2825 = vmatprep.subr.mxu0 0.0
      %2826 = vmatpush1.msra.mxu0 0.0
      %2827 = vmatprep.subr.mxu0 0.0
      %2828 = vmatpush1.msra.mxu0 0.0
      %2829 = vmatprep.subr.mxu0 0.0
      %2830 = vmatpush1.msra.mxu0 0.0
      %2831 = vmatprep.subr.mxu0 0.0
      %2832 = vmatpush1.msra.mxu0 0.0
      %2833 = vmatprep.subr.mxu0 0.0
      %2834 = vmatpush1.msra.mxu0 0.0
      %2835 = vmatprep.subr.mxu0 0.0
      %2836 = vmatpush1.msra.mxu0 0.0
      %2837 = vmatprep.subr.mxu0 0.0
      %2838 = vmatpush1.msra.mxu0 0.0
      %2839 = vmatprep.subr.mxu0 0.0
      %2840 = vmatpush1.msra.mxu0 0.0
      %2841 = vmatprep.subr.mxu0 0.0
      %2842 = vmatpush1.msra.mxu0 0.0
      %2843 = vmatprep.subr.mxu0 0.0
      %2844 = vmatpush1.msra.mxu0 0.0
      %2845 = vmatprep.subr.mxu0 0.0
      %2846 = vmatpush1.msra.mxu0 0.0
      %2847 = vmatprep.subr.mxu0 0.0
      %2848 = vmatpush1.msra.mxu0 0.0
      %2849 = vmatprep.subr.mxu0 0.0
      %2850 = vmatpush1.msra.mxu0 0.0
      %2851 = vmatprep.subr.mxu0 0.0
      %2852 = vmatpush1.msra.mxu0 0.0
      %2853 = vmatprep.subr.mxu0 0.0
      %2854 = vmatpush1.msra.mxu0 0.0
      %2855 = vmatprep.subr.mxu0 0.0
      %2856 = vmatpush1.msra.mxu0 0.0
      %2857 = vmatprep.subr.mxu0 0.0
      %2858 = vmatpush1.msra.mxu0 0.0
      %2859 = vmatprep.subr.mxu0 0.0
      %2860 = vmatpush1.msra.mxu0 0.0
      %2861 = vmatprep.subr.mxu0 0.0
      %2862 = vmatpush1.msra.mxu0 0.0
      %2863 = vmatprep.subr.mxu0 0.0
      %2864 = vmatpush1.msra.mxu0 0.0
      %2865 = vmatprep.subr.mxu0 0.0
      %2866 = vmatpush1.msra.mxu0 0.0
      %2867 = vmatprep.subr.mxu0 0.0
      %2868 = vmatpush1.msra.mxu0 0.0
      %2869 = vmatprep.subr.mxu0 0.0
      %2870 = vmatpush1.msra.mxu0 0.0
      %2871 = vmatprep.mubr.f32.mxu0 0.0
      %2872 = vmatmul.mubr.f32.gmra.mrb[0].mxu0 %v2805
      %v2873 = vpop.f32.mrb[0].mxu0
      %v2874 = vadd.f32 0.0, %v2873
      %v2875 = vpop.f32.mrb[0].mxu0
      %2876 = vdwg.mxu0
      %v2878 = vsel %vm829, %v2874, 0
      %2880 = vmatprep.subr.mxu0 0.0
      %2881 = vmatpush1.msra.mxu0 %v1996
      %2882 = vmatprep.subr.mxu0 0.0
      %2883 = vmatpush1.msra.mxu0 0.0
      %2884 = vmatprep.subr.mxu0 0.0
      %2885 = vmatpush1.msra.mxu0 0.0
      %2886 = vmatprep.subr.mxu0 0.0
      %2887 = vmatpush1.msra.mxu0 0.0
      %2888 = vmatprep.subr.mxu0 0.0
      %2889 = vmatpush1.msra.mxu0 0.0
      %2890 = vmatprep.subr.mxu0 0.0
      %2891 = vmatpush1.msra.mxu0 0.0
      %2892 = vmatprep.subr.mxu0 0.0
      %2893 = vmatpush1.msra.mxu0 0.0
      %2894 = vmatprep.subr.mxu0 0.0
      %2895 = vmatpush1.msra.mxu0 0.0
      %2896 = vmatprep.subr.mxu0 0.0
      %2897 = vmatpush1.msra.mxu0 0.0
      %2898 = vmatprep.subr.mxu0 0.0
      %2899 = vmatpush1.msra.mxu0 0.0
      %2900 = vmatprep.subr.mxu0 0.0
      %2901 = vmatpush1.msra.mxu0 0.0
      %2902 = vmatprep.subr.mxu0 0.0
      %2903 = vmatpush1.msra.mxu0 0.0
      %2904 = vmatprep.subr.mxu0 0.0
      %2905 = vmatpush1.msra.mxu0 0.0
      %2906 = vmatprep.subr.mxu0 0.0
      %2907 = vmatpush1.msra.mxu0 0.0
      %2908 = vmatprep.subr.mxu0 0.0
      %2909 = vmatpush1.msra.mxu0 0.0
      %2910 = vmatprep.subr.mxu0 0.0
      %2911 = vmatpush1.msra.mxu0 0.0
      %2912 = vmatprep.subr.mxu0 0.0
      %2913 = vmatpush1.msra.mxu0 0.0
      %2914 = vmatprep.subr.mxu0 0.0
      %2915 = vmatpush1.msra.mxu0 0.0
      %2916 = vmatprep.subr.mxu0 0.0
      %2917 = vmatpush1.msra.mxu0 0.0
      %2918 = vmatprep.subr.mxu0 0.0
      %2919 = vmatpush1.msra.mxu0 0.0
      %2920 = vmatprep.subr.mxu0 0.0
      %2921 = vmatpush1.msra.mxu0 0.0
      %2922 = vmatprep.subr.mxu0 0.0
      %2923 = vmatpush1.msra.mxu0 0.0
      %2924 = vmatprep.subr.mxu0 0.0
      %2925 = vmatpush1.msra.mxu0 0.0
      %2926 = vmatprep.subr.mxu0 0.0
      %2927 = vmatpush1.msra.mxu0 0.0
      %2928 = vmatprep.subr.mxu0 0.0
      %2929 = vmatpush1.msra.mxu0 0.0
      %2930 = vmatprep.subr.mxu0 0.0
      %2931 = vmatpush1.msra.mxu0 0.0
      %2932 = vmatprep.subr.mxu0 0.0
      %2933 = vmatpush1.msra.mxu0 0.0
      %2934 = vmatprep.subr.mxu0 0.0
      %2935 = vmatpush1.msra.mxu0 0.0
      %2936 = vmatprep.subr.mxu0 0.0
      %2937 = vmatpush1.msra.mxu0 0.0
      %2938 = vmatprep.subr.mxu0 0.0
      %2939 = vmatpush1.msra.mxu0 0.0
      %2940 = vmatprep.subr.mxu0 0.0
      %2941 = vmatpush1.msra.mxu0 0.0
      %2942 = vmatprep.subr.mxu0 0.0
      %2943 = vmatpush1.msra.mxu0 0.0
      %2944 = vmatprep.mubr.f32.mxu0 0.0
      %2945 = vmatmul.mubr.f32.gmra.mrb[0].mxu0 %v2878
      %v2946 = vpop.f32.mrb[0].mxu0
      %v2947 = vadd.f32 0.0, %v2946
      %v2948 = vpop.f32.mrb[0].mxu0
      %2949 = vdwg.mxu0
      %v2950 = vadd.f32 %v2711, %v2947
      %v2952 = vlaneseq
      %v2953 = vshrl.u32 %v2952, 7
      %v2954 = vsub.s32 0, %v2953
      %v2955 = vrot.slane %v1997, %v2954
      %v2957 = vadd.f32 %v2950, %v2955
      %v2958 = vadd.f32 %v2957, %v1824
      %v2959 = vld [vmem:[%s6] sm:$0x1]
      %v2960 = vld [vmem:[%s7] sm:$0x1]
      %v2961 = vsel %vm700, %v2958, 0.0
      %2962 = vadd.xlane.f32.xlu0 %v2961
      %v2963 = vpop.xlane.xlu0 %2962
      %v2964 = vmul.f32 %v2963, %v704
      %v2965 = vsub.f32 %v2958, %v2964
      %v2966 = vmul.f32 %v2965, %v2965
      %v2967 = vsel %vm700, %v2966, 0.0
      %2968 = vadd.xlane.f32.xlu0 %v2967
      %v2969 = vpop.xlane.xlu0 %2968
      %v2970 = vmul.f32 %v2969, 0.032258064
      %v2971 = vrsqrt.pop %v2970
      %v2972 = vmul.f32 %v2970, %v2971
      %vm2973 = vcmp.eq.f32.partialorder %v2970, inf
      %v2974 = vsel %vm2973, %v2970, %v2972
      %vm2975 = vcmp.eq.f32.partialorder %v2970, 0.0
      %v2976 = vand.u32 %v2970, 2147483648
      %v2977 = vsel %vm2975, %v2976, %v2974
      %v2978 = vadd.f32 %v2977, 1e-06
      %v2979 = vrcp.pop %v2978
      %v2980 = vmul.f32 %v2965, %v2979
      %v2982 = vlaneseq
      %v2983 = vshrl.u32 %v2982, 7
      %v2984 = vsub.s32 0, %v2983
      %v2985 = vrot.slane %v2959, %v2984
      %v2987 = vmul.f32 %v2985, %v2980
      %v2989 = vlaneseq
      %v2990 = vshrl.u32 %v2989, 7
      %v2991 = vsub.s32 0, %v2990
      %v2992 = vrot.slane %v2960, %v2991
      %v2994 = vadd.f32 %v2987, %v2992
      %v2995 = vld [vmem:[%s18] sm:$0xff]
      %v2996 = vld [vmem:[%s18 + $0x8] sm:$0xff]
      %v2997 = vld [vmem:[%s18 + $0x10] sm:$0xff]
      %v2998 = vld [vmem:[%s18 + $0x18] sm:$0xff]
      %v2999 = vld [vmem:[%s19] sm:$0x1]
      %v3000 = vld [vmem:[%s20] sm:$0xff]
      %v3001 = vld [vmem:[%s20 + $0x8] sm:$0xff]
      %v3002 = vld [vmem:[%s20 + $0x10] sm:$0xff]
      %v3003 = vld [vmem:[%s20 + $0x18] sm:$0xff]
      %v3004 = vld [vmem:[%s20 + $0x20] sm:$0xff]
      %v3005 = vld [vmem:[%s20 + $0x28] sm:$0xff]
      %v3006 = vld [vmem:[%s20 + $0x30] sm:$0xff]
      %v3007 = vld [vmem:[%s20 + $0x38] sm:$0xff]
      %v3008 = vld [vmem:[%s21] sm:$0x1]
      %v3010 = vlaneseq
      %v3011 = vshrl.u32 %v3010, 7
      %v3012 = vsub.s32 0, %v3011
      %v3013 = vrot.slane %v2999, %v3012
      %v3016 = vsel %vm700, %v2994, 0
      %3018 = vmatprep.subr.mxu0 0.0
      %3019 = vmatpush1.msra.mxu0 %v2995
      %3020 = vmatprep.subr.mxu0 0.0
      %3021 = vmatpush1.msra.mxu0 %v2996
      %3022 = vmatprep.subr.mxu0 0.0
      %3023 = vmatpush1.msra.mxu0 %v2997
      %3024 = vmatprep.subr.mxu0 0.0
      %3025 = vmatpush1.msra.mxu0 %v2998
      %3026 = vmatprep.subr.mxu0 0.0
      %3027 = vmatpush1.msra.mxu0 0.0
      %3028 = vmatprep.subr.mxu0 0.0
      %3029 = vmatpush1.msra.mxu0 0.0
      %3030 = vmatprep.subr.mxu0 0.0
      %3031 = vmatpush1.msra.mxu0 0.0
      %3032 = vmatprep.subr.mxu0 0.0
      %3033 = vmatpush1.msra.mxu0 0.0
      %3034 = vmatprep.subr.mxu0 0.0
      %3035 = vmatpush1.msra.mxu0 0.0
      %3036 = vmatprep.subr.mxu0 0.0
      %3037 = vmatpush1.msra.mxu0 0.0
      %3038 = vmatprep.subr.mxu0 0.0
      %3039 = vmatpush1.msra.mxu0 0.0
      %3040 = vmatprep.subr.mxu0 0.0
      %3041 = vmatpush1.msra.mxu0 0.0
      %3042 = vmatprep.subr.mxu0 0.0
      %3043 = vmatpush1.msra.mxu0 0.0
      %3044 = vmatprep.subr.mxu0 0.0
      %3045 = vmatpush1.msra.mxu0 0.0
      %3046 = vmatprep.subr.mxu0 0.0
      %3047 = vmatpush1.msra.mxu0 0.0
      %3048 = vmatprep.subr.mxu0 0.0
      %3049 = vmatpush1.msra.mxu0 0.0
      %3050 = vmatprep.subr.mxu0 0.0
      %3051 = vmatpush1.msra.mxu0 0.0
      %3052 = vmatprep.subr.mxu0 0.0
      %3053 = vmatpush1.msra.mxu0 0.0
      %3054 = vmatprep.subr.mxu0 0.0
      %3055 = vmatpush1.msra.mxu0 0.0
      %3056 = vmatprep.subr.mxu0 0.0
      %3057 = vmatpush1.msra.mxu0 0.0
      %3058 = vmatprep.subr.mxu0 0.0
      %3059 = vmatpush1.msra.mxu0 0.0
      %3060 = vmatprep.subr.mxu0 0.0
      %3061 = vmatpush1.msra.mxu0 0.0
      %3062 = vmatprep.subr.mxu0 0.0
      %3063 = vmatpush1.msra.mxu0 0.0
      %3064 = vmatprep.subr.mxu0 0.0
      %3065 = vmatpush1.msra.mxu0 0.0
      %3066 = vmatprep.subr.mxu0 0.0
      %3067 = vmatpush1.msra.mxu0 0.0
      %3068 = vmatprep.subr.mxu0 0.0
      %3069 = vmatpush1.msra.mxu0 0.0
      %3070 = vmatprep.subr.mxu0 0.0
      %3071 = vmatpush1.msra.mxu0 0.0
      %3072 = vmatprep.subr.mxu0 0.0
      %3073 = vmatpush1.msra.mxu0 0.0
      %3074 = vmatprep.subr.mxu0 0.0
      %3075 = vmatpush1.msra.mxu0 0.0
      %3076 = vmatprep.subr.mxu0 0.0
      %3077 = vmatpush1.msra.mxu0 0.0
      %3078 = vmatprep.subr.mxu0 0.0
      %3079 = vmatpush1.msra.mxu0 0.0
      %3080 = vmatprep.subr.mxu0 0.0
      %3081 = vmatpush1.msra.mxu0 0.0
      %3082 = vmatprep.mubr.f32.mxu0 0.0
      %3083 = vmatmul.mubr.f32.gmra.mrb[0].mxu0 %v3016
      %v3084 = vpop.f32.mrb[0].mxu0
      %v3085 = vadd.f32 %v3013, %v3084
      %v3086 = vpop.f32.mrb[0].mxu0
      %3087 = vdwg.mxu0
      %v3088 = vmax.f32 %v3085, 0.0
      %v3090 = vlaneseq
      %v3091 = vshrl.u32 %v3090, 7
      %v3092 = vsub.s32 0, %v3091
      %v3093 = vrot.slane %v3008, %v3092
      %vm3095 = vcmask 523264
      %v3097 = vsel %vm3095, %v3088, 0
      %3099 = vmatprep.subr.mxu0 0.0
      %3100 = vmatpush1.msra.mxu0 %v3000
      %3101 = vmatprep.subr.mxu0 0.0
      %3102 = vmatpush1.msra.mxu0 %v3001
      %3103 = vmatprep.subr.mxu0 0.0
      %3104 = vmatpush1.msra.mxu0 %v3002
      %3105 = vmatprep.subr.mxu0 0.0
      %3106 = vmatpush1.msra.mxu0 %v3003
      %3107 = vmatprep.subr.mxu0 0.0
      %3108 = vmatpush1.msra.mxu0 %v3004
      %3109 = vmatprep.subr.mxu0 0.0
      %3110 = vmatpush1.msra.mxu0 %v3005
      %3111 = vmatprep.subr.mxu0 0.0
      %3112 = vmatpush1.msra.mxu0 %v3006
      %3113 = vmatprep.subr.mxu0 0.0
      %3114 = vmatpush1.msra.mxu0 %v3007
      %3115 = vmatprep.subr.mxu0 0.0
      %3116 = vmatpush1.msra.mxu0 0.0
      %3117 = vmatprep.subr.mxu0 0.0
      %3118 = vmatpush1.msra.mxu0 0.0
      %3119 = vmatprep.subr.mxu0 0.0
      %3120 = vmatpush1.msra.mxu0 0.0
      %3121 = vmatprep.subr.mxu0 0.0
      %3122 = vmatpush1.msra.mxu0 0.0
      %3123 = vmatprep.subr.mxu0 0.0
      %3124 = vmatpush1.msra.mxu0 0.0
      %3125 = vmatprep.subr.mxu0 0.0
      %3126 = vmatpush1.msra.mxu0 0.0
      %3127 = vmatprep.subr.mxu0 0.0
      %3128 = vmatpush1.msra.mxu0 0.0
      %3129 = vmatprep.subr.mxu0 0.0
      %3130 = vmatpush1.msra.mxu0 0.0
      %3131 = vmatprep.subr.mxu0 0.0
      %3132 = vmatpush1.msra.mxu0 0.0
      %3133 = vmatprep.subr.mxu0 0.0
      %3134 = vmatpush1.msra.mxu0 0.0
      %3135 = vmatprep.subr.mxu0 0.0
      %3136 = vmatpush1.msra.mxu0 0.0
      %3137 = vmatprep.subr.mxu0 0.0
      %3138 = vmatpush1.msra.mxu0 0.0
      %3139 = vmatprep.subr.mxu0 0.0
      %3140 = vmatpush1.msra.mxu0 0.0
      %3141 = vmatprep.subr.mxu0 0.0
      %3142 = vmatpush1.msra.mxu0 0.0
      %3143 = vmatprep.subr.mxu0 0.0
      %3144 = vmatpush1.msra.mxu0 0.0
      %3145 = vmatprep.subr.mxu0 0.0
      %3146 = vmatpush1.msra.mxu0 0.0
      %3147 = vmatprep.subr.mxu0 0.0
      %3148 = vmatpush1.msra.mxu0 0.0
      %3149 = vmatprep.subr.mxu0 0.0
      %3150 = vmatpush1.msra.mxu0 0.0
      %3151 = vmatprep.subr.mxu0 0.0
      %3152 = vmatpush1.msra.mxu0 0.0
      %3153 = vmatprep.subr.mxu0 0.0
      %3154 = vmatpush1.msra.mxu0 0.0
      %3155 = vmatprep.subr.mxu0 0.0
      %3156 = vmatpush1.msra.mxu0 0.0
      %3157 = vmatprep.subr.mxu0 0.0
      %3158 = vmatpush1.msra.mxu0 0.0
      %3159 = vmatprep.subr.mxu0 0.0
      %3160 = vmatpush1.msra.mxu0 0.0
      %3161 = vmatprep.subr.mxu0 0.0
      %3162 = vmatpush1.msra.mxu0 0.0
      %3163 = vmatprep.mubr.f32.mxu0 0.0
      %3164 = vmatmul.mubr.f32.gmra.mrb[0].mxu0 %v3097
      %v3165 = vpop.f32.mrb[0].mxu0
      %v3166 = vadd.f32 %v3093, %v3165
      %v3167 = vpop.f32.mrb[0].mxu0
      %3168 = vdwg.mxu0
      %v3169 = vadd.f32 %v3166, %v2994
      %3170 = vst.msk [vmem:[%s695] sm:$0xff] %vm700, %v3169
      %p3171 = scmp.lt.s32.totalorder %s33, 1
      %s3172 = scalar_select %p3171, %s33, 1
      %s3173 = smul.addr %s3172, 8
      %s3174 = scalar_lea.vmem %s22, %s3173
      // Predicated region
      $region109: #{transformer_forward.9} parent=107 // pred_check
        %p3175 = pneg %p523
      $region110: #{transformer_forward.9} parent=107 // pred_check_branch
        %3177 = sbr.rel (%p3175) target = $region112
      $region111: #{transformer_forward.9} parent=107 // pred_region
        _
      $region112: #{transformer_forward.9} parent=107 // pred_fallthru
        _
    $region108: #{transformer_forward.9} parent=5 // pred_fallthru
      _
    %p3178 = scmp.le.s32.totalorder 2, %s28
    // Predicated region
    $region113: #{transformer_forward.9} parent=5 // pred_check
      %p3179 = pneg %p3178
    $region114: #{transformer_forward.9} parent=5 // pred_check_branch
      %3181 = sbr.rel (%p3179) target = $region116
    $region115: #{transformer_forward.9} parent=5 // pred_region
      %s3182 = ssub.s32 %s28, 2
      // Predicated region
      $region117: #{transformer_forward.9} parent=115 // pred_check
        %p3183 = pneg %p529
      $region118: #{transformer_forward.9} parent=115 // pred_check_branch
        %3185 = sbr.rel (%p3183) target = $region120
      $region119: #{transformer_forward.9} parent=115 // pred_region
        %p3186 = scmp.lt.s32.totalorder %s34, 1
        %s3187 = scalar_select %p3186, %s34, 1
        %s3188 = smul.addr %s3187, 8
        %s3189 = scalar_lea.vmem %s22, %s3188
      $region120: #{transformer_forward.9} parent=115 // pred_fallthru
        _
    $region116: #{transformer_forward.9} parent=5 // pred_fallthru
      _
  $region6: #{transformer_forward.9} parent=0 // loop_footer
    %s32 = sadd.s32 1, %s28
  $region7: #{transformer_forward.9} parent=0 // loop_footer_branch
    %27 = sbr.rel target = $region3
  $region8: #{transformer_forward.9} parent=0 // loop_exit
    _

</llo_original>
